<compile_context>
chip_gen: v7x
topology: tpu7x:2x2x1
jax: 0.10.0
libtpu: 0.0.40
codegen_flags: <defaults>
</compile_context>

<pallas_src>
import functools

import jax
import jax.numpy as jnp
from jax import lax
from jax.experimental import pallas as pl
from jax.experimental.pallas import tpu as pltpu


# ------------------------- synthetic config -------------------------
MODEL_CHANNELS = 8
OUTPUT_CHANNELS = 1
EXTENDED_CHANNEL_EXPANSION = (1, 2, 4)    # reversed -> (4, 2, 1): two decoder stages
NUM_RESNET_PER_UP_BLOCK = 1
TRANSITION_SCALE_FACTOR = 2
NUM_GROUPS = 4
GN_EPS = 1e-5


# ------------------------- in-kernel building blocks (traced values) -------------------------
def _tap_masks(H, W):
    """Boundary-validity masks (1, H*W) for the 9 taps of a 3x3 'same' conv.

    Computed ONCE per stage and reused by every conv at that resolution
    (upsampler conv, resnet convs, final conv) -- no per-conv iota/compare chains.
    """
    HW = H * W
    q = lax.broadcasted_iota(jnp.int32, (1, HW), 1)
    if W & (W - 1) == 0:
        col = jnp.bitwise_and(q, W - 1)
    else:
        col = q % W                                  # general (non power-of-two) widths
    row_ok = {-1: q >= W, 0: None, 1: q < (H - 1) * W}
    col_ok = {-1: col >= 1, 0: None, 1: col < (W - 1)}
    masks = {}
    for dy in range(3):
        for dx in range(3):
            r, c = row_ok[dy - 1], col_ok[dx - 1]
            if r is None:
                masks[(dy, dx)] = c
            elif c is None:
                masks[(dy, dx)] = r
            else:
                masks[(dy, dx)] = jnp.logical_and(r, c)
    return masks


def _group_masks(C):
    """NUM_GROUPS boolean (C, 1) membership masks (contiguous PyTorch grouping)."""
    B = C // NUM_GROUPS
    cidx = lax.broadcasted_iota(jnp.int32, (C, 1), 0)
    return [jnp.logical_and(cidx >= g * B, cidx < (g + 1) * B) for g in range(NUM_GROUPS)]


def _conv3x3(a, w_ref, b_ref, masks, W):
    """3x3 'same' conv in (C, H*W) layout as ONE wide-K MXU matmul.

    a: (Cin, HW) f32.  w_ref: (Cout, 9*Cin) bf16, tap-major.  b_ref: (Cout, 1) f32.
    The 9 shifted copies (lane rolls + boundary masks -> zero 'same' padding) are
    concatenated along sublanes into a (9*Cin, HW) slab, cast to bf16 only at the
    MXU boundary, and contracted in a single dot (lane-dense N = HW output).
    """
    HW = a.shape[1]
    taps = []
    for dy in range(3):
        for dx in range(3):
            off = (dy - 1) * W + (dx - 1)
            t = a if off == 0 else pltpu.roll(a, shift=(-off) % HW, axis=1)
            m = masks[(dy, dx)]
            if m is not None:
                t = jnp.where(m, t, 0.0)
            taps.append(t)
    slab = jnp.concatenate(taps, axis=0).astype(jnp.bfloat16)       # (9*Cin, HW)
    out = jnp.dot(w_ref[...], slab, preferred_element_type=jnp.float32)
    return out + b_ref[...]


def _gn_silu(a, g_ref, b_ref, gmasks):
    """GroupNorm (two-pass, biased var, f32 stats) + SiLU in (C, H*W) layout.

    Matmul-free: per-channel lane reductions + masked scalar reductions over the
    (C, 1) column produce the per-group mean/var, broadcast back with selects.
    """
    C, HW = a.shape
    inv_n = 1.0 / float((C // NUM_GROUPS) * HW)
    s = jnp.sum(a, axis=1, keepdims=True)                            # (C, 1)
    mean = jnp.zeros((C, 1), jnp.float32)
    for gm in gmasks:
        mean = mean + jnp.where(gm, jnp.sum(jnp.where(gm, s, 0.0)) * inv_n, 0.0)
    cent = a - mean
    q = jnp.sum(cent * cent, axis=1, keepdims=True)                  # (C, 1)
    var = jnp.zeros((C, 1), jnp.float32)
    for gm in gmasks:
        var = var + jnp.where(gm, jnp.sum(jnp.where(gm, q, 0.0)) * inv_n, 0.0)
    y = cent * lax.rsqrt(var + GN_EPS) * g_ref[...] + b_ref[...]
    return y * jax.nn.sigmoid(y)


# ------------------------- fused decoder kernel -------------------------
def _decoder_kernel(stage_hw, nres, *refs):
    """Whole decoder forward for one sample; everything stays in VMEM.

    refs = [x, skip_0..skip_{S-1},
            per-stage (U, up_w, up_b, then 8 per resnet) * S,
            convout_w, convout_b, out]
    """
    ns = len(stage_hw)
    nsw = 3 + 8 * nres
    x_ref = refs[0]
    skip_refs = refs[1:1 + ns]
    wbase = 1 + ns
    tail = wbase + ns * nsw
    cow_ref, cob_ref, out_ref = refs[tail], refs[tail + 1], refs[tail + 2]

    a = x_ref[0].astype(jnp.float32)                   # (C0, H0*W0), NCHW-flat

    masks = None
    for i, (H, W) in enumerate(stage_hw):
        sr = refs[wbase + i * nsw: wbase + (i + 1) * nsw]
        u_ref, upw_ref, upb_ref = sr[0], sr[1], sr[2]

        masks = _tap_masks(H, W)                       # hoisted: shared by all convs at (H, W)

        # UpSampler: nearest x2 upsample (bf16 0/1 selection matmul, lane-dense
        # output) followed by a 3x3 conv.  For large spatial sizes this matmul
        # should become a subpixel/phase-conv (no O(HW^2) operand); at these
        # shapes the bf16 matrix is < 0.6 MB total.
        a = jnp.dot(a.astype(jnp.bfloat16), u_ref[...],
                    preferred_element_type=jnp.float32)              # (Cin, H*W)
        a = _conv3x3(a, upw_ref, upb_ref, masks, W)                  # (Cout, H*W)

        # decoder skip connection: x = x + intermediate_outputs.pop()
        a = a + skip_refs[i][0].astype(jnp.float32)

        gmasks = _group_masks(a.shape[0])              # hoisted per stage
        for r in range(nres):
            g1, b1, w1, c1, g2, b2, w2, c2 = sr[3 + 8 * r: 11 + 8 * r]
            h = _gn_silu(a, g1, b1, gmasks)
            h = _conv3x3(h, w1, c1, masks, W)
            h = _gn_silu(h, g2, b2, gmasks)
            h = _conv3x3(h, w2, c2, masks, W)
            a = a + h                                   # dropout p = 0.0

    Hf, Wf = stage_hw[-1]
    # Final conv (Cout=1) at the last-stage resolution; masks from that stage.
    out_ref[0] = _conv3x3(a, cow_ref, cob_ref, masks, Wf).astype(out_ref.dtype)


# ------------------------- wrapper -------------------------
def _upsample_matrix(hc, wc, factor):
    """(hc*wc, hf*wf) 0/1 selection matrix (bf16) for nearest-neighbor x`factor`."""
    hf, wf = hc * factor, wc * factor
    pf = jnp.arange(hf * wf)
    src = (pf // wf // factor) * wc + (pf % wf) // factor
    return (jnp.arange(hc * wc)[:, None] == src[None, :]).astype(jnp.bfloat16)


def punetg_decoder_forward(params, x_nchw, intermediate_outputs=None):
    """NCHW in / NCHW out (PyTorch convention); single fused Pallas call inside."""
    N, C0, H0, W0 = x_nchw.shape
    rev = list(reversed(EXTENDED_CHANNEL_EXPANSION))
    num_stages = len(rev) - 1

    # per-stage (fine) resolutions and output channels
    stage_hw, stage_cout = [], []
    h, w = H0, W0
    for i in range(num_stages):
        h, w = h * TRANSITION_SCALE_FACTOR, w * TRANSITION_SCALE_FACTOR
        stage_hw.append((h, w))
        stage_cout.append(rev[i + 1] * MODEL_CHANNELS)

    # NCHW is already (C, H*W)-flat: pure reshapes, no transposes.
    x_flat = x_nchw.reshape(N, C0, H0 * W0)

    # skips: the PyTorch forward pops from the END of intermediate_outputs, once per stage.
    skip_list = list(intermediate_outputs) if intermediate_outputs else []
    skips = []
    for i in range(num_stages):
        (hh, ww), cc = stage_hw[i], stage_cout[i]
        if skip_list:
            skips.append(skip_list.pop().reshape(N, cc, hh * ww))
        else:
            skips.append(jnp.zeros((N, cc, hh * ww), x_nchw.dtype))

    # nearest-upsample selection matrices (coarse res of each stage), bf16
    u_mats, hc, wc = [], H0, W0
    for i in range(num_stages):
        u_mats.append(_upsample_matrix(hc, wc, TRANSITION_SCALE_FACTOR))
        hc, wc = stage_hw[i]

    # weights in kernel layout
    def conv_w(wt):   # (3,3,Cin,Cout) HWIO -> (Cout, 9*Cin) bf16, tap-major
        ci, co = wt.shape[2], wt.shape[3]
        return jnp.transpose(wt, (3, 0, 1, 2)).reshape(co, 9 * ci).astype(jnp.bfloat16)

    def col(v):       # (C,) -> (C, 1) f32
        return v.reshape(-1, 1).astype(jnp.float32)

    const_args = []
    for i, stage in enumerate(params["stages"]):
        const_args += [u_mats[i], conv_w(stage["up"]["w"]), col(stage["up"]["b"])]
        for rn in stage["resnets"]:
            const_args += [col(rn["gn1_g"]), col(rn["gn1_b"]),
                           conv_w(rn["conv1_w"]), col(rn["conv1_b"]),
                           col(rn["gn2_g"]), col(rn["gn2_b"]),
                           conv_w(rn["conv2_w"]), col(rn["conv2_b"])]
    const_args += [conv_w(params["convout_w"]), col(params["convout_b"])]

    per_sample = [x_flat] + skips

    in_specs = []
    for arr in per_sample:                                   # block over batch only
        in_specs.append(pl.BlockSpec((1,) + arr.shape[1:], lambda n: (n, 0, 0)))
    for arr in const_args:                                   # constants: full blocks, fixed index
        in_specs.append(pl.BlockSpec(arr.shape, lambda n, _r=arr.ndim: (0,) * _r))

    Hf, Wf = stage_hw[-1]
    out_specs = pl.BlockSpec((1, OUTPUT_CHANNELS, Hf * Wf), lambda n: (n, 0, 0))
    out_shape = jax.ShapeDtypeStruct((N, OUTPUT_CHANNELS, Hf * Wf), x_nchw.dtype)

    kernel = functools.partial(_decoder_kernel, tuple(stage_hw), NUM_RESNET_PER_UP_BLOCK)
    out_flat = pl.pallas_call(
        kernel,
        out_shape=out_shape,
        grid_spec=pltpu.PrefetchScalarGridSpec(
            num_scalar_prefetch=0,
            grid=(N,),
            in_specs=in_specs,
            out_specs=out_specs,
        ),
        compiler_params=pltpu.CompilerParams(
            dimension_semantics=("parallel",),          # 2 TensorCores on v7x, serial loop on v5e/v6e
            vmem_limit_bytes=32 * 1024 * 1024,
        ),
    )(*per_sample, *const_args)

    # (N, Cout, Hf*Wf) -> (N, Cout, Hf, Wf): output is already in NCHW order.
    return out_flat.reshape(N, OUTPUT_CHANNELS, Hf, Wf)


# ------------------------- parameters (deterministic, synthetic) -------------------------
def init_params(key):
    rev = list(reversed(EXTENDED_CHANNEL_EXPANSION))          # [4, 2, 1]
    stages = []
    for i, in_mult in enumerate(rev[:-1]):
        out_mult = rev[i + 1]
        cin = in_mult * MODEL_CHANNELS
        cout = out_mult * MODEL_CHANNELS
        key, k1, k2 = jax.random.split(key, 3)
        up = {
            "w": jax.random.normal(k1, (3, 3, cin, cout), jnp.float32) / jnp.sqrt(9.0 * cin),
            "b": jax.random.normal(k2, (cout,), jnp.float32) * 0.01,
        }
        resnets = []
        for _ in range(NUM_RESNET_PER_UP_BLOCK):
            key, k1, k2, k3, k4 = jax.random.split(key, 5)
            resnets.append({
                "gn1_g": jnp.ones((cout,), jnp.float32),
                "gn1_b": jnp.zeros((cout,), jnp.float32),
                "conv1_w": jax.random.normal(k1, (3, 3, cout, cout), jnp.float32) / jnp.sqrt(9.0 * cout),
                "conv1_b": jax.random.normal(k2, (cout,), jnp.float32) * 0.01,
                "gn2_g": jnp.ones((cout,), jnp.float32),
                "gn2_b": jnp.zeros((cout,), jnp.float32),
                "conv2_w": jax.random.normal(k3, (3, 3, cout, cout), jnp.float32) / jnp.sqrt(9.0 * cout),
                "conv2_b": jax.random.normal(k4, (cout,), jnp.float32) * 0.01,
            })
        stages.append({"up": up, "resnets": resnets})
    key, k1, k2 = jax.random.split(key, 3)
    return {
        "stages": stages,
        "convout_w": jax.random.normal(
            k1, (3, 3, MODEL_CHANNELS, OUTPUT_CHANNELS), jnp.float32) / jnp.sqrt(9.0 * MODEL_CHANNELS),
        "convout_b": jax.random.normal(k2, (OUTPUT_CHANNELS,), jnp.float32) * 0.01,
    }


# TODO(synk): time-embedding path (GaussianFourierProjection + per-resblock temb
# projection) not implemented; decoder is instantiated with use_time_embedding=False.


# ------------------------- demo -------------------------
if __name__ == "__main__":
    key = jax.random.PRNGKey(0)
    key, kp, kx, k1, k2 = jax.random.split(key, 5)
    params = init_params(kp)

    N, H0, W0 = 2, 8, 8
    cin = EXTENDED_CHANNEL_EXPANSION[-1] * MODEL_CHANNELS          # 32 channels at the bottleneck
    x = jax.random.normal(kx, (N, cin, H0, W0), jnp.float32)       # NCHW, matches PyTorch input

    # encoder skip connections (popped from the end of the list, as in the module)
    skip_last_stage = jax.random.normal(k1, (N, 1 * MODEL_CHANNELS, H0 * 4, W0 * 4), jnp.float32)
    skip_first_stage = jax.random.normal(k2, (N, 2 * MODEL_CHANNELS, H0 * 2, W0 * 2), jnp.float32)
    intermediate_outputs = [skip_last_stage, skip_first_stage]

    fwd = jax.jit(punetg_decoder_forward)
    out = fwd(params, x, intermediate_outputs)
    out = jax.block_until_ready(out)
    assert out.shape == (N, OUTPUT_CHANNELS, H0 * 4, W0 * 4), out.shape
    assert out.dtype == jnp.float32
    print("KERNEL_OK")
</pallas_src>

<mosaic_0001>
module attributes {stable_mosaic.version = 11 : i64} {
  func.func @_decoder_kernel(%arg0: i32, %arg1: memref<1x32x64xf32, #tpu.memory_space<vmem>>, %arg2: memref<1x16x256xf32, #tpu.memory_space<vmem>>, %arg3: memref<1x8x1024xf32, #tpu.memory_space<vmem>>, %arg4: memref<64x256xbf16, #tpu.memory_space<vmem>>, %arg5: memref<16x288xbf16, #tpu.memory_space<vmem>>, %arg6: memref<16x1xf32, #tpu.memory_space<vmem>>, %arg7: memref<16x1xf32, #tpu.memory_space<vmem>>, %arg8: memref<16x1xf32, #tpu.memory_space<vmem>>, %arg9: memref<16x144xbf16, #tpu.memory_space<vmem>>, %arg10: memref<16x1xf32, #tpu.memory_space<vmem>>, %arg11: memref<16x1xf32, #tpu.memory_space<vmem>>, %arg12: memref<16x1xf32, #tpu.memory_space<vmem>>, %arg13: memref<16x144xbf16, #tpu.memory_space<vmem>>, %arg14: memref<16x1xf32, #tpu.memory_space<vmem>>, %arg15: memref<256x1024xbf16, #tpu.memory_space<vmem>>, %arg16: memref<8x144xbf16, #tpu.memory_space<vmem>>, %arg17: memref<8x1xf32, #tpu.memory_space<vmem>>, %arg18: memref<8x1xf32, #tpu.memory_space<vmem>>, %arg19: memref<8x1xf32, #tpu.memory_space<vmem>>, %arg20: memref<8x72xbf16, #tpu.memory_space<vmem>>, %arg21: memref<8x1xf32, #tpu.memory_space<vmem>>, %arg22: memref<8x1xf32, #tpu.memory_space<vmem>>, %arg23: memref<8x1xf32, #tpu.memory_space<vmem>>, %arg24: memref<8x72xbf16, #tpu.memory_space<vmem>>, %arg25: memref<8x1xf32, #tpu.memory_space<vmem>>, %arg26: memref<1x72xbf16, #tpu.memory_space<vmem>>, %arg27: memref<1x1xf32, #tpu.memory_space<vmem>>, %arg28: memref<1x1x1024xf32, #tpu.memory_space<vmem>>) attributes {dimension_semantics = [#tpu.dimension_semantics<parallel>], iteration_bounds = array<i64: 2>, scalar_prefetch = 0 : i64, scratch_operands = 0 : i64, tpu.core_type = #tpu.core_type<tc>, window_params = [{transform_indices = @transform_0, window_bounds = array<i64: 1, 32, 64>}, {transform_indices = @transform_1, window_bounds = array<i64: 1, 16, 256>}, {transform_indices = @transform_2, window_bounds = array<i64: 1, 8, 1024>}, {pipeline_mode = #tpu.pipeline_mode<synchronous>, transform_indices = @transform_3, window_bounds = array<i64: 64, 256>}, {pipeline_mode = #tpu.pipeline_mode<synchronous>, transform_indices = @transform_4, window_bounds = array<i64: 16, 288>}, {pipeline_mode = #tpu.pipeline_mode<synchronous>, transform_indices = @transform_5, window_bounds = array<i64: 16, 1>}, {pipeline_mode = #tpu.pipeline_mode<synchronous>, transform_indices = @transform_6, window_bounds = array<i64: 16, 1>}, {pipeline_mode = #tpu.pipeline_mode<synchronous>, transform_indices = @transform_7, window_bounds = array<i64: 16, 1>}, {pipeline_mode = #tpu.pipeline_mode<synchronous>, transform_indices = @transform_8, window_bounds = array<i64: 16, 144>}, {pipeline_mode = #tpu.pipeline_mode<synchronous>, transform_indices = @transform_9, window_bounds = array<i64: 16, 1>}, {pipeline_mode = #tpu.pipeline_mode<synchronous>, transform_indices = @transform_10, window_bounds = array<i64: 16, 1>}, {pipeline_mode = #tpu.pipeline_mode<synchronous>, transform_indices = @transform_11, window_bounds = array<i64: 16, 1>}, {pipeline_mode = #tpu.pipeline_mode<synchronous>, transform_indices = @transform_12, window_bounds = array<i64: 16, 144>}, {pipeline_mode = #tpu.pipeline_mode<synchronous>, transform_indices = @transform_13, window_bounds = array<i64: 16, 1>}, {pipeline_mode = #tpu.pipeline_mode<synchronous>, transform_indices = @transform_14, window_bounds = array<i64: 256, 1024>}, {pipeline_mode = #tpu.pipeline_mode<synchronous>, transform_indices = @transform_15, window_bounds = array<i64: 8, 144>}, {pipeline_mode = #tpu.pipeline_mode<synchronous>, transform_indices = @transform_16, window_bounds = array<i64: 8, 1>}, {pipeline_mode = #tpu.pipeline_mode<synchronous>, transform_indices = @transform_17, window_bounds = array<i64: 8, 1>}, {pipeline_mode = #tpu.pipeline_mode<synchronous>, transform_indices = @transform_18, window_bounds = array<i64: 8, 1>}, {pipeline_mode = #tpu.pipeline_mode<synchronous>, transform_indices = @transform_19, window_bounds = array<i64: 8, 72>}, {pipeline_mode = #tpu.pipeline_mode<synchronous>, transform_indices = @transform_20, window_bounds = array<i64: 8, 1>}, {pipeline_mode = #tpu.pipeline_mode<synchronous>, transform_indices = @transform_21, window_bounds = array<i64: 8, 1>}, {pipeline_mode = #tpu.pipeline_mode<synchronous>, transform_indices = @transform_22, window_bounds = array<i64: 8, 1>}, {pipeline_mode = #tpu.pipeline_mode<synchronous>, transform_indices = @transform_23, window_bounds = array<i64: 8, 72>}, {pipeline_mode = #tpu.pipeline_mode<synchronous>, transform_indices = @transform_24, window_bounds = array<i64: 8, 1>}, {pipeline_mode = #tpu.pipeline_mode<synchronous>, transform_indices = @transform_25, window_bounds = array<i64: 1, 72>}, {pipeline_mode = #tpu.pipeline_mode<synchronous>, transform_indices = @transform_26, window_bounds = array<i64: 1, 1>}, {transform_indices = @transform_27, window_bounds = array<i64: 1, 1, 1024>}]} {
    %c0 = arith.constant 0 : index
    %c0_0 = arith.constant 0 : index
    %c0_1 = arith.constant 0 : index
    %0 = vector.load %arg1[%c0, %c0_0, %c0_1] : memref<1x32x64xf32, #tpu.memory_space<vmem>>, vector<1x32x64xf32>
    %1 = vector.shape_cast %0 : vector<1x32x64xf32> to vector<32x64xf32>
    %2 = tpu.iota {dimensions = array<i32: 1>} : vector<1x256xi32>
    %c15_i32 = arith.constant 15 : i32
    %3 = vector.broadcast %c15_i32 : i32 to vector<1x256xi32>
    %4 = arith.andi %2, %3 : vector<1x256xi32>
    %c16_i32 = arith.constant 16 : i32
    %5 = vector.broadcast %c16_i32 : i32 to vector<1x256xi32>
    %6 = arith.cmpi sge, %2, %5 : vector<1x256xi32>
    %c240_i32 = arith.constant 240 : i32
    %7 = vector.broadcast %c240_i32 : i32 to vector<1x256xi32>
    %8 = arith.cmpi slt, %2, %7 : vector<1x256xi32>
    %c1_i32 = arith.constant 1 : i32
    %9 = vector.broadcast %c1_i32 : i32 to vector<1x256xi32>
    %10 = arith.cmpi sge, %4, %9 : vector<1x256xi32>
    %c15_i32_2 = arith.constant 15 : i32
    %11 = vector.broadcast %c15_i32_2 : i32 to vector<1x256xi32>
    %12 = arith.cmpi slt, %4, %11 : vector<1x256xi32>
    %13 = arith.andi %6, %10 : vector<1x256xi1>
    %14 = arith.andi %6, %12 : vector<1x256xi1>
    %15 = arith.andi %8, %10 : vector<1x256xi1>
    %16 = arith.andi %8, %12 : vector<1x256xi1>
    %17 = arith.truncf %1 : vector<32x64xf32> to vector<32x64xbf16>
    %c0_3 = arith.constant 0 : index
    %c0_4 = arith.constant 0 : index
    %18 = vector.load %arg4[%c0_3, %c0_4] : memref<64x256xbf16, #tpu.memory_space<vmem>>, vector<64x256xbf16>
    %cst = arith.constant dense<0.000000e+00> : vector<32x256xf32>
    %19 = tpu.matmul %17, %18, %cst {dimension_numbers = #tpu.dot_dimension_numbers<[1], [0], [0], [1], [0, 0, 1, 1], [], []>} : vector<32x64xbf16>, vector<64x256xbf16>, vector<32x256xf32> -> vector<32x256xf32>
    %c17_i32 = arith.constant 17 : i32
    %20 = tpu.dynamic_rotate %19 by %c17_i32 dim 1 : vector<32x256xf32>, i32 -> vector<32x256xf32>
    %cst_5 = arith.constant 0.000000e+00 : f32
    %21 = vector.shape_cast %13 : vector<1x256xi1> to vector<1x256xi1>
    %22 = vector.broadcast %21 : vector<1x256xi1> to vector<32x256xi1>
    %23 = vector.broadcast %cst_5 : f32 to vector<32x256xf32>
    %24 = arith.select %22, %20, %23 : vector<32x256xi1>, vector<32x256xf32>
    %c16_i32_6 = arith.constant 16 : i32
    %25 = tpu.dynamic_rotate %19 by %c16_i32_6 dim 1 : vector<32x256xf32>, i32 -> vector<32x256xf32>
    %cst_7 = arith.constant 0.000000e+00 : f32
    %26 = vector.shape_cast %6 : vector<1x256xi1> to vector<1x256xi1>
    %27 = vector.broadcast %26 : vector<1x256xi1> to vector<32x256xi1>
    %28 = vector.broadcast %cst_7 : f32 to vector<32x256xf32>
    %29 = arith.select %27, %25, %28 : vector<32x256xi1>, vector<32x256xf32>
    %c15_i32_8 = arith.constant 15 : i32
    %30 = tpu.dynamic_rotate %19 by %c15_i32_8 dim 1 : vector<32x256xf32>, i32 -> vector<32x256xf32>
    %cst_9 = arith.constant 0.000000e+00 : f32
    %31 = vector.shape_cast %14 : vector<1x256xi1> to vector<1x256xi1>
    %32 = vector.broadcast %31 : vector<1x256xi1> to vector<32x256xi1>
    %33 = vector.broadcast %cst_9 : f32 to vector<32x256xf32>
    %34 = arith.select %32, %30, %33 : vector<32x256xi1>, vector<32x256xf32>
    %c1_i32_10 = arith.constant 1 : i32
    %35 = tpu.dynamic_rotate %19 by %c1_i32_10 dim 1 : vector<32x256xf32>, i32 -> vector<32x256xf32>
    %cst_11 = arith.constant 0.000000e+00 : f32
    %36 = vector.shape_cast %10 : vector<1x256xi1> to vector<1x256xi1>
    %37 = vector.broadcast %36 : vector<1x256xi1> to vector<32x256xi1>
    %38 = vector.broadcast %cst_11 : f32 to vector<32x256xf32>
    %39 = arith.select %37, %35, %38 : vector<32x256xi1>, vector<32x256xf32>
    %c255_i32 = arith.constant 255 : i32
    %40 = tpu.dynamic_rotate %19 by %c255_i32 dim 1 : vector<32x256xf32>, i32 -> vector<32x256xf32>
    %cst_12 = arith.constant 0.000000e+00 : f32
    %41 = vector.shape_cast %12 : vector<1x256xi1> to vector<1x256xi1>
    %42 = vector.broadcast %41 : vector<1x256xi1> to vector<32x256xi1>
    %43 = vector.broadcast %cst_12 : f32 to vector<32x256xf32>
    %44 = arith.select %42, %40, %43 : vector<32x256xi1>, vector<32x256xf32>
    %c241_i32 = arith.constant 241 : i32
    %45 = tpu.dynamic_rotate %19 by %c241_i32 dim 1 : vector<32x256xf32>, i32 -> vector<32x256xf32>
    %cst_13 = arith.constant 0.000000e+00 : f32
    %46 = vector.shape_cast %15 : vector<1x256xi1> to vector<1x256xi1>
    %47 = vector.broadcast %46 : vector<1x256xi1> to vector<32x256xi1>
    %48 = vector.broadcast %cst_13 : f32 to vector<32x256xf32>
    %49 = arith.select %47, %45, %48 : vector<32x256xi1>, vector<32x256xf32>
    %c240_i32_14 = arith.constant 240 : i32
    %50 = tpu.dynamic_rotate %19 by %c240_i32_14 dim 1 : vector<32x256xf32>, i32 -> vector<32x256xf32>
    %cst_15 = arith.constant 0.000000e+00 : f32
    %51 = vector.shape_cast %8 : vector<1x256xi1> to vector<1x256xi1>
    %52 = vector.broadcast %51 : vector<1x256xi1> to vector<32x256xi1>
    %53 = vector.broadcast %cst_15 : f32 to vector<32x256xf32>
    %54 = arith.select %52, %50, %53 : vector<32x256xi1>, vector<32x256xf32>
    %c239_i32 = arith.constant 239 : i32
    %55 = tpu.dynamic_rotate %19 by %c239_i32 dim 1 : vector<32x256xf32>, i32 -> vector<32x256xf32>
    %cst_16 = arith.constant 0.000000e+00 : f32
    %56 = vector.shape_cast %16 : vector<1x256xi1> to vector<1x256xi1>
    %57 = vector.broadcast %56 : vector<1x256xi1> to vector<32x256xi1>
    %58 = vector.broadcast %cst_16 : f32 to vector<32x256xf32>
    %59 = arith.select %57, %55, %58 : vector<32x256xi1>, vector<32x256xf32>
    %60 = tpu.concatenate %24, %29, %34, %39, %19, %44, %49, %54, %59 in 0 : vector<32x256xf32>, vector<32x256xf32>, vector<32x256xf32>, vector<32x256xf32>, vector<32x256xf32>, vector<32x256xf32>, vector<32x256xf32>, vector<32x256xf32>, vector<32x256xf32> -> vector<288x256xf32>
    %61 = arith.truncf %60 : vector<288x256xf32> to vector<288x256xbf16>
    %c0_17 = arith.constant 0 : index
    %c0_18 = arith.constant 0 : index
    %62 = vector.load %arg5[%c0_17, %c0_18] : memref<16x288xbf16, #tpu.memory_space<vmem>>, vector<16x288xbf16>
    %cst_19 = arith.constant dense<0.000000e+00> : vector<16x256xf32>
    %63 = tpu.matmul %62, %61, %cst_19 {dimension_numbers = #tpu.dot_dimension_numbers<[1], [0], [0], [1], [0, 0, 1, 1], [], []>} : vector<16x288xbf16>, vector<288x256xbf16>, vector<16x256xf32> -> vector<16x256xf32>
    %c0_20 = arith.constant 0 : index
    %c0_21 = arith.constant 0 : index
    %64 = vector.load %arg6[%c0_20, %c0_21] : memref<16x1xf32, #tpu.memory_space<vmem>>, vector<16x1xf32>
    %65 = vector.broadcast %64 : vector<16x1xf32> to vector<16x256xf32>
    %66 = arith.addf %63, %65 : vector<16x256xf32>
    %c0_22 = arith.constant 0 : index
    %c0_23 = arith.constant 0 : index
    %c0_24 = arith.constant 0 : index
    %67 = vector.load %arg2[%c0_22, %c0_23, %c0_24] : memref<1x16x256xf32, #tpu.memory_space<vmem>>, vector<1x16x256xf32>
    %68 = vector.shape_cast %67 : vector<1x16x256xf32> to vector<16x256xf32>
    %69 = arith.addf %66, %68 : vector<16x256xf32>
    %70 = tpu.iota {dimensions = array<i32: 0>} : vector<16x1xi32>
    %c0_i32 = arith.constant 0 : i32
    %71 = vector.broadcast %c0_i32 : i32 to vector<16x1xi32>
    %72 = arith.cmpi sge, %70, %71 : vector<16x1xi32>
    %c4_i32 = arith.constant 4 : i32
    %73 = vector.broadcast %c4_i32 : i32 to vector<16x1xi32>
    %74 = arith.cmpi slt, %70, %73 : vector<16x1xi32>
    %75 = arith.andi %72, %74 : vector<16x1xi1>
    %c4_i32_25 = arith.constant 4 : i32
    %76 = vector.broadcast %c4_i32_25 : i32 to vector<16x1xi32>
    %77 = arith.cmpi sge, %70, %76 : vector<16x1xi32>
    %c8_i32 = arith.constant 8 : i32
    %78 = vector.broadcast %c8_i32 : i32 to vector<16x1xi32>
    %79 = arith.cmpi slt, %70, %78 : vector<16x1xi32>
    %80 = arith.andi %77, %79 : vector<16x1xi1>
    %c8_i32_26 = arith.constant 8 : i32
    %81 = vector.broadcast %c8_i32_26 : i32 to vector<16x1xi32>
    %82 = arith.cmpi sge, %70, %81 : vector<16x1xi32>
    %c12_i32 = arith.constant 12 : i32
    %83 = vector.broadcast %c12_i32 : i32 to vector<16x1xi32>
    %84 = arith.cmpi slt, %70, %83 : vector<16x1xi32>
    %85 = arith.andi %82, %84 : vector<16x1xi1>
    %c12_i32_27 = arith.constant 12 : i32
    %86 = vector.broadcast %c12_i32_27 : i32 to vector<16x1xi32>
    %87 = arith.cmpi sge, %70, %86 : vector<16x1xi32>
    %c16_i32_28 = arith.constant 16 : i32
    %88 = vector.broadcast %c16_i32_28 : i32 to vector<16x1xi32>
    %89 = arith.cmpi slt, %70, %88 : vector<16x1xi32>
    %90 = arith.andi %87, %89 : vector<16x1xi1>
    %cst_29 = arith.constant dense<0.000000e+00> : vector<16xf32>
    %91 = vector.multi_reduction <add>, %69, %cst_29 [1] : vector<16x256xf32> to vector<16xf32>
    %92 = vector.shape_cast %91 : vector<16xf32> to vector<16x1xf32>
    %cst_30 = arith.constant 0.000000e+00 : f32
    %93 = vector.broadcast %cst_30 : f32 to vector<16x1xf32>
    %cst_31 = arith.constant 0.000000e+00 : f32
    %94 = vector.broadcast %cst_31 : f32 to vector<16x1xf32>
    %95 = arith.select %75, %92, %94 : vector<16x1xi1>, vector<16x1xf32>
    %96 = vector.shape_cast %95 : vector<16x1xf32> to vector<1x16x1xf32>
    %cst_32 = arith.constant dense<0.000000e+00> : vector<1xf32>
    %97 = vector.multi_reduction <add>, %96, %cst_32 [1, 2] : vector<1x16x1xf32> to vector<1xf32>
    %98 = vector.shape_cast %97 : vector<1xf32> to vector<1x1x1xf32>
    %99 = vector.extract %98[0, 0, 0] : f32 from vector<1x1x1xf32>
    %cst_33 = arith.constant 9.765625E-4 : f32
    %100 = arith.mulf %99, %cst_33 : f32
    %cst_34 = arith.constant 0.000000e+00 : f32
    %101 = vector.broadcast %100 : f32 to vector<16x1xf32>
    %102 = vector.broadcast %cst_34 : f32 to vector<16x1xf32>
    %103 = arith.select %75, %101, %102 : vector<16x1xi1>, vector<16x1xf32>
    %104 = arith.addf %93, %103 : vector<16x1xf32>
    %cst_35 = arith.constant 0.000000e+00 : f32
    %105 = vector.broadcast %cst_35 : f32 to vector<16x1xf32>
    %106 = arith.select %80, %92, %105 : vector<16x1xi1>, vector<16x1xf32>
    %107 = vector.shape_cast %106 : vector<16x1xf32> to vector<1x16x1xf32>
    %cst_36 = arith.constant dense<0.000000e+00> : vector<1xf32>
    %108 = vector.multi_reduction <add>, %107, %cst_36 [1, 2] : vector<1x16x1xf32> to vector<1xf32>
    %109 = vector.shape_cast %108 : vector<1xf32> to vector<1x1x1xf32>
    %110 = vector.extract %109[0, 0, 0] : f32 from vector<1x1x1xf32>
    %cst_37 = arith.constant 9.765625E-4 : f32
    %111 = arith.mulf %110, %cst_37 : f32
    %cst_38 = arith.constant 0.000000e+00 : f32
    %112 = vector.broadcast %111 : f32 to vector<16x1xf32>
    %113 = vector.broadcast %cst_38 : f32 to vector<16x1xf32>
    %114 = arith.select %80, %112, %113 : vector<16x1xi1>, vector<16x1xf32>
    %115 = arith.addf %104, %114 : vector<16x1xf32>
    %cst_39 = arith.constant 0.000000e+00 : f32
    %116 = vector.broadcast %cst_39 : f32 to vector<16x1xf32>
    %117 = arith.select %85, %92, %116 : vector<16x1xi1>, vector<16x1xf32>
    %118 = vector.shape_cast %117 : vector<16x1xf32> to vector<1x16x1xf32>
    %cst_40 = arith.constant dense<0.000000e+00> : vector<1xf32>
    %119 = vector.multi_reduction <add>, %118, %cst_40 [1, 2] : vector<1x16x1xf32> to vector<1xf32>
    %120 = vector.shape_cast %119 : vector<1xf32> to vector<1x1x1xf32>
    %121 = vector.extract %120[0, 0, 0] : f32 from vector<1x1x1xf32>
    %cst_41 = arith.constant 9.765625E-4 : f32
    %122 = arith.mulf %121, %cst_41 : f32
    %cst_42 = arith.constant 0.000000e+00 : f32
    %123 = vector.broadcast %122 : f32 to vector<16x1xf32>
    %124 = vector.broadcast %cst_42 : f32 to vector<16x1xf32>
    %125 = arith.select %85, %123, %124 : vector<16x1xi1>, vector<16x1xf32>
    %126 = arith.addf %115, %125 : vector<16x1xf32>
    %cst_43 = arith.constant 0.000000e+00 : f32
    %127 = vector.broadcast %cst_43 : f32 to vector<16x1xf32>
    %128 = arith.select %90, %92, %127 : vector<16x1xi1>, vector<16x1xf32>
    %129 = vector.shape_cast %128 : vector<16x1xf32> to vector<1x16x1xf32>
    %cst_44 = arith.constant dense<0.000000e+00> : vector<1xf32>
    %130 = vector.multi_reduction <add>, %129, %cst_44 [1, 2] : vector<1x16x1xf32> to vector<1xf32>
    %131 = vector.shape_cast %130 : vector<1xf32> to vector<1x1x1xf32>
    %132 = vector.extract %131[0, 0, 0] : f32 from vector<1x1x1xf32>
    %cst_45 = arith.constant 9.765625E-4 : f32
    %133 = arith.mulf %132, %cst_45 : f32
    %cst_46 = arith.constant 0.000000e+00 : f32
    %134 = vector.broadcast %133 : f32 to vector<16x1xf32>
    %135 = vector.broadcast %cst_46 : f32 to vector<16x1xf32>
    %136 = arith.select %90, %134, %135 : vector<16x1xi1>, vector<16x1xf32>
    %137 = arith.addf %126, %136 : vector<16x1xf32>
    %138 = vector.broadcast %137 : vector<16x1xf32> to vector<16x256xf32>
    %139 = arith.subf %69, %138 : vector<16x256xf32>
    %140 = arith.mulf %139, %139 : vector<16x256xf32>
    %cst_47 = arith.constant dense<0.000000e+00> : vector<16xf32>
    %141 = vector.multi_reduction <add>, %140, %cst_47 [1] : vector<16x256xf32> to vector<16xf32>
    %142 = vector.shape_cast %141 : vector<16xf32> to vector<16x1xf32>
    %cst_48 = arith.constant 0.000000e+00 : f32
    %143 = vector.broadcast %cst_48 : f32 to vector<16x1xf32>
    %cst_49 = arith.constant 0.000000e+00 : f32
    %144 = vector.broadcast %cst_49 : f32 to vector<16x1xf32>
    %145 = arith.select %75, %142, %144 : vector<16x1xi1>, vector<16x1xf32>
    %146 = vector.shape_cast %145 : vector<16x1xf32> to vector<1x16x1xf32>
    %cst_50 = arith.constant dense<0.000000e+00> : vector<1xf32>
    %147 = vector.multi_reduction <add>, %146, %cst_50 [1, 2] : vector<1x16x1xf32> to vector<1xf32>
    %148 = vector.shape_cast %147 : vector<1xf32> to vector<1x1x1xf32>
    %149 = vector.extract %148[0, 0, 0] : f32 from vector<1x1x1xf32>
    %cst_51 = arith.constant 9.765625E-4 : f32
    %150 = arith.mulf %149, %cst_51 : f32
    %cst_52 = arith.constant 0.000000e+00 : f32
    %151 = vector.broadcast %150 : f32 to vector<16x1xf32>
    %152 = vector.broadcast %cst_52 : f32 to vector<16x1xf32>
    %153 = arith.select %75, %151, %152 : vector<16x1xi1>, vector<16x1xf32>
    %154 = arith.addf %143, %153 : vector<16x1xf32>
    %cst_53 = arith.constant 0.000000e+00 : f32
    %155 = vector.broadcast %cst_53 : f32 to vector<16x1xf32>
    %156 = arith.select %80, %142, %155 : vector<16x1xi1>, vector<16x1xf32>
    %157 = vector.shape_cast %156 : vector<16x1xf32> to vector<1x16x1xf32>
    %cst_54 = arith.constant dense<0.000000e+00> : vector<1xf32>
    %158 = vector.multi_reduction <add>, %157, %cst_54 [1, 2] : vector<1x16x1xf32> to vector<1xf32>
    %159 = vector.shape_cast %158 : vector<1xf32> to vector<1x1x1xf32>
    %160 = vector.extract %159[0, 0, 0] : f32 from vector<1x1x1xf32>
    %cst_55 = arith.constant 9.765625E-4 : f32
    %161 = arith.mulf %160, %cst_55 : f32
    %cst_56 = arith.constant 0.000000e+00 : f32
    %162 = vector.broadcast %161 : f32 to vector<16x1xf32>
    %163 = vector.broadcast %cst_56 : f32 to vector<16x1xf32>
    %164 = arith.select %80, %162, %163 : vector<16x1xi1>, vector<16x1xf32>
    %165 = arith.addf %154, %164 : vector<16x1xf32>
    %cst_57 = arith.constant 0.000000e+00 : f32
    %166 = vector.broadcast %cst_57 : f32 to vector<16x1xf32>
    %167 = arith.select %85, %142, %166 : vector<16x1xi1>, vector<16x1xf32>
    %168 = vector.shape_cast %167 : vector<16x1xf32> to vector<1x16x1xf32>
    %cst_58 = arith.constant dense<0.000000e+00> : vector<1xf32>
    %169 = vector.multi_reduction <add>, %168, %cst_58 [1, 2] : vector<1x16x1xf32> to vector<1xf32>
    %170 = vector.shape_cast %169 : vector<1xf32> to vector<1x1x1xf32>
    %171 = vector.extract %170[0, 0, 0] : f32 from vector<1x1x1xf32>
    %cst_59 = arith.constant 9.765625E-4 : f32
    %172 = arith.mulf %171, %cst_59 : f32
    %cst_60 = arith.constant 0.000000e+00 : f32
    %173 = vector.broadcast %172 : f32 to vector<16x1xf32>
    %174 = vector.broadcast %cst_60 : f32 to vector<16x1xf32>
    %175 = arith.select %85, %173, %174 : vector<16x1xi1>, vector<16x1xf32>
    %176 = arith.addf %165, %175 : vector<16x1xf32>
    %cst_61 = arith.constant 0.000000e+00 : f32
    %177 = vector.broadcast %cst_61 : f32 to vector<16x1xf32>
    %178 = arith.select %90, %142, %177 : vector<16x1xi1>, vector<16x1xf32>
    %179 = vector.shape_cast %178 : vector<16x1xf32> to vector<1x16x1xf32>
    %cst_62 = arith.constant dense<0.000000e+00> : vector<1xf32>
    %180 = vector.multi_reduction <add>, %179, %cst_62 [1, 2] : vector<1x16x1xf32> to vector<1xf32>
    %181 = vector.shape_cast %180 : vector<1xf32> to vector<1x1x1xf32>
    %182 = vector.extract %181[0, 0, 0] : f32 from vector<1x1x1xf32>
    %cst_63 = arith.constant 9.765625E-4 : f32
    %183 = arith.mulf %182, %cst_63 : f32
    %cst_64 = arith.constant 0.000000e+00 : f32
    %184 = vector.broadcast %183 : f32 to vector<16x1xf32>
    %185 = vector.broadcast %cst_64 : f32 to vector<16x1xf32>
    %186 = arith.select %90, %184, %185 : vector<16x1xi1>, vector<16x1xf32>
    %187 = arith.addf %176, %186 : vector<16x1xf32>
    %cst_65 = arith.constant 9.99999974E-6 : f32
    %188 = vector.broadcast %cst_65 : f32 to vector<16x1xf32>
    %189 = arith.addf %187, %188 : vector<16x1xf32>
    %190 = math.rsqrt %189 : vector<16x1xf32>
    %191 = vector.broadcast %190 : vector<16x1xf32> to vector<16x256xf32>
    %192 = arith.mulf %139, %191 : vector<16x256xf32>
    %c0_66 = arith.constant 0 : index
    %c0_67 = arith.constant 0 : index
    %193 = vector.load %arg7[%c0_66, %c0_67] : memref<16x1xf32, #tpu.memory_space<vmem>>, vector<16x1xf32>
    %194 = vector.broadcast %193 : vector<16x1xf32> to vector<16x256xf32>
    %195 = arith.mulf %192, %194 : vector<16x256xf32>
    %c0_68 = arith.constant 0 : index
    %c0_69 = arith.constant 0 : index
    %196 = vector.load %arg8[%c0_68, %c0_69] : memref<16x1xf32, #tpu.memory_space<vmem>>, vector<16x1xf32>
    %197 = vector.broadcast %196 : vector<16x1xf32> to vector<16x256xf32>
    %198 = arith.addf %195, %197 : vector<16x256xf32>
    %199 = arith.negf %198 : vector<16x256xf32>
    %200 = math.exp %199 : vector<16x256xf32>
    %cst_70 = arith.constant 1.000000e+00 : f32
    %201 = vector.broadcast %cst_70 : f32 to vector<16x256xf32>
    %202 = arith.addf %201, %200 : vector<16x256xf32>
    %203 = arith.divf %201, %202 : vector<16x256xf32>
    %204 = arith.mulf %198, %203 : vector<16x256xf32>
    %c17_i32_71 = arith.constant 17 : i32
    %205 = tpu.dynamic_rotate %204 by %c17_i32_71 dim 1 : vector<16x256xf32>, i32 -> vector<16x256xf32>
    %cst_72 = arith.constant 0.000000e+00 : f32
    %206 = vector.shape_cast %13 : vector<1x256xi1> to vector<1x256xi1>
    %207 = vector.broadcast %206 : vector<1x256xi1> to vector<16x256xi1>
    %208 = vector.broadcast %cst_72 : f32 to vector<16x256xf32>
    %209 = arith.select %207, %205, %208 : vector<16x256xi1>, vector<16x256xf32>
    %c16_i32_73 = arith.constant 16 : i32
    %210 = tpu.dynamic_rotate %204 by %c16_i32_73 dim 1 : vector<16x256xf32>, i32 -> vector<16x256xf32>
    %cst_74 = arith.constant 0.000000e+00 : f32
    %211 = vector.shape_cast %6 : vector<1x256xi1> to vector<1x256xi1>
    %212 = vector.broadcast %211 : vector<1x256xi1> to vector<16x256xi1>
    %213 = vector.broadcast %cst_74 : f32 to vector<16x256xf32>
    %214 = arith.select %212, %210, %213 : vector<16x256xi1>, vector<16x256xf32>
    %c15_i32_75 = arith.constant 15 : i32
    %215 = tpu.dynamic_rotate %204 by %c15_i32_75 dim 1 : vector<16x256xf32>, i32 -> vector<16x256xf32>
    %cst_76 = arith.constant 0.000000e+00 : f32
    %216 = vector.shape_cast %14 : vector<1x256xi1> to vector<1x256xi1>
    %217 = vector.broadcast %216 : vector<1x256xi1> to vector<16x256xi1>
    %218 = vector.broadcast %cst_76 : f32 to vector<16x256xf32>
    %219 = arith.select %217, %215, %218 : vector<16x256xi1>, vector<16x256xf32>
    %c1_i32_77 = arith.constant 1 : i32
    %220 = tpu.dynamic_rotate %204 by %c1_i32_77 dim 1 : vector<16x256xf32>, i32 -> vector<16x256xf32>
    %cst_78 = arith.constant 0.000000e+00 : f32
    %221 = vector.shape_cast %10 : vector<1x256xi1> to vector<1x256xi1>
    %222 = vector.broadcast %221 : vector<1x256xi1> to vector<16x256xi1>
    %223 = vector.broadcast %cst_78 : f32 to vector<16x256xf32>
    %224 = arith.select %222, %220, %223 : vector<16x256xi1>, vector<16x256xf32>
    %c255_i32_79 = arith.constant 255 : i32
    %225 = tpu.dynamic_rotate %204 by %c255_i32_79 dim 1 : vector<16x256xf32>, i32 -> vector<16x256xf32>
    %cst_80 = arith.constant 0.000000e+00 : f32
    %226 = vector.shape_cast %12 : vector<1x256xi1> to vector<1x256xi1>
    %227 = vector.broadcast %226 : vector<1x256xi1> to vector<16x256xi1>
    %228 = vector.broadcast %cst_80 : f32 to vector<16x256xf32>
    %229 = arith.select %227, %225, %228 : vector<16x256xi1>, vector<16x256xf32>
    %c241_i32_81 = arith.constant 241 : i32
    %230 = tpu.dynamic_rotate %204 by %c241_i32_81 dim 1 : vector<16x256xf32>, i32 -> vector<16x256xf32>
    %cst_82 = arith.constant 0.000000e+00 : f32
    %231 = vector.shape_cast %15 : vector<1x256xi1> to vector<1x256xi1>
    %232 = vector.broadcast %231 : vector<1x256xi1> to vector<16x256xi1>
    %233 = vector.broadcast %cst_82 : f32 to vector<16x256xf32>
    %234 = arith.select %232, %230, %233 : vector<16x256xi1>, vector<16x256xf32>
    %c240_i32_83 = arith.constant 240 : i32
    %235 = tpu.dynamic_rotate %204 by %c240_i32_83 dim 1 : vector<16x256xf32>, i32 -> vector<16x256xf32>
    %cst_84 = arith.constant 0.000000e+00 : f32
    %236 = vector.shape_cast %8 : vector<1x256xi1> to vector<1x256xi1>
    %237 = vector.broadcast %236 : vector<1x256xi1> to vector<16x256xi1>
    %238 = vector.broadcast %cst_84 : f32 to vector<16x256xf32>
    %239 = arith.select %237, %235, %238 : vector<16x256xi1>, vector<16x256xf32>
    %c239_i32_85 = arith.constant 239 : i32
    %240 = tpu.dynamic_rotate %204 by %c239_i32_85 dim 1 : vector<16x256xf32>, i32 -> vector<16x256xf32>
    %cst_86 = arith.constant 0.000000e+00 : f32
    %241 = vector.shape_cast %16 : vector<1x256xi1> to vector<1x256xi1>
    %242 = vector.broadcast %241 : vector<1x256xi1> to vector<16x256xi1>
    %243 = vector.broadcast %cst_86 : f32 to vector<16x256xf32>
    %244 = arith.select %242, %240, %243 : vector<16x256xi1>, vector<16x256xf32>
    %245 = tpu.concatenate %209, %214, %219, %224, %204, %229, %234, %239, %244 in 0 : vector<16x256xf32>, vector<16x256xf32>, vector<16x256xf32>, vector<16x256xf32>, vector<16x256xf32>, vector<16x256xf32>, vector<16x256xf32>, vector<16x256xf32>, vector<16x256xf32> -> vector<144x256xf32>
    %246 = arith.truncf %245 : vector<144x256xf32> to vector<144x256xbf16>
    %c0_87 = arith.constant 0 : index
    %c0_88 = arith.constant 0 : index
    %247 = vector.load %arg9[%c0_87, %c0_88] : memref<16x144xbf16, #tpu.memory_space<vmem>>, vector<16x144xbf16>
    %cst_89 = arith.constant dense<0.000000e+00> : vector<16x256xf32>
    %248 = tpu.matmul %247, %246, %cst_89 {dimension_numbers = #tpu.dot_dimension_numbers<[1], [0], [0], [1], [0, 0, 1, 1], [], []>} : vector<16x144xbf16>, vector<144x256xbf16>, vector<16x256xf32> -> vector<16x256xf32>
    %c0_90 = arith.constant 0 : index
    %c0_91 = arith.constant 0 : index
    %249 = vector.load %arg10[%c0_90, %c0_91] : memref<16x1xf32, #tpu.memory_space<vmem>>, vector<16x1xf32>
    %250 = vector.broadcast %249 : vector<16x1xf32> to vector<16x256xf32>
    %251 = arith.addf %248, %250 : vector<16x256xf32>
    %cst_92 = arith.constant dense<0.000000e+00> : vector<16xf32>
    %252 = vector.multi_reduction <add>, %251, %cst_92 [1] : vector<16x256xf32> to vector<16xf32>
    %253 = vector.shape_cast %252 : vector<16xf32> to vector<16x1xf32>
    %cst_93 = arith.constant 0.000000e+00 : f32
    %254 = vector.broadcast %cst_93 : f32 to vector<16x1xf32>
    %cst_94 = arith.constant 0.000000e+00 : f32
    %255 = vector.broadcast %cst_94 : f32 to vector<16x1xf32>
    %256 = arith.select %75, %253, %255 : vector<16x1xi1>, vector<16x1xf32>
    %257 = vector.shape_cast %256 : vector<16x1xf32> to vector<1x16x1xf32>
    %cst_95 = arith.constant dense<0.000000e+00> : vector<1xf32>
    %258 = vector.multi_reduction <add>, %257, %cst_95 [1, 2] : vector<1x16x1xf32> to vector<1xf32>
    %259 = vector.shape_cast %258 : vector<1xf32> to vector<1x1x1xf32>
    %260 = vector.extract %259[0, 0, 0] : f32 from vector<1x1x1xf32>
    %cst_96 = arith.constant 9.765625E-4 : f32
    %261 = arith.mulf %260, %cst_96 : f32
    %cst_97 = arith.constant 0.000000e+00 : f32
    %262 = vector.broadcast %261 : f32 to vector<16x1xf32>
    %263 = vector.broadcast %cst_97 : f32 to vector<16x1xf32>
    %264 = arith.select %75, %262, %263 : vector<16x1xi1>, vector<16x1xf32>
    %265 = arith.addf %254, %264 : vector<16x1xf32>
    %cst_98 = arith.constant 0.000000e+00 : f32
    %266 = vector.broadcast %cst_98 : f32 to vector<16x1xf32>
    %267 = arith.select %80, %253, %266 : vector<16x1xi1>, vector<16x1xf32>
    %268 = vector.shape_cast %267 : vector<16x1xf32> to vector<1x16x1xf32>
    %cst_99 = arith.constant dense<0.000000e+00> : vector<1xf32>
    %269 = vector.multi_reduction <add>, %268, %cst_99 [1, 2] : vector<1x16x1xf32> to vector<1xf32>
    %270 = vector.shape_cast %269 : vector<1xf32> to vector<1x1x1xf32>
    %271 = vector.extract %270[0, 0, 0] : f32 from vector<1x1x1xf32>
    %cst_100 = arith.constant 9.765625E-4 : f32
    %272 = arith.mulf %271, %cst_100 : f32
    %cst_101 = arith.constant 0.000000e+00 : f32
    %273 = vector.broadcast %272 : f32 to vector<16x1xf32>
    %274 = vector.broadcast %cst_101 : f32 to vector<16x1xf32>
    %275 = arith.select %80, %273, %274 : vector<16x1xi1>, vector<16x1xf32>
    %276 = arith.addf %265, %275 : vector<16x1xf32>
    %cst_102 = arith.constant 0.000000e+00 : f32
    %277 = vector.broadcast %cst_102 : f32 to vector<16x1xf32>
    %278 = arith.select %85, %253, %277 : vector<16x1xi1>, vector<16x1xf32>
    %279 = vector.shape_cast %278 : vector<16x1xf32> to vector<1x16x1xf32>
    %cst_103 = arith.constant dense<0.000000e+00> : vector<1xf32>
    %280 = vector.multi_reduction <add>, %279, %cst_103 [1, 2] : vector<1x16x1xf32> to vector<1xf32>
    %281 = vector.shape_cast %280 : vector<1xf32> to vector<1x1x1xf32>
    %282 = vector.extract %281[0, 0, 0] : f32 from vector<1x1x1xf32>
    %cst_104 = arith.constant 9.765625E-4 : f32
    %283 = arith.mulf %282, %cst_104 : f32
    %cst_105 = arith.constant 0.000000e+00 : f32
    %284 = vector.broadcast %283 : f32 to vector<16x1xf32>
    %285 = vector.broadcast %cst_105 : f32 to vector<16x1xf32>
    %286 = arith.select %85, %284, %285 : vector<16x1xi1>, vector<16x1xf32>
    %287 = arith.addf %276, %286 : vector<16x1xf32>
    %cst_106 = arith.constant 0.000000e+00 : f32
    %288 = vector.broadcast %cst_106 : f32 to vector<16x1xf32>
    %289 = arith.select %90, %253, %288 : vector<16x1xi1>, vector<16x1xf32>
    %290 = vector.shape_cast %289 : vector<16x1xf32> to vector<1x16x1xf32>
    %cst_107 = arith.constant dense<0.000000e+00> : vector<1xf32>
    %291 = vector.multi_reduction <add>, %290, %cst_107 [1, 2] : vector<1x16x1xf32> to vector<1xf32>
    %292 = vector.shape_cast %291 : vector<1xf32> to vector<1x1x1xf32>
    %293 = vector.extract %292[0, 0, 0] : f32 from vector<1x1x1xf32>
    %cst_108 = arith.constant 9.765625E-4 : f32
    %294 = arith.mulf %293, %cst_108 : f32
    %cst_109 = arith.constant 0.000000e+00 : f32
    %295 = vector.broadcast %294 : f32 to vector<16x1xf32>
    %296 = vector.broadcast %cst_109 : f32 to vector<16x1xf32>
    %297 = arith.select %90, %295, %296 : vector<16x1xi1>, vector<16x1xf32>
    %298 = arith.addf %287, %297 : vector<16x1xf32>
    %299 = vector.broadcast %298 : vector<16x1xf32> to vector<16x256xf32>
    %300 = arith.subf %251, %299 : vector<16x256xf32>
    %301 = arith.mulf %300, %300 : vector<16x256xf32>
    %cst_110 = arith.constant dense<0.000000e+00> : vector<16xf32>
    %302 = vector.multi_reduction <add>, %301, %cst_110 [1] : vector<16x256xf32> to vector<16xf32>
    %303 = vector.shape_cast %302 : vector<16xf32> to vector<16x1xf32>
    %cst_111 = arith.constant 0.000000e+00 : f32
    %304 = vector.broadcast %cst_111 : f32 to vector<16x1xf32>
    %cst_112 = arith.constant 0.000000e+00 : f32
    %305 = vector.broadcast %cst_112 : f32 to vector<16x1xf32>
    %306 = arith.select %75, %303, %305 : vector<16x1xi1>, vector<16x1xf32>
    %307 = vector.shape_cast %306 : vector<16x1xf32> to vector<1x16x1xf32>
    %cst_113 = arith.constant dense<0.000000e+00> : vector<1xf32>
    %308 = vector.multi_reduction <add>, %307, %cst_113 [1, 2] : vector<1x16x1xf32> to vector<1xf32>
    %309 = vector.shape_cast %308 : vector<1xf32> to vector<1x1x1xf32>
    %310 = vector.extract %309[0, 0, 0] : f32 from vector<1x1x1xf32>
    %cst_114 = arith.constant 9.765625E-4 : f32
    %311 = arith.mulf %310, %cst_114 : f32
    %cst_115 = arith.constant 0.000000e+00 : f32
    %312 = vector.broadcast %311 : f32 to vector<16x1xf32>
    %313 = vector.broadcast %cst_115 : f32 to vector<16x1xf32>
    %314 = arith.select %75, %312, %313 : vector<16x1xi1>, vector<16x1xf32>
    %315 = arith.addf %304, %314 : vector<16x1xf32>
    %cst_116 = arith.constant 0.000000e+00 : f32
    %316 = vector.broadcast %cst_116 : f32 to vector<16x1xf32>
    %317 = arith.select %80, %303, %316 : vector<16x1xi1>, vector<16x1xf32>
    %318 = vector.shape_cast %317 : vector<16x1xf32> to vector<1x16x1xf32>
    %cst_117 = arith.constant dense<0.000000e+00> : vector<1xf32>
    %319 = vector.multi_reduction <add>, %318, %cst_117 [1, 2] : vector<1x16x1xf32> to vector<1xf32>
    %320 = vector.shape_cast %319 : vector<1xf32> to vector<1x1x1xf32>
    %321 = vector.extract %320[0, 0, 0] : f32 from vector<1x1x1xf32>
    %cst_118 = arith.constant 9.765625E-4 : f32
    %322 = arith.mulf %321, %cst_118 : f32
    %cst_119 = arith.constant 0.000000e+00 : f32
    %323 = vector.broadcast %322 : f32 to vector<16x1xf32>
    %324 = vector.broadcast %cst_119 : f32 to vector<16x1xf32>
    %325 = arith.select %80, %323, %324 : vector<16x1xi1>, vector<16x1xf32>
    %326 = arith.addf %315, %325 : vector<16x1xf32>
    %cst_120 = arith.constant 0.000000e+00 : f32
    %327 = vector.broadcast %cst_120 : f32 to vector<16x1xf32>
    %328 = arith.select %85, %303, %327 : vector<16x1xi1>, vector<16x1xf32>
    %329 = vector.shape_cast %328 : vector<16x1xf32> to vector<1x16x1xf32>
    %cst_121 = arith.constant dense<0.000000e+00> : vector<1xf32>
    %330 = vector.multi_reduction <add>, %329, %cst_121 [1, 2] : vector<1x16x1xf32> to vector<1xf32>
    %331 = vector.shape_cast %330 : vector<1xf32> to vector<1x1x1xf32>
    %332 = vector.extract %331[0, 0, 0] : f32 from vector<1x1x1xf32>
    %cst_122 = arith.constant 9.765625E-4 : f32
    %333 = arith.mulf %332, %cst_122 : f32
    %cst_123 = arith.constant 0.000000e+00 : f32
    %334 = vector.broadcast %333 : f32 to vector<16x1xf32>
    %335 = vector.broadcast %cst_123 : f32 to vector<16x1xf32>
    %336 = arith.select %85, %334, %335 : vector<16x1xi1>, vector<16x1xf32>
    %337 = arith.addf %326, %336 : vector<16x1xf32>
    %cst_124 = arith.constant 0.000000e+00 : f32
    %338 = vector.broadcast %cst_124 : f32 to vector<16x1xf32>
    %339 = arith.select %90, %303, %338 : vector<16x1xi1>, vector<16x1xf32>
    %340 = vector.shape_cast %339 : vector<16x1xf32> to vector<1x16x1xf32>
    %cst_125 = arith.constant dense<0.000000e+00> : vector<1xf32>
    %341 = vector.multi_reduction <add>, %340, %cst_125 [1, 2] : vector<1x16x1xf32> to vector<1xf32>
    %342 = vector.shape_cast %341 : vector<1xf32> to vector<1x1x1xf32>
    %343 = vector.extract %342[0, 0, 0] : f32 from vector<1x1x1xf32>
    %cst_126 = arith.constant 9.765625E-4 : f32
    %344 = arith.mulf %343, %cst_126 : f32
    %cst_127 = arith.constant 0.000000e+00 : f32
    %345 = vector.broadcast %344 : f32 to vector<16x1xf32>
    %346 = vector.broadcast %cst_127 : f32 to vector<16x1xf32>
    %347 = arith.select %90, %345, %346 : vector<16x1xi1>, vector<16x1xf32>
    %348 = arith.addf %337, %347 : vector<16x1xf32>
    %cst_128 = arith.constant 9.99999974E-6 : f32
    %349 = vector.broadcast %cst_128 : f32 to vector<16x1xf32>
    %350 = arith.addf %348, %349 : vector<16x1xf32>
    %351 = math.rsqrt %350 : vector<16x1xf32>
    %352 = vector.broadcast %351 : vector<16x1xf32> to vector<16x256xf32>
    %353 = arith.mulf %300, %352 : vector<16x256xf32>
    %c0_129 = arith.constant 0 : index
    %c0_130 = arith.constant 0 : index
    %354 = vector.load %arg11[%c0_129, %c0_130] : memref<16x1xf32, #tpu.memory_space<vmem>>, vector<16x1xf32>
    %355 = vector.broadcast %354 : vector<16x1xf32> to vector<16x256xf32>
    %356 = arith.mulf %353, %355 : vector<16x256xf32>
    %c0_131 = arith.constant 0 : index
    %c0_132 = arith.constant 0 : index
    %357 = vector.load %arg12[%c0_131, %c0_132] : memref<16x1xf32, #tpu.memory_space<vmem>>, vector<16x1xf32>
    %358 = vector.broadcast %357 : vector<16x1xf32> to vector<16x256xf32>
    %359 = arith.addf %356, %358 : vector<16x256xf32>
    %360 = arith.negf %359 : vector<16x256xf32>
    %361 = math.exp %360 : vector<16x256xf32>
    %cst_133 = arith.constant 1.000000e+00 : f32
    %362 = vector.broadcast %cst_133 : f32 to vector<16x256xf32>
    %363 = arith.addf %362, %361 : vector<16x256xf32>
    %364 = arith.divf %362, %363 : vector<16x256xf32>
    %365 = arith.mulf %359, %364 : vector<16x256xf32>
    %c17_i32_134 = arith.constant 17 : i32
    %366 = tpu.dynamic_rotate %365 by %c17_i32_134 dim 1 : vector<16x256xf32>, i32 -> vector<16x256xf32>
    %cst_135 = arith.constant 0.000000e+00 : f32
    %367 = vector.shape_cast %13 : vector<1x256xi1> to vector<1x256xi1>
    %368 = vector.broadcast %367 : vector<1x256xi1> to vector<16x256xi1>
    %369 = vector.broadcast %cst_135 : f32 to vector<16x256xf32>
    %370 = arith.select %368, %366, %369 : vector<16x256xi1>, vector<16x256xf32>
    %c16_i32_136 = arith.constant 16 : i32
    %371 = tpu.dynamic_rotate %365 by %c16_i32_136 dim 1 : vector<16x256xf32>, i32 -> vector<16x256xf32>
    %cst_137 = arith.constant 0.000000e+00 : f32
    %372 = vector.shape_cast %6 : vector<1x256xi1> to vector<1x256xi1>
    %373 = vector.broadcast %372 : vector<1x256xi1> to vector<16x256xi1>
    %374 = vector.broadcast %cst_137 : f32 to vector<16x256xf32>
    %375 = arith.select %373, %371, %374 : vector<16x256xi1>, vector<16x256xf32>
    %c15_i32_138 = arith.constant 15 : i32
    %376 = tpu.dynamic_rotate %365 by %c15_i32_138 dim 1 : vector<16x256xf32>, i32 -> vector<16x256xf32>
    %cst_139 = arith.constant 0.000000e+00 : f32
    %377 = vector.shape_cast %14 : vector<1x256xi1> to vector<1x256xi1>
    %378 = vector.broadcast %377 : vector<1x256xi1> to vector<16x256xi1>
    %379 = vector.broadcast %cst_139 : f32 to vector<16x256xf32>
    %380 = arith.select %378, %376, %379 : vector<16x256xi1>, vector<16x256xf32>
    %c1_i32_140 = arith.constant 1 : i32
    %381 = tpu.dynamic_rotate %365 by %c1_i32_140 dim 1 : vector<16x256xf32>, i32 -> vector<16x256xf32>
    %cst_141 = arith.constant 0.000000e+00 : f32
    %382 = vector.shape_cast %10 : vector<1x256xi1> to vector<1x256xi1>
    %383 = vector.broadcast %382 : vector<1x256xi1> to vector<16x256xi1>
    %384 = vector.broadcast %cst_141 : f32 to vector<16x256xf32>
    %385 = arith.select %383, %381, %384 : vector<16x256xi1>, vector<16x256xf32>
    %c255_i32_142 = arith.constant 255 : i32
    %386 = tpu.dynamic_rotate %365 by %c255_i32_142 dim 1 : vector<16x256xf32>, i32 -> vector<16x256xf32>
    %cst_143 = arith.constant 0.000000e+00 : f32
    %387 = vector.shape_cast %12 : vector<1x256xi1> to vector<1x256xi1>
    %388 = vector.broadcast %387 : vector<1x256xi1> to vector<16x256xi1>
    %389 = vector.broadcast %cst_143 : f32 to vector<16x256xf32>
    %390 = arith.select %388, %386, %389 : vector<16x256xi1>, vector<16x256xf32>
    %c241_i32_144 = arith.constant 241 : i32
    %391 = tpu.dynamic_rotate %365 by %c241_i32_144 dim 1 : vector<16x256xf32>, i32 -> vector<16x256xf32>
    %cst_145 = arith.constant 0.000000e+00 : f32
    %392 = vector.shape_cast %15 : vector<1x256xi1> to vector<1x256xi1>
    %393 = vector.broadcast %392 : vector<1x256xi1> to vector<16x256xi1>
    %394 = vector.broadcast %cst_145 : f32 to vector<16x256xf32>
    %395 = arith.select %393, %391, %394 : vector<16x256xi1>, vector<16x256xf32>
    %c240_i32_146 = arith.constant 240 : i32
    %396 = tpu.dynamic_rotate %365 by %c240_i32_146 dim 1 : vector<16x256xf32>, i32 -> vector<16x256xf32>
    %cst_147 = arith.constant 0.000000e+00 : f32
    %397 = vector.shape_cast %8 : vector<1x256xi1> to vector<1x256xi1>
    %398 = vector.broadcast %397 : vector<1x256xi1> to vector<16x256xi1>
    %399 = vector.broadcast %cst_147 : f32 to vector<16x256xf32>
    %400 = arith.select %398, %396, %399 : vector<16x256xi1>, vector<16x256xf32>
    %c239_i32_148 = arith.constant 239 : i32
    %401 = tpu.dynamic_rotate %365 by %c239_i32_148 dim 1 : vector<16x256xf32>, i32 -> vector<16x256xf32>
    %cst_149 = arith.constant 0.000000e+00 : f32
    %402 = vector.shape_cast %16 : vector<1x256xi1> to vector<1x256xi1>
    %403 = vector.broadcast %402 : vector<1x256xi1> to vector<16x256xi1>
    %404 = vector.broadcast %cst_149 : f32 to vector<16x256xf32>
    %405 = arith.select %403, %401, %404 : vector<16x256xi1>, vector<16x256xf32>
    %406 = tpu.concatenate %370, %375, %380, %385, %365, %390, %395, %400, %405 in 0 : vector<16x256xf32>, vector<16x256xf32>, vector<16x256xf32>, vector<16x256xf32>, vector<16x256xf32>, vector<16x256xf32>, vector<16x256xf32>, vector<16x256xf32>, vector<16x256xf32> -> vector<144x256xf32>
    %407 = arith.truncf %406 : vector<144x256xf32> to vector<144x256xbf16>
    %c0_150 = arith.constant 0 : index
    %c0_151 = arith.constant 0 : index
    %408 = vector.load %arg13[%c0_150, %c0_151] : memref<16x144xbf16, #tpu.memory_space<vmem>>, vector<16x144xbf16>
    %cst_152 = arith.constant dense<0.000000e+00> : vector<16x256xf32>
    %409 = tpu.matmul %408, %407, %cst_152 {dimension_numbers = #tpu.dot_dimension_numbers<[1], [0], [0], [1], [0, 0, 1, 1], [], []>} : vector<16x144xbf16>, vector<144x256xbf16>, vector<16x256xf32> -> vector<16x256xf32>
    %c0_153 = arith.constant 0 : index
    %c0_154 = arith.constant 0 : index
    %410 = vector.load %arg14[%c0_153, %c0_154] : memref<16x1xf32, #tpu.memory_space<vmem>>, vector<16x1xf32>
    %411 = vector.broadcast %410 : vector<16x1xf32> to vector<16x256xf32>
    %412 = arith.addf %409, %411 : vector<16x256xf32>
    %413 = arith.addf %69, %412 : vector<16x256xf32>
    %414 = tpu.iota {dimensions = array<i32: 1>} : vector<1x1024xi32>
    %c31_i32 = arith.constant 31 : i32
    %415 = vector.broadcast %c31_i32 : i32 to vector<1x1024xi32>
    %416 = arith.andi %414, %415 : vector<1x1024xi32>
    %c32_i32 = arith.constant 32 : i32
    %417 = vector.broadcast %c32_i32 : i32 to vector<1x1024xi32>
    %418 = arith.cmpi sge, %414, %417 : vector<1x1024xi32>
    %c992_i32 = arith.constant 992 : i32
    %419 = vector.broadcast %c992_i32 : i32 to vector<1x1024xi32>
    %420 = arith.cmpi slt, %414, %419 : vector<1x1024xi32>
    %c1_i32_155 = arith.constant 1 : i32
    %421 = vector.broadcast %c1_i32_155 : i32 to vector<1x1024xi32>
    %422 = arith.cmpi sge, %416, %421 : vector<1x1024xi32>
    %c31_i32_156 = arith.constant 31 : i32
    %423 = vector.broadcast %c31_i32_156 : i32 to vector<1x1024xi32>
    %424 = arith.cmpi slt, %416, %423 : vector<1x1024xi32>
    %425 = arith.andi %418, %422 : vector<1x1024xi1>
    %426 = arith.andi %418, %424 : vector<1x1024xi1>
    %427 = arith.andi %420, %422 : vector<1x1024xi1>
    %428 = arith.andi %420, %424 : vector<1x1024xi1>
    %429 = arith.truncf %413 : vector<16x256xf32> to vector<16x256xbf16>
    %c0_157 = arith.constant 0 : index
    %c0_158 = arith.constant 0 : index
    %430 = vector.load %arg15[%c0_157, %c0_158] : memref<256x1024xbf16, #tpu.memory_space<vmem>>, vector<256x1024xbf16>
    %cst_159 = arith.constant dense<0.000000e+00> : vector<16x1024xf32>
    %431 = tpu.matmul %429, %430, %cst_159 {dimension_numbers = #tpu.dot_dimension_numbers<[1], [0], [0], [1], [0, 0, 1, 1], [], []>} : vector<16x256xbf16>, vector<256x1024xbf16>, vector<16x1024xf32> -> vector<16x1024xf32>
    %c33_i32 = arith.constant 33 : i32
    %432 = tpu.dynamic_rotate %431 by %c33_i32 dim 1 : vector<16x1024xf32>, i32 -> vector<16x1024xf32>
    %cst_160 = arith.constant 0.000000e+00 : f32
    %433 = vector.shape_cast %425 : vector<1x1024xi1> to vector<1x1024xi1>
    %434 = vector.broadcast %433 : vector<1x1024xi1> to vector<16x1024xi1>
    %435 = vector.broadcast %cst_160 : f32 to vector<16x1024xf32>
    %436 = arith.select %434, %432, %435 : vector<16x1024xi1>, vector<16x1024xf32>
    %c32_i32_161 = arith.constant 32 : i32
    %437 = tpu.dynamic_rotate %431 by %c32_i32_161 dim 1 : vector<16x1024xf32>, i32 -> vector<16x1024xf32>
    %cst_162 = arith.constant 0.000000e+00 : f32
    %438 = vector.shape_cast %418 : vector<1x1024xi1> to vector<1x1024xi1>
    %439 = vector.broadcast %438 : vector<1x1024xi1> to vector<16x1024xi1>
    %440 = vector.broadcast %cst_162 : f32 to vector<16x1024xf32>
    %441 = arith.select %439, %437, %440 : vector<16x1024xi1>, vector<16x1024xf32>
    %c31_i32_163 = arith.constant 31 : i32
    %442 = tpu.dynamic_rotate %431 by %c31_i32_163 dim 1 : vector<16x1024xf32>, i32 -> vector<16x1024xf32>
    %cst_164 = arith.constant 0.000000e+00 : f32
    %443 = vector.shape_cast %426 : vector<1x1024xi1> to vector<1x1024xi1>
    %444 = vector.broadcast %443 : vector<1x1024xi1> to vector<16x1024xi1>
    %445 = vector.broadcast %cst_164 : f32 to vector<16x1024xf32>
    %446 = arith.select %444, %442, %445 : vector<16x1024xi1>, vector<16x1024xf32>
    %c1_i32_165 = arith.constant 1 : i32
    %447 = tpu.dynamic_rotate %431 by %c1_i32_165 dim 1 : vector<16x1024xf32>, i32 -> vector<16x1024xf32>
    %cst_166 = arith.constant 0.000000e+00 : f32
    %448 = vector.shape_cast %422 : vector<1x1024xi1> to vector<1x1024xi1>
    %449 = vector.broadcast %448 : vector<1x1024xi1> to vector<16x1024xi1>
    %450 = vector.broadcast %cst_166 : f32 to vector<16x1024xf32>
    %451 = arith.select %449, %447, %450 : vector<16x1024xi1>, vector<16x1024xf32>
    %c1023_i32 = arith.constant 1023 : i32
    %452 = tpu.dynamic_rotate %431 by %c1023_i32 dim 1 : vector<16x1024xf32>, i32 -> vector<16x1024xf32>
    %cst_167 = arith.constant 0.000000e+00 : f32
    %453 = vector.shape_cast %424 : vector<1x1024xi1> to vector<1x1024xi1>
    %454 = vector.broadcast %453 : vector<1x1024xi1> to vector<16x1024xi1>
    %455 = vector.broadcast %cst_167 : f32 to vector<16x1024xf32>
    %456 = arith.select %454, %452, %455 : vector<16x1024xi1>, vector<16x1024xf32>
    %c993_i32 = arith.constant 993 : i32
    %457 = tpu.dynamic_rotate %431 by %c993_i32 dim 1 : vector<16x1024xf32>, i32 -> vector<16x1024xf32>
    %cst_168 = arith.constant 0.000000e+00 : f32
    %458 = vector.shape_cast %427 : vector<1x1024xi1> to vector<1x1024xi1>
    %459 = vector.broadcast %458 : vector<1x1024xi1> to vector<16x1024xi1>
    %460 = vector.broadcast %cst_168 : f32 to vector<16x1024xf32>
    %461 = arith.select %459, %457, %460 : vector<16x1024xi1>, vector<16x1024xf32>
    %c992_i32_169 = arith.constant 992 : i32
    %462 = tpu.dynamic_rotate %431 by %c992_i32_169 dim 1 : vector<16x1024xf32>, i32 -> vector<16x1024xf32>
    %cst_170 = arith.constant 0.000000e+00 : f32
    %463 = vector.shape_cast %420 : vector<1x1024xi1> to vector<1x1024xi1>
    %464 = vector.broadcast %463 : vector<1x1024xi1> to vector<16x1024xi1>
    %465 = vector.broadcast %cst_170 : f32 to vector<16x1024xf32>
    %466 = arith.select %464, %462, %465 : vector<16x1024xi1>, vector<16x1024xf32>
    %c991_i32 = arith.constant 991 : i32
    %467 = tpu.dynamic_rotate %431 by %c991_i32 dim 1 : vector<16x1024xf32>, i32 -> vector<16x1024xf32>
    %cst_171 = arith.constant 0.000000e+00 : f32
    %468 = vector.shape_cast %428 : vector<1x1024xi1> to vector<1x1024xi1>
    %469 = vector.broadcast %468 : vector<1x1024xi1> to vector<16x1024xi1>
    %470 = vector.broadcast %cst_171 : f32 to vector<16x1024xf32>
    %471 = arith.select %469, %467, %470 : vector<16x1024xi1>, vector<16x1024xf32>
    %472 = tpu.concatenate %436, %441, %446, %451, %431, %456, %461, %466, %471 in 0 : vector<16x1024xf32>, vector<16x1024xf32>, vector<16x1024xf32>, vector<16x1024xf32>, vector<16x1024xf32>, vector<16x1024xf32>, vector<16x1024xf32>, vector<16x1024xf32>, vector<16x1024xf32> -> vector<144x1024xf32>
    %473 = arith.truncf %472 : vector<144x1024xf32> to vector<144x1024xbf16>
    %c0_172 = arith.constant 0 : index
    %c0_173 = arith.constant 0 : index
    %474 = vector.load %arg16[%c0_172, %c0_173] : memref<8x144xbf16, #tpu.memory_space<vmem>>, vector<8x144xbf16>
    %cst_174 = arith.constant dense<0.000000e+00> : vector<8x1024xf32>
    %475 = tpu.matmul %474, %473, %cst_174 {dimension_numbers = #tpu.dot_dimension_numbers<[1], [0], [0], [1], [0, 0, 1, 1], [], []>} : vector<8x144xbf16>, vector<144x1024xbf16>, vector<8x1024xf32> -> vector<8x1024xf32>
    %c0_175 = arith.constant 0 : index
    %c0_176 = arith.constant 0 : index
    %476 = vector.load %arg17[%c0_175, %c0_176] : memref<8x1xf32, #tpu.memory_space<vmem>>, vector<8x1xf32>
    %477 = vector.broadcast %476 : vector<8x1xf32> to vector<8x1024xf32>
    %478 = arith.addf %475, %477 : vector<8x1024xf32>
    %c0_177 = arith.constant 0 : index
    %c0_178 = arith.constant 0 : index
    %c0_179 = arith.constant 0 : index
    %479 = vector.load %arg3[%c0_177, %c0_178, %c0_179] : memref<1x8x1024xf32, #tpu.memory_space<vmem>>, vector<1x8x1024xf32>
    %480 = vector.shape_cast %479 : vector<1x8x1024xf32> to vector<8x1024xf32>
    %481 = arith.addf %478, %480 : vector<8x1024xf32>
    %482 = tpu.iota {dimensions = array<i32: 0>} : vector<8x1xi32>
    %c0_i32_180 = arith.constant 0 : i32
    %483 = vector.broadcast %c0_i32_180 : i32 to vector<8x1xi32>
    %484 = arith.cmpi sge, %482, %483 : vector<8x1xi32>
    %c2_i32 = arith.constant 2 : i32
    %485 = vector.broadcast %c2_i32 : i32 to vector<8x1xi32>
    %486 = arith.cmpi slt, %482, %485 : vector<8x1xi32>
    %487 = arith.andi %484, %486 : vector<8x1xi1>
    %c2_i32_181 = arith.constant 2 : i32
    %488 = vector.broadcast %c2_i32_181 : i32 to vector<8x1xi32>
    %489 = arith.cmpi sge, %482, %488 : vector<8x1xi32>
    %c4_i32_182 = arith.constant 4 : i32
    %490 = vector.broadcast %c4_i32_182 : i32 to vector<8x1xi32>
    %491 = arith.cmpi slt, %482, %490 : vector<8x1xi32>
    %492 = arith.andi %489, %491 : vector<8x1xi1>
    %c4_i32_183 = arith.constant 4 : i32
    %493 = vector.broadcast %c4_i32_183 : i32 to vector<8x1xi32>
    %494 = arith.cmpi sge, %482, %493 : vector<8x1xi32>
    %c6_i32 = arith.constant 6 : i32
    %495 = vector.broadcast %c6_i32 : i32 to vector<8x1xi32>
    %496 = arith.cmpi slt, %482, %495 : vector<8x1xi32>
    %497 = arith.andi %494, %496 : vector<8x1xi1>
    %c6_i32_184 = arith.constant 6 : i32
    %498 = vector.broadcast %c6_i32_184 : i32 to vector<8x1xi32>
    %499 = arith.cmpi sge, %482, %498 : vector<8x1xi32>
    %c8_i32_185 = arith.constant 8 : i32
    %500 = vector.broadcast %c8_i32_185 : i32 to vector<8x1xi32>
    %501 = arith.cmpi slt, %482, %500 : vector<8x1xi32>
    %502 = arith.andi %499, %501 : vector<8x1xi1>
    %cst_186 = arith.constant dense<0.000000e+00> : vector<8xf32>
    %503 = vector.multi_reduction <add>, %481, %cst_186 [1] : vector<8x1024xf32> to vector<8xf32>
    %504 = vector.shape_cast %503 : vector<8xf32> to vector<8x1xf32>
    %cst_187 = arith.constant 0.000000e+00 : f32
    %505 = vector.broadcast %cst_187 : f32 to vector<8x1xf32>
    %cst_188 = arith.constant 0.000000e+00 : f32
    %506 = vector.broadcast %cst_188 : f32 to vector<8x1xf32>
    %507 = arith.select %487, %504, %506 : vector<8x1xi1>, vector<8x1xf32>
    %508 = vector.shape_cast %507 : vector<8x1xf32> to vector<1x8x1xf32>
    %cst_189 = arith.constant dense<0.000000e+00> : vector<1xf32>
    %509 = vector.multi_reduction <add>, %508, %cst_189 [1, 2] : vector<1x8x1xf32> to vector<1xf32>
    %510 = vector.shape_cast %509 : vector<1xf32> to vector<1x1x1xf32>
    %511 = vector.extract %510[0, 0, 0] : f32 from vector<1x1x1xf32>
    %cst_190 = arith.constant 4.8828125E-4 : f32
    %512 = arith.mulf %511, %cst_190 : f32
    %cst_191 = arith.constant 0.000000e+00 : f32
    %513 = vector.broadcast %512 : f32 to vector<8x1xf32>
    %514 = vector.broadcast %cst_191 : f32 to vector<8x1xf32>
    %515 = arith.select %487, %513, %514 : vector<8x1xi1>, vector<8x1xf32>
    %516 = arith.addf %505, %515 : vector<8x1xf32>
    %cst_192 = arith.constant 0.000000e+00 : f32
    %517 = vector.broadcast %cst_192 : f32 to vector<8x1xf32>
    %518 = arith.select %492, %504, %517 : vector<8x1xi1>, vector<8x1xf32>
    %519 = vector.shape_cast %518 : vector<8x1xf32> to vector<1x8x1xf32>
    %cst_193 = arith.constant dense<0.000000e+00> : vector<1xf32>
    %520 = vector.multi_reduction <add>, %519, %cst_193 [1, 2] : vector<1x8x1xf32> to vector<1xf32>
    %521 = vector.shape_cast %520 : vector<1xf32> to vector<1x1x1xf32>
    %522 = vector.extract %521[0, 0, 0] : f32 from vector<1x1x1xf32>
    %cst_194 = arith.constant 4.8828125E-4 : f32
    %523 = arith.mulf %522, %cst_194 : f32
    %cst_195 = arith.constant 0.000000e+00 : f32
    %524 = vector.broadcast %523 : f32 to vector<8x1xf32>
    %525 = vector.broadcast %cst_195 : f32 to vector<8x1xf32>
    %526 = arith.select %492, %524, %525 : vector<8x1xi1>, vector<8x1xf32>
    %527 = arith.addf %516, %526 : vector<8x1xf32>
    %cst_196 = arith.constant 0.000000e+00 : f32
    %528 = vector.broadcast %cst_196 : f32 to vector<8x1xf32>
    %529 = arith.select %497, %504, %528 : vector<8x1xi1>, vector<8x1xf32>
    %530 = vector.shape_cast %529 : vector<8x1xf32> to vector<1x8x1xf32>
    %cst_197 = arith.constant dense<0.000000e+00> : vector<1xf32>
    %531 = vector.multi_reduction <add>, %530, %cst_197 [1, 2] : vector<1x8x1xf32> to vector<1xf32>
    %532 = vector.shape_cast %531 : vector<1xf32> to vector<1x1x1xf32>
    %533 = vector.extract %532[0, 0, 0] : f32 from vector<1x1x1xf32>
    %cst_198 = arith.constant 4.8828125E-4 : f32
    %534 = arith.mulf %533, %cst_198 : f32
    %cst_199 = arith.constant 0.000000e+00 : f32
    %535 = vector.broadcast %534 : f32 to vector<8x1xf32>
    %536 = vector.broadcast %cst_199 : f32 to vector<8x1xf32>
    %537 = arith.select %497, %535, %536 : vector<8x1xi1>, vector<8x1xf32>
    %538 = arith.addf %527, %537 : vector<8x1xf32>
    %cst_200 = arith.constant 0.000000e+00 : f32
    %539 = vector.broadcast %cst_200 : f32 to vector<8x1xf32>
    %540 = arith.select %502, %504, %539 : vector<8x1xi1>, vector<8x1xf32>
    %541 = vector.shape_cast %540 : vector<8x1xf32> to vector<1x8x1xf32>
    %cst_201 = arith.constant dense<0.000000e+00> : vector<1xf32>
    %542 = vector.multi_reduction <add>, %541, %cst_201 [1, 2] : vector<1x8x1xf32> to vector<1xf32>
    %543 = vector.shape_cast %542 : vector<1xf32> to vector<1x1x1xf32>
    %544 = vector.extract %543[0, 0, 0] : f32 from vector<1x1x1xf32>
    %cst_202 = arith.constant 4.8828125E-4 : f32
    %545 = arith.mulf %544, %cst_202 : f32
    %cst_203 = arith.constant 0.000000e+00 : f32
    %546 = vector.broadcast %545 : f32 to vector<8x1xf32>
    %547 = vector.broadcast %cst_203 : f32 to vector<8x1xf32>
    %548 = arith.select %502, %546, %547 : vector<8x1xi1>, vector<8x1xf32>
    %549 = arith.addf %538, %548 : vector<8x1xf32>
    %550 = vector.broadcast %549 : vector<8x1xf32> to vector<8x1024xf32>
    %551 = arith.subf %481, %550 : vector<8x1024xf32>
    %552 = arith.mulf %551, %551 : vector<8x1024xf32>
    %cst_204 = arith.constant dense<0.000000e+00> : vector<8xf32>
    %553 = vector.multi_reduction <add>, %552, %cst_204 [1] : vector<8x1024xf32> to vector<8xf32>
    %554 = vector.shape_cast %553 : vector<8xf32> to vector<8x1xf32>
    %cst_205 = arith.constant 0.000000e+00 : f32
    %555 = vector.broadcast %cst_205 : f32 to vector<8x1xf32>
    %cst_206 = arith.constant 0.000000e+00 : f32
    %556 = vector.broadcast %cst_206 : f32 to vector<8x1xf32>
    %557 = arith.select %487, %554, %556 : vector<8x1xi1>, vector<8x1xf32>
    %558 = vector.shape_cast %557 : vector<8x1xf32> to vector<1x8x1xf32>
    %cst_207 = arith.constant dense<0.000000e+00> : vector<1xf32>
    %559 = vector.multi_reduction <add>, %558, %cst_207 [1, 2] : vector<1x8x1xf32> to vector<1xf32>
    %560 = vector.shape_cast %559 : vector<1xf32> to vector<1x1x1xf32>
    %561 = vector.extract %560[0, 0, 0] : f32 from vector<1x1x1xf32>
    %cst_208 = arith.constant 4.8828125E-4 : f32
    %562 = arith.mulf %561, %cst_208 : f32
    %cst_209 = arith.constant 0.000000e+00 : f32
    %563 = vector.broadcast %562 : f32 to vector<8x1xf32>
    %564 = vector.broadcast %cst_209 : f32 to vector<8x1xf32>
    %565 = arith.select %487, %563, %564 : vector<8x1xi1>, vector<8x1xf32>
    %566 = arith.addf %555, %565 : vector<8x1xf32>
    %cst_210 = arith.constant 0.000000e+00 : f32
    %567 = vector.broadcast %cst_210 : f32 to vector<8x1xf32>
    %568 = arith.select %492, %554, %567 : vector<8x1xi1>, vector<8x1xf32>
    %569 = vector.shape_cast %568 : vector<8x1xf32> to vector<1x8x1xf32>
    %cst_211 = arith.constant dense<0.000000e+00> : vector<1xf32>
    %570 = vector.multi_reduction <add>, %569, %cst_211 [1, 2] : vector<1x8x1xf32> to vector<1xf32>
    %571 = vector.shape_cast %570 : vector<1xf32> to vector<1x1x1xf32>
    %572 = vector.extract %571[0, 0, 0] : f32 from vector<1x1x1xf32>
    %cst_212 = arith.constant 4.8828125E-4 : f32
    %573 = arith.mulf %572, %cst_212 : f32
    %cst_213 = arith.constant 0.000000e+00 : f32
    %574 = vector.broadcast %573 : f32 to vector<8x1xf32>
    %575 = vector.broadcast %cst_213 : f32 to vector<8x1xf32>
    %576 = arith.select %492, %574, %575 : vector<8x1xi1>, vector<8x1xf32>
    %577 = arith.addf %566, %576 : vector<8x1xf32>
    %cst_214 = arith.constant 0.000000e+00 : f32
    %578 = vector.broadcast %cst_214 : f32 to vector<8x1xf32>
    %579 = arith.select %497, %554, %578 : vector<8x1xi1>, vector<8x1xf32>
    %580 = vector.shape_cast %579 : vector<8x1xf32> to vector<1x8x1xf32>
    %cst_215 = arith.constant dense<0.000000e+00> : vector<1xf32>
    %581 = vector.multi_reduction <add>, %580, %cst_215 [1, 2] : vector<1x8x1xf32> to vector<1xf32>
    %582 = vector.shape_cast %581 : vector<1xf32> to vector<1x1x1xf32>
    %583 = vector.extract %582[0, 0, 0] : f32 from vector<1x1x1xf32>
    %cst_216 = arith.constant 4.8828125E-4 : f32
    %584 = arith.mulf %583, %cst_216 : f32
    %cst_217 = arith.constant 0.000000e+00 : f32
    %585 = vector.broadcast %584 : f32 to vector<8x1xf32>
    %586 = vector.broadcast %cst_217 : f32 to vector<8x1xf32>
    %587 = arith.select %497, %585, %586 : vector<8x1xi1>, vector<8x1xf32>
    %588 = arith.addf %577, %587 : vector<8x1xf32>
    %cst_218 = arith.constant 0.000000e+00 : f32
    %589 = vector.broadcast %cst_218 : f32 to vector<8x1xf32>
    %590 = arith.select %502, %554, %589 : vector<8x1xi1>, vector<8x1xf32>
    %591 = vector.shape_cast %590 : vector<8x1xf32> to vector<1x8x1xf32>
    %cst_219 = arith.constant dense<0.000000e+00> : vector<1xf32>
    %592 = vector.multi_reduction <add>, %591, %cst_219 [1, 2] : vector<1x8x1xf32> to vector<1xf32>
    %593 = vector.shape_cast %592 : vector<1xf32> to vector<1x1x1xf32>
    %594 = vector.extract %593[0, 0, 0] : f32 from vector<1x1x1xf32>
    %cst_220 = arith.constant 4.8828125E-4 : f32
    %595 = arith.mulf %594, %cst_220 : f32
    %cst_221 = arith.constant 0.000000e+00 : f32
    %596 = vector.broadcast %595 : f32 to vector<8x1xf32>
    %597 = vector.broadcast %cst_221 : f32 to vector<8x1xf32>
    %598 = arith.select %502, %596, %597 : vector<8x1xi1>, vector<8x1xf32>
    %599 = arith.addf %588, %598 : vector<8x1xf32>
    %cst_222 = arith.constant 9.99999974E-6 : f32
    %600 = vector.broadcast %cst_222 : f32 to vector<8x1xf32>
    %601 = arith.addf %599, %600 : vector<8x1xf32>
    %602 = math.rsqrt %601 : vector<8x1xf32>
    %603 = vector.broadcast %602 : vector<8x1xf32> to vector<8x1024xf32>
    %604 = arith.mulf %551, %603 : vector<8x1024xf32>
    %c0_223 = arith.constant 0 : index
    %c0_224 = arith.constant 0 : index
    %605 = vector.load %arg18[%c0_223, %c0_224] : memref<8x1xf32, #tpu.memory_space<vmem>>, vector<8x1xf32>
    %606 = vector.broadcast %605 : vector<8x1xf32> to vector<8x1024xf32>
    %607 = arith.mulf %604, %606 : vector<8x1024xf32>
    %c0_225 = arith.constant 0 : index
    %c0_226 = arith.constant 0 : index
    %608 = vector.load %arg19[%c0_225, %c0_226] : memref<8x1xf32, #tpu.memory_space<vmem>>, vector<8x1xf32>
    %609 = vector.broadcast %608 : vector<8x1xf32> to vector<8x1024xf32>
    %610 = arith.addf %607, %609 : vector<8x1024xf32>
    %611 = arith.negf %610 : vector<8x1024xf32>
    %612 = math.exp %611 : vector<8x1024xf32>
    %cst_227 = arith.constant 1.000000e+00 : f32
    %613 = vector.broadcast %cst_227 : f32 to vector<8x1024xf32>
    %614 = arith.addf %613, %612 : vector<8x1024xf32>
    %615 = arith.divf %613, %614 : vector<8x1024xf32>
    %616 = arith.mulf %610, %615 : vector<8x1024xf32>
    %c33_i32_228 = arith.constant 33 : i32
    %617 = tpu.dynamic_rotate %616 by %c33_i32_228 dim 1 : vector<8x1024xf32>, i32 -> vector<8x1024xf32>
    %cst_229 = arith.constant 0.000000e+00 : f32
    %618 = vector.shape_cast %425 : vector<1x1024xi1> to vector<1x1024xi1>
    %619 = vector.broadcast %618 : vector<1x1024xi1> to vector<8x1024xi1>
    %620 = vector.broadcast %cst_229 : f32 to vector<8x1024xf32>
    %621 = arith.select %619, %617, %620 : vector<8x1024xi1>, vector<8x1024xf32>
    %c32_i32_230 = arith.constant 32 : i32
    %622 = tpu.dynamic_rotate %616 by %c32_i32_230 dim 1 : vector<8x1024xf32>, i32 -> vector<8x1024xf32>
    %cst_231 = arith.constant 0.000000e+00 : f32
    %623 = vector.shape_cast %418 : vector<1x1024xi1> to vector<1x1024xi1>
    %624 = vector.broadcast %623 : vector<1x1024xi1> to vector<8x1024xi1>
    %625 = vector.broadcast %cst_231 : f32 to vector<8x1024xf32>
    %626 = arith.select %624, %622, %625 : vector<8x1024xi1>, vector<8x1024xf32>
    %c31_i32_232 = arith.constant 31 : i32
    %627 = tpu.dynamic_rotate %616 by %c31_i32_232 dim 1 : vector<8x1024xf32>, i32 -> vector<8x1024xf32>
    %cst_233 = arith.constant 0.000000e+00 : f32
    %628 = vector.shape_cast %426 : vector<1x1024xi1> to vector<1x1024xi1>
    %629 = vector.broadcast %628 : vector<1x1024xi1> to vector<8x1024xi1>
    %630 = vector.broadcast %cst_233 : f32 to vector<8x1024xf32>
    %631 = arith.select %629, %627, %630 : vector<8x1024xi1>, vector<8x1024xf32>
    %c1_i32_234 = arith.constant 1 : i32
    %632 = tpu.dynamic_rotate %616 by %c1_i32_234 dim 1 : vector<8x1024xf32>, i32 -> vector<8x1024xf32>
    %cst_235 = arith.constant 0.000000e+00 : f32
    %633 = vector.shape_cast %422 : vector<1x1024xi1> to vector<1x1024xi1>
    %634 = vector.broadcast %633 : vector<1x1024xi1> to vector<8x1024xi1>
    %635 = vector.broadcast %cst_235 : f32 to vector<8x1024xf32>
    %636 = arith.select %634, %632, %635 : vector<8x1024xi1>, vector<8x1024xf32>
    %c1023_i32_236 = arith.constant 1023 : i32
    %637 = tpu.dynamic_rotate %616 by %c1023_i32_236 dim 1 : vector<8x1024xf32>, i32 -> vector<8x1024xf32>
    %cst_237 = arith.constant 0.000000e+00 : f32
    %638 = vector.shape_cast %424 : vector<1x1024xi1> to vector<1x1024xi1>
    %639 = vector.broadcast %638 : vector<1x1024xi1> to vector<8x1024xi1>
    %640 = vector.broadcast %cst_237 : f32 to vector<8x1024xf32>
    %641 = arith.select %639, %637, %640 : vector<8x1024xi1>, vector<8x1024xf32>
    %c993_i32_238 = arith.constant 993 : i32
    %642 = tpu.dynamic_rotate %616 by %c993_i32_238 dim 1 : vector<8x1024xf32>, i32 -> vector<8x1024xf32>
    %cst_239 = arith.constant 0.000000e+00 : f32
    %643 = vector.shape_cast %427 : vector<1x1024xi1> to vector<1x1024xi1>
    %644 = vector.broadcast %643 : vector<1x1024xi1> to vector<8x1024xi1>
    %645 = vector.broadcast %cst_239 : f32 to vector<8x1024xf32>
    %646 = arith.select %644, %642, %645 : vector<8x1024xi1>, vector<8x1024xf32>
    %c992_i32_240 = arith.constant 992 : i32
    %647 = tpu.dynamic_rotate %616 by %c992_i32_240 dim 1 : vector<8x1024xf32>, i32 -> vector<8x1024xf32>
    %cst_241 = arith.constant 0.000000e+00 : f32
    %648 = vector.shape_cast %420 : vector<1x1024xi1> to vector<1x1024xi1>
    %649 = vector.broadcast %648 : vector<1x1024xi1> to vector<8x1024xi1>
    %650 = vector.broadcast %cst_241 : f32 to vector<8x1024xf32>
    %651 = arith.select %649, %647, %650 : vector<8x1024xi1>, vector<8x1024xf32>
    %c991_i32_242 = arith.constant 991 : i32
    %652 = tpu.dynamic_rotate %616 by %c991_i32_242 dim 1 : vector<8x1024xf32>, i32 -> vector<8x1024xf32>
    %cst_243 = arith.constant 0.000000e+00 : f32
    %653 = vector.shape_cast %428 : vector<1x1024xi1> to vector<1x1024xi1>
    %654 = vector.broadcast %653 : vector<1x1024xi1> to vector<8x1024xi1>
    %655 = vector.broadcast %cst_243 : f32 to vector<8x1024xf32>
    %656 = arith.select %654, %652, %655 : vector<8x1024xi1>, vector<8x1024xf32>
    %657 = tpu.concatenate %621, %626, %631, %636, %616, %641, %646, %651, %656 in 0 : vector<8x1024xf32>, vector<8x1024xf32>, vector<8x1024xf32>, vector<8x1024xf32>, vector<8x1024xf32>, vector<8x1024xf32>, vector<8x1024xf32>, vector<8x1024xf32>, vector<8x1024xf32> -> vector<72x1024xf32>
    %658 = arith.truncf %657 : vector<72x1024xf32> to vector<72x1024xbf16>
    %c0_244 = arith.constant 0 : index
    %c0_245 = arith.constant 0 : index
    %659 = vector.load %arg20[%c0_244, %c0_245] : memref<8x72xbf16, #tpu.memory_space<vmem>>, vector<8x72xbf16>
    %cst_246 = arith.constant dense<0.000000e+00> : vector<8x1024xf32>
    %660 = tpu.matmul %659, %658, %cst_246 {dimension_numbers = #tpu.dot_dimension_numbers<[1], [0], [0], [1], [0, 0, 1, 1], [], []>} : vector<8x72xbf16>, vector<72x1024xbf16>, vector<8x1024xf32> -> vector<8x1024xf32>
    %c0_247 = arith.constant 0 : index
    %c0_248 = arith.constant 0 : index
    %661 = vector.load %arg21[%c0_247, %c0_248] : memref<8x1xf32, #tpu.memory_space<vmem>>, vector<8x1xf32>
    %662 = vector.broadcast %661 : vector<8x1xf32> to vector<8x1024xf32>
    %663 = arith.addf %660, %662 : vector<8x1024xf32>
    %cst_249 = arith.constant dense<0.000000e+00> : vector<8xf32>
    %664 = vector.multi_reduction <add>, %663, %cst_249 [1] : vector<8x1024xf32> to vector<8xf32>
    %665 = vector.shape_cast %664 : vector<8xf32> to vector<8x1xf32>
    %cst_250 = arith.constant 0.000000e+00 : f32
    %666 = vector.broadcast %cst_250 : f32 to vector<8x1xf32>
    %cst_251 = arith.constant 0.000000e+00 : f32
    %667 = vector.broadcast %cst_251 : f32 to vector<8x1xf32>
    %668 = arith.select %487, %665, %667 : vector<8x1xi1>, vector<8x1xf32>
    %669 = vector.shape_cast %668 : vector<8x1xf32> to vector<1x8x1xf32>
    %cst_252 = arith.constant dense<0.000000e+00> : vector<1xf32>
    %670 = vector.multi_reduction <add>, %669, %cst_252 [1, 2] : vector<1x8x1xf32> to vector<1xf32>
    %671 = vector.shape_cast %670 : vector<1xf32> to vector<1x1x1xf32>
    %672 = vector.extract %671[0, 0, 0] : f32 from vector<1x1x1xf32>
    %cst_253 = arith.constant 4.8828125E-4 : f32
    %673 = arith.mulf %672, %cst_253 : f32
    %cst_254 = arith.constant 0.000000e+00 : f32
    %674 = vector.broadcast %673 : f32 to vector<8x1xf32>
    %675 = vector.broadcast %cst_254 : f32 to vector<8x1xf32>
    %676 = arith.select %487, %674, %675 : vector<8x1xi1>, vector<8x1xf32>
    %677 = arith.addf %666, %676 : vector<8x1xf32>
    %cst_255 = arith.constant 0.000000e+00 : f32
    %678 = vector.broadcast %cst_255 : f32 to vector<8x1xf32>
    %679 = arith.select %492, %665, %678 : vector<8x1xi1>, vector<8x1xf32>
    %680 = vector.shape_cast %679 : vector<8x1xf32> to vector<1x8x1xf32>
    %cst_256 = arith.constant dense<0.000000e+00> : vector<1xf32>
    %681 = vector.multi_reduction <add>, %680, %cst_256 [1, 2] : vector<1x8x1xf32> to vector<1xf32>
    %682 = vector.shape_cast %681 : vector<1xf32> to vector<1x1x1xf32>
    %683 = vector.extract %682[0, 0, 0] : f32 from vector<1x1x1xf32>
    %cst_257 = arith.constant 4.8828125E-4 : f32
    %684 = arith.mulf %683, %cst_257 : f32
    %cst_258 = arith.constant 0.000000e+00 : f32
    %685 = vector.broadcast %684 : f32 to vector<8x1xf32>
    %686 = vector.broadcast %cst_258 : f32 to vector<8x1xf32>
    %687 = arith.select %492, %685, %686 : vector<8x1xi1>, vector<8x1xf32>
    %688 = arith.addf %677, %687 : vector<8x1xf32>
    %cst_259 = arith.constant 0.000000e+00 : f32
    %689 = vector.broadcast %cst_259 : f32 to vector<8x1xf32>
    %690 = arith.select %497, %665, %689 : vector<8x1xi1>, vector<8x1xf32>
    %691 = vector.shape_cast %690 : vector<8x1xf32> to vector<1x8x1xf32>
    %cst_260 = arith.constant dense<0.000000e+00> : vector<1xf32>
    %692 = vector.multi_reduction <add>, %691, %cst_260 [1, 2] : vector<1x8x1xf32> to vector<1xf32>
    %693 = vector.shape_cast %692 : vector<1xf32> to vector<1x1x1xf32>
    %694 = vector.extract %693[0, 0, 0] : f32 from vector<1x1x1xf32>
    %cst_261 = arith.constant 4.8828125E-4 : f32
    %695 = arith.mulf %694, %cst_261 : f32
    %cst_262 = arith.constant 0.000000e+00 : f32
    %696 = vector.broadcast %695 : f32 to vector<8x1xf32>
    %697 = vector.broadcast %cst_262 : f32 to vector<8x1xf32>
    %698 = arith.select %497, %696, %697 : vector<8x1xi1>, vector<8x1xf32>
    %699 = arith.addf %688, %698 : vector<8x1xf32>
    %cst_263 = arith.constant 0.000000e+00 : f32
    %700 = vector.broadcast %cst_263 : f32 to vector<8x1xf32>
    %701 = arith.select %502, %665, %700 : vector<8x1xi1>, vector<8x1xf32>
    %702 = vector.shape_cast %701 : vector<8x1xf32> to vector<1x8x1xf32>
    %cst_264 = arith.constant dense<0.000000e+00> : vector<1xf32>
    %703 = vector.multi_reduction <add>, %702, %cst_264 [1, 2] : vector<1x8x1xf32> to vector<1xf32>
    %704 = vector.shape_cast %703 : vector<1xf32> to vector<1x1x1xf32>
    %705 = vector.extract %704[0, 0, 0] : f32 from vector<1x1x1xf32>
    %cst_265 = arith.constant 4.8828125E-4 : f32
    %706 = arith.mulf %705, %cst_265 : f32
    %cst_266 = arith.constant 0.000000e+00 : f32
    %707 = vector.broadcast %706 : f32 to vector<8x1xf32>
    %708 = vector.broadcast %cst_266 : f32 to vector<8x1xf32>
    %709 = arith.select %502, %707, %708 : vector<8x1xi1>, vector<8x1xf32>
    %710 = arith.addf %699, %709 : vector<8x1xf32>
    %711 = vector.broadcast %710 : vector<8x1xf32> to vector<8x1024xf32>
    %712 = arith.subf %663, %711 : vector<8x1024xf32>
    %713 = arith.mulf %712, %712 : vector<8x1024xf32>
    %cst_267 = arith.constant dense<0.000000e+00> : vector<8xf32>
    %714 = vector.multi_reduction <add>, %713, %cst_267 [1] : vector<8x1024xf32> to vector<8xf32>
    %715 = vector.shape_cast %714 : vector<8xf32> to vector<8x1xf32>
    %cst_268 = arith.constant 0.000000e+00 : f32
    %716 = vector.broadcast %cst_268 : f32 to vector<8x1xf32>
    %cst_269 = arith.constant 0.000000e+00 : f32
    %717 = vector.broadcast %cst_269 : f32 to vector<8x1xf32>
    %718 = arith.select %487, %715, %717 : vector<8x1xi1>, vector<8x1xf32>
    %719 = vector.shape_cast %718 : vector<8x1xf32> to vector<1x8x1xf32>
    %cst_270 = arith.constant dense<0.000000e+00> : vector<1xf32>
    %720 = vector.multi_reduction <add>, %719, %cst_270 [1, 2] : vector<1x8x1xf32> to vector<1xf32>
    %721 = vector.shape_cast %720 : vector<1xf32> to vector<1x1x1xf32>
    %722 = vector.extract %721[0, 0, 0] : f32 from vector<1x1x1xf32>
    %cst_271 = arith.constant 4.8828125E-4 : f32
    %723 = arith.mulf %722, %cst_271 : f32
    %cst_272 = arith.constant 0.000000e+00 : f32
    %724 = vector.broadcast %723 : f32 to vector<8x1xf32>
    %725 = vector.broadcast %cst_272 : f32 to vector<8x1xf32>
    %726 = arith.select %487, %724, %725 : vector<8x1xi1>, vector<8x1xf32>
    %727 = arith.addf %716, %726 : vector<8x1xf32>
    %cst_273 = arith.constant 0.000000e+00 : f32
    %728 = vector.broadcast %cst_273 : f32 to vector<8x1xf32>
    %729 = arith.select %492, %715, %728 : vector<8x1xi1>, vector<8x1xf32>
    %730 = vector.shape_cast %729 : vector<8x1xf32> to vector<1x8x1xf32>
    %cst_274 = arith.constant dense<0.000000e+00> : vector<1xf32>
    %731 = vector.multi_reduction <add>, %730, %cst_274 [1, 2] : vector<1x8x1xf32> to vector<1xf32>
    %732 = vector.shape_cast %731 : vector<1xf32> to vector<1x1x1xf32>
    %733 = vector.extract %732[0, 0, 0] : f32 from vector<1x1x1xf32>
    %cst_275 = arith.constant 4.8828125E-4 : f32
    %734 = arith.mulf %733, %cst_275 : f32
    %cst_276 = arith.constant 0.000000e+00 : f32
    %735 = vector.broadcast %734 : f32 to vector<8x1xf32>
    %736 = vector.broadcast %cst_276 : f32 to vector<8x1xf32>
    %737 = arith.select %492, %735, %736 : vector<8x1xi1>, vector<8x1xf32>
    %738 = arith.addf %727, %737 : vector<8x1xf32>
    %cst_277 = arith.constant 0.000000e+00 : f32
    %739 = vector.broadcast %cst_277 : f32 to vector<8x1xf32>
    %740 = arith.select %497, %715, %739 : vector<8x1xi1>, vector<8x1xf32>
    %741 = vector.shape_cast %740 : vector<8x1xf32> to vector<1x8x1xf32>
    %cst_278 = arith.constant dense<0.000000e+00> : vector<1xf32>
    %742 = vector.multi_reduction <add>, %741, %cst_278 [1, 2] : vector<1x8x1xf32> to vector<1xf32>
    %743 = vector.shape_cast %742 : vector<1xf32> to vector<1x1x1xf32>
    %744 = vector.extract %743[0, 0, 0] : f32 from vector<1x1x1xf32>
    %cst_279 = arith.constant 4.8828125E-4 : f32
    %745 = arith.mulf %744, %cst_279 : f32
    %cst_280 = arith.constant 0.000000e+00 : f32
    %746 = vector.broadcast %745 : f32 to vector<8x1xf32>
    %747 = vector.broadcast %cst_280 : f32 to vector<8x1xf32>
    %748 = arith.select %497, %746, %747 : vector<8x1xi1>, vector<8x1xf32>
    %749 = arith.addf %738, %748 : vector<8x1xf32>
    %cst_281 = arith.constant 0.000000e+00 : f32
    %750 = vector.broadcast %cst_281 : f32 to vector<8x1xf32>
    %751 = arith.select %502, %715, %750 : vector<8x1xi1>, vector<8x1xf32>
    %752 = vector.shape_cast %751 : vector<8x1xf32> to vector<1x8x1xf32>
    %cst_282 = arith.constant dense<0.000000e+00> : vector<1xf32>
    %753 = vector.multi_reduction <add>, %752, %cst_282 [1, 2] : vector<1x8x1xf32> to vector<1xf32>
    %754 = vector.shape_cast %753 : vector<1xf32> to vector<1x1x1xf32>
    %755 = vector.extract %754[0, 0, 0] : f32 from vector<1x1x1xf32>
    %cst_283 = arith.constant 4.8828125E-4 : f32
    %756 = arith.mulf %755, %cst_283 : f32
    %cst_284 = arith.constant 0.000000e+00 : f32
    %757 = vector.broadcast %756 : f32 to vector<8x1xf32>
    %758 = vector.broadcast %cst_284 : f32 to vector<8x1xf32>
    %759 = arith.select %502, %757, %758 : vector<8x1xi1>, vector<8x1xf32>
    %760 = arith.addf %749, %759 : vector<8x1xf32>
    %cst_285 = arith.constant 9.99999974E-6 : f32
    %761 = vector.broadcast %cst_285 : f32 to vector<8x1xf32>
    %762 = arith.addf %760, %761 : vector<8x1xf32>
    %763 = math.rsqrt %762 : vector<8x1xf32>
    %764 = vector.broadcast %763 : vector<8x1xf32> to vector<8x1024xf32>
    %765 = arith.mulf %712, %764 : vector<8x1024xf32>
    %c0_286 = arith.constant 0 : index
    %c0_287 = arith.constant 0 : index
    %766 = vector.load %arg22[%c0_286, %c0_287] : memref<8x1xf32, #tpu.memory_space<vmem>>, vector<8x1xf32>
    %767 = vector.broadcast %766 : vector<8x1xf32> to vector<8x1024xf32>
    %768 = arith.mulf %765, %767 : vector<8x1024xf32>
    %c0_288 = arith.constant 0 : index
    %c0_289 = arith.constant 0 : index
    %769 = vector.load %arg23[%c0_288, %c0_289] : memref<8x1xf32, #tpu.memory_space<vmem>>, vector<8x1xf32>
    %770 = vector.broadcast %769 : vector<8x1xf32> to vector<8x1024xf32>
    %771 = arith.addf %768, %770 : vector<8x1024xf32>
    %772 = arith.negf %771 : vector<8x1024xf32>
    %773 = math.exp %772 : vector<8x1024xf32>
    %cst_290 = arith.constant 1.000000e+00 : f32
    %774 = vector.broadcast %cst_290 : f32 to vector<8x1024xf32>
    %775 = arith.addf %774, %773 : vector<8x1024xf32>
    %776 = arith.divf %774, %775 : vector<8x1024xf32>
    %777 = arith.mulf %771, %776 : vector<8x1024xf32>
    %c33_i32_291 = arith.constant 33 : i32
    %778 = tpu.dynamic_rotate %777 by %c33_i32_291 dim 1 : vector<8x1024xf32>, i32 -> vector<8x1024xf32>
    %cst_292 = arith.constant 0.000000e+00 : f32
    %779 = vector.shape_cast %425 : vector<1x1024xi1> to vector<1x1024xi1>
    %780 = vector.broadcast %779 : vector<1x1024xi1> to vector<8x1024xi1>
    %781 = vector.broadcast %cst_292 : f32 to vector<8x1024xf32>
    %782 = arith.select %780, %778, %781 : vector<8x1024xi1>, vector<8x1024xf32>
    %c32_i32_293 = arith.constant 32 : i32
    %783 = tpu.dynamic_rotate %777 by %c32_i32_293 dim 1 : vector<8x1024xf32>, i32 -> vector<8x1024xf32>
    %cst_294 = arith.constant 0.000000e+00 : f32
    %784 = vector.shape_cast %418 : vector<1x1024xi1> to vector<1x1024xi1>
    %785 = vector.broadcast %784 : vector<1x1024xi1> to vector<8x1024xi1>
    %786 = vector.broadcast %cst_294 : f32 to vector<8x1024xf32>
    %787 = arith.select %785, %783, %786 : vector<8x1024xi1>, vector<8x1024xf32>
    %c31_i32_295 = arith.constant 31 : i32
    %788 = tpu.dynamic_rotate %777 by %c31_i32_295 dim 1 : vector<8x1024xf32>, i32 -> vector<8x1024xf32>
    %cst_296 = arith.constant 0.000000e+00 : f32
    %789 = vector.shape_cast %426 : vector<1x1024xi1> to vector<1x1024xi1>
    %790 = vector.broadcast %789 : vector<1x1024xi1> to vector<8x1024xi1>
    %791 = vector.broadcast %cst_296 : f32 to vector<8x1024xf32>
    %792 = arith.select %790, %788, %791 : vector<8x1024xi1>, vector<8x1024xf32>
    %c1_i32_297 = arith.constant 1 : i32
    %793 = tpu.dynamic_rotate %777 by %c1_i32_297 dim 1 : vector<8x1024xf32>, i32 -> vector<8x1024xf32>
    %cst_298 = arith.constant 0.000000e+00 : f32
    %794 = vector.shape_cast %422 : vector<1x1024xi1> to vector<1x1024xi1>
    %795 = vector.broadcast %794 : vector<1x1024xi1> to vector<8x1024xi1>
    %796 = vector.broadcast %cst_298 : f32 to vector<8x1024xf32>
    %797 = arith.select %795, %793, %796 : vector<8x1024xi1>, vector<8x1024xf32>
    %c1023_i32_299 = arith.constant 1023 : i32
    %798 = tpu.dynamic_rotate %777 by %c1023_i32_299 dim 1 : vector<8x1024xf32>, i32 -> vector<8x1024xf32>
    %cst_300 = arith.constant 0.000000e+00 : f32
    %799 = vector.shape_cast %424 : vector<1x1024xi1> to vector<1x1024xi1>
    %800 = vector.broadcast %799 : vector<1x1024xi1> to vector<8x1024xi1>
    %801 = vector.broadcast %cst_300 : f32 to vector<8x1024xf32>
    %802 = arith.select %800, %798, %801 : vector<8x1024xi1>, vector<8x1024xf32>
    %c993_i32_301 = arith.constant 993 : i32
    %803 = tpu.dynamic_rotate %777 by %c993_i32_301 dim 1 : vector<8x1024xf32>, i32 -> vector<8x1024xf32>
    %cst_302 = arith.constant 0.000000e+00 : f32
    %804 = vector.shape_cast %427 : vector<1x1024xi1> to vector<1x1024xi1>
    %805 = vector.broadcast %804 : vector<1x1024xi1> to vector<8x1024xi1>
    %806 = vector.broadcast %cst_302 : f32 to vector<8x1024xf32>
    %807 = arith.select %805, %803, %806 : vector<8x1024xi1>, vector<8x1024xf32>
    %c992_i32_303 = arith.constant 992 : i32
    %808 = tpu.dynamic_rotate %777 by %c992_i32_303 dim 1 : vector<8x1024xf32>, i32 -> vector<8x1024xf32>
    %cst_304 = arith.constant 0.000000e+00 : f32
    %809 = vector.shape_cast %420 : vector<1x1024xi1> to vector<1x1024xi1>
    %810 = vector.broadcast %809 : vector<1x1024xi1> to vector<8x1024xi1>
    %811 = vector.broadcast %cst_304 : f32 to vector<8x1024xf32>
    %812 = arith.select %810, %808, %811 : vector<8x1024xi1>, vector<8x1024xf32>
    %c991_i32_305 = arith.constant 991 : i32
    %813 = tpu.dynamic_rotate %777 by %c991_i32_305 dim 1 : vector<8x1024xf32>, i32 -> vector<8x1024xf32>
    %cst_306 = arith.constant 0.000000e+00 : f32
    %814 = vector.shape_cast %428 : vector<1x1024xi1> to vector<1x1024xi1>
    %815 = vector.broadcast %814 : vector<1x1024xi1> to vector<8x1024xi1>
    %816 = vector.broadcast %cst_306 : f32 to vector<8x1024xf32>
    %817 = arith.select %815, %813, %816 : vector<8x1024xi1>, vector<8x1024xf32>
    %818 = tpu.concatenate %782, %787, %792, %797, %777, %802, %807, %812, %817 in 0 : vector<8x1024xf32>, vector<8x1024xf32>, vector<8x1024xf32>, vector<8x1024xf32>, vector<8x1024xf32>, vector<8x1024xf32>, vector<8x1024xf32>, vector<8x1024xf32>, vector<8x1024xf32> -> vector<72x1024xf32>
    %819 = arith.truncf %818 : vector<72x1024xf32> to vector<72x1024xbf16>
    %c0_307 = arith.constant 0 : index
    %c0_308 = arith.constant 0 : index
    %820 = vector.load %arg24[%c0_307, %c0_308] : memref<8x72xbf16, #tpu.memory_space<vmem>>, vector<8x72xbf16>
    %cst_309 = arith.constant dense<0.000000e+00> : vector<8x1024xf32>
    %821 = tpu.matmul %820, %819, %cst_309 {dimension_numbers = #tpu.dot_dimension_numbers<[1], [0], [0], [1], [0, 0, 1, 1], [], []>} : vector<8x72xbf16>, vector<72x1024xbf16>, vector<8x1024xf32> -> vector<8x1024xf32>
    %c0_310 = arith.constant 0 : index
    %c0_311 = arith.constant 0 : index
    %822 = vector.load %arg25[%c0_310, %c0_311] : memref<8x1xf32, #tpu.memory_space<vmem>>, vector<8x1xf32>
    %823 = vector.broadcast %822 : vector<8x1xf32> to vector<8x1024xf32>
    %824 = arith.addf %821, %823 : vector<8x1024xf32>
    %825 = arith.addf %481, %824 : vector<8x1024xf32>
    %c33_i32_312 = arith.constant 33 : i32
    %826 = tpu.dynamic_rotate %825 by %c33_i32_312 dim 1 : vector<8x1024xf32>, i32 -> vector<8x1024xf32>
    %cst_313 = arith.constant 0.000000e+00 : f32
    %827 = vector.shape_cast %425 : vector<1x1024xi1> to vector<1x1024xi1>
    %828 = vector.broadcast %827 : vector<1x1024xi1> to vector<8x1024xi1>
    %829 = vector.broadcast %cst_313 : f32 to vector<8x1024xf32>
    %830 = arith.select %828, %826, %829 : vector<8x1024xi1>, vector<8x1024xf32>
    %c32_i32_314 = arith.constant 32 : i32
    %831 = tpu.dynamic_rotate %825 by %c32_i32_314 dim 1 : vector<8x1024xf32>, i32 -> vector<8x1024xf32>
    %cst_315 = arith.constant 0.000000e+00 : f32
    %832 = vector.shape_cast %418 : vector<1x1024xi1> to vector<1x1024xi1>
    %833 = vector.broadcast %832 : vector<1x1024xi1> to vector<8x1024xi1>
    %834 = vector.broadcast %cst_315 : f32 to vector<8x1024xf32>
    %835 = arith.select %833, %831, %834 : vector<8x1024xi1>, vector<8x1024xf32>
    %c31_i32_316 = arith.constant 31 : i32
    %836 = tpu.dynamic_rotate %825 by %c31_i32_316 dim 1 : vector<8x1024xf32>, i32 -> vector<8x1024xf32>
    %cst_317 = arith.constant 0.000000e+00 : f32
    %837 = vector.shape_cast %426 : vector<1x1024xi1> to vector<1x1024xi1>
    %838 = vector.broadcast %837 : vector<1x1024xi1> to vector<8x1024xi1>
    %839 = vector.broadcast %cst_317 : f32 to vector<8x1024xf32>
    %840 = arith.select %838, %836, %839 : vector<8x1024xi1>, vector<8x1024xf32>
    %c1_i32_318 = arith.constant 1 : i32
    %841 = tpu.dynamic_rotate %825 by %c1_i32_318 dim 1 : vector<8x1024xf32>, i32 -> vector<8x1024xf32>
    %cst_319 = arith.constant 0.000000e+00 : f32
    %842 = vector.shape_cast %422 : vector<1x1024xi1> to vector<1x1024xi1>
    %843 = vector.broadcast %842 : vector<1x1024xi1> to vector<8x1024xi1>
    %844 = vector.broadcast %cst_319 : f32 to vector<8x1024xf32>
    %845 = arith.select %843, %841, %844 : vector<8x1024xi1>, vector<8x1024xf32>
    %c1023_i32_320 = arith.constant 1023 : i32
    %846 = tpu.dynamic_rotate %825 by %c1023_i32_320 dim 1 : vector<8x1024xf32>, i32 -> vector<8x1024xf32>
    %cst_321 = arith.constant 0.000000e+00 : f32
    %847 = vector.shape_cast %424 : vector<1x1024xi1> to vector<1x1024xi1>
    %848 = vector.broadcast %847 : vector<1x1024xi1> to vector<8x1024xi1>
    %849 = vector.broadcast %cst_321 : f32 to vector<8x1024xf32>
    %850 = arith.select %848, %846, %849 : vector<8x1024xi1>, vector<8x1024xf32>
    %c993_i32_322 = arith.constant 993 : i32
    %851 = tpu.dynamic_rotate %825 by %c993_i32_322 dim 1 : vector<8x1024xf32>, i32 -> vector<8x1024xf32>
    %cst_323 = arith.constant 0.000000e+00 : f32
    %852 = vector.shape_cast %427 : vector<1x1024xi1> to vector<1x1024xi1>
    %853 = vector.broadcast %852 : vector<1x1024xi1> to vector<8x1024xi1>
    %854 = vector.broadcast %cst_323 : f32 to vector<8x1024xf32>
    %855 = arith.select %853, %851, %854 : vector<8x1024xi1>, vector<8x1024xf32>
    %c992_i32_324 = arith.constant 992 : i32
    %856 = tpu.dynamic_rotate %825 by %c992_i32_324 dim 1 : vector<8x1024xf32>, i32 -> vector<8x1024xf32>
    %cst_325 = arith.constant 0.000000e+00 : f32
    %857 = vector.shape_cast %420 : vector<1x1024xi1> to vector<1x1024xi1>
    %858 = vector.broadcast %857 : vector<1x1024xi1> to vector<8x1024xi1>
    %859 = vector.broadcast %cst_325 : f32 to vector<8x1024xf32>
    %860 = arith.select %858, %856, %859 : vector<8x1024xi1>, vector<8x1024xf32>
    %c991_i32_326 = arith.constant 991 : i32
    %861 = tpu.dynamic_rotate %825 by %c991_i32_326 dim 1 : vector<8x1024xf32>, i32 -> vector<8x1024xf32>
    %cst_327 = arith.constant 0.000000e+00 : f32
    %862 = vector.shape_cast %428 : vector<1x1024xi1> to vector<1x1024xi1>
    %863 = vector.broadcast %862 : vector<1x1024xi1> to vector<8x1024xi1>
    %864 = vector.broadcast %cst_327 : f32 to vector<8x1024xf32>
    %865 = arith.select %863, %861, %864 : vector<8x1024xi1>, vector<8x1024xf32>
    %866 = tpu.concatenate %830, %835, %840, %845, %825, %850, %855, %860, %865 in 0 : vector<8x1024xf32>, vector<8x1024xf32>, vector<8x1024xf32>, vector<8x1024xf32>, vector<8x1024xf32>, vector<8x1024xf32>, vector<8x1024xf32>, vector<8x1024xf32>, vector<8x1024xf32> -> vector<72x1024xf32>
    %867 = arith.truncf %866 : vector<72x1024xf32> to vector<72x1024xbf16>
    %c0_328 = arith.constant 0 : index
    %c0_329 = arith.constant 0 : index
    %868 = vector.load %arg26[%c0_328, %c0_329] : memref<1x72xbf16, #tpu.memory_space<vmem>>, vector<1x72xbf16>
    %cst_330 = arith.constant dense<0.000000e+00> : vector<1x1024xf32>
    %869 = tpu.matmul %868, %867, %cst_330 {dimension_numbers = #tpu.dot_dimension_numbers<[1], [0], [0], [1], [0, 0, 1, 1], [], []>} : vector<1x72xbf16>, vector<72x1024xbf16>, vector<1x1024xf32> -> vector<1x1024xf32>
    %c0_331 = arith.constant 0 : index
    %c0_332 = arith.constant 0 : index
    %870 = vector.load %arg27[%c0_331, %c0_332] : memref<1x1xf32, #tpu.memory_space<vmem>>, vector<1x1xf32>
    %871 = vector.broadcast %870 : vector<1x1xf32> to vector<1x1024xf32>
    %872 = arith.addf %869, %871 : vector<1x1024xf32>
    %c0_333 = arith.constant 0 : index
    %c0_334 = arith.constant 0 : index
    %c0_335 = arith.constant 0 : index
    %873 = vector.load %arg28[%c0_333, %c0_334, %c0_335] : memref<1x1x1024xf32, #tpu.memory_space<vmem>>, vector<1x1x1024xf32>
    %874 = vector.shape_cast %873 : vector<1x1x1024xf32> to vector<1x1024xf32>
    %875 = vector.shape_cast %872 : vector<1x1024xf32> to vector<1x1x1024xf32>
    tpu.vector_store %arg28[%c0_333, %c0_334, %c0_335], %875 {strides = array<i32>} : memref<1x1x1024xf32, #tpu.memory_space<vmem>>, vector<1x1x1024xf32>,
    return
  }
  func.func @transform_0(%arg0: i32) -> (i32, i32, i32) {
    %c0_i32 = arith.constant 0 : i32
    %c0_i32_0 = arith.constant 0 : i32
    %c0_i32_1 = arith.constant 0 : i32
    return %arg0, %c0_i32, %c0_i32_0 : i32, i32, i32
  }
  func.func @transform_1(%arg0: i32) -> (i32, i32, i32) {
    %c0_i32 = arith.constant 0 : i32
    %c0_i32_0 = arith.constant 0 : i32
    %c0_i32_1 = arith.constant 0 : i32
    return %arg0, %c0_i32, %c0_i32_0 : i32, i32, i32
  }
  func.func @transform_2(%arg0: i32) -> (i32, i32, i32) {
    %c0_i32 = arith.constant 0 : i32
    %c0_i32_0 = arith.constant 0 : i32
    %c0_i32_1 = arith.constant 0 : i32
    return %arg0, %c0_i32, %c0_i32_0 : i32, i32, i32
  }
  func.func @transform_3(%arg0: i32) -> (i32, i32) {
    %c0_i32 = arith.constant 0 : i32
    %c0_i32_0 = arith.constant 0 : i32
    %c0_i32_1 = arith.constant 0 : i32
    return %c0_i32, %c0_i32_0 : i32, i32
  }
  func.func @transform_4(%arg0: i32) -> (i32, i32) {
    %c0_i32 = arith.constant 0 : i32
    %c0_i32_0 = arith.constant 0 : i32
    %c0_i32_1 = arith.constant 0 : i32
    return %c0_i32, %c0_i32_0 : i32, i32
  }
  func.func @transform_5(%arg0: i32) -> (i32, i32) {
    %c0_i32 = arith.constant 0 : i32
    %c0_i32_0 = arith.constant 0 : i32
    %c0_i32_1 = arith.constant 0 : i32
    return %c0_i32, %c0_i32_0 : i32, i32
  }
  func.func @transform_6(%arg0: i32) -> (i32, i32) {
    %c0_i32 = arith.constant 0 : i32
    %c0_i32_0 = arith.constant 0 : i32
    %c0_i32_1 = arith.constant 0 : i32
    return %c0_i32, %c0_i32_0 : i32, i32
  }
  func.func @transform_7(%arg0: i32) -> (i32, i32) {
    %c0_i32 = arith.constant 0 : i32
    %c0_i32_0 = arith.constant 0 : i32
    %c0_i32_1 = arith.constant 0 : i32
    return %c0_i32, %c0_i32_0 : i32, i32
  }
  func.func @transform_8(%arg0: i32) -> (i32, i32) {
    %c0_i32 = arith.constant 0 : i32
    %c0_i32_0 = arith.constant 0 : i32
    %c0_i32_1 = arith.constant 0 : i32
    return %c0_i32, %c0_i32_0 : i32, i32
  }
  func.func @transform_9(%arg0: i32) -> (i32, i32) {
    %c0_i32 = arith.constant 0 : i32
    %c0_i32_0 = arith.constant 0 : i32
    %c0_i32_1 = arith.constant 0 : i32
    return %c0_i32, %c0_i32_0 : i32, i32
  }
  func.func @transform_10(%arg0: i32) -> (i32, i32) {
    %c0_i32 = arith.constant 0 : i32
    %c0_i32_0 = arith.constant 0 : i32
    %c0_i32_1 = arith.constant 0 : i32
    return %c0_i32, %c0_i32_0 : i32, i32
  }
  func.func @transform_11(%arg0: i32) -> (i32, i32) {
    %c0_i32 = arith.constant 0 : i32
    %c0_i32_0 = arith.constant 0 : i32
    %c0_i32_1 = arith.constant 0 : i32
    return %c0_i32, %c0_i32_0 : i32, i32
  }
  func.func @transform_12(%arg0: i32) -> (i32, i32) {
    %c0_i32 = arith.constant 0 : i32
    %c0_i32_0 = arith.constant 0 : i32
    %c0_i32_1 = arith.constant 0 : i32
    return %c0_i32, %c0_i32_0 : i32, i32
  }
  func.func @transform_13(%arg0: i32) -> (i32, i32) {
    %c0_i32 = arith.constant 0 : i32
    %c0_i32_0 = arith.constant 0 : i32
    %c0_i32_1 = arith.constant 0 : i32
    return %c0_i32, %c0_i32_0 : i32, i32
  }
  func.func @transform_14(%arg0: i32) -> (i32, i32) {
    %c0_i32 = arith.constant 0 : i32
    %c0_i32_0 = arith.constant 0 : i32
    %c0_i32_1 = arith.constant 0 : i32
    return %c0_i32, %c0_i32_0 : i32, i32
  }
  func.func @transform_15(%arg0: i32) -> (i32, i32) {
    %c0_i32 = arith.constant 0 : i32
    %c0_i32_0 = arith.constant 0 : i32
    %c0_i32_1 = arith.constant 0 : i32
    return %c0_i32, %c0_i32_0 : i32, i32
  }
  func.func @transform_16(%arg0: i32) -> (i32, i32) {
    %c0_i32 = arith.constant 0 : i32
    %c0_i32_0 = arith.constant 0 : i32
    %c0_i32_1 = arith.constant 0 : i32
    return %c0_i32, %c0_i32_0 : i32, i32
  }
  func.func @transform_17(%arg0: i32) -> (i32, i32) {
    %c0_i32 = arith.constant 0 : i32
    %c0_i32_0 = arith.constant 0 : i32
    %c0_i32_1 = arith.constant 0 : i32
    return %c0_i32, %c0_i32_0 : i32, i32
  }
  func.func @transform_18(%arg0: i32) -> (i32, i32) {
    %c0_i32 = arith.constant 0 : i32
    %c0_i32_0 = arith.constant 0 : i32
    %c0_i32_1 = arith.constant 0 : i32
    return %c0_i32, %c0_i32_0 : i32, i32
  }
  func.func @transform_19(%arg0: i32) -> (i32, i32) {
    %c0_i32 = arith.constant 0 : i32
    %c0_i32_0 = arith.constant 0 : i32
    %c0_i32_1 = arith.constant 0 : i32
    return %c0_i32, %c0_i32_0 : i32, i32
  }
  func.func @transform_20(%arg0: i32) -> (i32, i32) {
    %c0_i32 = arith.constant 0 : i32
    %c0_i32_0 = arith.constant 0 : i32
    %c0_i32_1 = arith.constant 0 : i32
    return %c0_i32, %c0_i32_0 : i32, i32
  }
  func.func @transform_21(%arg0: i32) -> (i32, i32) {
    %c0_i32 = arith.constant 0 : i32
    %c0_i32_0 = arith.constant 0 : i32
    %c0_i32_1 = arith.constant 0 : i32
    return %c0_i32, %c0_i32_0 : i32, i32
  }
  func.func @transform_22(%arg0: i32) -> (i32, i32) {
    %c0_i32 = arith.constant 0 : i32
    %c0_i32_0 = arith.constant 0 : i32
    %c0_i32_1 = arith.constant 0 : i32
    return %c0_i32, %c0_i32_0 : i32, i32
  }
  func.func @transform_23(%arg0: i32) -> (i32, i32) {
    %c0_i32 = arith.constant 0 : i32
    %c0_i32_0 = arith.constant 0 : i32
    %c0_i32_1 = arith.constant 0 : i32
    return %c0_i32, %c0_i32_0 : i32, i32
  }
  func.func @transform_24(%arg0: i32) -> (i32, i32) {
    %c0_i32 = arith.constant 0 : i32
    %c0_i32_0 = arith.constant 0 : i32
    %c0_i32_1 = arith.constant 0 : i32
    return %c0_i32, %c0_i32_0 : i32, i32
  }
  func.func @transform_25(%arg0: i32) -> (i32, i32) {
    %c0_i32 = arith.constant 0 : i32
    %c0_i32_0 = arith.constant 0 : i32
    %c0_i32_1 = arith.constant 0 : i32
    return %c0_i32, %c0_i32_0 : i32, i32
  }
  func.func @transform_26(%arg0: i32) -> (i32, i32) {
    %c0_i32 = arith.constant 0 : i32
    %c0_i32_0 = arith.constant 0 : i32
    %c0_i32_1 = arith.constant 0 : i32
    return %c0_i32, %c0_i32_0 : i32, i32
  }
  func.func @transform_27(%arg0: i32) -> (i32, i32, i32) {
    %c0_i32 = arith.constant 0 : i32
    %c0_i32_0 = arith.constant 0 : i32
    %c0_i32_1 = arith.constant 0 : i32
    return %arg0, %c0_i32, %c0_i32_0 : i32, i32, i32
  }
}

</mosaic_0001>

<llo_original>
// kernel: punetg_decoder_forward.1
$region0: #{punetg_decoder_forward.1}
  #allocation0 [shape = 'u32[]', space=smem, size = 0x4, offset = 0x4, fixed_abs, tag = 'smem constant byte address 0x4 - core index']
  #allocation1 [shape = 'u32[144,128]{1,0:T(1,128)}', space=vmem, size = 0x12000, scoped, tag = 'internal scratch']
  #allocation2 [shape = 'f32[1,1]{1,0:T(1,128)S(1)}', space=vmem, size = 0x200, scoped, tag = 'scoped memory for punetg_decoder_forward.1']
  %s0 = inlined_call_operand.vmem [shape: f32[2,32,64], index: 0, kind: input, shape index: {}]
  %s1 = inlined_call_operand.vmem [shape: f32[2,16,256], index: 1, kind: input, shape index: {}]
  %s2 = inlined_call_operand.vmem [shape: f32[2,8,1024], index: 2, kind: input, shape index: {}]
  %s3 = inlined_call_operand.vmem [shape: bf16[64,256], index: 3, kind: input, shape index: {}]
  %s4 = inlined_call_operand.vmem [shape: bf16[16,288], index: 4, kind: input, shape index: {}]
  %s5 = inlined_call_operand.vmem [shape: f32[16,1], index: 5, kind: input, shape index: {}]
  %s6 = inlined_call_operand.vmem [shape: f32[16,1], index: 6, kind: input, shape index: {}]
  %s7 = inlined_call_operand.vmem [shape: f32[16,1], index: 7, kind: input, shape index: {}]
  %s8 = inlined_call_operand.vmem [shape: bf16[16,144], index: 8, kind: input, shape index: {}]
  %s9 = inlined_call_operand.vmem [shape: f32[16,1], index: 9, kind: input, shape index: {}]
  %s10 = inlined_call_operand.vmem [shape: f32[16,1], index: 10, kind: input, shape index: {}]
  %s11 = inlined_call_operand.vmem [shape: f32[16,1], index: 11, kind: input, shape index: {}]
  %s12 = inlined_call_operand.vmem [shape: bf16[16,144], index: 12, kind: input, shape index: {}]
  %s13 = inlined_call_operand.vmem [shape: f32[16,1], index: 13, kind: input, shape index: {}]
  %s14 = inlined_call_operand.vmem [shape: bf16[256,1024], index: 14, kind: input, shape index: {}]
  %s15 = inlined_call_operand.vmem [shape: bf16[8,144], index: 15, kind: input, shape index: {}]
  %s16 = inlined_call_operand.vmem [shape: f32[8,1], index: 16, kind: input, shape index: {}]
  %s17 = inlined_call_operand.vmem [shape: f32[8,1], index: 17, kind: input, shape index: {}]
  %s18 = inlined_call_operand.vmem [shape: f32[8,1], index: 18, kind: input, shape index: {}]
  %s19 = inlined_call_operand.vmem [shape: bf16[8,72], index: 19, kind: input, shape index: {}]
  %s20 = inlined_call_operand.vmem [shape: f32[8,1], index: 20, kind: input, shape index: {}]
  %s21 = inlined_call_operand.vmem [shape: f32[8,1], index: 21, kind: input, shape index: {}]
  %s22 = inlined_call_operand.vmem [shape: f32[8,1], index: 22, kind: input, shape index: {}]
  %s23 = inlined_call_operand.vmem [shape: bf16[8,72], index: 23, kind: input, shape index: {}]
  %s24 = inlined_call_operand.vmem [shape: f32[8,1], index: 24, kind: input, shape index: {}]
  %s25 = inlined_call_operand.vmem [shape: bf16[1,72], index: 25, kind: input, shape index: {}]
  %s26 = inlined_call_operand.<no memory space> [shape: f32[1,1], index: 26, kind: input, shape index: {}]
  %s27 = inlined_call_operand.vmem [shape: f32[2,1,1024], index: 27, kind: output, shape index: {}]
  %s28 = sld [smem:[#allocation0]]
  $region141: #{punetg_decoder_forward.1} parent=0
    _
  %s30 = ssub.s32 1, %s28
  %s31 = scalar_select 0, %s30, %s28
  %v32 = vstv %s26
  %33 = vst [vmem:[#allocation2] sm:$0x1] %v32
  loop: start=0, step=1, limit=4
  $region2: #{punetg_decoder_forward.1} parent=0 // loop_pre_header
    _
  $region3: #{punetg_decoder_forward.1} parent=0 // loop_header
    %s35 = sphi 0, %s39
    %p36 = scmp.ge.s32.totalorder %s35, 4
    %s45 = sphi 0, %s47
    %s48 = sphi 0, %s45
    %s49 = sphi 0, %s48
    %s65 = sphi 0, %s49
    %s71 = sphi 0, %s73
    %s74 = sphi 0, %s71
    %s75 = sphi 0, %s74
    %s91 = sphi 0, %s75
    %s97 = sphi 0, %s99
    %s100 = sphi 0, %s97
    %s101 = sphi 0, %s100
    %s117 = sphi 0, %s101
    %s121 = sphi 0, %s121
    %s123 = sphi 0, %s121
    %s124 = sphi 0, %s123
    %s138 = sphi 0, %s124
    %s142 = sphi 0, %s142
    %s144 = sphi 0, %s142
    %s145 = sphi 0, %s144
    %s159 = sphi 0, %s145
    %s163 = sphi 0, %s163
    %s165 = sphi 0, %s163
    %s166 = sphi 0, %s165
    %s180 = sphi 0, %s166
    %s184 = sphi 0, %s184
    %s186 = sphi 0, %s184
    %s187 = sphi 0, %s186
    %s201 = sphi 0, %s187
    %s205 = sphi 0, %s205
    %s207 = sphi 0, %s205
    %s208 = sphi 0, %s207
    %s222 = sphi 0, %s208
    %s226 = sphi 0, %s226
    %s228 = sphi 0, %s226
    %s229 = sphi 0, %s228
    %s243 = sphi 0, %s229
    %s247 = sphi 0, %s247
    %s249 = sphi 0, %s247
    %s250 = sphi 0, %s249
    %s264 = sphi 0, %s250
    %s268 = sphi 0, %s268
    %s270 = sphi 0, %s268
    %s271 = sphi 0, %s270
    %s285 = sphi 0, %s271
    %s289 = sphi 0, %s289
    %s291 = sphi 0, %s289
    %s292 = sphi 0, %s291
    %s306 = sphi 0, %s292
    %s310 = sphi 0, %s310
    %s312 = sphi 0, %s310
    %s313 = sphi 0, %s312
    %s327 = sphi 0, %s313
    %s331 = sphi 0, %s331
    %s333 = sphi 0, %s331
    %s334 = sphi 0, %s333
    %s348 = sphi 0, %s334
    %s352 = sphi 0, %s352
    %s354 = sphi 0, %s352
    %s355 = sphi 0, %s354
    %s369 = sphi 0, %s355
    %s373 = sphi 0, %s373
    %s375 = sphi 0, %s373
    %s376 = sphi 0, %s375
    %s390 = sphi 0, %s376
    %s394 = sphi 0, %s394
    %s396 = sphi 0, %s394
    %s397 = sphi 0, %s396
    %s411 = sphi 0, %s397
    %s415 = sphi 0, %s415
    %s417 = sphi 0, %s415
    %s418 = sphi 0, %s417
    %s432 = sphi 0, %s418
    %s436 = sphi 0, %s436
    %s438 = sphi 0, %s436
    %s439 = sphi 0, %s438
    %s453 = sphi 0, %s439
    %s457 = sphi 0, %s457
    %s459 = sphi 0, %s457
    %s460 = sphi 0, %s459
    %s474 = sphi 0, %s460
    %s478 = sphi 0, %s478
    %s480 = sphi 0, %s478
    %s481 = sphi 0, %s480
    %s495 = sphi 0, %s481
    %s499 = sphi 0, %s499
    %s501 = sphi 0, %s499
    %s502 = sphi 0, %s501
    %s516 = sphi 0, %s502
    %s520 = sphi 0, %s520
    %s522 = sphi 0, %s520
    %s523 = sphi 0, %s522
    %s537 = sphi 0, %s523
    %s541 = sphi 0, %s541
    %s543 = sphi 0, %s541
    %s544 = sphi 0, %s543
    %s558 = sphi 0, %s544
    %s562 = sphi 0, %s562
    %s564 = sphi 0, %s562
    %s565 = sphi 0, %s564
    %s579 = sphi 0, %s565
    %s583 = sphi 0, %s583
    %s585 = sphi 0, %s583
    %s586 = sphi 0, %s585
    %s600 = sphi 0, %s586
    %s604 = sphi 0, %s604
    %s606 = sphi 0, %s604
    %s607 = sphi 0, %s606
    %s621 = sphi 0, %s607
    %s627 = sphi 0, %s629
    %s630 = sphi 0, %s627
    %s631 = sphi 0, %s630
    %s647 = sphi 0, %s631
  $region4: #{punetg_decoder_forward.1} parent=0 // loop_header_branch
    %38 = sbr.rel (%p36) target = $region8
  $region5: #{punetg_decoder_forward.1} parent=0 // loop_body
    %s40 = ssub.s32 %s35, 1
    %s41 = ssub.s32 %s35, 2
    %s42 = sadd.s32 %s35, 1
    %s43 = ssub.s32 %s35, %s42
    %p44 = scmp.eq.s32.totalorder %s43, 0
    %s46 = sadd.s32 %s45, 1
    %s47 = scalar_select %p44, %s45, %s46
    %p50 = pneg %p44
    %p51 = scmp.eq.s32.totalorder %s35, 1
    %p52 = por %p50, %p51
    %p53 = scmp.ne.s32.totalorder %s45, %s48
    %p54 = scmp.eq.s32.totalorder %s35, 0
    %p55 = por %p53, %p54
    %p56 = scmp.ne.s32.totalorder %s45, %s48
    %p57 = scmp.eq.s32.totalorder %s40, 1
    %p58 = por %p56, %p57
    %p59 = scmp.ne.s32.totalorder %s48, %s49
    %p60 = scmp.eq.s32.totalorder %s40, 0
    %p61 = por %p59, %p60
    %p62 = scmp.ne.s32.totalorder %s48, %s49
    %p63 = scmp.eq.s32.totalorder %s41, 1
    %p64 = por %p62, %p63
    %p66 = scmp.ne.s32.totalorder %s49, %s65
    %p67 = scmp.eq.s32.totalorder %s41, 0
    %p68 = por %p66, %p67
    %s69 = ssub.s32 %s35, %s42
    %p70 = scmp.eq.s32.totalorder %s69, 0
    %s72 = sadd.s32 %s71, 1
    %s73 = scalar_select %p70, %s71, %s72
    %p76 = pneg %p70
    %p77 = scmp.eq.s32.totalorder %s35, 1
    %p78 = por %p76, %p77
    %p79 = scmp.ne.s32.totalorder %s71, %s74
    %p80 = scmp.eq.s32.totalorder %s35, 0
    %p81 = por %p79, %p80
    %p82 = scmp.ne.s32.totalorder %s71, %s74
    %p83 = scmp.eq.s32.totalorder %s40, 1
    %p84 = por %p82, %p83
    %p85 = scmp.ne.s32.totalorder %s74, %s75
    %p86 = scmp.eq.s32.totalorder %s40, 0
    %p87 = por %p85, %p86
    %p88 = scmp.ne.s32.totalorder %s74, %s75
    %p89 = scmp.eq.s32.totalorder %s41, 1
    %p90 = por %p88, %p89
    %p92 = scmp.ne.s32.totalorder %s75, %s91
    %p93 = scmp.eq.s32.totalorder %s41, 0
    %p94 = por %p92, %p93
    %s95 = ssub.s32 %s35, %s42
    %p96 = scmp.eq.s32.totalorder %s95, 0
    %s98 = sadd.s32 %s97, 1
    %s99 = scalar_select %p96, %s97, %s98
    %p102 = pneg %p96
    %p103 = scmp.eq.s32.totalorder %s35, 1
    %p104 = por %p102, %p103
    %p105 = scmp.ne.s32.totalorder %s97, %s100
    %p106 = scmp.eq.s32.totalorder %s35, 0
    %p107 = por %p105, %p106
    %p108 = scmp.ne.s32.totalorder %s97, %s100
    %p109 = scmp.eq.s32.totalorder %s40, 1
    %p110 = por %p108, %p109
    %p111 = scmp.ne.s32.totalorder %s100, %s101
    %p112 = scmp.eq.s32.totalorder %s40, 0
    %p113 = por %p111, %p112
    %p114 = scmp.ne.s32.totalorder %s100, %s101
    %p115 = scmp.eq.s32.totalorder %s41, 1
    %p116 = por %p114, %p115
    %p118 = scmp.ne.s32.totalorder %s101, %s117
    %p119 = scmp.eq.s32.totalorder %s41, 0
    %p120 = por %p118, %p119
    %s122 = sadd.s32 %s121, 1
    %p125 = scmp.eq.s32.totalorder %s35, 1
    %p126 = scmp.ne.s32.totalorder %s121, %s123
    %p127 = scmp.eq.s32.totalorder %s35, 0
    %p128 = por %p126, %p127
    %p129 = scmp.ne.s32.totalorder %s121, %s123
    %p130 = scmp.eq.s32.totalorder %s40, 1
    %p131 = por %p129, %p130
    %p132 = scmp.ne.s32.totalorder %s123, %s124
    %p133 = scmp.eq.s32.totalorder %s40, 0
    %p134 = por %p132, %p133
    %p135 = scmp.ne.s32.totalorder %s123, %s124
    %p136 = scmp.eq.s32.totalorder %s41, 1
    %p137 = por %p135, %p136
    %p139 = scmp.ne.s32.totalorder %s124, %s138
    %p140 = scmp.eq.s32.totalorder %s41, 0
    %p141 = por %p139, %p140
    %s143 = sadd.s32 %s142, 1
    %p146 = scmp.eq.s32.totalorder %s35, 1
    %p147 = scmp.ne.s32.totalorder %s142, %s144
    %p148 = scmp.eq.s32.totalorder %s35, 0
    %p149 = por %p147, %p148
    %p150 = scmp.ne.s32.totalorder %s142, %s144
    %p151 = scmp.eq.s32.totalorder %s40, 1
    %p152 = por %p150, %p151
    %p153 = scmp.ne.s32.totalorder %s144, %s145
    %p154 = scmp.eq.s32.totalorder %s40, 0
    %p155 = por %p153, %p154
    %p156 = scmp.ne.s32.totalorder %s144, %s145
    %p157 = scmp.eq.s32.totalorder %s41, 1
    %p158 = por %p156, %p157
    %p160 = scmp.ne.s32.totalorder %s145, %s159
    %p161 = scmp.eq.s32.totalorder %s41, 0
    %p162 = por %p160, %p161
    %s164 = sadd.s32 %s163, 1
    %p167 = scmp.eq.s32.totalorder %s35, 1
    %p168 = scmp.ne.s32.totalorder %s163, %s165
    %p169 = scmp.eq.s32.totalorder %s35, 0
    %p170 = por %p168, %p169
    %p171 = scmp.ne.s32.totalorder %s163, %s165
    %p172 = scmp.eq.s32.totalorder %s40, 1
    %p173 = por %p171, %p172
    %p174 = scmp.ne.s32.totalorder %s165, %s166
    %p175 = scmp.eq.s32.totalorder %s40, 0
    %p176 = por %p174, %p175
    %p177 = scmp.ne.s32.totalorder %s165, %s166
    %p178 = scmp.eq.s32.totalorder %s41, 1
    %p179 = por %p177, %p178
    %p181 = scmp.ne.s32.totalorder %s166, %s180
    %p182 = scmp.eq.s32.totalorder %s41, 0
    %p183 = por %p181, %p182
    %s185 = sadd.s32 %s184, 1
    %p188 = scmp.eq.s32.totalorder %s35, 1
    %p189 = scmp.ne.s32.totalorder %s184, %s186
    %p190 = scmp.eq.s32.totalorder %s35, 0
    %p191 = por %p189, %p190
    %p192 = scmp.ne.s32.totalorder %s184, %s186
    %p193 = scmp.eq.s32.totalorder %s40, 1
    %p194 = por %p192, %p193
    %p195 = scmp.ne.s32.totalorder %s186, %s187
    %p196 = scmp.eq.s32.totalorder %s40, 0
    %p197 = por %p195, %p196
    %p198 = scmp.ne.s32.totalorder %s186, %s187
    %p199 = scmp.eq.s32.totalorder %s41, 1
    %p200 = por %p198, %p199
    %p202 = scmp.ne.s32.totalorder %s187, %s201
    %p203 = scmp.eq.s32.totalorder %s41, 0
    %p204 = por %p202, %p203
    %s206 = sadd.s32 %s205, 1
    %p209 = scmp.eq.s32.totalorder %s35, 1
    %p210 = scmp.ne.s32.totalorder %s205, %s207
    %p211 = scmp.eq.s32.totalorder %s35, 0
    %p212 = por %p210, %p211
    %p213 = scmp.ne.s32.totalorder %s205, %s207
    %p214 = scmp.eq.s32.totalorder %s40, 1
    %p215 = por %p213, %p214
    %p216 = scmp.ne.s32.totalorder %s207, %s208
    %p217 = scmp.eq.s32.totalorder %s40, 0
    %p218 = por %p216, %p217
    %p219 = scmp.ne.s32.totalorder %s207, %s208
    %p220 = scmp.eq.s32.totalorder %s41, 1
    %p221 = por %p219, %p220
    %p223 = scmp.ne.s32.totalorder %s208, %s222
    %p224 = scmp.eq.s32.totalorder %s41, 0
    %p225 = por %p223, %p224
    %s227 = sadd.s32 %s226, 1
    %p230 = scmp.eq.s32.totalorder %s35, 1
    %p231 = scmp.ne.s32.totalorder %s226, %s228
    %p232 = scmp.eq.s32.totalorder %s35, 0
    %p233 = por %p231, %p232
    %p234 = scmp.ne.s32.totalorder %s226, %s228
    %p235 = scmp.eq.s32.totalorder %s40, 1
    %p236 = por %p234, %p235
    %p237 = scmp.ne.s32.totalorder %s228, %s229
    %p238 = scmp.eq.s32.totalorder %s40, 0
    %p239 = por %p237, %p238
    %p240 = scmp.ne.s32.totalorder %s228, %s229
    %p241 = scmp.eq.s32.totalorder %s41, 1
    %p242 = por %p240, %p241
    %p244 = scmp.ne.s32.totalorder %s229, %s243
    %p245 = scmp.eq.s32.totalorder %s41, 0
    %p246 = por %p244, %p245
    %s248 = sadd.s32 %s247, 1
    %p251 = scmp.eq.s32.totalorder %s35, 1
    %p252 = scmp.ne.s32.totalorder %s247, %s249
    %p253 = scmp.eq.s32.totalorder %s35, 0
    %p254 = por %p252, %p253
    %p255 = scmp.ne.s32.totalorder %s247, %s249
    %p256 = scmp.eq.s32.totalorder %s40, 1
    %p257 = por %p255, %p256
    %p258 = scmp.ne.s32.totalorder %s249, %s250
    %p259 = scmp.eq.s32.totalorder %s40, 0
    %p260 = por %p258, %p259
    %p261 = scmp.ne.s32.totalorder %s249, %s250
    %p262 = scmp.eq.s32.totalorder %s41, 1
    %p263 = por %p261, %p262
    %p265 = scmp.ne.s32.totalorder %s250, %s264
    %p266 = scmp.eq.s32.totalorder %s41, 0
    %p267 = por %p265, %p266
    %s269 = sadd.s32 %s268, 1
    %p272 = scmp.eq.s32.totalorder %s35, 1
    %p273 = scmp.ne.s32.totalorder %s268, %s270
    %p274 = scmp.eq.s32.totalorder %s35, 0
    %p275 = por %p273, %p274
    %p276 = scmp.ne.s32.totalorder %s268, %s270
    %p277 = scmp.eq.s32.totalorder %s40, 1
    %p278 = por %p276, %p277
    %p279 = scmp.ne.s32.totalorder %s270, %s271
    %p280 = scmp.eq.s32.totalorder %s40, 0
    %p281 = por %p279, %p280
    %p282 = scmp.ne.s32.totalorder %s270, %s271
    %p283 = scmp.eq.s32.totalorder %s41, 1
    %p284 = por %p282, %p283
    %p286 = scmp.ne.s32.totalorder %s271, %s285
    %p287 = scmp.eq.s32.totalorder %s41, 0
    %p288 = por %p286, %p287
    %s290 = sadd.s32 %s289, 1
    %p293 = scmp.eq.s32.totalorder %s35, 1
    %p294 = scmp.ne.s32.totalorder %s289, %s291
    %p295 = scmp.eq.s32.totalorder %s35, 0
    %p296 = por %p294, %p295
    %p297 = scmp.ne.s32.totalorder %s289, %s291
    %p298 = scmp.eq.s32.totalorder %s40, 1
    %p299 = por %p297, %p298
    %p300 = scmp.ne.s32.totalorder %s291, %s292
    %p301 = scmp.eq.s32.totalorder %s40, 0
    %p302 = por %p300, %p301
    %p303 = scmp.ne.s32.totalorder %s291, %s292
    %p304 = scmp.eq.s32.totalorder %s41, 1
    %p305 = por %p303, %p304
    %p307 = scmp.ne.s32.totalorder %s292, %s306
    %p308 = scmp.eq.s32.totalorder %s41, 0
    %p309 = por %p307, %p308
    %s311 = sadd.s32 %s310, 1
    %p314 = scmp.eq.s32.totalorder %s35, 1
    %p315 = scmp.ne.s32.totalorder %s310, %s312
    %p316 = scmp.eq.s32.totalorder %s35, 0
    %p317 = por %p315, %p316
    %p318 = scmp.ne.s32.totalorder %s310, %s312
    %p319 = scmp.eq.s32.totalorder %s40, 1
    %p320 = por %p318, %p319
    %p321 = scmp.ne.s32.totalorder %s312, %s313
    %p322 = scmp.eq.s32.totalorder %s40, 0
    %p323 = por %p321, %p322
    %p324 = scmp.ne.s32.totalorder %s312, %s313
    %p325 = scmp.eq.s32.totalorder %s41, 1
    %p326 = por %p324, %p325
    %p328 = scmp.ne.s32.totalorder %s313, %s327
    %p329 = scmp.eq.s32.totalorder %s41, 0
    %p330 = por %p328, %p329
    %s332 = sadd.s32 %s331, 1
    %p335 = scmp.eq.s32.totalorder %s35, 1
    %p336 = scmp.ne.s32.totalorder %s331, %s333
    %p337 = scmp.eq.s32.totalorder %s35, 0
    %p338 = por %p336, %p337
    %p339 = scmp.ne.s32.totalorder %s331, %s333
    %p340 = scmp.eq.s32.totalorder %s40, 1
    %p341 = por %p339, %p340
    %p342 = scmp.ne.s32.totalorder %s333, %s334
    %p343 = scmp.eq.s32.totalorder %s40, 0
    %p344 = por %p342, %p343
    %p345 = scmp.ne.s32.totalorder %s333, %s334
    %p346 = scmp.eq.s32.totalorder %s41, 1
    %p347 = por %p345, %p346
    %p349 = scmp.ne.s32.totalorder %s334, %s348
    %p350 = scmp.eq.s32.totalorder %s41, 0
    %p351 = por %p349, %p350
    %s353 = sadd.s32 %s352, 1
    %p356 = scmp.eq.s32.totalorder %s35, 1
    %p357 = scmp.ne.s32.totalorder %s352, %s354
    %p358 = scmp.eq.s32.totalorder %s35, 0
    %p359 = por %p357, %p358
    %p360 = scmp.ne.s32.totalorder %s352, %s354
    %p361 = scmp.eq.s32.totalorder %s40, 1
    %p362 = por %p360, %p361
    %p363 = scmp.ne.s32.totalorder %s354, %s355
    %p364 = scmp.eq.s32.totalorder %s40, 0
    %p365 = por %p363, %p364
    %p366 = scmp.ne.s32.totalorder %s354, %s355
    %p367 = scmp.eq.s32.totalorder %s41, 1
    %p368 = por %p366, %p367
    %p370 = scmp.ne.s32.totalorder %s355, %s369
    %p371 = scmp.eq.s32.totalorder %s41, 0
    %p372 = por %p370, %p371
    %s374 = sadd.s32 %s373, 1
    %p377 = scmp.eq.s32.totalorder %s35, 1
    %p378 = scmp.ne.s32.totalorder %s373, %s375
    %p379 = scmp.eq.s32.totalorder %s35, 0
    %p380 = por %p378, %p379
    %p381 = scmp.ne.s32.totalorder %s373, %s375
    %p382 = scmp.eq.s32.totalorder %s40, 1
    %p383 = por %p381, %p382
    %p384 = scmp.ne.s32.totalorder %s375, %s376
    %p385 = scmp.eq.s32.totalorder %s40, 0
    %p386 = por %p384, %p385
    %p387 = scmp.ne.s32.totalorder %s375, %s376
    %p388 = scmp.eq.s32.totalorder %s41, 1
    %p389 = por %p387, %p388
    %p391 = scmp.ne.s32.totalorder %s376, %s390
    %p392 = scmp.eq.s32.totalorder %s41, 0
    %p393 = por %p391, %p392
    %s395 = sadd.s32 %s394, 1
    %p398 = scmp.eq.s32.totalorder %s35, 1
    %p399 = scmp.ne.s32.totalorder %s394, %s396
    %p400 = scmp.eq.s32.totalorder %s35, 0
    %p401 = por %p399, %p400
    %p402 = scmp.ne.s32.totalorder %s394, %s396
    %p403 = scmp.eq.s32.totalorder %s40, 1
    %p404 = por %p402, %p403
    %p405 = scmp.ne.s32.totalorder %s396, %s397
    %p406 = scmp.eq.s32.totalorder %s40, 0
    %p407 = por %p405, %p406
    %p408 = scmp.ne.s32.totalorder %s396, %s397
    %p409 = scmp.eq.s32.totalorder %s41, 1
    %p410 = por %p408, %p409
    %p412 = scmp.ne.s32.totalorder %s397, %s411
    %p413 = scmp.eq.s32.totalorder %s41, 0
    %p414 = por %p412, %p413
    %s416 = sadd.s32 %s415, 1
    %p419 = scmp.eq.s32.totalorder %s35, 1
    %p420 = scmp.ne.s32.totalorder %s415, %s417
    %p421 = scmp.eq.s32.totalorder %s35, 0
    %p422 = por %p420, %p421
    %p423 = scmp.ne.s32.totalorder %s415, %s417
    %p424 = scmp.eq.s32.totalorder %s40, 1
    %p425 = por %p423, %p424
    %p426 = scmp.ne.s32.totalorder %s417, %s418
    %p427 = scmp.eq.s32.totalorder %s40, 0
    %p428 = por %p426, %p427
    %p429 = scmp.ne.s32.totalorder %s417, %s418
    %p430 = scmp.eq.s32.totalorder %s41, 1
    %p431 = por %p429, %p430
    %p433 = scmp.ne.s32.totalorder %s418, %s432
    %p434 = scmp.eq.s32.totalorder %s41, 0
    %p435 = por %p433, %p434
    %s437 = sadd.s32 %s436, 1
    %p440 = scmp.eq.s32.totalorder %s35, 1
    %p441 = scmp.ne.s32.totalorder %s436, %s438
    %p442 = scmp.eq.s32.totalorder %s35, 0
    %p443 = por %p441, %p442
    %p444 = scmp.ne.s32.totalorder %s436, %s438
    %p445 = scmp.eq.s32.totalorder %s40, 1
    %p446 = por %p444, %p445
    %p447 = scmp.ne.s32.totalorder %s438, %s439
    %p448 = scmp.eq.s32.totalorder %s40, 0
    %p449 = por %p447, %p448
    %p450 = scmp.ne.s32.totalorder %s438, %s439
    %p451 = scmp.eq.s32.totalorder %s41, 1
    %p452 = por %p450, %p451
    %p454 = scmp.ne.s32.totalorder %s439, %s453
    %p455 = scmp.eq.s32.totalorder %s41, 0
    %p456 = por %p454, %p455
    %s458 = sadd.s32 %s457, 1
    %p461 = scmp.eq.s32.totalorder %s35, 1
    %p462 = scmp.ne.s32.totalorder %s457, %s459
    %p463 = scmp.eq.s32.totalorder %s35, 0
    %p464 = por %p462, %p463
    %p465 = scmp.ne.s32.totalorder %s457, %s459
    %p466 = scmp.eq.s32.totalorder %s40, 1
    %p467 = por %p465, %p466
    %p468 = scmp.ne.s32.totalorder %s459, %s460
    %p469 = scmp.eq.s32.totalorder %s40, 0
    %p470 = por %p468, %p469
    %p471 = scmp.ne.s32.totalorder %s459, %s460
    %p472 = scmp.eq.s32.totalorder %s41, 1
    %p473 = por %p471, %p472
    %p475 = scmp.ne.s32.totalorder %s460, %s474
    %p476 = scmp.eq.s32.totalorder %s41, 0
    %p477 = por %p475, %p476
    %s479 = sadd.s32 %s478, 1
    %p482 = scmp.eq.s32.totalorder %s35, 1
    %p483 = scmp.ne.s32.totalorder %s478, %s480
    %p484 = scmp.eq.s32.totalorder %s35, 0
    %p485 = por %p483, %p484
    %p486 = scmp.ne.s32.totalorder %s478, %s480
    %p487 = scmp.eq.s32.totalorder %s40, 1
    %p488 = por %p486, %p487
    %p489 = scmp.ne.s32.totalorder %s480, %s481
    %p490 = scmp.eq.s32.totalorder %s40, 0
    %p491 = por %p489, %p490
    %p492 = scmp.ne.s32.totalorder %s480, %s481
    %p493 = scmp.eq.s32.totalorder %s41, 1
    %p494 = por %p492, %p493
    %p496 = scmp.ne.s32.totalorder %s481, %s495
    %p497 = scmp.eq.s32.totalorder %s41, 0
    %p498 = por %p496, %p497
    %s500 = sadd.s32 %s499, 1
    %p503 = scmp.eq.s32.totalorder %s35, 1
    %p504 = scmp.ne.s32.totalorder %s499, %s501
    %p505 = scmp.eq.s32.totalorder %s35, 0
    %p506 = por %p504, %p505
    %p507 = scmp.ne.s32.totalorder %s499, %s501
    %p508 = scmp.eq.s32.totalorder %s40, 1
    %p509 = por %p507, %p508
    %p510 = scmp.ne.s32.totalorder %s501, %s502
    %p511 = scmp.eq.s32.totalorder %s40, 0
    %p512 = por %p510, %p511
    %p513 = scmp.ne.s32.totalorder %s501, %s502
    %p514 = scmp.eq.s32.totalorder %s41, 1
    %p515 = por %p513, %p514
    %p517 = scmp.ne.s32.totalorder %s502, %s516
    %p518 = scmp.eq.s32.totalorder %s41, 0
    %p519 = por %p517, %p518
    %s521 = sadd.s32 %s520, 1
    %p524 = scmp.eq.s32.totalorder %s35, 1
    %p525 = scmp.ne.s32.totalorder %s520, %s522
    %p526 = scmp.eq.s32.totalorder %s35, 0
    %p527 = por %p525, %p526
    %p528 = scmp.ne.s32.totalorder %s520, %s522
    %p529 = scmp.eq.s32.totalorder %s40, 1
    %p530 = por %p528, %p529
    %p531 = scmp.ne.s32.totalorder %s522, %s523
    %p532 = scmp.eq.s32.totalorder %s40, 0
    %p533 = por %p531, %p532
    %p534 = scmp.ne.s32.totalorder %s522, %s523
    %p535 = scmp.eq.s32.totalorder %s41, 1
    %p536 = por %p534, %p535
    %p538 = scmp.ne.s32.totalorder %s523, %s537
    %p539 = scmp.eq.s32.totalorder %s41, 0
    %p540 = por %p538, %p539
    %s542 = sadd.s32 %s541, 1
    %p545 = scmp.eq.s32.totalorder %s35, 1
    %p546 = scmp.ne.s32.totalorder %s541, %s543
    %p547 = scmp.eq.s32.totalorder %s35, 0
    %p548 = por %p546, %p547
    %p549 = scmp.ne.s32.totalorder %s541, %s543
    %p550 = scmp.eq.s32.totalorder %s40, 1
    %p551 = por %p549, %p550
    %p552 = scmp.ne.s32.totalorder %s543, %s544
    %p553 = scmp.eq.s32.totalorder %s40, 0
    %p554 = por %p552, %p553
    %p555 = scmp.ne.s32.totalorder %s543, %s544
    %p556 = scmp.eq.s32.totalorder %s41, 1
    %p557 = por %p555, %p556
    %p559 = scmp.ne.s32.totalorder %s544, %s558
    %p560 = scmp.eq.s32.totalorder %s41, 0
    %p561 = por %p559, %p560
    %s563 = sadd.s32 %s562, 1
    %p566 = scmp.eq.s32.totalorder %s35, 1
    %p567 = scmp.ne.s32.totalorder %s562, %s564
    %p568 = scmp.eq.s32.totalorder %s35, 0
    %p569 = por %p567, %p568
    %p570 = scmp.ne.s32.totalorder %s562, %s564
    %p571 = scmp.eq.s32.totalorder %s40, 1
    %p572 = por %p570, %p571
    %p573 = scmp.ne.s32.totalorder %s564, %s565
    %p574 = scmp.eq.s32.totalorder %s40, 0
    %p575 = por %p573, %p574
    %p576 = scmp.ne.s32.totalorder %s564, %s565
    %p577 = scmp.eq.s32.totalorder %s41, 1
    %p578 = por %p576, %p577
    %p580 = scmp.ne.s32.totalorder %s565, %s579
    %p581 = scmp.eq.s32.totalorder %s41, 0
    %p582 = por %p580, %p581
    %s584 = sadd.s32 %s583, 1
    %p587 = scmp.eq.s32.totalorder %s35, 1
    %p588 = scmp.ne.s32.totalorder %s583, %s585
    %p589 = scmp.eq.s32.totalorder %s35, 0
    %p590 = por %p588, %p589
    %p591 = scmp.ne.s32.totalorder %s583, %s585
    %p592 = scmp.eq.s32.totalorder %s40, 1
    %p593 = por %p591, %p592
    %p594 = scmp.ne.s32.totalorder %s585, %s586
    %p595 = scmp.eq.s32.totalorder %s40, 0
    %p596 = por %p594, %p595
    %p597 = scmp.ne.s32.totalorder %s585, %s586
    %p598 = scmp.eq.s32.totalorder %s41, 1
    %p599 = por %p597, %p598
    %p601 = scmp.ne.s32.totalorder %s586, %s600
    %p602 = scmp.eq.s32.totalorder %s41, 0
    %p603 = por %p601, %p602
    %s605 = sadd.s32 %s604, 1
    %p608 = scmp.eq.s32.totalorder %s35, 1
    %p609 = scmp.ne.s32.totalorder %s604, %s606
    %p610 = scmp.eq.s32.totalorder %s35, 0
    %p611 = por %p609, %p610
    %p612 = scmp.ne.s32.totalorder %s604, %s606
    %p613 = scmp.eq.s32.totalorder %s40, 1
    %p614 = por %p612, %p613
    %p615 = scmp.ne.s32.totalorder %s606, %s607
    %p616 = scmp.eq.s32.totalorder %s40, 0
    %p617 = por %p615, %p616
    %p618 = scmp.ne.s32.totalorder %s606, %s607
    %p619 = scmp.eq.s32.totalorder %s41, 1
    %p620 = por %p618, %p619
    %p622 = scmp.ne.s32.totalorder %s607, %s621
    %p623 = scmp.eq.s32.totalorder %s41, 0
    %p624 = por %p622, %p623
    %s625 = ssub.s32 %s35, %s42
    %p626 = scmp.eq.s32.totalorder %s625, 0
    %s628 = sadd.s32 %s627, 1
    %s629 = scalar_select %p626, %s627, %s628
    %p632 = pneg %p626
    %p633 = scmp.eq.s32.totalorder %s35, 1
    %p634 = por %p632, %p633
    %p635 = scmp.ne.s32.totalorder %s627, %s630
    %p636 = scmp.eq.s32.totalorder %s35, 0
    %p637 = por %p635, %p636
    %p638 = scmp.ne.s32.totalorder %s627, %s630
    %p639 = scmp.eq.s32.totalorder %s40, 1
    %p640 = por %p638, %p639
    %p641 = scmp.ne.s32.totalorder %s630, %s631
    %p642 = scmp.eq.s32.totalorder %s40, 0
    %p643 = por %p641, %p642
    %p644 = scmp.ne.s32.totalorder %s630, %s631
    %p645 = scmp.eq.s32.totalorder %s41, 1
    %p646 = por %p644, %p645
    %p648 = scmp.ne.s32.totalorder %s631, %s647
    %p649 = scmp.eq.s32.totalorder %s41, 0
    %p650 = por %p648, %p649
    %p651 = scmp.le.s32.totalorder 1, %s35
    %p652 = scmp.lt.s32.totalorder %s35, 3
    %p653 = pnand %p651, %p652
    %p654 = pneg %p653
    // Predicated region
    $region9: #{punetg_decoder_forward.1} parent=5 // pred_check
      _
    $region10: #{punetg_decoder_forward.1} parent=5 // pred_check_branch
      %656 = sbr.rel (%p653) target = $region12
    $region11: #{punetg_decoder_forward.1} parent=5 // pred_region
      %s657 = ssub.s32 %s35, 1
      // Predicated region
      $region13: #{punetg_decoder_forward.1} parent=11 // pred_check
        %p658 = pneg %p134
      $region14: #{punetg_decoder_forward.1} parent=11 // pred_check_branch
        %660 = sbr.rel (%p658) target = $region16
      $region15: #{punetg_decoder_forward.1} parent=11 // pred_region
        _
      $region16: #{punetg_decoder_forward.1} parent=11 // pred_fallthru
        _
      // Predicated region
      $region17: #{punetg_decoder_forward.1} parent=11 // pred_check
        %p661 = pneg %p155
      $region18: #{punetg_decoder_forward.1} parent=11 // pred_check_branch
        %663 = sbr.rel (%p661) target = $region20
      $region19: #{punetg_decoder_forward.1} parent=11 // pred_region
        _
      $region20: #{punetg_decoder_forward.1} parent=11 // pred_fallthru
        _
      // Predicated region
      $region21: #{punetg_decoder_forward.1} parent=11 // pred_check
        %p664 = pneg %p176
      $region22: #{punetg_decoder_forward.1} parent=11 // pred_check_branch
        %666 = sbr.rel (%p664) target = $region24
      $region23: #{punetg_decoder_forward.1} parent=11 // pred_region
        _
      $region24: #{punetg_decoder_forward.1} parent=11 // pred_fallthru
        _
      // Predicated region
      $region25: #{punetg_decoder_forward.1} parent=11 // pred_check
        %p667 = pneg %p197
      $region26: #{punetg_decoder_forward.1} parent=11 // pred_check_branch
        %669 = sbr.rel (%p667) target = $region28
      $region27: #{punetg_decoder_forward.1} parent=11 // pred_region
        _
      $region28: #{punetg_decoder_forward.1} parent=11 // pred_fallthru
        _
      // Predicated region
      $region29: #{punetg_decoder_forward.1} parent=11 // pred_check
        %p670 = pneg %p218
      $region30: #{punetg_decoder_forward.1} parent=11 // pred_check_branch
        %672 = sbr.rel (%p670) target = $region32
      $region31: #{punetg_decoder_forward.1} parent=11 // pred_region
        _
      $region32: #{punetg_decoder_forward.1} parent=11 // pred_fallthru
        _
      // Predicated region
      $region33: #{punetg_decoder_forward.1} parent=11 // pred_check
        %p673 = pneg %p239
      $region34: #{punetg_decoder_forward.1} parent=11 // pred_check_branch
        %675 = sbr.rel (%p673) target = $region36
      $region35: #{punetg_decoder_forward.1} parent=11 // pred_region
        _
      $region36: #{punetg_decoder_forward.1} parent=11 // pred_fallthru
        _
      // Predicated region
      $region37: #{punetg_decoder_forward.1} parent=11 // pred_check
        %p676 = pneg %p260
      $region38: #{punetg_decoder_forward.1} parent=11 // pred_check_branch
        %678 = sbr.rel (%p676) target = $region40
      $region39: #{punetg_decoder_forward.1} parent=11 // pred_region
        _
      $region40: #{punetg_decoder_forward.1} parent=11 // pred_fallthru
        _
      // Predicated region
      $region41: #{punetg_decoder_forward.1} parent=11 // pred_check
        %p679 = pneg %p281
      $region42: #{punetg_decoder_forward.1} parent=11 // pred_check_branch
        %681 = sbr.rel (%p679) target = $region44
      $region43: #{punetg_decoder_forward.1} parent=11 // pred_region
        _
      $region44: #{punetg_decoder_forward.1} parent=11 // pred_fallthru
        _
      // Predicated region
      $region45: #{punetg_decoder_forward.1} parent=11 // pred_check
        %p682 = pneg %p302
      $region46: #{punetg_decoder_forward.1} parent=11 // pred_check_branch
        %684 = sbr.rel (%p682) target = $region48
      $region47: #{punetg_decoder_forward.1} parent=11 // pred_region
        _
      $region48: #{punetg_decoder_forward.1} parent=11 // pred_fallthru
        _
      // Predicated region
      $region49: #{punetg_decoder_forward.1} parent=11 // pred_check
        %p685 = pneg %p323
      $region50: #{punetg_decoder_forward.1} parent=11 // pred_check_branch
        %687 = sbr.rel (%p685) target = $region52
      $region51: #{punetg_decoder_forward.1} parent=11 // pred_region
        _
      $region52: #{punetg_decoder_forward.1} parent=11 // pred_fallthru
        _
      // Predicated region
      $region53: #{punetg_decoder_forward.1} parent=11 // pred_check
        %p688 = pneg %p344
      $region54: #{punetg_decoder_forward.1} parent=11 // pred_check_branch
        %690 = sbr.rel (%p688) target = $region56
      $region55: #{punetg_decoder_forward.1} parent=11 // pred_region
        _
      $region56: #{punetg_decoder_forward.1} parent=11 // pred_fallthru
        _
      // Predicated region
      $region57: #{punetg_decoder_forward.1} parent=11 // pred_check
        %p691 = pneg %p365
      $region58: #{punetg_decoder_forward.1} parent=11 // pred_check_branch
        %693 = sbr.rel (%p691) target = $region60
      $region59: #{punetg_decoder_forward.1} parent=11 // pred_region
        _
      $region60: #{punetg_decoder_forward.1} parent=11 // pred_fallthru
        _
      // Predicated region
      $region61: #{punetg_decoder_forward.1} parent=11 // pred_check
        %p694 = pneg %p386
      $region62: #{punetg_decoder_forward.1} parent=11 // pred_check_branch
        %696 = sbr.rel (%p694) target = $region64
      $region63: #{punetg_decoder_forward.1} parent=11 // pred_region
        _
      $region64: #{punetg_decoder_forward.1} parent=11 // pred_fallthru
        _
      // Predicated region
      $region65: #{punetg_decoder_forward.1} parent=11 // pred_check
        %p697 = pneg %p407
      $region66: #{punetg_decoder_forward.1} parent=11 // pred_check_branch
        %699 = sbr.rel (%p697) target = $region68
      $region67: #{punetg_decoder_forward.1} parent=11 // pred_region
        _
      $region68: #{punetg_decoder_forward.1} parent=11 // pred_fallthru
        _
      // Predicated region
      $region69: #{punetg_decoder_forward.1} parent=11 // pred_check
        %p700 = pneg %p428
      $region70: #{punetg_decoder_forward.1} parent=11 // pred_check_branch
        %702 = sbr.rel (%p700) target = $region72
      $region71: #{punetg_decoder_forward.1} parent=11 // pred_region
        _
      $region72: #{punetg_decoder_forward.1} parent=11 // pred_fallthru
        _
      // Predicated region
      $region73: #{punetg_decoder_forward.1} parent=11 // pred_check
        %p703 = pneg %p449
      $region74: #{punetg_decoder_forward.1} parent=11 // pred_check_branch
        %705 = sbr.rel (%p703) target = $region76
      $region75: #{punetg_decoder_forward.1} parent=11 // pred_region
        _
      $region76: #{punetg_decoder_forward.1} parent=11 // pred_fallthru
        _
      // Predicated region
      $region77: #{punetg_decoder_forward.1} parent=11 // pred_check
        %p706 = pneg %p470
      $region78: #{punetg_decoder_forward.1} parent=11 // pred_check_branch
        %708 = sbr.rel (%p706) target = $region80
      $region79: #{punetg_decoder_forward.1} parent=11 // pred_region
        _
      $region80: #{punetg_decoder_forward.1} parent=11 // pred_fallthru
        _
      // Predicated region
      $region81: #{punetg_decoder_forward.1} parent=11 // pred_check
        %p709 = pneg %p491
      $region82: #{punetg_decoder_forward.1} parent=11 // pred_check_branch
        %711 = sbr.rel (%p709) target = $region84
      $region83: #{punetg_decoder_forward.1} parent=11 // pred_region
        _
      $region84: #{punetg_decoder_forward.1} parent=11 // pred_fallthru
        _
      // Predicated region
      $region85: #{punetg_decoder_forward.1} parent=11 // pred_check
        %p712 = pneg %p512
      $region86: #{punetg_decoder_forward.1} parent=11 // pred_check_branch
        %714 = sbr.rel (%p712) target = $region88
      $region87: #{punetg_decoder_forward.1} parent=11 // pred_region
        _
      $region88: #{punetg_decoder_forward.1} parent=11 // pred_fallthru
        _
      // Predicated region
      $region89: #{punetg_decoder_forward.1} parent=11 // pred_check
        %p715 = pneg %p533
      $region90: #{punetg_decoder_forward.1} parent=11 // pred_check_branch
        %717 = sbr.rel (%p715) target = $region92
      $region91: #{punetg_decoder_forward.1} parent=11 // pred_region
        _
      $region92: #{punetg_decoder_forward.1} parent=11 // pred_fallthru
        _
      // Predicated region
      $region93: #{punetg_decoder_forward.1} parent=11 // pred_check
        %p718 = pneg %p554
      $region94: #{punetg_decoder_forward.1} parent=11 // pred_check_branch
        %720 = sbr.rel (%p718) target = $region96
      $region95: #{punetg_decoder_forward.1} parent=11 // pred_region
        _
      $region96: #{punetg_decoder_forward.1} parent=11 // pred_fallthru
        _
      // Predicated region
      $region97: #{punetg_decoder_forward.1} parent=11 // pred_check
        %p721 = pneg %p575
      $region98: #{punetg_decoder_forward.1} parent=11 // pred_check_branch
        %723 = sbr.rel (%p721) target = $region100
      $region99: #{punetg_decoder_forward.1} parent=11 // pred_region
        _
      $region100: #{punetg_decoder_forward.1} parent=11 // pred_fallthru
        _
      // Predicated region
      $region101: #{punetg_decoder_forward.1} parent=11 // pred_check
        %p724 = pneg %p596
      $region102: #{punetg_decoder_forward.1} parent=11 // pred_check_branch
        %726 = sbr.rel (%p724) target = $region104
      $region103: #{punetg_decoder_forward.1} parent=11 // pred_region
        _
      $region104: #{punetg_decoder_forward.1} parent=11 // pred_fallthru
        _
      // Predicated region
      $region105: #{punetg_decoder_forward.1} parent=11 // pred_check
        %p727 = pneg %p617
      $region106: #{punetg_decoder_forward.1} parent=11 // pred_check_branch
        %729 = sbr.rel (%p727) target = $region108
      $region107: #{punetg_decoder_forward.1} parent=11 // pred_region
        _
      $region108: #{punetg_decoder_forward.1} parent=11 // pred_fallthru
        _
    $region12: #{punetg_decoder_forward.1} parent=5 // pred_fallthru
      _
    %p730 = scmp.lt.s32.totalorder %s35, 2
    // Predicated region
    $region109: #{punetg_decoder_forward.1} parent=5 // pred_check
      %p731 = pneg %p730
    $region110: #{punetg_decoder_forward.1} parent=5 // pred_check_branch
      %733 = sbr.rel (%p731) target = $region112
    $region111: #{punetg_decoder_forward.1} parent=5 // pred_region
      // Predicated region
      $region113: #{punetg_decoder_forward.1} parent=111 // pred_check
        %p734 = pneg %p55
      $region114: #{punetg_decoder_forward.1} parent=111 // pred_check_branch
        %736 = sbr.rel (%p734) target = $region116
      $region115: #{punetg_decoder_forward.1} parent=111 // pred_region
        %p737 = scmp.lt.s32.totalorder %s35, 1
        %s738 = scalar_select %p737, %s35, 1
        %s739 = smul.addr %s738, 4
        %s740 = smul.addr %s739, 8
        %s741 = scalar_lea.vmem %s0, %s740
      $region116: #{punetg_decoder_forward.1} parent=111 // pred_fallthru
        _
      // Predicated region
      $region117: #{punetg_decoder_forward.1} parent=111 // pred_check
        %p742 = pneg %p81
      $region118: #{punetg_decoder_forward.1} parent=111 // pred_check_branch
        %744 = sbr.rel (%p742) target = $region120
      $region119: #{punetg_decoder_forward.1} parent=111 // pred_region
        %p745 = scmp.lt.s32.totalorder %s35, 1
        %s746 = scalar_select %p745, %s35, 1
        %s747 = smul.addr %s746, 4
        %s748 = smul.addr %s747, 8
        %s749 = scalar_lea.vmem %s1, %s748
      $region120: #{punetg_decoder_forward.1} parent=111 // pred_fallthru
        _
      // Predicated region
      $region121: #{punetg_decoder_forward.1} parent=111 // pred_check
        %p750 = pneg %p107
      $region122: #{punetg_decoder_forward.1} parent=111 // pred_check_branch
        %752 = sbr.rel (%p750) target = $region124
      $region123: #{punetg_decoder_forward.1} parent=111 // pred_region
        %p753 = scmp.lt.s32.totalorder %s35, 1
        %s754 = scalar_select %p753, %s35, 1
        %s755 = smul.addr %s754, 8
        %s756 = smul.addr %s755, 8
        %s757 = scalar_lea.vmem %s2, %s756
      $region124: #{punetg_decoder_forward.1} parent=111 // pred_fallthru
        _
    $region112: #{punetg_decoder_forward.1} parent=5 // pred_fallthru
      _
    %p758 = scmp.le.s32.totalorder 1, %s35
    %p759 = scmp.lt.s32.totalorder %s35, 3
    %p760 = pnand %p758, %p759
    %p761 = pneg %p760
    // Predicated region
    $region125: #{punetg_decoder_forward.1} parent=5 // pred_check
      _
    $region126: #{punetg_decoder_forward.1} parent=5 // pred_check_branch
      %763 = sbr.rel (%p760) target = $region128
    $region127: #{punetg_decoder_forward.1} parent=5 // pred_region
      %s764 = ssub.s32 %s35, 1
      %p765 = scmp.lt.s32.totalorder %s40, 1
      %s766 = scalar_select %p765, %s40, 1
      %s767 = smul.addr %s766, 4
      %s768 = smul.addr %s767, 8
      %s769 = scalar_lea.vmem %s0, %s768
      %p770 = pneg %p61
      %p771 = pneg %p58
      %p772 = scmp.lt.s32.totalorder %s40, 1
      %s773 = scalar_select %p772, %s40, 1
      %s774 = smul.addr %s773, 4
      %s775 = smul.addr %s774, 8
      %s776 = scalar_lea.vmem %s1, %s775
      %p777 = pneg %p87
      %p778 = pneg %p84
      %p779 = scmp.lt.s32.totalorder %s40, 1
      %s780 = scalar_select %p779, %s40, 1
      %s781 = smul.addr %s780, 8
      %s782 = smul.addr %s781, 8
      %s783 = scalar_lea.vmem %s2, %s782
      %p784 = pneg %p113
      %p785 = pneg %p110
      %p786 = pneg %p134
      %p787 = pneg %p131
      %p788 = pneg %p155
      %p789 = pneg %p152
      %p790 = pneg %p176
      %p791 = pneg %p173
      %p792 = pneg %p197
      %p793 = pneg %p194
      %p794 = pneg %p218
      %p795 = pneg %p215
      %p796 = pneg %p239
      %p797 = pneg %p236
      %p798 = pneg %p260
      %p799 = pneg %p257
      %p800 = pneg %p281
      %p801 = pneg %p278
      %p802 = pneg %p302
      %p803 = pneg %p299
      %p804 = pneg %p323
      %p805 = pneg %p320
      %p806 = pneg %p344
      %p807 = pneg %p341
      %p808 = pneg %p365
      %p809 = pneg %p362
      %p810 = pneg %p386
      %p811 = pneg %p383
      %p812 = pneg %p407
      %p813 = pneg %p404
      %p814 = pneg %p428
      %p815 = pneg %p425
      %p816 = pneg %p449
      %p817 = pneg %p446
      %p818 = pneg %p470
      %p819 = pneg %p467
      %p820 = pneg %p491
      %p821 = pneg %p488
      %p822 = pneg %p512
      %p823 = pneg %p509
      %p824 = pneg %p533
      %p825 = pneg %p530
      %p826 = pneg %p554
      %p827 = pneg %p551
      %p828 = pneg %p575
      %p829 = pneg %p572
      %p830 = pneg %p596
      %p831 = pneg %p593
      %p832 = pneg %p617
      %p833 = pneg %p614
      %p834 = pneg %p643
      %p835 = pneg %p640
      %p836 = scmp.lt.s32.totalorder %s40, 1
      %s837 = scalar_select %p836, %s40, 1
      %s838 = smul.addr %s837, 8
      %s839 = scalar_lea.vmem %s27, %s838
      %p840 = scmp.lt.s32.totalorder %s40, 1
      %s841 = scalar_select %p840, %s40, 1
      %s842 = smul.addr %s841, 4
      %s843 = smul.addr %s842, 8
      %s844 = scalar_lea.vmem %s0, %s843
      %p845 = scmp.lt.s32.totalorder %s40, 1
      %s846 = scalar_select %p845, %s40, 1
      %s847 = smul.addr %s846, 4
      %s848 = smul.addr %s847, 8
      %s849 = scalar_lea.vmem %s1, %s848
      %p850 = scmp.lt.s32.totalorder %s40, 1
      %s851 = scalar_select %p850, %s40, 1
      %s852 = smul.addr %s851, 8
      %s853 = smul.addr %s852, 8
      %s854 = scalar_lea.vmem %s2, %s853
      %p855 = scmp.lt.s32.totalorder %s40, 1
      %s856 = scalar_select %p855, %s40, 1
      %s857 = smul.addr %s856, 8
      %s858 = scalar_lea.vmem %s27, %s857
      %v860 = vld [vmem:[%s844] sm:$0xff]
      %v861 = vld [vmem:[%s844 + $0x8] sm:$0xff]
      %v862 = vld [vmem:[%s844 + $0x10] sm:$0xff]
      %v863 = vld [vmem:[%s844 + $0x18] sm:$0xff]
      %v864 = vlaneseq
      %v865 = vand.u32 %v864, 127
      %v866 = vadd.s32 %v865, 128
      %v867 = vand.u32 %v865, 15
      %v868 = vand.u32 %v866, 15
      %vm869 = vcmp.ge.s32.totalorder %v865, 16
      %vm870 = vcmp.ge.s32.totalorder %v866, 16
      %vm871 = vcmp.lt.s32.totalorder %v865, 240
      %vm872 = vcmp.lt.s32.totalorder %v866, 240
      %vm873 = vcmp.ge.s32.totalorder %v867, 1
      %vm874 = vcmp.ge.s32.totalorder %v868, 1
      %vm875 = vcmp.lt.s32.totalorder %v867, 15
      %vm876 = vcmp.lt.s32.totalorder %v868, 15
      %vm877 = vmand %vm869, %vm873
      %vm878 = vmand %vm870, %vm874
      %vm879 = vmand %vm869, %vm875
      %vm880 = vmand %vm870, %vm876
      %vm881 = vmand %vm871, %vm873
      %vm882 = vmand %vm872, %vm874
      %vm883 = vmand %vm871, %vm875
      %vm884 = vmand %vm872, %vm876
      %v885 = vpack.c.bf16 %v861, %v860
      %v886 = vpack.c.bf16 %v863, %v862
      %v887 = vld [vmem:[%s3] sm:$0xff]
      %v888 = vld [vmem:[%s3 + $0x8] sm:$0xff]
      %v889 = vld [vmem:[%s3 + $0x10] sm:$0xff]
      %v890 = vld [vmem:[%s3 + $0x18] sm:$0xff]
      %v891 = vld [vmem:[%s3 + $0x20] sm:$0xff]
      %v892 = vld [vmem:[%s3 + $0x28] sm:$0xff]
      %v893 = vld [vmem:[%s3 + $0x30] sm:$0xff]
      %v894 = vld [vmem:[%s3 + $0x38] sm:$0xff]
      %v903 = vunpack.c.l.b16 %v887
      %v904 = vunpack.c.h.b16 %v887
      %v905 = vunpack.c.l.b16 %v888
      %v906 = vunpack.c.h.b16 %v888
      %v907 = vunpack.c.l.b16 %v889
      %v908 = vunpack.c.h.b16 %v889
      %v909 = vunpack.c.l.b16 %v890
      %v910 = vunpack.c.h.b16 %v890
      %v911 = vunpack.c.l.b16 %v891
      %v912 = vunpack.c.h.b16 %v891
      %v913 = vunpack.c.l.b16 %v892
      %v914 = vunpack.c.h.b16 %v892
      %v915 = vunpack.c.l.b16 %v893
      %v916 = vunpack.c.h.b16 %v893
      %v917 = vunpack.c.l.b16 %v894
      %v918 = vunpack.c.h.b16 %v894
      %v919 = vpack.c.b16 %v905, %v903
      %v920 = vpack.c.b16 %v906, %v904
      %v921 = vpack.c.b16 %v909, %v907
      %v922 = vpack.c.b16 %v910, %v908
      %v923 = vpack.c.b16 %v913, %v911
      %v924 = vpack.c.b16 %v914, %v912
      %v925 = vpack.c.b16 %v917, %v915
      %v926 = vpack.c.b16 %v918, %v916
      %vm935 = vcmask 523264
      %v937 = vsel %vm935, %v885, 0
      %v940 = vsel %vm935, %v886, 0
      %942 = vmatprep.subr.bf16.mxu0 %v920
      %943 = vmatpush1.bf16.msra.mxu0 %v919
      %944 = vmatprep.subr.bf16.mxu0 %v922
      %945 = vmatpush1.bf16.msra.mxu0 %v921
      %946 = vmatprep.subr.bf16.mxu0 %v924
      %947 = vmatpush1.bf16.msra.mxu0 %v923
      %948 = vmatprep.subr.bf16.mxu0 %v926
      %949 = vmatpush1.bf16.msra.mxu0 %v925
      %950 = vmatprep.subr.bf16.mxu0 0
      %951 = vmatpush1.bf16.msra.mxu0 0
      %952 = vmatprep.subr.bf16.mxu0 0
      %953 = vmatpush1.bf16.msra.mxu0 0
      %954 = vmatprep.subr.bf16.mxu0 0
      %955 = vmatpush1.bf16.msra.mxu0 0
      %956 = vmatprep.subr.bf16.mxu0 0
      %957 = vmatpush1.bf16.msra.mxu0 0
      %958 = vmatprep.subr.bf16.mxu0 0
      %959 = vmatpush1.bf16.msra.mxu0 0
      %960 = vmatprep.subr.bf16.mxu0 0
      %961 = vmatpush1.bf16.msra.mxu0 0
      %962 = vmatprep.subr.bf16.mxu0 0
      %963 = vmatpush1.bf16.msra.mxu0 0
      %964 = vmatprep.subr.bf16.mxu0 0
      %965 = vmatpush1.bf16.msra.mxu0 0
      %966 = vmatprep.subr.bf16.mxu0 0
      %967 = vmatpush1.bf16.msra.mxu0 0
      %968 = vmatprep.subr.bf16.mxu0 0
      %969 = vmatpush1.bf16.msra.mxu0 0
      %970 = vmatprep.subr.bf16.mxu0 0
      %971 = vmatpush1.bf16.msra.mxu0 0
      %972 = vmatprep.subr.bf16.mxu0 0
      %973 = vmatpush1.bf16.msra.mxu0 0
      %974 = vmatprep.mubr.bf16.mxu0 0
      %975 = vmatmul.mubr.bf16.gmra.mrb[0].mxu0 %v937
      %v976 = vpop.f32.mrb[0].mxu0
      %v977 = vadd.f32 0.0, %v976
      %v978 = vpop.f32.mrb[0].mxu0
      %v979 = vadd.f32 0.0, %v978
      %v980 = vpop.f32.mrb[0].mxu0
      %v981 = vadd.f32 0.0, %v980
      %v982 = vpop.f32.mrb[0].mxu0
      %v983 = vadd.f32 0.0, %v982
      %984 = vmatprep.mubr.bf16.mxu0 0
      %985 = vmatmul.mubr.bf16.gmra.mrb[0].mxu0 %v940
      %v986 = vpop.f32.mrb[0].mxu0
      %v987 = vadd.f32 0.0, %v986
      %v988 = vpop.f32.mrb[0].mxu0
      %v989 = vadd.f32 0.0, %v988
      %v990 = vpop.f32.mrb[0].mxu0
      %v991 = vadd.f32 0.0, %v990
      %v992 = vpop.f32.mrb[0].mxu0
      %v993 = vadd.f32 0.0, %v992
      %994 = vdwg.mxu0
      %995 = vrot.lane.b32.xlu0 %v977, 17
      %v996 = vpop.permute.xlu0 %995
      %997 = vrot.lane.b32.xlu0 %v981, 17
      %v998 = vpop.permute.xlu0 %997
      %999 = vrot.lane.b32.xlu0 %v987, 17
      %v1000 = vpop.permute.xlu0 %999
      %1001 = vrot.lane.b32.xlu0 %v991, 17
      %v1002 = vpop.permute.xlu0 %1001
      %1003 = vrot.lane.b32.xlu0 %v979, 17
      %v1004 = vpop.permute.xlu0 %1003
      %1005 = vrot.lane.b32.xlu0 %v983, 17
      %v1006 = vpop.permute.xlu0 %1005
      %1007 = vrot.lane.b32.xlu0 %v989, 17
      %v1008 = vpop.permute.xlu0 %1007
      %1009 = vrot.lane.b32.xlu0 %v993, 17
      %v1010 = vpop.permute.xlu0 %1009
      %vm1011 = vcmp.lt.s32.totalorder %v865, 17
      %v1012 = vsel %vm1011, %v996, %v1004
      %v1013 = vsel %vm1011, %v998, %v1006
      %v1014 = vsel %vm1011, %v1000, %v1008
      %v1015 = vsel %vm1011, %v1002, %v1010
      %v1016 = vsel %vm1011, %v1004, %v996
      %v1017 = vsel %vm1011, %v1006, %v998
      %v1018 = vsel %vm1011, %v1008, %v1000
      %v1019 = vsel %vm1011, %v1010, %v1002
      %v1020 = vsel %vm877, 1, 0
      %v1021 = vsel %vm878, 1, 0
      %vm1022 = vcmp.eq.s32.totalorder %v1020, 1
      %vm1023 = vcmp.eq.s32.totalorder %v1021, 1
      %v1024 = vsel %vm1022, %v1016, 0.0
      %v1025 = vsel %vm1023, %v1012, 0.0
      %v1026 = vsel %vm1022, %v1017, 0.0
      %v1027 = vsel %vm1023, %v1013, 0.0
      %v1028 = vsel %vm1022, %v1018, 0.0
      %v1029 = vsel %vm1023, %v1014, 0.0
      %v1030 = vsel %vm1022, %v1019, 0.0
      %v1031 = vsel %vm1023, %v1015, 0.0
      %1032 = vrot.lane.b32.xlu0 %v977, 16
      %v1033 = vpop.permute.xlu0 %1032
      %1034 = vrot.lane.b32.xlu0 %v981, 16
      %v1035 = vpop.permute.xlu0 %1034
      %1036 = vrot.lane.b32.xlu0 %v987, 16
      %v1037 = vpop.permute.xlu0 %1036
      %1038 = vrot.lane.b32.xlu0 %v991, 16
      %v1039 = vpop.permute.xlu0 %1038
      %1040 = vrot.lane.b32.xlu0 %v979, 16
      %v1041 = vpop.permute.xlu0 %1040
      %1042 = vrot.lane.b32.xlu0 %v983, 16
      %v1043 = vpop.permute.xlu0 %1042
      %1044 = vrot.lane.b32.xlu0 %v989, 16
      %v1045 = vpop.permute.xlu0 %1044
      %1046 = vrot.lane.b32.xlu0 %v993, 16
      %v1047 = vpop.permute.xlu0 %1046
      %vm1048 = vcmp.lt.s32.totalorder %v865, 16
      %v1049 = vsel %vm1048, %v1033, %v1041
      %v1050 = vsel %vm1048, %v1035, %v1043
      %v1051 = vsel %vm1048, %v1037, %v1045
      %v1052 = vsel %vm1048, %v1039, %v1047
      %v1053 = vsel %vm1048, %v1041, %v1033
      %v1054 = vsel %vm1048, %v1043, %v1035
      %v1055 = vsel %vm1048, %v1045, %v1037
      %v1056 = vsel %vm1048, %v1047, %v1039
      %v1057 = vsel %vm869, 1, 0
      %v1058 = vsel %vm870, 1, 0
      %vm1059 = vcmp.eq.s32.totalorder %v1057, 1
      %vm1060 = vcmp.eq.s32.totalorder %v1058, 1
      %v1061 = vsel %vm1059, %v1053, 0.0
      %v1062 = vsel %vm1060, %v1049, 0.0
      %v1063 = vsel %vm1059, %v1054, 0.0
      %v1064 = vsel %vm1060, %v1050, 0.0
      %v1065 = vsel %vm1059, %v1055, 0.0
      %v1066 = vsel %vm1060, %v1051, 0.0
      %v1067 = vsel %vm1059, %v1056, 0.0
      %v1068 = vsel %vm1060, %v1052, 0.0
      %1069 = vrot.lane.b32.xlu0 %v977, 15
      %v1070 = vpop.permute.xlu0 %1069
      %1071 = vrot.lane.b32.xlu0 %v981, 15
      %v1072 = vpop.permute.xlu0 %1071
      %1073 = vrot.lane.b32.xlu0 %v987, 15
      %v1074 = vpop.permute.xlu0 %1073
      %1075 = vrot.lane.b32.xlu0 %v991, 15
      %v1076 = vpop.permute.xlu0 %1075
      %1077 = vrot.lane.b32.xlu0 %v979, 15
      %v1078 = vpop.permute.xlu0 %1077
      %1079 = vrot.lane.b32.xlu0 %v983, 15
      %v1080 = vpop.permute.xlu0 %1079
      %1081 = vrot.lane.b32.xlu0 %v989, 15
      %v1082 = vpop.permute.xlu0 %1081
      %1083 = vrot.lane.b32.xlu0 %v993, 15
      %v1084 = vpop.permute.xlu0 %1083
      %vm1085 = vcmp.lt.s32.totalorder %v865, 15
      %v1086 = vsel %vm1085, %v1070, %v1078
      %v1087 = vsel %vm1085, %v1072, %v1080
      %v1088 = vsel %vm1085, %v1074, %v1082
      %v1089 = vsel %vm1085, %v1076, %v1084
      %v1090 = vsel %vm1085, %v1078, %v1070
      %v1091 = vsel %vm1085, %v1080, %v1072
      %v1092 = vsel %vm1085, %v1082, %v1074
      %v1093 = vsel %vm1085, %v1084, %v1076
      %v1094 = vsel %vm879, 1, 0
      %v1095 = vsel %vm880, 1, 0
      %vm1096 = vcmp.eq.s32.totalorder %v1094, 1
      %vm1097 = vcmp.eq.s32.totalorder %v1095, 1
      %v1098 = vsel %vm1096, %v1090, 0.0
      %v1099 = vsel %vm1097, %v1086, 0.0
      %v1100 = vsel %vm1096, %v1091, 0.0
      %v1101 = vsel %vm1097, %v1087, 0.0
      %v1102 = vsel %vm1096, %v1092, 0.0
      %v1103 = vsel %vm1097, %v1088, 0.0
      %v1104 = vsel %vm1096, %v1093, 0.0
      %v1105 = vsel %vm1097, %v1089, 0.0
      %1106 = vrot.lane.b32.xlu0 %v977, 1
      %v1107 = vpop.permute.xlu0 %1106
      %1108 = vrot.lane.b32.xlu0 %v981, 1
      %v1109 = vpop.permute.xlu0 %1108
      %1110 = vrot.lane.b32.xlu0 %v987, 1
      %v1111 = vpop.permute.xlu0 %1110
      %1112 = vrot.lane.b32.xlu0 %v991, 1
      %v1113 = vpop.permute.xlu0 %1112
      %1114 = vrot.lane.b32.xlu0 %v979, 1
      %v1115 = vpop.permute.xlu0 %1114
      %1116 = vrot.lane.b32.xlu0 %v983, 1
      %v1117 = vpop.permute.xlu0 %1116
      %1118 = vrot.lane.b32.xlu0 %v989, 1
      %v1119 = vpop.permute.xlu0 %1118
      %1120 = vrot.lane.b32.xlu0 %v993, 1
      %v1121 = vpop.permute.xlu0 %1120
      %vm1122 = vcmp.lt.s32.totalorder %v865, 1
      %v1123 = vsel %vm1122, %v1107, %v1115
      %v1124 = vsel %vm1122, %v1109, %v1117
      %v1125 = vsel %vm1122, %v1111, %v1119
      %v1126 = vsel %vm1122, %v1113, %v1121
      %v1127 = vsel %vm1122, %v1115, %v1107
      %v1128 = vsel %vm1122, %v1117, %v1109
      %v1129 = vsel %vm1122, %v1119, %v1111
      %v1130 = vsel %vm1122, %v1121, %v1113
      %v1131 = vsel %vm873, 1, 0
      %v1132 = vsel %vm874, 1, 0
      %vm1133 = vcmp.eq.s32.totalorder %v1131, 1
      %vm1134 = vcmp.eq.s32.totalorder %v1132, 1
      %v1135 = vsel %vm1133, %v1127, 0.0
      %v1136 = vsel %vm1134, %v1123, 0.0
      %v1137 = vsel %vm1133, %v1128, 0.0
      %v1138 = vsel %vm1134, %v1124, 0.0
      %v1139 = vsel %vm1133, %v1129, 0.0
      %v1140 = vsel %vm1134, %v1125, 0.0
      %v1141 = vsel %vm1133, %v1130, 0.0
      %v1142 = vsel %vm1134, %v1126, 0.0
      %1143 = vrot.lane.b32.xlu0 %v977, 127
      %v1144 = vpop.permute.xlu0 %1143
      %1145 = vrot.lane.b32.xlu0 %v981, 127
      %v1146 = vpop.permute.xlu0 %1145
      %1147 = vrot.lane.b32.xlu0 %v987, 127
      %v1148 = vpop.permute.xlu0 %1147
      %1149 = vrot.lane.b32.xlu0 %v991, 127
      %v1150 = vpop.permute.xlu0 %1149
      %1151 = vrot.lane.b32.xlu0 %v979, 127
      %v1152 = vpop.permute.xlu0 %1151
      %1153 = vrot.lane.b32.xlu0 %v983, 127
      %v1154 = vpop.permute.xlu0 %1153
      %1155 = vrot.lane.b32.xlu0 %v989, 127
      %v1156 = vpop.permute.xlu0 %1155
      %1157 = vrot.lane.b32.xlu0 %v993, 127
      %v1158 = vpop.permute.xlu0 %1157
      %vm1159 = vcmp.lt.s32.totalorder %v865, 127
      %v1160 = vsel %vm1159, %v1144, %v1152
      %v1161 = vsel %vm1159, %v1146, %v1154
      %v1162 = vsel %vm1159, %v1148, %v1156
      %v1163 = vsel %vm1159, %v1150, %v1158
      %v1164 = vsel %vm1159, %v1152, %v1144
      %v1165 = vsel %vm1159, %v1154, %v1146
      %v1166 = vsel %vm1159, %v1156, %v1148
      %v1167 = vsel %vm1159, %v1158, %v1150
      %v1168 = vsel %vm875, 1, 0
      %v1169 = vsel %vm876, 1, 0
      %vm1170 = vcmp.eq.s32.totalorder %v1168, 1
      %vm1171 = vcmp.eq.s32.totalorder %v1169, 1
      %v1172 = vsel %vm1170, %v1160, 0.0
      %v1173 = vsel %vm1171, %v1164, 0.0
      %v1174 = vsel %vm1170, %v1161, 0.0
      %v1175 = vsel %vm1171, %v1165, 0.0
      %v1176 = vsel %vm1170, %v1162, 0.0
      %v1177 = vsel %vm1171, %v1166, 0.0
      %v1178 = vsel %vm1170, %v1163, 0.0
      %v1179 = vsel %vm1171, %v1167, 0.0
      %1180 = vrot.lane.b32.xlu0 %v977, 113
      %v1181 = vpop.permute.xlu0 %1180
      %1182 = vrot.lane.b32.xlu0 %v981, 113
      %v1183 = vpop.permute.xlu0 %1182
      %1184 = vrot.lane.b32.xlu0 %v987, 113
      %v1185 = vpop.permute.xlu0 %1184
      %1186 = vrot.lane.b32.xlu0 %v991, 113
      %v1187 = vpop.permute.xlu0 %1186
      %1188 = vrot.lane.b32.xlu0 %v979, 113
      %v1189 = vpop.permute.xlu0 %1188
      %1190 = vrot.lane.b32.xlu0 %v983, 113
      %v1191 = vpop.permute.xlu0 %1190
      %1192 = vrot.lane.b32.xlu0 %v989, 113
      %v1193 = vpop.permute.xlu0 %1192
      %1194 = vrot.lane.b32.xlu0 %v993, 113
      %v1195 = vpop.permute.xlu0 %1194
      %vm1196 = vcmp.lt.s32.totalorder %v865, 113
      %v1197 = vsel %vm1196, %v1181, %v1189
      %v1198 = vsel %vm1196, %v1183, %v1191
      %v1199 = vsel %vm1196, %v1185, %v1193
      %v1200 = vsel %vm1196, %v1187, %v1195
      %v1201 = vsel %vm1196, %v1189, %v1181
      %v1202 = vsel %vm1196, %v1191, %v1183
      %v1203 = vsel %vm1196, %v1193, %v1185
      %v1204 = vsel %vm1196, %v1195, %v1187
      %v1205 = vsel %vm881, 1, 0
      %v1206 = vsel %vm882, 1, 0
      %vm1207 = vcmp.eq.s32.totalorder %v1205, 1
      %vm1208 = vcmp.eq.s32.totalorder %v1206, 1
      %v1209 = vsel %vm1207, %v1197, 0.0
      %v1210 = vsel %vm1208, %v1201, 0.0
      %v1211 = vsel %vm1207, %v1198, 0.0
      %v1212 = vsel %vm1208, %v1202, 0.0
      %v1213 = vsel %vm1207, %v1199, 0.0
      %v1214 = vsel %vm1208, %v1203, 0.0
      %v1215 = vsel %vm1207, %v1200, 0.0
      %v1216 = vsel %vm1208, %v1204, 0.0
      %1217 = vrot.lane.b32.xlu0 %v977, 112
      %v1218 = vpop.permute.xlu0 %1217
      %1219 = vrot.lane.b32.xlu0 %v981, 112
      %v1220 = vpop.permute.xlu0 %1219
      %1221 = vrot.lane.b32.xlu0 %v987, 112
      %v1222 = vpop.permute.xlu0 %1221
      %1223 = vrot.lane.b32.xlu0 %v991, 112
      %v1224 = vpop.permute.xlu0 %1223
      %1225 = vrot.lane.b32.xlu0 %v979, 112
      %v1226 = vpop.permute.xlu0 %1225
      %1227 = vrot.lane.b32.xlu0 %v983, 112
      %v1228 = vpop.permute.xlu0 %1227
      %1229 = vrot.lane.b32.xlu0 %v989, 112
      %v1230 = vpop.permute.xlu0 %1229
      %1231 = vrot.lane.b32.xlu0 %v993, 112
      %v1232 = vpop.permute.xlu0 %1231
      %vm1233 = vcmp.lt.s32.totalorder %v865, 112
      %v1234 = vsel %vm1233, %v1218, %v1226
      %v1235 = vsel %vm1233, %v1220, %v1228
      %v1236 = vsel %vm1233, %v1222, %v1230
      %v1237 = vsel %vm1233, %v1224, %v1232
      %v1238 = vsel %vm1233, %v1226, %v1218
      %v1239 = vsel %vm1233, %v1228, %v1220
      %v1240 = vsel %vm1233, %v1230, %v1222
      %v1241 = vsel %vm1233, %v1232, %v1224
      %v1242 = vsel %vm871, 1, 0
      %v1243 = vsel %vm872, 1, 0
      %vm1244 = vcmp.eq.s32.totalorder %v1242, 1
      %vm1245 = vcmp.eq.s32.totalorder %v1243, 1
      %v1246 = vsel %vm1244, %v1234, 0.0
      %v1247 = vsel %vm1245, %v1238, 0.0
      %v1248 = vsel %vm1244, %v1235, 0.0
      %v1249 = vsel %vm1245, %v1239, 0.0
      %v1250 = vsel %vm1244, %v1236, 0.0
      %v1251 = vsel %vm1245, %v1240, 0.0
      %v1252 = vsel %vm1244, %v1237, 0.0
      %v1253 = vsel %vm1245, %v1241, 0.0
      %1254 = vrot.lane.b32.xlu0 %v977, 111
      %v1255 = vpop.permute.xlu0 %1254
      %1256 = vrot.lane.b32.xlu0 %v981, 111
      %v1257 = vpop.permute.xlu0 %1256
      %1258 = vrot.lane.b32.xlu0 %v987, 111
      %v1259 = vpop.permute.xlu0 %1258
      %1260 = vrot.lane.b32.xlu0 %v991, 111
      %v1261 = vpop.permute.xlu0 %1260
      %1262 = vrot.lane.b32.xlu0 %v979, 111
      %v1263 = vpop.permute.xlu0 %1262
      %1264 = vrot.lane.b32.xlu0 %v983, 111
      %v1265 = vpop.permute.xlu0 %1264
      %1266 = vrot.lane.b32.xlu0 %v989, 111
      %v1267 = vpop.permute.xlu0 %1266
      %1268 = vrot.lane.b32.xlu0 %v993, 111
      %v1269 = vpop.permute.xlu0 %1268
      %vm1270 = vcmp.lt.s32.totalorder %v865, 111
      %v1271 = vsel %vm1270, %v1255, %v1263
      %v1272 = vsel %vm1270, %v1257, %v1265
      %v1273 = vsel %vm1270, %v1259, %v1267
      %v1274 = vsel %vm1270, %v1261, %v1269
      %v1275 = vsel %vm1270, %v1263, %v1255
      %v1276 = vsel %vm1270, %v1265, %v1257
      %v1277 = vsel %vm1270, %v1267, %v1259
      %v1278 = vsel %vm1270, %v1269, %v1261
      %v1279 = vsel %vm883, 1, 0
      %v1280 = vsel %vm884, 1, 0
      %vm1281 = vcmp.eq.s32.totalorder %v1279, 1
      %vm1282 = vcmp.eq.s32.totalorder %v1280, 1
      %v1283 = vsel %vm1281, %v1271, 0.0
      %v1284 = vsel %vm1282, %v1275, 0.0
      %v1285 = vsel %vm1281, %v1272, 0.0
      %v1286 = vsel %vm1282, %v1276, 0.0
      %v1287 = vsel %vm1281, %v1273, 0.0
      %v1288 = vsel %vm1282, %v1277, 0.0
      %v1289 = vsel %vm1281, %v1274, 0.0
      %v1290 = vsel %vm1282, %v1278, 0.0
      %v1291 = vpack.c.bf16 %v1026, %v1024
      %v1292 = vpack.c.bf16 %v1027, %v1025
      %v1293 = vpack.c.bf16 %v1030, %v1028
      %v1294 = vpack.c.bf16 %v1031, %v1029
      %v1295 = vpack.c.bf16 %v1063, %v1061
      %v1296 = vpack.c.bf16 %v1064, %v1062
      %v1297 = vpack.c.bf16 %v1067, %v1065
      %v1298 = vpack.c.bf16 %v1068, %v1066
      %v1299 = vpack.c.bf16 %v1100, %v1098
      %v1300 = vpack.c.bf16 %v1101, %v1099
      %v1301 = vpack.c.bf16 %v1104, %v1102
      %v1302 = vpack.c.bf16 %v1105, %v1103
      %v1303 = vpack.c.bf16 %v1137, %v1135
      %v1304 = vpack.c.bf16 %v1138, %v1136
      %v1305 = vpack.c.bf16 %v1141, %v1139
      %v1306 = vpack.c.bf16 %v1142, %v1140
      %v1307 = vpack.c.bf16 %v981, %v977
      %v1308 = vpack.c.bf16 %v983, %v979
      %v1309 = vpack.c.bf16 %v991, %v987
      %v1310 = vpack.c.bf16 %v993, %v989
      %v1311 = vpack.c.bf16 %v1174, %v1172
      %v1312 = vpack.c.bf16 %v1175, %v1173
      %v1313 = vpack.c.bf16 %v1178, %v1176
      %v1314 = vpack.c.bf16 %v1179, %v1177
      %v1315 = vpack.c.bf16 %v1211, %v1209
      %v1316 = vpack.c.bf16 %v1212, %v1210
      %v1317 = vpack.c.bf16 %v1215, %v1213
      %v1318 = vpack.c.bf16 %v1216, %v1214
      %v1319 = vpack.c.bf16 %v1248, %v1246
      %v1320 = vpack.c.bf16 %v1249, %v1247
      %v1321 = vpack.c.bf16 %v1252, %v1250
      %v1322 = vpack.c.bf16 %v1253, %v1251
      %v1323 = vpack.c.bf16 %v1285, %v1283
      %v1324 = vpack.c.bf16 %v1286, %v1284
      %v1325 = vpack.c.bf16 %v1289, %v1287
      %v1326 = vpack.c.bf16 %v1290, %v1288
      %v1327 = vld [vmem:[%s4] sm:$0xff]
      %v1328 = vld [vmem:[%s4 + $0x8] sm:$0xf]
      %v1329 = vld [vmem:[%s4 + $0xc] sm:$0xff]
      %v1330 = vld [vmem:[%s4 + $0x14] sm:$0xf]
      %v1331 = vld [vmem:[%s5] sm:$0xff]
      %v1332 = vld [vmem:[%s5 + $0x8] sm:$0xff]
      %1334 = vset.pattern.permute.xlu0 0
      %1335 = vperm.xlu0 %1334, %v1331
      %v1336 = vpop.permute.xlu0 %1335
      %1339 = vset.pattern.permute.xlu0 0
      %1340 = vperm.xlu0 %1339, %v1332
      %v1341 = vpop.permute.xlu0 %1340
      %v1347 = vunpack.c.l.b16 %v1327
      %v1348 = vunpack.c.h.b16 %v1327
      %v1349 = vunpack.c.l.b16 %v1328
      %v1350 = vunpack.c.l.b16 %v1329
      %v1351 = vunpack.c.h.b16 %v1329
      %v1352 = vunpack.c.l.b16 %v1330
      %v1353 = vpack.c.b16 %v1350, %v1347
      %v1354 = vpack.c.b16 %v1351, %v1348
      %v1355 = vpack.c.b16 %v1352, %v1349
      %vm1358 = vcmask 261120
      %v1360 = vsel %vm1358, %v1355, 0
      %1362 = vmatprep.subr.bf16.mxu0 %v1292
      %1363 = vmatpush1.bf16.msra.mxu0 %v1291
      %1364 = vmatprep.subr.bf16.mxu0 %v1294
      %1365 = vmatpush1.bf16.msra.mxu0 %v1293
      %1366 = vmatprep.subr.bf16.mxu0 %v1296
      %1367 = vmatpush1.bf16.msra.mxu0 %v1295
      %1368 = vmatprep.subr.bf16.mxu0 %v1298
      %1369 = vmatpush1.bf16.msra.mxu0 %v1297
      %1370 = vmatprep.subr.bf16.mxu0 %v1300
      %1371 = vmatpush1.bf16.msra.mxu0 %v1299
      %1372 = vmatprep.subr.bf16.mxu0 %v1302
      %1373 = vmatpush1.bf16.msra.mxu0 %v1301
      %1374 = vmatprep.subr.bf16.mxu0 %v1304
      %1375 = vmatpush1.bf16.msra.mxu0 %v1303
      %1376 = vmatprep.subr.bf16.mxu0 %v1306
      %1377 = vmatpush1.bf16.msra.mxu0 %v1305
      %1378 = vmatprep.subr.bf16.mxu0 %v1308
      %1379 = vmatpush1.bf16.msra.mxu0 %v1307
      %1380 = vmatprep.subr.bf16.mxu0 %v1310
      %1381 = vmatpush1.bf16.msra.mxu0 %v1309
      %1382 = vmatprep.subr.bf16.mxu0 %v1312
      %1383 = vmatpush1.bf16.msra.mxu0 %v1311
      %1384 = vmatprep.subr.bf16.mxu0 %v1314
      %1385 = vmatpush1.bf16.msra.mxu0 %v1313
      %1386 = vmatprep.subr.bf16.mxu0 %v1316
      %1387 = vmatpush1.bf16.msra.mxu0 %v1315
      %1388 = vmatprep.subr.bf16.mxu0 %v1318
      %1389 = vmatpush1.bf16.msra.mxu0 %v1317
      %1390 = vmatprep.subr.bf16.mxu0 %v1320
      %1391 = vmatpush1.bf16.msra.mxu0 %v1319
      %1392 = vmatprep.subr.bf16.mxu0 %v1322
      %1393 = vmatpush1.bf16.msra.mxu0 %v1321
      %1394 = vmatprep.mubr.bf16.mxu0 %v1354
      %1395 = vmatmul.mubr.bf16.gmra.mrb[0].mxu0 %v1353
      %v1396 = vpop.f32.mrb[0].mxu0
      %v1397 = vadd.f32 %v1336, %v1396
      %v1398 = vpop.f32.mrb[0].mxu0
      %v1399 = vadd.f32 %v1336, %v1398
      %v1400 = vpop.f32.mrb[0].mxu0
      %v1401 = vadd.f32 %v1341, %v1400
      %v1402 = vpop.f32.mrb[0].mxu0
      %v1403 = vadd.f32 %v1341, %v1402
      %1404 = vdwg.mxu0
      %1405 = vmatprep.subr.bf16.mxu0 %v1324
      %1406 = vmatpush1.bf16.msra.mxu0 %v1323
      %1407 = vmatprep.subr.bf16.mxu0 %v1326
      %1408 = vmatpush1.bf16.msra.mxu0 %v1325
      %1409 = vmatprep.subr.bf16.mxu0 0
      %1410 = vmatpush1.bf16.msra.mxu0 0
      %1411 = vmatprep.subr.bf16.mxu0 0
      %1412 = vmatpush1.bf16.msra.mxu0 0
      %1413 = vmatprep.subr.bf16.mxu0 0
      %1414 = vmatpush1.bf16.msra.mxu0 0
      %1415 = vmatprep.subr.bf16.mxu0 0
      %1416 = vmatpush1.bf16.msra.mxu0 0
      %1417 = vmatprep.subr.bf16.mxu0 0
      %1418 = vmatpush1.bf16.msra.mxu0 0
      %1419 = vmatprep.subr.bf16.mxu0 0
      %1420 = vmatpush1.bf16.msra.mxu0 0
      %1421 = vmatprep.subr.bf16.mxu0 0
      %1422 = vmatpush1.bf16.msra.mxu0 0
      %1423 = vmatprep.subr.bf16.mxu0 0
      %1424 = vmatpush1.bf16.msra.mxu0 0
      %1425 = vmatprep.subr.bf16.mxu0 0
      %1426 = vmatpush1.bf16.msra.mxu0 0
      %1427 = vmatprep.subr.bf16.mxu0 0
      %1428 = vmatpush1.bf16.msra.mxu0 0
      %1429 = vmatprep.subr.bf16.mxu0 0
      %1430 = vmatpush1.bf16.msra.mxu0 0
      %1431 = vmatprep.subr.bf16.mxu0 0
      %1432 = vmatpush1.bf16.msra.mxu0 0
      %1433 = vmatprep.subr.bf16.mxu0 0
      %1434 = vmatpush1.bf16.msra.mxu0 0
      %1435 = vmatprep.subr.bf16.mxu0 0
      %1436 = vmatpush1.bf16.msra.mxu0 0
      %1437 = vmatprep.mubr.bf16.mxu0 0
      %1438 = vmatmul.mubr.bf16.gmra.mrb[0].mxu0 %v1360
      %v1439 = vpop.f32.mrb[0].mxu0
      %v1440 = vadd.f32 %v1397, %v1439
      %v1441 = vpop.f32.mrb[0].mxu0
      %v1442 = vadd.f32 %v1399, %v1441
      %v1443 = vpop.f32.mrb[0].mxu0
      %v1444 = vadd.f32 %v1401, %v1443
      %v1445 = vpop.f32.mrb[0].mxu0
      %v1446 = vadd.f32 %v1403, %v1445
      %1447 = vdwg.mxu0
      %v1448 = vld [vmem:[%s849] sm:$0xff]
      %v1449 = vld [vmem:[%s849 + $0x8] sm:$0xff]
      %v1450 = vld [vmem:[%s849 + $0x10] sm:$0xff]
      %v1451 = vld [vmem:[%s849 + $0x18] sm:$0xff]
      %v1452 = vadd.f32 %v1440, %v1448
      %v1453 = vadd.f32 %v1442, %v1449
      %v1454 = vadd.f32 %v1444, %v1450
      %v1455 = vadd.f32 %v1446, %v1451
      %v1456 = vlaneseq
      %v1457 = vshrl.u32 %v1456, 7
      %v1458 = vadd.s32 %v1457, 8
      %vm1459 = vcmp.ge.s32.totalorder %v1457, 0
      %vm1460 = vcmp.ge.s32.totalorder %v1458, 0
      %vm1461 = vcmp.lt.s32.totalorder %v1457, 4
      %vm1462 = vcmp.lt.s32.totalorder %v1458, 4
      %vm1463 = vmand %vm1459, %vm1461
      %vm1464 = vmand %vm1460, %vm1462
      %vm1465 = vcmp.ge.s32.totalorder %v1457, 4
      %vm1466 = vcmp.ge.s32.totalorder %v1458, 4
      %vm1467 = vcmp.lt.s32.totalorder %v1457, 8
      %vm1468 = vcmp.lt.s32.totalorder %v1458, 8
      %vm1469 = vmand %vm1465, %vm1467
      %vm1470 = vmand %vm1466, %vm1468
      %vm1471 = vcmp.ge.s32.totalorder %v1457, 8
      %vm1472 = vcmp.ge.s32.totalorder %v1458, 8
      %vm1473 = vcmp.lt.s32.totalorder %v1457, 12
      %vm1474 = vcmp.lt.s32.totalorder %v1458, 12
      %vm1475 = vmand %vm1471, %vm1473
      %vm1476 = vmand %vm1472, %vm1474
      %vm1477 = vcmp.ge.s32.totalorder %v1457, 12
      %vm1478 = vcmp.ge.s32.totalorder %v1458, 12
      %vm1479 = vcmp.lt.s32.totalorder %v1457, 16
      %vm1480 = vcmp.lt.s32.totalorder %v1458, 16
      %vm1481 = vmand %vm1477, %vm1479
      %vm1482 = vmand %vm1478, %vm1480
      %v1483 = vadd.f32 %v1452, %v1453
      %1484 = vadd.xlane.f32.xlu0 %v1483
      %v1485 = vpop.xlane.xlu0 %1484
      %v1486 = vadd.f32 %v1454, %v1455
      %1487 = vadd.xlane.f32.xlu0 %v1486
      %v1488 = vpop.xlane.xlu0 %1487
      %v1489 = vsel %vm1463, %v1485, 0.0
      %v1490 = vsel %vm1464, %v1488, 0.0
      %vm1491 = vcmask 7168
      %v1492 = vsel %vm1491, %v1489, 0.0
      %v1493 = vsel %vm1491, %v1490, 0.0
      %v1494 = vadd.f32 %v1492, %v1493
      %1495 = vadd.xlane.f32.xlu0 %v1494
      %v1496 = vpop.xlane.xlu0 %1495
      %v1497 = vrot.slane %v1496, 4
      %v1498 = vadd.f32 %v1496, %v1497
      %v1499 = vrot.slane %v1498, 2
      %v1500 = vadd.f32 %v1498, %v1499
      %v1501 = vrot.slane %v1500, 1
      %v1502 = vadd.f32 %v1500, %v1501
      %s1503 = vtos %v1502
      %s1504 = smul.f32 %s1503, 0.0009765625
      %v1505 = vstv %s1504
      %v1506 = vsel %vm1463, %v1505, 0.0
      %v1507 = vsel %vm1464, %v1505, 0.0
      %v1508 = vadd.f32 %v1506, 0.0
      %v1509 = vadd.f32 %v1507, 0.0
      %v1510 = vsel %vm1469, %v1485, 0.0
      %v1511 = vsel %vm1470, %v1488, 0.0
      %v1512 = vsel %vm1491, %v1510, 0.0
      %v1513 = vsel %vm1491, %v1511, 0.0
      %v1514 = vadd.f32 %v1512, %v1513
      %1515 = vadd.xlane.f32.xlu0 %v1514
      %v1516 = vpop.xlane.xlu0 %1515
      %v1517 = vrot.slane %v1516, 4
      %v1518 = vadd.f32 %v1516, %v1517
      %v1519 = vrot.slane %v1518, 2
      %v1520 = vadd.f32 %v1518, %v1519
      %v1521 = vrot.slane %v1520, 1
      %v1522 = vadd.f32 %v1520, %v1521
      %s1523 = vtos %v1522
      %s1524 = smul.f32 %s1523, 0.0009765625
      %v1525 = vstv %s1524
      %v1526 = vsel %vm1469, %v1525, 0.0
      %v1527 = vsel %vm1470, %v1525, 0.0
      %v1528 = vadd.f32 %v1508, %v1526
      %v1529 = vadd.f32 %v1509, %v1527
      %v1530 = vsel %vm1475, %v1485, 0.0
      %v1531 = vsel %vm1476, %v1488, 0.0
      %v1532 = vsel %vm1491, %v1530, 0.0
      %v1533 = vsel %vm1491, %v1531, 0.0
      %v1534 = vadd.f32 %v1532, %v1533
      %1535 = vadd.xlane.f32.xlu0 %v1534
      %v1536 = vpop.xlane.xlu0 %1535
      %v1537 = vrot.slane %v1536, 4
      %v1538 = vadd.f32 %v1536, %v1537
      %v1539 = vrot.slane %v1538, 2
      %v1540 = vadd.f32 %v1538, %v1539
      %v1541 = vrot.slane %v1540, 1
      %v1542 = vadd.f32 %v1540, %v1541
      %s1543 = vtos %v1542
      %s1544 = smul.f32 %s1543, 0.0009765625
      %v1545 = vstv %s1544
      %v1546 = vsel %vm1475, %v1545, 0.0
      %v1547 = vsel %vm1476, %v1545, 0.0
      %v1548 = vadd.f32 %v1528, %v1546
      %v1549 = vadd.f32 %v1529, %v1547
      %v1550 = vsel %vm1481, %v1485, 0.0
      %v1551 = vsel %vm1482, %v1488, 0.0
      %v1552 = vsel %vm1491, %v1550, 0.0
      %v1553 = vsel %vm1491, %v1551, 0.0
      %v1554 = vadd.f32 %v1552, %v1553
      %1555 = vadd.xlane.f32.xlu0 %v1554
      %v1556 = vpop.xlane.xlu0 %1555
      %v1557 = vrot.slane %v1556, 4
      %v1558 = vadd.f32 %v1556, %v1557
      %v1559 = vrot.slane %v1558, 2
      %v1560 = vadd.f32 %v1558, %v1559
      %v1561 = vrot.slane %v1560, 1
      %v1562 = vadd.f32 %v1560, %v1561
      %s1563 = vtos %v1562
      %s1564 = smul.f32 %s1563, 0.0009765625
      %v1565 = vstv %s1564
      %v1566 = vsel %vm1481, %v1565, 0.0
      %v1567 = vsel %vm1482, %v1565, 0.0
      %v1568 = vadd.f32 %v1548, %v1566
      %v1569 = vadd.f32 %v1549, %v1567
      %v1570 = vsub.f32 %v1452, %v1568
      %v1571 = vsub.f32 %v1453, %v1568
      %v1572 = vsub.f32 %v1454, %v1569
      %v1573 = vsub.f32 %v1455, %v1569
      %v1574 = vmul.f32 %v1570, %v1570
      %v1575 = vmul.f32 %v1571, %v1571
      %v1576 = vmul.f32 %v1572, %v1572
      %v1577 = vmul.f32 %v1573, %v1573
      %v1578 = vadd.f32 %v1574, %v1575
      %1579 = vadd.xlane.f32.xlu0 %v1578
      %v1580 = vpop.xlane.xlu0 %1579
      %v1581 = vadd.f32 %v1576, %v1577
      %1582 = vadd.xlane.f32.xlu0 %v1581
      %v1583 = vpop.xlane.xlu0 %1582
      %v1584 = vsel %vm1463, %v1580, 0.0
      %v1585 = vsel %vm1464, %v1583, 0.0
      %v1586 = vsel %vm1491, %v1584, 0.0
      %v1587 = vsel %vm1491, %v1585, 0.0
      %v1588 = vadd.f32 %v1586, %v1587
      %1589 = vadd.xlane.f32.xlu0 %v1588
      %v1590 = vpop.xlane.xlu0 %1589
      %v1591 = vrot.slane %v1590, 4
      %v1592 = vadd.f32 %v1590, %v1591
      %v1593 = vrot.slane %v1592, 2
      %v1594 = vadd.f32 %v1592, %v1593
      %v1595 = vrot.slane %v1594, 1
      %v1596 = vadd.f32 %v1594, %v1595
      %s1597 = vtos %v1596
      %s1598 = smul.f32 %s1597, 0.0009765625
      %v1599 = vstv %s1598
      %v1600 = vsel %vm1463, %v1599, 0.0
      %v1601 = vsel %vm1464, %v1599, 0.0
      %v1602 = vadd.f32 %v1600, 0.0
      %v1603 = vadd.f32 %v1601, 0.0
      %v1604 = vsel %vm1469, %v1580, 0.0
      %v1605 = vsel %vm1470, %v1583, 0.0
      %v1606 = vsel %vm1491, %v1604, 0.0
      %v1607 = vsel %vm1491, %v1605, 0.0
      %v1608 = vadd.f32 %v1606, %v1607
      %1609 = vadd.xlane.f32.xlu0 %v1608
      %v1610 = vpop.xlane.xlu0 %1609
      %v1611 = vrot.slane %v1610, 4
      %v1612 = vadd.f32 %v1610, %v1611
      %v1613 = vrot.slane %v1612, 2
      %v1614 = vadd.f32 %v1612, %v1613
      %v1615 = vrot.slane %v1614, 1
      %v1616 = vadd.f32 %v1614, %v1615
      %s1617 = vtos %v1616
      %s1618 = smul.f32 %s1617, 0.0009765625
      %v1619 = vstv %s1618
      %v1620 = vsel %vm1469, %v1619, 0.0
      %v1621 = vsel %vm1470, %v1619, 0.0
      %v1622 = vadd.f32 %v1602, %v1620
      %v1623 = vadd.f32 %v1603, %v1621
      %v1624 = vsel %vm1475, %v1580, 0.0
      %v1625 = vsel %vm1476, %v1583, 0.0
      %v1626 = vsel %vm1491, %v1624, 0.0
      %v1627 = vsel %vm1491, %v1625, 0.0
      %v1628 = vadd.f32 %v1626, %v1627
      %1629 = vadd.xlane.f32.xlu0 %v1628
      %v1630 = vpop.xlane.xlu0 %1629
      %v1631 = vrot.slane %v1630, 4
      %v1632 = vadd.f32 %v1630, %v1631
      %v1633 = vrot.slane %v1632, 2
      %v1634 = vadd.f32 %v1632, %v1633
      %v1635 = vrot.slane %v1634, 1
      %v1636 = vadd.f32 %v1634, %v1635
      %s1637 = vtos %v1636
      %s1638 = smul.f32 %s1637, 0.0009765625
      %v1639 = vstv %s1638
      %v1640 = vsel %vm1475, %v1639, 0.0
      %v1641 = vsel %vm1476, %v1639, 0.0
      %v1642 = vadd.f32 %v1622, %v1640
      %v1643 = vadd.f32 %v1623, %v1641
      %v1644 = vsel %vm1481, %v1580, 0.0
      %v1645 = vsel %vm1482, %v1583, 0.0
      %v1646 = vsel %vm1491, %v1644, 0.0
      %v1647 = vsel %vm1491, %v1645, 0.0
      %v1648 = vadd.f32 %v1646, %v1647
      %1649 = vadd.xlane.f32.xlu0 %v1648
      %v1650 = vpop.xlane.xlu0 %1649
      %v1651 = vrot.slane %v1650, 4
      %v1652 = vadd.f32 %v1650, %v1651
      %v1653 = vrot.slane %v1652, 2
      %v1654 = vadd.f32 %v1652, %v1653
      %v1655 = vrot.slane %v1654, 1
      %v1656 = vadd.f32 %v1654, %v1655
      %s1657 = vtos %v1656
      %s1658 = smul.f32 %s1657, 0.0009765625
      %v1659 = vstv %s1658
      %v1660 = vsel %vm1481, %v1659, 0.0
      %v1661 = vsel %vm1482, %v1659, 0.0
      %v1662 = vadd.f32 %v1642, %v1660
      %v1663 = vadd.f32 %v1643, %v1661
      %v1664 = vadd.f32 %v1662, 1e-05
      %v1665 = vadd.f32 %v1663, 1e-05
      %v1666 = vrsqrt.pop %v1664
      %v1667 = vrsqrt.pop %v1665
      %v1668 = vmul.f32 %v1570, %v1666
      %v1669 = vmul.f32 %v1571, %v1666
      %v1670 = vmul.f32 %v1572, %v1667
      %v1671 = vmul.f32 %v1573, %v1667
      %v1672 = vld [vmem:[%s6] sm:$0xff]
      %v1673 = vld [vmem:[%s6 + $0x8] sm:$0xff]
      %1675 = vset.pattern.permute.xlu0 0
      %1676 = vperm.xlu0 %1675, %v1672
      %v1677 = vpop.permute.xlu0 %1676
      %1680 = vset.pattern.permute.xlu0 0
      %1681 = vperm.xlu0 %1680, %v1673
      %v1682 = vpop.permute.xlu0 %1681
      %v1684 = vmul.f32 %v1668, %v1677
      %v1685 = vmul.f32 %v1669, %v1677
      %v1686 = vmul.f32 %v1670, %v1682
      %v1687 = vmul.f32 %v1671, %v1682
      %v1688 = vld [vmem:[%s7] sm:$0xff]
      %v1689 = vld [vmem:[%s7 + $0x8] sm:$0xff]
      %1691 = vset.pattern.permute.xlu0 0
      %1692 = vperm.xlu0 %1691, %v1688
      %v1693 = vpop.permute.xlu0 %1692
      %1696 = vset.pattern.permute.xlu0 0
      %1697 = vperm.xlu0 %1696, %v1689
      %v1698 = vpop.permute.xlu0 %1697
      %v1700 = vadd.f32 %v1684, %v1693
      %v1701 = vadd.f32 %v1685, %v1693
      %v1702 = vadd.f32 %v1686, %v1698
      %v1703 = vadd.f32 %v1687, %v1698
      %v1704 = vxor.u32 %v1700, 2147483648
      %v1705 = vxor.u32 %v1701, 2147483648
      %v1706 = vxor.u32 %v1702, 2147483648
      %v1707 = vxor.u32 %v1703, 2147483648
      %v1708 = vmul.f32 %v1704, 1.442695
      %v1709 = vpow.pop %v1708
      %v1710 = vmul.f32 %v1705, 1.442695
      %v1711 = vpow.pop %v1710
      %v1712 = vmul.f32 %v1706, 1.442695
      %v1713 = vpow.pop %v1712
      %v1714 = vmul.f32 %v1707, 1.442695
      %v1715 = vpow.pop %v1714
      %v1716 = vadd.f32 %v1709, 1.0
      %v1717 = vadd.f32 %v1711, 1.0
      %v1718 = vadd.f32 %v1713, 1.0
      %v1719 = vadd.f32 %v1715, 1.0
      %v1720 = vrcp.pop %v1716
      %v1721 = vmul.f32 1.0, %v1720
      %v1722 = vrcp.pop %v1717
      %v1723 = vmul.f32 1.0, %v1722
      %v1724 = vrcp.pop %v1718
      %v1725 = vmul.f32 1.0, %v1724
      %v1726 = vrcp.pop %v1719
      %v1727 = vmul.f32 1.0, %v1726
      %v1728 = vmul.f32 %v1700, %v1721
      %v1729 = vmul.f32 %v1701, %v1723
      %v1730 = vmul.f32 %v1702, %v1725
      %v1731 = vmul.f32 %v1703, %v1727
      %1732 = vrot.lane.b32.xlu0 %v1728, 17
      %v1733 = vpop.permute.xlu0 %1732
      %1734 = vrot.lane.b32.xlu0 %v1730, 17
      %v1735 = vpop.permute.xlu0 %1734
      %1736 = vrot.lane.b32.xlu0 %v1729, 17
      %v1737 = vpop.permute.xlu0 %1736
      %1738 = vrot.lane.b32.xlu0 %v1731, 17
      %v1739 = vpop.permute.xlu0 %1738
      %v1740 = vsel %vm1011, %v1733, %v1737
      %v1741 = vsel %vm1011, %v1735, %v1739
      %v1742 = vsel %vm1011, %v1737, %v1733
      %v1743 = vsel %vm1011, %v1739, %v1735
      %v1744 = vsel %vm1022, %v1742, 0.0
      %v1745 = vsel %vm1023, %v1740, 0.0
      %v1746 = vsel %vm1022, %v1743, 0.0
      %v1747 = vsel %vm1023, %v1741, 0.0
      %1748 = vrot.lane.b32.xlu0 %v1728, 16
      %v1749 = vpop.permute.xlu0 %1748
      %1750 = vrot.lane.b32.xlu0 %v1730, 16
      %v1751 = vpop.permute.xlu0 %1750
      %1752 = vrot.lane.b32.xlu0 %v1729, 16
      %v1753 = vpop.permute.xlu0 %1752
      %1754 = vrot.lane.b32.xlu0 %v1731, 16
      %v1755 = vpop.permute.xlu0 %1754
      %v1756 = vsel %vm1048, %v1749, %v1753
      %v1757 = vsel %vm1048, %v1751, %v1755
      %v1758 = vsel %vm1048, %v1753, %v1749
      %v1759 = vsel %vm1048, %v1755, %v1751
      %v1760 = vsel %vm1059, %v1758, 0.0
      %v1761 = vsel %vm1060, %v1756, 0.0
      %v1762 = vsel %vm1059, %v1759, 0.0
      %v1763 = vsel %vm1060, %v1757, 0.0
      %1764 = vrot.lane.b32.xlu0 %v1728, 15
      %v1765 = vpop.permute.xlu0 %1764
      %1766 = vrot.lane.b32.xlu0 %v1730, 15
      %v1767 = vpop.permute.xlu0 %1766
      %1768 = vrot.lane.b32.xlu0 %v1729, 15
      %v1769 = vpop.permute.xlu0 %1768
      %1770 = vrot.lane.b32.xlu0 %v1731, 15
      %v1771 = vpop.permute.xlu0 %1770
      %v1772 = vsel %vm1085, %v1765, %v1769
      %v1773 = vsel %vm1085, %v1767, %v1771
      %v1774 = vsel %vm1085, %v1769, %v1765
      %v1775 = vsel %vm1085, %v1771, %v1767
      %v1776 = vsel %vm1096, %v1774, 0.0
      %v1777 = vsel %vm1097, %v1772, 0.0
      %v1778 = vsel %vm1096, %v1775, 0.0
      %v1779 = vsel %vm1097, %v1773, 0.0
      %1780 = vrot.lane.b32.xlu0 %v1728, 1
      %v1781 = vpop.permute.xlu0 %1780
      %1782 = vrot.lane.b32.xlu0 %v1730, 1
      %v1783 = vpop.permute.xlu0 %1782
      %1784 = vrot.lane.b32.xlu0 %v1729, 1
      %v1785 = vpop.permute.xlu0 %1784
      %1786 = vrot.lane.b32.xlu0 %v1731, 1
      %v1787 = vpop.permute.xlu0 %1786
      %v1788 = vsel %vm1122, %v1781, %v1785
      %v1789 = vsel %vm1122, %v1783, %v1787
      %v1790 = vsel %vm1122, %v1785, %v1781
      %v1791 = vsel %vm1122, %v1787, %v1783
      %v1792 = vsel %vm1133, %v1790, 0.0
      %v1793 = vsel %vm1134, %v1788, 0.0
      %v1794 = vsel %vm1133, %v1791, 0.0
      %v1795 = vsel %vm1134, %v1789, 0.0
      %1796 = vrot.lane.b32.xlu0 %v1728, 127
      %v1797 = vpop.permute.xlu0 %1796
      %1798 = vrot.lane.b32.xlu0 %v1730, 127
      %v1799 = vpop.permute.xlu0 %1798
      %1800 = vrot.lane.b32.xlu0 %v1729, 127
      %v1801 = vpop.permute.xlu0 %1800
      %1802 = vrot.lane.b32.xlu0 %v1731, 127
      %v1803 = vpop.permute.xlu0 %1802
      %v1804 = vsel %vm1159, %v1797, %v1801
      %v1805 = vsel %vm1159, %v1799, %v1803
      %v1806 = vsel %vm1159, %v1801, %v1797
      %v1807 = vsel %vm1159, %v1803, %v1799
      %v1808 = vsel %vm1170, %v1804, 0.0
      %v1809 = vsel %vm1171, %v1806, 0.0
      %v1810 = vsel %vm1170, %v1805, 0.0
      %v1811 = vsel %vm1171, %v1807, 0.0
      %1812 = vrot.lane.b32.xlu0 %v1728, 113
      %v1813 = vpop.permute.xlu0 %1812
      %1814 = vrot.lane.b32.xlu0 %v1730, 113
      %v1815 = vpop.permute.xlu0 %1814
      %1816 = vrot.lane.b32.xlu0 %v1729, 113
      %v1817 = vpop.permute.xlu0 %1816
      %1818 = vrot.lane.b32.xlu0 %v1731, 113
      %v1819 = vpop.permute.xlu0 %1818
      %v1820 = vsel %vm1196, %v1813, %v1817
      %v1821 = vsel %vm1196, %v1815, %v1819
      %v1822 = vsel %vm1196, %v1817, %v1813
      %v1823 = vsel %vm1196, %v1819, %v1815
      %v1824 = vsel %vm1207, %v1820, 0.0
      %v1825 = vsel %vm1208, %v1822, 0.0
      %v1826 = vsel %vm1207, %v1821, 0.0
      %v1827 = vsel %vm1208, %v1823, 0.0
      %1828 = vrot.lane.b32.xlu0 %v1728, 112
      %v1829 = vpop.permute.xlu0 %1828
      %1830 = vrot.lane.b32.xlu0 %v1730, 112
      %v1831 = vpop.permute.xlu0 %1830
      %1832 = vrot.lane.b32.xlu0 %v1729, 112
      %v1833 = vpop.permute.xlu0 %1832
      %1834 = vrot.lane.b32.xlu0 %v1731, 112
      %v1835 = vpop.permute.xlu0 %1834
      %v1836 = vsel %vm1233, %v1829, %v1833
      %v1837 = vsel %vm1233, %v1831, %v1835
      %v1838 = vsel %vm1233, %v1833, %v1829
      %v1839 = vsel %vm1233, %v1835, %v1831
      %v1840 = vsel %vm1244, %v1836, 0.0
      %v1841 = vsel %vm1245, %v1838, 0.0
      %v1842 = vsel %vm1244, %v1837, 0.0
      %v1843 = vsel %vm1245, %v1839, 0.0
      %1844 = vrot.lane.b32.xlu0 %v1728, 111
      %v1845 = vpop.permute.xlu0 %1844
      %1846 = vrot.lane.b32.xlu0 %v1730, 111
      %v1847 = vpop.permute.xlu0 %1846
      %1848 = vrot.lane.b32.xlu0 %v1729, 111
      %v1849 = vpop.permute.xlu0 %1848
      %1850 = vrot.lane.b32.xlu0 %v1731, 111
      %v1851 = vpop.permute.xlu0 %1850
      %v1852 = vsel %vm1270, %v1845, %v1849
      %v1853 = vsel %vm1270, %v1847, %v1851
      %v1854 = vsel %vm1270, %v1849, %v1845
      %v1855 = vsel %vm1270, %v1851, %v1847
      %v1856 = vsel %vm1281, %v1852, 0.0
      %v1857 = vsel %vm1282, %v1854, 0.0
      %v1858 = vsel %vm1281, %v1853, 0.0
      %v1859 = vsel %vm1282, %v1855, 0.0
      %v1860 = vpack.c.bf16 %v1746, %v1744
      %v1861 = vpack.c.bf16 %v1747, %v1745
      %v1862 = vpack.c.bf16 %v1762, %v1760
      %v1863 = vpack.c.bf16 %v1763, %v1761
      %v1864 = vpack.c.bf16 %v1778, %v1776
      %v1865 = vpack.c.bf16 %v1779, %v1777
      %v1866 = vpack.c.bf16 %v1794, %v1792
      %v1867 = vpack.c.bf16 %v1795, %v1793
      %v1868 = vpack.c.bf16 %v1730, %v1728
      %v1869 = vpack.c.bf16 %v1731, %v1729
      %v1870 = vpack.c.bf16 %v1810, %v1808
      %v1871 = vpack.c.bf16 %v1811, %v1809
      %v1872 = vpack.c.bf16 %v1826, %v1824
      %v1873 = vpack.c.bf16 %v1827, %v1825
      %v1874 = vpack.c.bf16 %v1842, %v1840
      %v1875 = vpack.c.bf16 %v1843, %v1841
      %v1876 = vpack.c.bf16 %v1858, %v1856
      %v1877 = vpack.c.bf16 %v1859, %v1857
      %v1878 = vld [vmem:[%s8] sm:$0xff]
      %v1879 = vld [vmem:[%s8 + $0x8] sm:$0xff]
      %v1880 = vld [vmem:[%s9] sm:$0xff]
      %v1881 = vld [vmem:[%s9 + $0x8] sm:$0xff]
      %1883 = vset.pattern.permute.xlu0 0
      %1884 = vperm.xlu0 %1883, %v1880
      %v1885 = vpop.permute.xlu0 %1884
      %1888 = vset.pattern.permute.xlu0 0
      %1889 = vperm.xlu0 %1888, %v1881
      %v1890 = vpop.permute.xlu0 %1889
      %v1894 = vunpack.c.l.b16 %v1878
      %v1895 = vunpack.c.h.b16 %v1878
      %v1896 = vunpack.c.l.b16 %v1879
      %v1897 = vunpack.c.h.b16 %v1879
      %v1898 = vpack.c.b16 %v1896, %v1894
      %v1899 = vpack.c.b16 %v1897, %v1895
      %vm1901 = vcmask 130048
      %v1903 = vsel %vm1901, %v1899, 0
      %1905 = vmatprep.subr.bf16.mxu0 %v1861
      %1906 = vmatpush1.bf16.msra.mxu0 %v1860
      %1907 = vmatprep.subr.bf16.mxu0 %v1863
      %1908 = vmatpush1.bf16.msra.mxu0 %v1862
      %1909 = vmatprep.subr.bf16.mxu0 %v1865
      %1910 = vmatpush1.bf16.msra.mxu0 %v1864
      %1911 = vmatprep.subr.bf16.mxu0 %v1867
      %1912 = vmatpush1.bf16.msra.mxu0 %v1866
      %1913 = vmatprep.subr.bf16.mxu0 %v1869
      %1914 = vmatpush1.bf16.msra.mxu0 %v1868
      %1915 = vmatprep.subr.bf16.mxu0 %v1871
      %1916 = vmatpush1.bf16.msra.mxu0 %v1870
      %1917 = vmatprep.subr.bf16.mxu0 %v1873
      %1918 = vmatpush1.bf16.msra.mxu0 %v1872
      %1919 = vmatprep.subr.bf16.mxu0 %v1875
      %1920 = vmatpush1.bf16.msra.mxu0 %v1874
      %1921 = vmatprep.subr.bf16.mxu0 %v1877
      %1922 = vmatpush1.bf16.msra.mxu0 %v1876
      %1923 = vmatprep.subr.bf16.mxu0 0
      %1924 = vmatpush1.bf16.msra.mxu0 0
      %1925 = vmatprep.subr.bf16.mxu0 0
      %1926 = vmatpush1.bf16.msra.mxu0 0
      %1927 = vmatprep.subr.bf16.mxu0 0
      %1928 = vmatpush1.bf16.msra.mxu0 0
      %1929 = vmatprep.subr.bf16.mxu0 0
      %1930 = vmatpush1.bf16.msra.mxu0 0
      %1931 = vmatprep.subr.bf16.mxu0 0
      %1932 = vmatpush1.bf16.msra.mxu0 0
      %1933 = vmatprep.subr.bf16.mxu0 0
      %1934 = vmatpush1.bf16.msra.mxu0 0
      %1935 = vmatprep.subr.bf16.mxu0 0
      %1936 = vmatpush1.bf16.msra.mxu0 0
      %1937 = vmatprep.mubr.bf16.mxu0 %v1903
      %1938 = vmatmul.mubr.bf16.gmra.mrb[0].mxu0 %v1898
      %v1939 = vpop.f32.mrb[0].mxu0
      %v1940 = vadd.f32 %v1885, %v1939
      %v1941 = vpop.f32.mrb[0].mxu0
      %v1942 = vadd.f32 %v1885, %v1941
      %v1943 = vpop.f32.mrb[0].mxu0
      %v1944 = vadd.f32 %v1890, %v1943
      %v1945 = vpop.f32.mrb[0].mxu0
      %v1946 = vadd.f32 %v1890, %v1945
      %1947 = vdwg.mxu0
      %v1948 = vadd.f32 %v1940, %v1942
      %1949 = vadd.xlane.f32.xlu0 %v1948
      %v1950 = vpop.xlane.xlu0 %1949
      %v1951 = vadd.f32 %v1944, %v1946
      %1952 = vadd.xlane.f32.xlu0 %v1951
      %v1953 = vpop.xlane.xlu0 %1952
      %v1954 = vsel %vm1463, %v1950, 0.0
      %v1955 = vsel %vm1464, %v1953, 0.0
      %v1956 = vsel %vm1491, %v1954, 0.0
      %v1957 = vsel %vm1491, %v1955, 0.0
      %v1958 = vadd.f32 %v1956, %v1957
      %1959 = vadd.xlane.f32.xlu0 %v1958
      %v1960 = vpop.xlane.xlu0 %1959
      %v1961 = vrot.slane %v1960, 4
      %v1962 = vadd.f32 %v1960, %v1961
      %v1963 = vrot.slane %v1962, 2
      %v1964 = vadd.f32 %v1962, %v1963
      %v1965 = vrot.slane %v1964, 1
      %v1966 = vadd.f32 %v1964, %v1965
      %s1967 = vtos %v1966
      %s1968 = smul.f32 %s1967, 0.0009765625
      %v1969 = vstv %s1968
      %v1970 = vsel %vm1463, %v1969, 0.0
      %v1971 = vsel %vm1464, %v1969, 0.0
      %v1972 = vadd.f32 %v1970, 0.0
      %v1973 = vadd.f32 %v1971, 0.0
      %v1974 = vsel %vm1469, %v1950, 0.0
      %v1975 = vsel %vm1470, %v1953, 0.0
      %v1976 = vsel %vm1491, %v1974, 0.0
      %v1977 = vsel %vm1491, %v1975, 0.0
      %v1978 = vadd.f32 %v1976, %v1977
      %1979 = vadd.xlane.f32.xlu0 %v1978
      %v1980 = vpop.xlane.xlu0 %1979
      %v1981 = vrot.slane %v1980, 4
      %v1982 = vadd.f32 %v1980, %v1981
      %v1983 = vrot.slane %v1982, 2
      %v1984 = vadd.f32 %v1982, %v1983
      %v1985 = vrot.slane %v1984, 1
      %v1986 = vadd.f32 %v1984, %v1985
      %s1987 = vtos %v1986
      %s1988 = smul.f32 %s1987, 0.0009765625
      %v1989 = vstv %s1988
      %v1990 = vsel %vm1469, %v1989, 0.0
      %v1991 = vsel %vm1470, %v1989, 0.0
      %v1992 = vadd.f32 %v1972, %v1990
      %v1993 = vadd.f32 %v1973, %v1991
      %v1994 = vsel %vm1475, %v1950, 0.0
      %v1995 = vsel %vm1476, %v1953, 0.0
      %v1996 = vsel %vm1491, %v1994, 0.0
      %v1997 = vsel %vm1491, %v1995, 0.0
      %v1998 = vadd.f32 %v1996, %v1997
      %1999 = vadd.xlane.f32.xlu0 %v1998
      %v2000 = vpop.xlane.xlu0 %1999
      %v2001 = vrot.slane %v2000, 4
      %v2002 = vadd.f32 %v2000, %v2001
      %v2003 = vrot.slane %v2002, 2
      %v2004 = vadd.f32 %v2002, %v2003
      %v2005 = vrot.slane %v2004, 1
      %v2006 = vadd.f32 %v2004, %v2005
      %s2007 = vtos %v2006
      %s2008 = smul.f32 %s2007, 0.0009765625
      %v2009 = vstv %s2008
      %v2010 = vsel %vm1475, %v2009, 0.0
      %v2011 = vsel %vm1476, %v2009, 0.0
      %v2012 = vadd.f32 %v1992, %v2010
      %v2013 = vadd.f32 %v1993, %v2011
      %v2014 = vsel %vm1481, %v1950, 0.0
      %v2015 = vsel %vm1482, %v1953, 0.0
      %v2016 = vsel %vm1491, %v2014, 0.0
      %v2017 = vsel %vm1491, %v2015, 0.0
      %v2018 = vadd.f32 %v2016, %v2017
      %2019 = vadd.xlane.f32.xlu0 %v2018
      %v2020 = vpop.xlane.xlu0 %2019
      %v2021 = vrot.slane %v2020, 4
      %v2022 = vadd.f32 %v2020, %v2021
      %v2023 = vrot.slane %v2022, 2
      %v2024 = vadd.f32 %v2022, %v2023
      %v2025 = vrot.slane %v2024, 1
      %v2026 = vadd.f32 %v2024, %v2025
      %s2027 = vtos %v2026
      %s2028 = smul.f32 %s2027, 0.0009765625
      %v2029 = vstv %s2028
      %v2030 = vsel %vm1481, %v2029, 0.0
      %v2031 = vsel %vm1482, %v2029, 0.0
      %v2032 = vadd.f32 %v2012, %v2030
      %v2033 = vadd.f32 %v2013, %v2031
      %v2034 = vsub.f32 %v1940, %v2032
      %v2035 = vsub.f32 %v1942, %v2032
      %v2036 = vsub.f32 %v1944, %v2033
      %v2037 = vsub.f32 %v1946, %v2033
      %v2038 = vmul.f32 %v2034, %v2034
      %v2039 = vmul.f32 %v2035, %v2035
      %v2040 = vmul.f32 %v2036, %v2036
      %v2041 = vmul.f32 %v2037, %v2037
      %v2042 = vadd.f32 %v2038, %v2039
      %2043 = vadd.xlane.f32.xlu0 %v2042
      %v2044 = vpop.xlane.xlu0 %2043
      %v2045 = vadd.f32 %v2040, %v2041
      %2046 = vadd.xlane.f32.xlu0 %v2045
      %v2047 = vpop.xlane.xlu0 %2046
      %v2048 = vsel %vm1463, %v2044, 0.0
      %v2049 = vsel %vm1464, %v2047, 0.0
      %v2050 = vsel %vm1491, %v2048, 0.0
      %v2051 = vsel %vm1491, %v2049, 0.0
      %v2052 = vadd.f32 %v2050, %v2051
      %2053 = vadd.xlane.f32.xlu0 %v2052
      %v2054 = vpop.xlane.xlu0 %2053
      %v2055 = vrot.slane %v2054, 4
      %v2056 = vadd.f32 %v2054, %v2055
      %v2057 = vrot.slane %v2056, 2
      %v2058 = vadd.f32 %v2056, %v2057
      %v2059 = vrot.slane %v2058, 1
      %v2060 = vadd.f32 %v2058, %v2059
      %s2061 = vtos %v2060
      %s2062 = smul.f32 %s2061, 0.0009765625
      %v2063 = vstv %s2062
      %v2064 = vsel %vm1463, %v2063, 0.0
      %v2065 = vsel %vm1464, %v2063, 0.0
      %v2066 = vadd.f32 %v2064, 0.0
      %v2067 = vadd.f32 %v2065, 0.0
      %v2068 = vsel %vm1469, %v2044, 0.0
      %v2069 = vsel %vm1470, %v2047, 0.0
      %v2070 = vsel %vm1491, %v2068, 0.0
      %v2071 = vsel %vm1491, %v2069, 0.0
      %v2072 = vadd.f32 %v2070, %v2071
      %2073 = vadd.xlane.f32.xlu0 %v2072
      %v2074 = vpop.xlane.xlu0 %2073
      %v2075 = vrot.slane %v2074, 4
      %v2076 = vadd.f32 %v2074, %v2075
      %v2077 = vrot.slane %v2076, 2
      %v2078 = vadd.f32 %v2076, %v2077
      %v2079 = vrot.slane %v2078, 1
      %v2080 = vadd.f32 %v2078, %v2079
      %s2081 = vtos %v2080
      %s2082 = smul.f32 %s2081, 0.0009765625
      %v2083 = vstv %s2082
      %v2084 = vsel %vm1469, %v2083, 0.0
      %v2085 = vsel %vm1470, %v2083, 0.0
      %v2086 = vadd.f32 %v2066, %v2084
      %v2087 = vadd.f32 %v2067, %v2085
      %v2088 = vsel %vm1475, %v2044, 0.0
      %v2089 = vsel %vm1476, %v2047, 0.0
      %v2090 = vsel %vm1491, %v2088, 0.0
      %v2091 = vsel %vm1491, %v2089, 0.0
      %v2092 = vadd.f32 %v2090, %v2091
      %2093 = vadd.xlane.f32.xlu0 %v2092
      %v2094 = vpop.xlane.xlu0 %2093
      %v2095 = vrot.slane %v2094, 4
      %v2096 = vadd.f32 %v2094, %v2095
      %v2097 = vrot.slane %v2096, 2
      %v2098 = vadd.f32 %v2096, %v2097
      %v2099 = vrot.slane %v2098, 1
      %v2100 = vadd.f32 %v2098, %v2099
      %s2101 = vtos %v2100
      %s2102 = smul.f32 %s2101, 0.0009765625
      %v2103 = vstv %s2102
      %v2104 = vsel %vm1475, %v2103, 0.0
      %v2105 = vsel %vm1476, %v2103, 0.0
      %v2106 = vadd.f32 %v2086, %v2104
      %v2107 = vadd.f32 %v2087, %v2105
      %v2108 = vsel %vm1481, %v2044, 0.0
      %v2109 = vsel %vm1482, %v2047, 0.0
      %v2110 = vsel %vm1491, %v2108, 0.0
      %v2111 = vsel %vm1491, %v2109, 0.0
      %v2112 = vadd.f32 %v2110, %v2111
      %2113 = vadd.xlane.f32.xlu0 %v2112
      %v2114 = vpop.xlane.xlu0 %2113
      %v2115 = vrot.slane %v2114, 4
      %v2116 = vadd.f32 %v2114, %v2115
      %v2117 = vrot.slane %v2116, 2
      %v2118 = vadd.f32 %v2116, %v2117
      %v2119 = vrot.slane %v2118, 1
      %v2120 = vadd.f32 %v2118, %v2119
      %s2121 = vtos %v2120
      %s2122 = smul.f32 %s2121, 0.0009765625
      %v2123 = vstv %s2122
      %v2124 = vsel %vm1481, %v2123, 0.0
      %v2125 = vsel %vm1482, %v2123, 0.0
      %v2126 = vadd.f32 %v2106, %v2124
      %v2127 = vadd.f32 %v2107, %v2125
      %v2128 = vadd.f32 %v2126, 1e-05
      %v2129 = vadd.f32 %v2127, 1e-05
      %v2130 = vrsqrt.pop %v2128
      %v2131 = vrsqrt.pop %v2129
      %v2132 = vmul.f32 %v2034, %v2130
      %v2133 = vmul.f32 %v2035, %v2130
      %v2134 = vmul.f32 %v2036, %v2131
      %v2135 = vmul.f32 %v2037, %v2131
      %v2136 = vld [vmem:[%s10] sm:$0xff]
      %v2137 = vld [vmem:[%s10 + $0x8] sm:$0xff]
      %2139 = vset.pattern.permute.xlu0 0
      %2140 = vperm.xlu0 %2139, %v2136
      %v2141 = vpop.permute.xlu0 %2140
      %2144 = vset.pattern.permute.xlu0 0
      %2145 = vperm.xlu0 %2144, %v2137
      %v2146 = vpop.permute.xlu0 %2145
      %v2148 = vmul.f32 %v2132, %v2141
      %v2149 = vmul.f32 %v2133, %v2141
      %v2150 = vmul.f32 %v2134, %v2146
      %v2151 = vmul.f32 %v2135, %v2146
      %v2152 = vld [vmem:[%s11] sm:$0xff]
      %v2153 = vld [vmem:[%s11 + $0x8] sm:$0xff]
      %2155 = vset.pattern.permute.xlu0 0
      %2156 = vperm.xlu0 %2155, %v2152
      %v2157 = vpop.permute.xlu0 %2156
      %2160 = vset.pattern.permute.xlu0 0
      %2161 = vperm.xlu0 %2160, %v2153
      %v2162 = vpop.permute.xlu0 %2161
      %v2164 = vadd.f32 %v2148, %v2157
      %v2165 = vadd.f32 %v2149, %v2157
      %v2166 = vadd.f32 %v2150, %v2162
      %v2167 = vadd.f32 %v2151, %v2162
      %v2168 = vxor.u32 %v2164, 2147483648
      %v2169 = vxor.u32 %v2165, 2147483648
      %v2170 = vxor.u32 %v2166, 2147483648
      %v2171 = vxor.u32 %v2167, 2147483648
      %v2172 = vmul.f32 %v2168, 1.442695
      %v2173 = vpow.pop %v2172
      %v2174 = vmul.f32 %v2169, 1.442695
      %v2175 = vpow.pop %v2174
      %v2176 = vmul.f32 %v2170, 1.442695
      %v2177 = vpow.pop %v2176
      %v2178 = vmul.f32 %v2171, 1.442695
      %v2179 = vpow.pop %v2178
      %v2180 = vadd.f32 %v2173, 1.0
      %v2181 = vadd.f32 %v2175, 1.0
      %v2182 = vadd.f32 %v2177, 1.0
      %v2183 = vadd.f32 %v2179, 1.0
      %v2184 = vrcp.pop %v2180
      %v2185 = vmul.f32 1.0, %v2184
      %v2186 = vrcp.pop %v2181
      %v2187 = vmul.f32 1.0, %v2186
      %v2188 = vrcp.pop %v2182
      %v2189 = vmul.f32 1.0, %v2188
      %v2190 = vrcp.pop %v2183
      %v2191 = vmul.f32 1.0, %v2190
      %v2192 = vmul.f32 %v2164, %v2185
      %v2193 = vmul.f32 %v2165, %v2187
      %v2194 = vmul.f32 %v2166, %v2189
      %v2195 = vmul.f32 %v2167, %v2191
      %2196 = vrot.lane.b32.xlu0 %v2192, 17
      %v2197 = vpop.permute.xlu0 %2196
      %2198 = vrot.lane.b32.xlu0 %v2194, 17
      %v2199 = vpop.permute.xlu0 %2198
      %2200 = vrot.lane.b32.xlu0 %v2193, 17
      %v2201 = vpop.permute.xlu0 %2200
      %2202 = vrot.lane.b32.xlu0 %v2195, 17
      %v2203 = vpop.permute.xlu0 %2202
      %v2204 = vsel %vm1011, %v2197, %v2201
      %v2205 = vsel %vm1011, %v2199, %v2203
      %v2206 = vsel %vm1011, %v2201, %v2197
      %v2207 = vsel %vm1011, %v2203, %v2199
      %v2208 = vsel %vm1022, %v2206, 0.0
      %v2209 = vsel %vm1023, %v2204, 0.0
      %v2210 = vsel %vm1022, %v2207, 0.0
      %v2211 = vsel %vm1023, %v2205, 0.0
      %2212 = vrot.lane.b32.xlu0 %v2192, 16
      %v2213 = vpop.permute.xlu0 %2212
      %2214 = vrot.lane.b32.xlu0 %v2194, 16
      %v2215 = vpop.permute.xlu0 %2214
      %2216 = vrot.lane.b32.xlu0 %v2193, 16
      %v2217 = vpop.permute.xlu0 %2216
      %2218 = vrot.lane.b32.xlu0 %v2195, 16
      %v2219 = vpop.permute.xlu0 %2218
      %v2220 = vsel %vm1048, %v2213, %v2217
      %v2221 = vsel %vm1048, %v2215, %v2219
      %v2222 = vsel %vm1048, %v2217, %v2213
      %v2223 = vsel %vm1048, %v2219, %v2215
      %v2224 = vsel %vm1059, %v2222, 0.0
      %v2225 = vsel %vm1060, %v2220, 0.0
      %v2226 = vsel %vm1059, %v2223, 0.0
      %v2227 = vsel %vm1060, %v2221, 0.0
      %2228 = vrot.lane.b32.xlu0 %v2192, 15
      %v2229 = vpop.permute.xlu0 %2228
      %2230 = vrot.lane.b32.xlu0 %v2194, 15
      %v2231 = vpop.permute.xlu0 %2230
      %2232 = vrot.lane.b32.xlu0 %v2193, 15
      %v2233 = vpop.permute.xlu0 %2232
      %2234 = vrot.lane.b32.xlu0 %v2195, 15
      %v2235 = vpop.permute.xlu0 %2234
      %v2236 = vsel %vm1085, %v2229, %v2233
      %v2237 = vsel %vm1085, %v2231, %v2235
      %v2238 = vsel %vm1085, %v2233, %v2229
      %v2239 = vsel %vm1085, %v2235, %v2231
      %v2240 = vsel %vm1096, %v2238, 0.0
      %v2241 = vsel %vm1097, %v2236, 0.0
      %v2242 = vsel %vm1096, %v2239, 0.0
      %v2243 = vsel %vm1097, %v2237, 0.0
      %2244 = vrot.lane.b32.xlu0 %v2192, 1
      %v2245 = vpop.permute.xlu0 %2244
      %2246 = vrot.lane.b32.xlu0 %v2194, 1
      %v2247 = vpop.permute.xlu0 %2246
      %2248 = vrot.lane.b32.xlu0 %v2193, 1
      %v2249 = vpop.permute.xlu0 %2248
      %2250 = vrot.lane.b32.xlu0 %v2195, 1
      %v2251 = vpop.permute.xlu0 %2250
      %v2252 = vsel %vm1122, %v2245, %v2249
      %v2253 = vsel %vm1122, %v2247, %v2251
      %v2254 = vsel %vm1122, %v2249, %v2245
      %v2255 = vsel %vm1122, %v2251, %v2247
      %v2256 = vsel %vm1133, %v2254, 0.0
      %v2257 = vsel %vm1134, %v2252, 0.0
      %v2258 = vsel %vm1133, %v2255, 0.0
      %v2259 = vsel %vm1134, %v2253, 0.0
      %2260 = vrot.lane.b32.xlu0 %v2192, 127
      %v2261 = vpop.permute.xlu0 %2260
      %2262 = vrot.lane.b32.xlu0 %v2194, 127
      %v2263 = vpop.permute.xlu0 %2262
      %2264 = vrot.lane.b32.xlu0 %v2193, 127
      %v2265 = vpop.permute.xlu0 %2264
      %2266 = vrot.lane.b32.xlu0 %v2195, 127
      %v2267 = vpop.permute.xlu0 %2266
      %v2268 = vsel %vm1159, %v2261, %v2265
      %v2269 = vsel %vm1159, %v2263, %v2267
      %v2270 = vsel %vm1159, %v2265, %v2261
      %v2271 = vsel %vm1159, %v2267, %v2263
      %v2272 = vsel %vm1170, %v2268, 0.0
      %v2273 = vsel %vm1171, %v2270, 0.0
      %v2274 = vsel %vm1170, %v2269, 0.0
      %v2275 = vsel %vm1171, %v2271, 0.0
      %2276 = vrot.lane.b32.xlu0 %v2192, 113
      %v2277 = vpop.permute.xlu0 %2276
      %2278 = vrot.lane.b32.xlu0 %v2194, 113
      %v2279 = vpop.permute.xlu0 %2278
      %2280 = vrot.lane.b32.xlu0 %v2193, 113
      %v2281 = vpop.permute.xlu0 %2280
      %2282 = vrot.lane.b32.xlu0 %v2195, 113
      %v2283 = vpop.permute.xlu0 %2282
      %v2284 = vsel %vm1196, %v2277, %v2281
      %v2285 = vsel %vm1196, %v2279, %v2283
      %v2286 = vsel %vm1196, %v2281, %v2277
      %v2287 = vsel %vm1196, %v2283, %v2279
      %v2288 = vsel %vm1207, %v2284, 0.0
      %v2289 = vsel %vm1208, %v2286, 0.0
      %v2290 = vsel %vm1207, %v2285, 0.0
      %v2291 = vsel %vm1208, %v2287, 0.0
      %2292 = vrot.lane.b32.xlu0 %v2192, 112
      %v2293 = vpop.permute.xlu0 %2292
      %2294 = vrot.lane.b32.xlu0 %v2194, 112
      %v2295 = vpop.permute.xlu0 %2294
      %2296 = vrot.lane.b32.xlu0 %v2193, 112
      %v2297 = vpop.permute.xlu0 %2296
      %2298 = vrot.lane.b32.xlu0 %v2195, 112
      %v2299 = vpop.permute.xlu0 %2298
      %v2300 = vsel %vm1233, %v2293, %v2297
      %v2301 = vsel %vm1233, %v2295, %v2299
      %v2302 = vsel %vm1233, %v2297, %v2293
      %v2303 = vsel %vm1233, %v2299, %v2295
      %v2304 = vsel %vm1244, %v2300, 0.0
      %v2305 = vsel %vm1245, %v2302, 0.0
      %v2306 = vsel %vm1244, %v2301, 0.0
      %v2307 = vsel %vm1245, %v2303, 0.0
      %2308 = vrot.lane.b32.xlu0 %v2192, 111
      %v2309 = vpop.permute.xlu0 %2308
      %2310 = vrot.lane.b32.xlu0 %v2194, 111
      %v2311 = vpop.permute.xlu0 %2310
      %2312 = vrot.lane.b32.xlu0 %v2193, 111
      %v2313 = vpop.permute.xlu0 %2312
      %2314 = vrot.lane.b32.xlu0 %v2195, 111
      %v2315 = vpop.permute.xlu0 %2314
      %v2316 = vsel %vm1270, %v2309, %v2313
      %v2317 = vsel %vm1270, %v2311, %v2315
      %v2318 = vsel %vm1270, %v2313, %v2309
      %v2319 = vsel %vm1270, %v2315, %v2311
      %v2320 = vsel %vm1281, %v2316, 0.0
      %v2321 = vsel %vm1282, %v2318, 0.0
      %v2322 = vsel %vm1281, %v2317, 0.0
      %v2323 = vsel %vm1282, %v2319, 0.0
      %v2324 = vpack.c.bf16 %v2210, %v2208
      %v2325 = vpack.c.bf16 %v2211, %v2209
      %v2326 = vpack.c.bf16 %v2226, %v2224
      %v2327 = vpack.c.bf16 %v2227, %v2225
      %v2328 = vpack.c.bf16 %v2242, %v2240
      %v2329 = vpack.c.bf16 %v2243, %v2241
      %v2330 = vpack.c.bf16 %v2258, %v2256
      %v2331 = vpack.c.bf16 %v2259, %v2257
      %v2332 = vpack.c.bf16 %v2194, %v2192
      %v2333 = vpack.c.bf16 %v2195, %v2193
      %v2334 = vpack.c.bf16 %v2274, %v2272
      %v2335 = vpack.c.bf16 %v2275, %v2273
      %v2336 = vpack.c.bf16 %v2290, %v2288
      %v2337 = vpack.c.bf16 %v2291, %v2289
      %v2338 = vpack.c.bf16 %v2306, %v2304
      %v2339 = vpack.c.bf16 %v2307, %v2305
      %v2340 = vpack.c.bf16 %v2322, %v2320
      %v2341 = vpack.c.bf16 %v2323, %v2321
      %v2342 = vld [vmem:[%s12] sm:$0xff]
      %v2343 = vld [vmem:[%s12 + $0x8] sm:$0xff]
      %v2344 = vld [vmem:[%s13] sm:$0xff]
      %v2345 = vld [vmem:[%s13 + $0x8] sm:$0xff]
      %2347 = vset.pattern.permute.xlu0 0
      %2348 = vperm.xlu0 %2347, %v2344
      %v2349 = vpop.permute.xlu0 %2348
      %2352 = vset.pattern.permute.xlu0 0
      %2353 = vperm.xlu0 %2352, %v2345
      %v2354 = vpop.permute.xlu0 %2353
      %v2358 = vunpack.c.l.b16 %v2342
      %v2359 = vunpack.c.h.b16 %v2342
      %v2360 = vunpack.c.l.b16 %v2343
      %v2361 = vunpack.c.h.b16 %v2343
      %v2362 = vpack.c.b16 %v2360, %v2358
      %v2363 = vpack.c.b16 %v2361, %v2359
      %v2366 = vsel %vm1901, %v2363, 0
      %2368 = vmatprep.subr.bf16.mxu0 %v2325
      %2369 = vmatpush1.bf16.msra.mxu0 %v2324
      %2370 = vmatprep.subr.bf16.mxu0 %v2327
      %2371 = vmatpush1.bf16.msra.mxu0 %v2326
      %2372 = vmatprep.subr.bf16.mxu0 %v2329
      %2373 = vmatpush1.bf16.msra.mxu0 %v2328
      %2374 = vmatprep.subr.bf16.mxu0 %v2331
      %2375 = vmatpush1.bf16.msra.mxu0 %v2330
      %2376 = vmatprep.subr.bf16.mxu0 %v2333
      %2377 = vmatpush1.bf16.msra.mxu0 %v2332
      %2378 = vmatprep.subr.bf16.mxu0 %v2335
      %2379 = vmatpush1.bf16.msra.mxu0 %v2334
      %2380 = vmatprep.subr.bf16.mxu0 %v2337
      %2381 = vmatpush1.bf16.msra.mxu0 %v2336
      %2382 = vmatprep.subr.bf16.mxu0 %v2339
      %2383 = vmatpush1.bf16.msra.mxu0 %v2338
      %2384 = vmatprep.subr.bf16.mxu0 %v2341
      %2385 = vmatpush1.bf16.msra.mxu0 %v2340
      %2386 = vmatprep.subr.bf16.mxu0 0
      %2387 = vmatpush1.bf16.msra.mxu0 0
      %2388 = vmatprep.subr.bf16.mxu0 0
      %2389 = vmatpush1.bf16.msra.mxu0 0
      %2390 = vmatprep.subr.bf16.mxu0 0
      %2391 = vmatpush1.bf16.msra.mxu0 0
      %2392 = vmatprep.subr.bf16.mxu0 0
      %2393 = vmatpush1.bf16.msra.mxu0 0
      %2394 = vmatprep.subr.bf16.mxu0 0
      %2395 = vmatpush1.bf16.msra.mxu0 0
      %2396 = vmatprep.subr.bf16.mxu0 0
      %2397 = vmatpush1.bf16.msra.mxu0 0
      %2398 = vmatprep.subr.bf16.mxu0 0
      %2399 = vmatpush1.bf16.msra.mxu0 0
      %2400 = vmatprep.mubr.bf16.mxu0 %v2366
      %2401 = vmatmul.mubr.bf16.gmra.mrb[0].mxu0 %v2362
      %v2402 = vpop.f32.mrb[0].mxu0
      %v2403 = vadd.f32 %v2349, %v2402
      %v2404 = vpop.f32.mrb[0].mxu0
      %v2405 = vadd.f32 %v2349, %v2404
      %v2406 = vpop.f32.mrb[0].mxu0
      %v2407 = vadd.f32 %v2354, %v2406
      %v2408 = vpop.f32.mrb[0].mxu0
      %v2409 = vadd.f32 %v2354, %v2408
      %2410 = vdwg.mxu0
      %v2411 = vadd.f32 %v1452, %v2403
      %v2412 = vadd.f32 %v1453, %v2405
      %v2413 = vadd.f32 %v1454, %v2407
      %v2414 = vadd.f32 %v1455, %v2409
      %v2415 = vadd.s32 %v865, 256
      %v2416 = vadd.s32 %v865, 384
      %v2417 = vadd.s32 %v865, 512
      %v2418 = vadd.s32 %v865, 640
      %v2419 = vadd.s32 %v865, 768
      %v2420 = vadd.s32 %v865, 896
      %v2421 = vand.u32 %v865, 31
      %v2422 = vand.u32 %v866, 31
      %v2423 = vand.u32 %v2415, 31
      %v2424 = vand.u32 %v2416, 31
      %v2425 = vand.u32 %v2417, 31
      %v2426 = vand.u32 %v2418, 31
      %v2427 = vand.u32 %v2419, 31
      %v2428 = vand.u32 %v2420, 31
      %vm2429 = vcmp.ge.s32.totalorder %v865, 32
      %vm2430 = vcmp.ge.s32.totalorder %v866, 32
      %vm2431 = vcmp.ge.s32.totalorder %v2415, 32
      %vm2432 = vcmp.ge.s32.totalorder %v2416, 32
      %vm2433 = vcmp.ge.s32.totalorder %v2417, 32
      %vm2434 = vcmp.ge.s32.totalorder %v2418, 32
      %vm2435 = vcmp.ge.s32.totalorder %v2419, 32
      %vm2436 = vcmp.ge.s32.totalorder %v2420, 32
      %vm2437 = vcmp.lt.s32.totalorder %v865, 992
      %vm2438 = vcmp.lt.s32.totalorder %v866, 992
      %vm2439 = vcmp.lt.s32.totalorder %v2415, 992
      %vm2440 = vcmp.lt.s32.totalorder %v2416, 992
      %vm2441 = vcmp.lt.s32.totalorder %v2417, 992
      %vm2442 = vcmp.lt.s32.totalorder %v2418, 992
      %vm2443 = vcmp.lt.s32.totalorder %v2419, 992
      %vm2444 = vcmp.lt.s32.totalorder %v2420, 992
      %vm2445 = vcmp.ge.s32.totalorder %v2421, 1
      %vm2446 = vcmp.ge.s32.totalorder %v2422, 1
      %vm2447 = vcmp.ge.s32.totalorder %v2423, 1
      %vm2448 = vcmp.ge.s32.totalorder %v2424, 1
      %vm2449 = vcmp.ge.s32.totalorder %v2425, 1
      %vm2450 = vcmp.ge.s32.totalorder %v2426, 1
      %vm2451 = vcmp.ge.s32.totalorder %v2427, 1
      %vm2452 = vcmp.ge.s32.totalorder %v2428, 1
      %vm2453 = vcmp.lt.s32.totalorder %v2421, 31
      %vm2454 = vcmp.lt.s32.totalorder %v2422, 31
      %vm2455 = vcmp.lt.s32.totalorder %v2423, 31
      %vm2456 = vcmp.lt.s32.totalorder %v2424, 31
      %vm2457 = vcmp.lt.s32.totalorder %v2425, 31
      %vm2458 = vcmp.lt.s32.totalorder %v2426, 31
      %vm2459 = vcmp.lt.s32.totalorder %v2427, 31
      %vm2460 = vcmp.lt.s32.totalorder %v2428, 31
      %vm2461 = vmand %vm2429, %vm2445
      %vm2462 = vmand %vm2430, %vm2446
      %vm2463 = vmand %vm2431, %vm2447
      %vm2464 = vmand %vm2432, %vm2448
      %vm2465 = vmand %vm2433, %vm2449
      %vm2466 = vmand %vm2434, %vm2450
      %vm2467 = vmand %vm2435, %vm2451
      %vm2468 = vmand %vm2436, %vm2452
      %vm2469 = vmand %vm2429, %vm2453
      %vm2470 = vmand %vm2430, %vm2454
      %vm2471 = vmand %vm2431, %vm2455
      %vm2472 = vmand %vm2432, %vm2456
      %vm2473 = vmand %vm2433, %vm2457
      %vm2474 = vmand %vm2434, %vm2458
      %vm2475 = vmand %vm2435, %vm2459
      %vm2476 = vmand %vm2436, %vm2460
      %vm2477 = vmand %vm2437, %vm2445
      %vm2478 = vmand %vm2438, %vm2446
      %vm2479 = vmand %vm2439, %vm2447
      %vm2480 = vmand %vm2440, %vm2448
      %vm2481 = vmand %vm2441, %vm2449
      %vm2482 = vmand %vm2442, %vm2450
      %vm2483 = vmand %vm2443, %vm2451
      %vm2484 = vmand %vm2444, %vm2452
      %vm2485 = vmand %vm2437, %vm2453
      %vm2486 = vmand %vm2438, %vm2454
      %vm2487 = vmand %vm2439, %vm2455
      %vm2488 = vmand %vm2440, %vm2456
      %vm2489 = vmand %vm2441, %vm2457
      %vm2490 = vmand %vm2442, %vm2458
      %vm2491 = vmand %vm2443, %vm2459
      %vm2492 = vmand %vm2444, %vm2460
      %v2493 = vpack.c.bf16 %v2413, %v2411
      %v2494 = vpack.c.bf16 %v2414, %v2412
      %v2495 = vld [vmem:[%s14] sm:$0xff]
      %v2496 = vld [vmem:[%s14 + $0x8] sm:$0xff]
      %v2497 = vld [vmem:[%s14 + $0x10] sm:$0xff]
      %v2498 = vld [vmem:[%s14 + $0x18] sm:$0xff]
      %v2499 = vld [vmem:[%s14 + $0x20] sm:$0xff]
      %v2500 = vld [vmem:[%s14 + $0x28] sm:$0xff]
      %v2501 = vld [vmem:[%s14 + $0x30] sm:$0xff]
      %v2502 = vld [vmem:[%s14 + $0x38] sm:$0xff]
      %v2503 = vld [vmem:[%s14 + $0x40] sm:$0xff]
      %v2504 = vld [vmem:[%s14 + $0x48] sm:$0xff]
      %v2505 = vld [vmem:[%s14 + $0x50] sm:$0xff]
      %v2506 = vld [vmem:[%s14 + $0x58] sm:$0xff]
      %v2507 = vld [vmem:[%s14 + $0x60] sm:$0xff]
      %v2508 = vld [vmem:[%s14 + $0x68] sm:$0xff]
      %v2509 = vld [vmem:[%s14 + $0x70] sm:$0xff]
      %v2510 = vld [vmem:[%s14 + $0x78] sm:$0xff]
      %v2511 = vld [vmem:[%s14 + $0x80] sm:$0xff]
      %v2512 = vld [vmem:[%s14 + $0x88] sm:$0xff]
      %v2513 = vld [vmem:[%s14 + $0x90] sm:$0xff]
      %v2514 = vld [vmem:[%s14 + $0x98] sm:$0xff]
      %v2515 = vld [vmem:[%s14 + $0xa0] sm:$0xff]
      %v2516 = vld [vmem:[%s14 + $0xa8] sm:$0xff]
      %v2517 = vld [vmem:[%s14 + $0xb0] sm:$0xff]
      %v2518 = vld [vmem:[%s14 + $0xb8] sm:$0xff]
      %v2519 = vld [vmem:[%s14 + $0xc0] sm:$0xff]
      %v2520 = vld [vmem:[%s14 + $0xc8] sm:$0xff]
      %v2521 = vld [vmem:[%s14 + $0xd0] sm:$0xff]
      %v2522 = vld [vmem:[%s14 + $0xd8] sm:$0xff]
      %v2523 = vld [vmem:[%s14 + $0xe0] sm:$0xff]
      %v2524 = vld [vmem:[%s14 + $0xe8] sm:$0xff]
      %v2525 = vld [vmem:[%s14 + $0xf0] sm:$0xff]
      %v2526 = vld [vmem:[%s14 + $0xf8] sm:$0xff]
      %v2527 = vld [vmem:[%s14 + $0x100] sm:$0xff]
      %v2528 = vld [vmem:[%s14 + $0x108] sm:$0xff]
      %v2529 = vld [vmem:[%s14 + $0x110] sm:$0xff]
      %v2530 = vld [vmem:[%s14 + $0x118] sm:$0xff]
      %v2531 = vld [vmem:[%s14 + $0x120] sm:$0xff]
      %v2532 = vld [vmem:[%s14 + $0x128] sm:$0xff]
      %v2533 = vld [vmem:[%s14 + $0x130] sm:$0xff]
      %v2534 = vld [vmem:[%s14 + $0x138] sm:$0xff]
      %v2535 = vld [vmem:[%s14 + $0x140] sm:$0xff]
      %v2536 = vld [vmem:[%s14 + $0x148] sm:$0xff]
      %v2537 = vld [vmem:[%s14 + $0x150] sm:$0xff]
      %v2538 = vld [vmem:[%s14 + $0x158] sm:$0xff]
      %v2539 = vld [vmem:[%s14 + $0x160] sm:$0xff]
      %v2540 = vld [vmem:[%s14 + $0x168] sm:$0xff]
      %v2541 = vld [vmem:[%s14 + $0x170] sm:$0xff]
      %v2542 = vld [vmem:[%s14 + $0x178] sm:$0xff]
      %v2543 = vld [vmem:[%s14 + $0x180] sm:$0xff]
      %v2544 = vld [vmem:[%s14 + $0x188] sm:$0xff]
      %v2545 = vld [vmem:[%s14 + $0x190] sm:$0xff]
      %v2546 = vld [vmem:[%s14 + $0x198] sm:$0xff]
      %v2547 = vld [vmem:[%s14 + $0x1a0] sm:$0xff]
      %v2548 = vld [vmem:[%s14 + $0x1a8] sm:$0xff]
      %v2549 = vld [vmem:[%s14 + $0x1b0] sm:$0xff]
      %v2550 = vld [vmem:[%s14 + $0x1b8] sm:$0xff]
      %v2551 = vld [vmem:[%s14 + $0x1c0] sm:$0xff]
      %v2552 = vld [vmem:[%s14 + $0x1c8] sm:$0xff]
      %v2553 = vld [vmem:[%s14 + $0x1d0] sm:$0xff]
      %v2554 = vld [vmem:[%s14 + $0x1d8] sm:$0xff]
      %v2555 = vld [vmem:[%s14 + $0x1e0] sm:$0xff]
      %v2556 = vld [vmem:[%s14 + $0x1e8] sm:$0xff]
      %v2557 = vld [vmem:[%s14 + $0x1f0] sm:$0xff]
      %v2558 = vld [vmem:[%s14 + $0x1f8] sm:$0xff]
      %v2559 = vld [vmem:[%s14 + $0x200] sm:$0xff]
      %v2560 = vld [vmem:[%s14 + $0x208] sm:$0xff]
      %v2561 = vld [vmem:[%s14 + $0x210] sm:$0xff]
      %v2562 = vld [vmem:[%s14 + $0x218] sm:$0xff]
      %v2563 = vld [vmem:[%s14 + $0x220] sm:$0xff]
      %v2564 = vld [vmem:[%s14 + $0x228] sm:$0xff]
      %v2565 = vld [vmem:[%s14 + $0x230] sm:$0xff]
      %v2566 = vld [vmem:[%s14 + $0x238] sm:$0xff]
      %v2567 = vld [vmem:[%s14 + $0x240] sm:$0xff]
      %v2568 = vld [vmem:[%s14 + $0x248] sm:$0xff]
      %v2569 = vld [vmem:[%s14 + $0x250] sm:$0xff]
      %v2570 = vld [vmem:[%s14 + $0x258] sm:$0xff]
      %v2571 = vld [vmem:[%s14 + $0x260] sm:$0xff]
      %v2572 = vld [vmem:[%s14 + $0x268] sm:$0xff]
      %v2573 = vld [vmem:[%s14 + $0x270] sm:$0xff]
      %v2574 = vld [vmem:[%s14 + $0x278] sm:$0xff]
      %v2575 = vld [vmem:[%s14 + $0x280] sm:$0xff]
      %v2576 = vld [vmem:[%s14 + $0x288] sm:$0xff]
      %v2577 = vld [vmem:[%s14 + $0x290] sm:$0xff]
      %v2578 = vld [vmem:[%s14 + $0x298] sm:$0xff]
      %v2579 = vld [vmem:[%s14 + $0x2a0] sm:$0xff]
      %v2580 = vld [vmem:[%s14 + $0x2a8] sm:$0xff]
      %v2581 = vld [vmem:[%s14 + $0x2b0] sm:$0xff]
      %v2582 = vld [vmem:[%s14 + $0x2b8] sm:$0xff]
      %v2583 = vld [vmem:[%s14 + $0x2c0] sm:$0xff]
      %v2584 = vld [vmem:[%s14 + $0x2c8] sm:$0xff]
      %v2585 = vld [vmem:[%s14 + $0x2d0] sm:$0xff]
      %v2586 = vld [vmem:[%s14 + $0x2d8] sm:$0xff]
      %v2587 = vld [vmem:[%s14 + $0x2e0] sm:$0xff]
      %v2588 = vld [vmem:[%s14 + $0x2e8] sm:$0xff]
      %v2589 = vld [vmem:[%s14 + $0x2f0] sm:$0xff]
      %v2590 = vld [vmem:[%s14 + $0x2f8] sm:$0xff]
      %v2591 = vld [vmem:[%s14 + $0x300] sm:$0xff]
      %v2592 = vld [vmem:[%s14 + $0x308] sm:$0xff]
      %v2593 = vld [vmem:[%s14 + $0x310] sm:$0xff]
      %v2594 = vld [vmem:[%s14 + $0x318] sm:$0xff]
      %v2595 = vld [vmem:[%s14 + $0x320] sm:$0xff]
      %v2596 = vld [vmem:[%s14 + $0x328] sm:$0xff]
      %v2597 = vld [vmem:[%s14 + $0x330] sm:$0xff]
      %v2598 = vld [vmem:[%s14 + $0x338] sm:$0xff]
      %v2599 = vld [vmem:[%s14 + $0x340] sm:$0xff]
      %v2600 = vld [vmem:[%s14 + $0x348] sm:$0xff]
      %v2601 = vld [vmem:[%s14 + $0x350] sm:$0xff]
      %v2602 = vld [vmem:[%s14 + $0x358] sm:$0xff]
      %v2603 = vld [vmem:[%s14 + $0x360] sm:$0xff]
      %v2604 = vld [vmem:[%s14 + $0x368] sm:$0xff]
      %v2605 = vld [vmem:[%s14 + $0x370] sm:$0xff]
      %v2606 = vld [vmem:[%s14 + $0x378] sm:$0xff]
      %v2607 = vld [vmem:[%s14 + $0x380] sm:$0xff]
      %v2608 = vld [vmem:[%s14 + $0x388] sm:$0xff]
      %v2609 = vld [vmem:[%s14 + $0x390] sm:$0xff]
      %v2610 = vld [vmem:[%s14 + $0x398] sm:$0xff]
      %v2611 = vld [vmem:[%s14 + $0x3a0] sm:$0xff]
      %v2612 = vld [vmem:[%s14 + $0x3a8] sm:$0xff]
      %v2613 = vld [vmem:[%s14 + $0x3b0] sm:$0xff]
      %v2614 = vld [vmem:[%s14 + $0x3b8] sm:$0xff]
      %v2615 = vld [vmem:[%s14 + $0x3c0] sm:$0xff]
      %v2616 = vld [vmem:[%s14 + $0x3c8] sm:$0xff]
      %v2617 = vld [vmem:[%s14 + $0x3d0] sm:$0xff]
      %v2618 = vld [vmem:[%s14 + $0x3d8] sm:$0xff]
      %v2619 = vld [vmem:[%s14 + $0x3e0] sm:$0xff]
      %v2620 = vld [vmem:[%s14 + $0x3e8] sm:$0xff]
      %v2621 = vld [vmem:[%s14 + $0x3f0] sm:$0xff]
      %v2622 = vld [vmem:[%s14 + $0x3f8] sm:$0xff]
      %v2751 = vunpack.c.l.b16 %v2495
      %v2752 = vunpack.c.h.b16 %v2495
      %v2753 = vunpack.c.l.b16 %v2496
      %v2754 = vunpack.c.h.b16 %v2496
      %v2755 = vunpack.c.l.b16 %v2497
      %v2756 = vunpack.c.h.b16 %v2497
      %v2757 = vunpack.c.l.b16 %v2498
      %v2758 = vunpack.c.h.b16 %v2498
      %v2759 = vunpack.c.l.b16 %v2499
      %v2760 = vunpack.c.h.b16 %v2499
      %v2761 = vunpack.c.l.b16 %v2500
      %v2762 = vunpack.c.h.b16 %v2500
      %v2763 = vunpack.c.l.b16 %v2501
      %v2764 = vunpack.c.h.b16 %v2501
      %v2765 = vunpack.c.l.b16 %v2502
      %v2766 = vunpack.c.h.b16 %v2502
      %v2767 = vunpack.c.l.b16 %v2503
      %v2768 = vunpack.c.h.b16 %v2503
      %v2769 = vunpack.c.l.b16 %v2504
      %v2770 = vunpack.c.h.b16 %v2504
      %v2771 = vunpack.c.l.b16 %v2505
      %v2772 = vunpack.c.h.b16 %v2505
      %v2773 = vunpack.c.l.b16 %v2506
      %v2774 = vunpack.c.h.b16 %v2506
      %v2775 = vunpack.c.l.b16 %v2507
      %v2776 = vunpack.c.h.b16 %v2507
      %v2777 = vunpack.c.l.b16 %v2508
      %v2778 = vunpack.c.h.b16 %v2508
      %v2779 = vunpack.c.l.b16 %v2509
      %v2780 = vunpack.c.h.b16 %v2509
      %v2781 = vunpack.c.l.b16 %v2510
      %v2782 = vunpack.c.h.b16 %v2510
      %v2783 = vunpack.c.l.b16 %v2511
      %v2784 = vunpack.c.h.b16 %v2511
      %v2785 = vunpack.c.l.b16 %v2512
      %v2786 = vunpack.c.h.b16 %v2512
      %v2787 = vunpack.c.l.b16 %v2513
      %v2788 = vunpack.c.h.b16 %v2513
      %v2789 = vunpack.c.l.b16 %v2514
      %v2790 = vunpack.c.h.b16 %v2514
      %v2791 = vunpack.c.l.b16 %v2515
      %v2792 = vunpack.c.h.b16 %v2515
      %v2793 = vunpack.c.l.b16 %v2516
      %v2794 = vunpack.c.h.b16 %v2516
      %v2795 = vunpack.c.l.b16 %v2517
      %v2796 = vunpack.c.h.b16 %v2517
      %v2797 = vunpack.c.l.b16 %v2518
      %v2798 = vunpack.c.h.b16 %v2518
      %v2799 = vunpack.c.l.b16 %v2519
      %v2800 = vunpack.c.h.b16 %v2519
      %v2801 = vunpack.c.l.b16 %v2520
      %v2802 = vunpack.c.h.b16 %v2520
      %v2803 = vunpack.c.l.b16 %v2521
      %v2804 = vunpack.c.h.b16 %v2521
      %v2805 = vunpack.c.l.b16 %v2522
      %v2806 = vunpack.c.h.b16 %v2522
      %v2807 = vunpack.c.l.b16 %v2523
      %v2808 = vunpack.c.h.b16 %v2523
      %v2809 = vunpack.c.l.b16 %v2524
      %v2810 = vunpack.c.h.b16 %v2524
      %v2811 = vunpack.c.l.b16 %v2525
      %v2812 = vunpack.c.h.b16 %v2525
      %v2813 = vunpack.c.l.b16 %v2526
      %v2814 = vunpack.c.h.b16 %v2526
      %v2815 = vunpack.c.l.b16 %v2527
      %v2816 = vunpack.c.h.b16 %v2527
      %v2817 = vunpack.c.l.b16 %v2528
      %v2818 = vunpack.c.h.b16 %v2528
      %v2819 = vunpack.c.l.b16 %v2529
      %v2820 = vunpack.c.h.b16 %v2529
      %v2821 = vunpack.c.l.b16 %v2530
      %v2822 = vunpack.c.h.b16 %v2530
      %v2823 = vunpack.c.l.b16 %v2531
      %v2824 = vunpack.c.h.b16 %v2531
      %v2825 = vunpack.c.l.b16 %v2532
      %v2826 = vunpack.c.h.b16 %v2532
      %v2827 = vunpack.c.l.b16 %v2533
      %v2828 = vunpack.c.h.b16 %v2533
      %v2829 = vunpack.c.l.b16 %v2534
      %v2830 = vunpack.c.h.b16 %v2534
      %v2831 = vunpack.c.l.b16 %v2535
      %v2832 = vunpack.c.h.b16 %v2535
      %v2833 = vunpack.c.l.b16 %v2536
      %v2834 = vunpack.c.h.b16 %v2536
      %v2835 = vunpack.c.l.b16 %v2537
      %v2836 = vunpack.c.h.b16 %v2537
      %v2837 = vunpack.c.l.b16 %v2538
      %v2838 = vunpack.c.h.b16 %v2538
      %v2839 = vunpack.c.l.b16 %v2539
      %v2840 = vunpack.c.h.b16 %v2539
      %v2841 = vunpack.c.l.b16 %v2540
      %v2842 = vunpack.c.h.b16 %v2540
      %v2843 = vunpack.c.l.b16 %v2541
      %v2844 = vunpack.c.h.b16 %v2541
      %v2845 = vunpack.c.l.b16 %v2542
      %v2846 = vunpack.c.h.b16 %v2542
      %v2847 = vunpack.c.l.b16 %v2543
      %v2848 = vunpack.c.h.b16 %v2543
      %v2849 = vunpack.c.l.b16 %v2544
      %v2850 = vunpack.c.h.b16 %v2544
      %v2851 = vunpack.c.l.b16 %v2545
      %v2852 = vunpack.c.h.b16 %v2545
      %v2853 = vunpack.c.l.b16 %v2546
      %v2854 = vunpack.c.h.b16 %v2546
      %v2855 = vunpack.c.l.b16 %v2547
      %v2856 = vunpack.c.h.b16 %v2547
      %v2857 = vunpack.c.l.b16 %v2548
      %v2858 = vunpack.c.h.b16 %v2548
      %v2859 = vunpack.c.l.b16 %v2549
      %v2860 = vunpack.c.h.b16 %v2549
      %v2861 = vunpack.c.l.b16 %v2550
      %v2862 = vunpack.c.h.b16 %v2550
      %v2863 = vunpack.c.l.b16 %v2551
      %v2864 = vunpack.c.h.b16 %v2551
      %v2865 = vunpack.c.l.b16 %v2552
      %v2866 = vunpack.c.h.b16 %v2552
      %v2867 = vunpack.c.l.b16 %v2553
      %v2868 = vunpack.c.h.b16 %v2553
      %v2869 = vunpack.c.l.b16 %v2554
      %v2870 = vunpack.c.h.b16 %v2554
      %v2871 = vunpack.c.l.b16 %v2555
      %v2872 = vunpack.c.h.b16 %v2555
      %v2873 = vunpack.c.l.b16 %v2556
      %v2874 = vunpack.c.h.b16 %v2556
      %v2875 = vunpack.c.l.b16 %v2557
      %v2876 = vunpack.c.h.b16 %v2557
      %v2877 = vunpack.c.l.b16 %v2558
      %v2878 = vunpack.c.h.b16 %v2558
      %v2879 = vunpack.c.l.b16 %v2559
      %v2880 = vunpack.c.h.b16 %v2559
      %v2881 = vunpack.c.l.b16 %v2560
      %v2882 = vunpack.c.h.b16 %v2560
      %v2883 = vunpack.c.l.b16 %v2561
      %v2884 = vunpack.c.h.b16 %v2561
      %v2885 = vunpack.c.l.b16 %v2562
      %v2886 = vunpack.c.h.b16 %v2562
      %v2887 = vunpack.c.l.b16 %v2563
      %v2888 = vunpack.c.h.b16 %v2563
      %v2889 = vunpack.c.l.b16 %v2564
      %v2890 = vunpack.c.h.b16 %v2564
      %v2891 = vunpack.c.l.b16 %v2565
      %v2892 = vunpack.c.h.b16 %v2565
      %v2893 = vunpack.c.l.b16 %v2566
      %v2894 = vunpack.c.h.b16 %v2566
      %v2895 = vunpack.c.l.b16 %v2567
      %v2896 = vunpack.c.h.b16 %v2567
      %v2897 = vunpack.c.l.b16 %v2568
      %v2898 = vunpack.c.h.b16 %v2568
      %v2899 = vunpack.c.l.b16 %v2569
      %v2900 = vunpack.c.h.b16 %v2569
      %v2901 = vunpack.c.l.b16 %v2570
      %v2902 = vunpack.c.h.b16 %v2570
      %v2903 = vunpack.c.l.b16 %v2571
      %v2904 = vunpack.c.h.b16 %v2571
      %v2905 = vunpack.c.l.b16 %v2572
      %v2906 = vunpack.c.h.b16 %v2572
      %v2907 = vunpack.c.l.b16 %v2573
      %v2908 = vunpack.c.h.b16 %v2573
      %v2909 = vunpack.c.l.b16 %v2574
      %v2910 = vunpack.c.h.b16 %v2574
      %v2911 = vunpack.c.l.b16 %v2575
      %v2912 = vunpack.c.h.b16 %v2575
      %v2913 = vunpack.c.l.b16 %v2576
      %v2914 = vunpack.c.h.b16 %v2576
      %v2915 = vunpack.c.l.b16 %v2577
      %v2916 = vunpack.c.h.b16 %v2577
      %v2917 = vunpack.c.l.b16 %v2578
      %v2918 = vunpack.c.h.b16 %v2578
      %v2919 = vunpack.c.l.b16 %v2579
      %v2920 = vunpack.c.h.b16 %v2579
      %v2921 = vunpack.c.l.b16 %v2580
      %v2922 = vunpack.c.h.b16 %v2580
      %v2923 = vunpack.c.l.b16 %v2581
      %v2924 = vunpack.c.h.b16 %v2581
      %v2925 = vunpack.c.l.b16 %v2582
      %v2926 = vunpack.c.h.b16 %v2582
      %v2927 = vunpack.c.l.b16 %v2583
      %v2928 = vunpack.c.h.b16 %v2583
      %v2929 = vunpack.c.l.b16 %v2584
      %v2930 = vunpack.c.h.b16 %v2584
      %v2931 = vunpack.c.l.b16 %v2585
      %v2932 = vunpack.c.h.b16 %v2585
      %v2933 = vunpack.c.l.b16 %v2586
      %v2934 = vunpack.c.h.b16 %v2586
      %v2935 = vunpack.c.l.b16 %v2587
      %v2936 = vunpack.c.h.b16 %v2587
      %v2937 = vunpack.c.l.b16 %v2588
      %v2938 = vunpack.c.h.b16 %v2588
      %v2939 = vunpack.c.l.b16 %v2589
      %v2940 = vunpack.c.h.b16 %v2589
      %v2941 = vunpack.c.l.b16 %v2590
      %v2942 = vunpack.c.h.b16 %v2590
      %v2943 = vunpack.c.l.b16 %v2591
      %v2944 = vunpack.c.h.b16 %v2591
      %v2945 = vunpack.c.l.b16 %v2592
      %v2946 = vunpack.c.h.b16 %v2592
      %v2947 = vunpack.c.l.b16 %v2593
      %v2948 = vunpack.c.h.b16 %v2593
      %v2949 = vunpack.c.l.b16 %v2594
      %v2950 = vunpack.c.h.b16 %v2594
      %v2951 = vunpack.c.l.b16 %v2595
      %v2952 = vunpack.c.h.b16 %v2595
      %v2953 = vunpack.c.l.b16 %v2596
      %v2954 = vunpack.c.h.b16 %v2596
      %v2955 = vunpack.c.l.b16 %v2597
      %v2956 = vunpack.c.h.b16 %v2597
      %v2957 = vunpack.c.l.b16 %v2598
      %v2958 = vunpack.c.h.b16 %v2598
      %v2959 = vunpack.c.l.b16 %v2599
      %v2960 = vunpack.c.h.b16 %v2599
      %v2961 = vunpack.c.l.b16 %v2600
      %v2962 = vunpack.c.h.b16 %v2600
      %v2963 = vunpack.c.l.b16 %v2601
      %v2964 = vunpack.c.h.b16 %v2601
      %v2965 = vunpack.c.l.b16 %v2602
      %v2966 = vunpack.c.h.b16 %v2602
      %v2967 = vunpack.c.l.b16 %v2603
      %v2968 = vunpack.c.h.b16 %v2603
      %v2969 = vunpack.c.l.b16 %v2604
      %v2970 = vunpack.c.h.b16 %v2604
      %v2971 = vunpack.c.l.b16 %v2605
      %v2972 = vunpack.c.h.b16 %v2605
      %v2973 = vunpack.c.l.b16 %v2606
      %v2974 = vunpack.c.h.b16 %v2606
      %v2975 = vunpack.c.l.b16 %v2607
      %v2976 = vunpack.c.h.b16 %v2607
      %v2977 = vunpack.c.l.b16 %v2608
      %v2978 = vunpack.c.h.b16 %v2608
      %v2979 = vunpack.c.l.b16 %v2609
      %v2980 = vunpack.c.h.b16 %v2609
      %v2981 = vunpack.c.l.b16 %v2610
      %v2982 = vunpack.c.h.b16 %v2610
      %v2983 = vunpack.c.l.b16 %v2611
      %v2984 = vunpack.c.h.b16 %v2611
      %v2985 = vunpack.c.l.b16 %v2612
      %v2986 = vunpack.c.h.b16 %v2612
      %v2987 = vunpack.c.l.b16 %v2613
      %v2988 = vunpack.c.h.b16 %v2613
      %v2989 = vunpack.c.l.b16 %v2614
      %v2990 = vunpack.c.h.b16 %v2614
      %v2991 = vunpack.c.l.b16 %v2615
      %v2992 = vunpack.c.h.b16 %v2615
      %v2993 = vunpack.c.l.b16 %v2616
      %v2994 = vunpack.c.h.b16 %v2616
      %v2995 = vunpack.c.l.b16 %v2617
      %v2996 = vunpack.c.h.b16 %v2617
      %v2997 = vunpack.c.l.b16 %v2618
      %v2998 = vunpack.c.h.b16 %v2618
      %v2999 = vunpack.c.l.b16 %v2619
      %v3000 = vunpack.c.h.b16 %v2619
      %v3001 = vunpack.c.l.b16 %v2620
      %v3002 = vunpack.c.h.b16 %v2620
      %v3003 = vunpack.c.l.b16 %v2621
      %v3004 = vunpack.c.h.b16 %v2621
      %v3005 = vunpack.c.l.b16 %v2622
      %v3006 = vunpack.c.h.b16 %v2622
      %v3007 = vpack.c.b16 %v2759, %v2751
      %v3008 = vpack.c.b16 %v2760, %v2752
      %v3009 = vpack.c.b16 %v2761, %v2753
      %v3010 = vpack.c.b16 %v2762, %v2754
      %v3011 = vpack.c.b16 %v2763, %v2755
      %v3012 = vpack.c.b16 %v2764, %v2756
      %v3013 = vpack.c.b16 %v2765, %v2757
      %v3014 = vpack.c.b16 %v2766, %v2758
      %v3015 = vpack.c.b16 %v2775, %v2767
      %v3016 = vpack.c.b16 %v2776, %v2768
      %v3017 = vpack.c.b16 %v2777, %v2769
      %v3018 = vpack.c.b16 %v2778, %v2770
      %v3019 = vpack.c.b16 %v2779, %v2771
      %v3020 = vpack.c.b16 %v2780, %v2772
      %v3021 = vpack.c.b16 %v2781, %v2773
      %v3022 = vpack.c.b16 %v2782, %v2774
      %v3023 = vpack.c.b16 %v2791, %v2783
      %v3024 = vpack.c.b16 %v2792, %v2784
      %v3025 = vpack.c.b16 %v2793, %v2785
      %v3026 = vpack.c.b16 %v2794, %v2786
      %v3027 = vpack.c.b16 %v2795, %v2787
      %v3028 = vpack.c.b16 %v2796, %v2788
      %v3029 = vpack.c.b16 %v2797, %v2789
      %v3030 = vpack.c.b16 %v2798, %v2790
      %v3031 = vpack.c.b16 %v2807, %v2799
      %v3032 = vpack.c.b16 %v2808, %v2800
      %v3033 = vpack.c.b16 %v2809, %v2801
      %v3034 = vpack.c.b16 %v2810, %v2802
      %v3035 = vpack.c.b16 %v2811, %v2803
      %v3036 = vpack.c.b16 %v2812, %v2804
      %v3037 = vpack.c.b16 %v2813, %v2805
      %v3038 = vpack.c.b16 %v2814, %v2806
      %v3039 = vpack.c.b16 %v2823, %v2815
      %v3040 = vpack.c.b16 %v2824, %v2816
      %v3041 = vpack.c.b16 %v2825, %v2817
      %v3042 = vpack.c.b16 %v2826, %v2818
      %v3043 = vpack.c.b16 %v2827, %v2819
      %v3044 = vpack.c.b16 %v2828, %v2820
      %v3045 = vpack.c.b16 %v2829, %v2821
      %v3046 = vpack.c.b16 %v2830, %v2822
      %v3047 = vpack.c.b16 %v2839, %v2831
      %v3048 = vpack.c.b16 %v2840, %v2832
      %v3049 = vpack.c.b16 %v2841, %v2833
      %v3050 = vpack.c.b16 %v2842, %v2834
      %v3051 = vpack.c.b16 %v2843, %v2835
      %v3052 = vpack.c.b16 %v2844, %v2836
      %v3053 = vpack.c.b16 %v2845, %v2837
      %v3054 = vpack.c.b16 %v2846, %v2838
      %v3055 = vpack.c.b16 %v2855, %v2847
      %v3056 = vpack.c.b16 %v2856, %v2848
      %v3057 = vpack.c.b16 %v2857, %v2849
      %v3058 = vpack.c.b16 %v2858, %v2850
      %v3059 = vpack.c.b16 %v2859, %v2851
      %v3060 = vpack.c.b16 %v2860, %v2852
      %v3061 = vpack.c.b16 %v2861, %v2853
      %v3062 = vpack.c.b16 %v2862, %v2854
      %v3063 = vpack.c.b16 %v2871, %v2863
      %v3064 = vpack.c.b16 %v2872, %v2864
      %v3065 = vpack.c.b16 %v2873, %v2865
      %v3066 = vpack.c.b16 %v2874, %v2866
      %v3067 = vpack.c.b16 %v2875, %v2867
      %v3068 = vpack.c.b16 %v2876, %v2868
      %v3069 = vpack.c.b16 %v2877, %v2869
      %v3070 = vpack.c.b16 %v2878, %v2870
      %v3071 = vpack.c.b16 %v2887, %v2879
      %v3072 = vpack.c.b16 %v2888, %v2880
      %v3073 = vpack.c.b16 %v2889, %v2881
      %v3074 = vpack.c.b16 %v2890, %v2882
      %v3075 = vpack.c.b16 %v2891, %v2883
      %v3076 = vpack.c.b16 %v2892, %v2884
      %v3077 = vpack.c.b16 %v2893, %v2885
      %v3078 = vpack.c.b16 %v2894, %v2886
      %v3079 = vpack.c.b16 %v2903, %v2895
      %v3080 = vpack.c.b16 %v2904, %v2896
      %v3081 = vpack.c.b16 %v2905, %v2897
      %v3082 = vpack.c.b16 %v2906, %v2898
      %v3083 = vpack.c.b16 %v2907, %v2899
      %v3084 = vpack.c.b16 %v2908, %v2900
      %v3085 = vpack.c.b16 %v2909, %v2901
      %v3086 = vpack.c.b16 %v2910, %v2902
      %v3087 = vpack.c.b16 %v2919, %v2911
      %v3088 = vpack.c.b16 %v2920, %v2912
      %v3089 = vpack.c.b16 %v2921, %v2913
      %v3090 = vpack.c.b16 %v2922, %v2914
      %v3091 = vpack.c.b16 %v2923, %v2915
      %v3092 = vpack.c.b16 %v2924, %v2916
      %v3093 = vpack.c.b16 %v2925, %v2917
      %v3094 = vpack.c.b16 %v2926, %v2918
      %v3095 = vpack.c.b16 %v2935, %v2927
      %v3096 = vpack.c.b16 %v2936, %v2928
      %v3097 = vpack.c.b16 %v2937, %v2929
      %v3098 = vpack.c.b16 %v2938, %v2930
      %v3099 = vpack.c.b16 %v2939, %v2931
      %v3100 = vpack.c.b16 %v2940, %v2932
      %v3101 = vpack.c.b16 %v2941, %v2933
      %v3102 = vpack.c.b16 %v2942, %v2934
      %v3103 = vpack.c.b16 %v2951, %v2943
      %v3104 = vpack.c.b16 %v2952, %v2944
      %v3105 = vpack.c.b16 %v2953, %v2945
      %v3106 = vpack.c.b16 %v2954, %v2946
      %v3107 = vpack.c.b16 %v2955, %v2947
      %v3108 = vpack.c.b16 %v2956, %v2948
      %v3109 = vpack.c.b16 %v2957, %v2949
      %v3110 = vpack.c.b16 %v2958, %v2950
      %v3111 = vpack.c.b16 %v2967, %v2959
      %v3112 = vpack.c.b16 %v2968, %v2960
      %v3113 = vpack.c.b16 %v2969, %v2961
      %v3114 = vpack.c.b16 %v2970, %v2962
      %v3115 = vpack.c.b16 %v2971, %v2963
      %v3116 = vpack.c.b16 %v2972, %v2964
      %v3117 = vpack.c.b16 %v2973, %v2965
      %v3118 = vpack.c.b16 %v2974, %v2966
      %v3119 = vpack.c.b16 %v2983, %v2975
      %v3120 = vpack.c.b16 %v2984, %v2976
      %v3121 = vpack.c.b16 %v2985, %v2977
      %v3122 = vpack.c.b16 %v2986, %v2978
      %v3123 = vpack.c.b16 %v2987, %v2979
      %v3124 = vpack.c.b16 %v2988, %v2980
      %v3125 = vpack.c.b16 %v2989, %v2981
      %v3126 = vpack.c.b16 %v2990, %v2982
      %v3127 = vpack.c.b16 %v2999, %v2991
      %v3128 = vpack.c.b16 %v3000, %v2992
      %v3129 = vpack.c.b16 %v3001, %v2993
      %v3130 = vpack.c.b16 %v3002, %v2994
      %v3131 = vpack.c.b16 %v3003, %v2995
      %v3132 = vpack.c.b16 %v3004, %v2996
      %v3133 = vpack.c.b16 %v3005, %v2997
      %v3134 = vpack.c.b16 %v3006, %v2998
      %3263 = vmatprep.subr.bf16.mxu0 %v3008
      %3264 = vmatpush1.bf16.msra.mxu0 %v3007
      %3265 = vmatprep.subr.bf16.mxu0 %v3016
      %3266 = vmatpush1.bf16.msra.mxu0 %v3015
      %3267 = vmatprep.subr.bf16.mxu0 %v3024
      %3268 = vmatpush1.bf16.msra.mxu0 %v3023
      %3269 = vmatprep.subr.bf16.mxu0 %v3032
      %3270 = vmatpush1.bf16.msra.mxu0 %v3031
      %3271 = vmatprep.subr.bf16.mxu0 %v3040
      %3272 = vmatpush1.bf16.msra.mxu0 %v3039
      %3273 = vmatprep.subr.bf16.mxu0 %v3048
      %3274 = vmatpush1.bf16.msra.mxu0 %v3047
      %3275 = vmatprep.subr.bf16.mxu0 %v3056
      %3276 = vmatpush1.bf16.msra.mxu0 %v3055
      %3277 = vmatprep.subr.bf16.mxu0 %v3064
      %3278 = vmatpush1.bf16.msra.mxu0 %v3063
      %3279 = vmatprep.subr.bf16.mxu0 %v3072
      %3280 = vmatpush1.bf16.msra.mxu0 %v3071
      %3281 = vmatprep.subr.bf16.mxu0 %v3080
      %3282 = vmatpush1.bf16.msra.mxu0 %v3079
      %3283 = vmatprep.subr.bf16.mxu0 %v3088
      %3284 = vmatpush1.bf16.msra.mxu0 %v3087
      %3285 = vmatprep.subr.bf16.mxu0 %v3096
      %3286 = vmatpush1.bf16.msra.mxu0 %v3095
      %3287 = vmatprep.subr.bf16.mxu0 %v3104
      %3288 = vmatpush1.bf16.msra.mxu0 %v3103
      %3289 = vmatprep.subr.bf16.mxu0 %v3112
      %3290 = vmatpush1.bf16.msra.mxu0 %v3111
      %3291 = vmatprep.subr.bf16.mxu0 %v3120
      %3292 = vmatpush1.bf16.msra.mxu0 %v3119
      %3293 = vmatprep.subr.bf16.mxu0 %v3128
      %3294 = vmatpush1.bf16.msra.mxu0 %v3127
      %3295 = vmatprep.mubr.bf16.mxu0 %v2494
      %3296 = vmatmul.mubr.bf16.gmra.mrb[0].mxu0 %v2493
      %v3297 = vpop.f32.mrb[0].mxu0
      %v3298 = vadd.f32 0.0, %v3297
      %v3299 = vpop.f32.mrb[0].mxu0
      %v3300 = vadd.f32 0.0, %v3299
      %v3301 = vpop.f32.mrb[0].mxu0
      %v3302 = vadd.f32 0.0, %v3301
      %v3303 = vpop.f32.mrb[0].mxu0
      %v3304 = vadd.f32 0.0, %v3303
      %3305 = vdwg.mxu0
      %3306 = vmatprep.subr.bf16.mxu0 %v3010
      %3307 = vmatpush1.bf16.msra.mxu0 %v3009
      %3308 = vmatprep.subr.bf16.mxu0 %v3018
      %3309 = vmatpush1.bf16.msra.mxu0 %v3017
      %3310 = vmatprep.subr.bf16.mxu0 %v3026
      %3311 = vmatpush1.bf16.msra.mxu0 %v3025
      %3312 = vmatprep.subr.bf16.mxu0 %v3034
      %3313 = vmatpush1.bf16.msra.mxu0 %v3033
      %3314 = vmatprep.subr.bf16.mxu0 %v3042
      %3315 = vmatpush1.bf16.msra.mxu0 %v3041
      %3316 = vmatprep.subr.bf16.mxu0 %v3050
      %3317 = vmatpush1.bf16.msra.mxu0 %v3049
      %3318 = vmatprep.subr.bf16.mxu0 %v3058
      %3319 = vmatpush1.bf16.msra.mxu0 %v3057
      %3320 = vmatprep.subr.bf16.mxu0 %v3066
      %3321 = vmatpush1.bf16.msra.mxu0 %v3065
      %3322 = vmatprep.subr.bf16.mxu0 %v3074
      %3323 = vmatpush1.bf16.msra.mxu0 %v3073
      %3324 = vmatprep.subr.bf16.mxu0 %v3082
      %3325 = vmatpush1.bf16.msra.mxu0 %v3081
      %3326 = vmatprep.subr.bf16.mxu0 %v3090
      %3327 = vmatpush1.bf16.msra.mxu0 %v3089
      %3328 = vmatprep.subr.bf16.mxu0 %v3098
      %3329 = vmatpush1.bf16.msra.mxu0 %v3097
      %3330 = vmatprep.subr.bf16.mxu0 %v3106
      %3331 = vmatpush1.bf16.msra.mxu0 %v3105
      %3332 = vmatprep.subr.bf16.mxu0 %v3114
      %3333 = vmatpush1.bf16.msra.mxu0 %v3113
      %3334 = vmatprep.subr.bf16.mxu0 %v3122
      %3335 = vmatpush1.bf16.msra.mxu0 %v3121
      %3336 = vmatprep.subr.bf16.mxu0 %v3130
      %3337 = vmatpush1.bf16.msra.mxu0 %v3129
      %3338 = vmatprep.mubr.bf16.mxu0 %v2494
      %3339 = vmatmul.mubr.bf16.gmra.mrb[0].mxu0 %v2493
      %v3340 = vpop.f32.mrb[0].mxu0
      %v3341 = vadd.f32 0.0, %v3340
      %v3342 = vpop.f32.mrb[0].mxu0
      %v3343 = vadd.f32 0.0, %v3342
      %v3344 = vpop.f32.mrb[0].mxu0
      %v3345 = vadd.f32 0.0, %v3344
      %v3346 = vpop.f32.mrb[0].mxu0
      %v3347 = vadd.f32 0.0, %v3346
      %3348 = vdwg.mxu0
      %3349 = vmatprep.subr.bf16.mxu0 %v3012
      %3350 = vmatpush1.bf16.msra.mxu0 %v3011
      %3351 = vmatprep.subr.bf16.mxu0 %v3020
      %3352 = vmatpush1.bf16.msra.mxu0 %v3019
      %3353 = vmatprep.subr.bf16.mxu0 %v3028
      %3354 = vmatpush1.bf16.msra.mxu0 %v3027
      %3355 = vmatprep.subr.bf16.mxu0 %v3036
      %3356 = vmatpush1.bf16.msra.mxu0 %v3035
      %3357 = vmatprep.subr.bf16.mxu0 %v3044
      %3358 = vmatpush1.bf16.msra.mxu0 %v3043
      %3359 = vmatprep.subr.bf16.mxu0 %v3052
      %3360 = vmatpush1.bf16.msra.mxu0 %v3051
      %3361 = vmatprep.subr.bf16.mxu0 %v3060
      %3362 = vmatpush1.bf16.msra.mxu0 %v3059
      %3363 = vmatprep.subr.bf16.mxu0 %v3068
      %3364 = vmatpush1.bf16.msra.mxu0 %v3067
      %3365 = vmatprep.subr.bf16.mxu0 %v3076
      %3366 = vmatpush1.bf16.msra.mxu0 %v3075
      %3367 = vmatprep.subr.bf16.mxu0 %v3084
      %3368 = vmatpush1.bf16.msra.mxu0 %v3083
      %3369 = vmatprep.subr.bf16.mxu0 %v3092
      %3370 = vmatpush1.bf16.msra.mxu0 %v3091
      %3371 = vmatprep.subr.bf16.mxu0 %v3100
      %3372 = vmatpush1.bf16.msra.mxu0 %v3099
      %3373 = vmatprep.subr.bf16.mxu0 %v3108
      %3374 = vmatpush1.bf16.msra.mxu0 %v3107
      %3375 = vmatprep.subr.bf16.mxu0 %v3116
      %3376 = vmatpush1.bf16.msra.mxu0 %v3115
      %3377 = vmatprep.subr.bf16.mxu0 %v3124
      %3378 = vmatpush1.bf16.msra.mxu0 %v3123
      %3379 = vmatprep.subr.bf16.mxu0 %v3132
      %3380 = vmatpush1.bf16.msra.mxu0 %v3131
      %3381 = vmatprep.mubr.bf16.mxu0 %v2494
      %3382 = vmatmul.mubr.bf16.gmra.mrb[0].mxu0 %v2493
      %v3383 = vpop.f32.mrb[0].mxu0
      %v3384 = vadd.f32 0.0, %v3383
      %v3385 = vpop.f32.mrb[0].mxu0
      %v3386 = vadd.f32 0.0, %v3385
      %v3387 = vpop.f32.mrb[0].mxu0
      %v3388 = vadd.f32 0.0, %v3387
      %v3389 = vpop.f32.mrb[0].mxu0
      %v3390 = vadd.f32 0.0, %v3389
      %3391 = vdwg.mxu0
      %3392 = vmatprep.subr.bf16.mxu0 %v3014
      %3393 = vmatpush1.bf16.msra.mxu0 %v3013
      %3394 = vmatprep.subr.bf16.mxu0 %v3022
      %3395 = vmatpush1.bf16.msra.mxu0 %v3021
      %3396 = vmatprep.subr.bf16.mxu0 %v3030
      %3397 = vmatpush1.bf16.msra.mxu0 %v3029
      %3398 = vmatprep.subr.bf16.mxu0 %v3038
      %3399 = vmatpush1.bf16.msra.mxu0 %v3037
      %3400 = vmatprep.subr.bf16.mxu0 %v3046
      %3401 = vmatpush1.bf16.msra.mxu0 %v3045
      %3402 = vmatprep.subr.bf16.mxu0 %v3054
      %3403 = vmatpush1.bf16.msra.mxu0 %v3053
      %3404 = vmatprep.subr.bf16.mxu0 %v3062
      %3405 = vmatpush1.bf16.msra.mxu0 %v3061
      %3406 = vmatprep.subr.bf16.mxu0 %v3070
      %3407 = vmatpush1.bf16.msra.mxu0 %v3069
      %3408 = vmatprep.subr.bf16.mxu0 %v3078
      %3409 = vmatpush1.bf16.msra.mxu0 %v3077
      %3410 = vmatprep.subr.bf16.mxu0 %v3086
      %3411 = vmatpush1.bf16.msra.mxu0 %v3085
      %3412 = vmatprep.subr.bf16.mxu0 %v3094
      %3413 = vmatpush1.bf16.msra.mxu0 %v3093
      %3414 = vmatprep.subr.bf16.mxu0 %v3102
      %3415 = vmatpush1.bf16.msra.mxu0 %v3101
      %3416 = vmatprep.subr.bf16.mxu0 %v3110
      %3417 = vmatpush1.bf16.msra.mxu0 %v3109
      %3418 = vmatprep.subr.bf16.mxu0 %v3118
      %3419 = vmatpush1.bf16.msra.mxu0 %v3117
      %3420 = vmatprep.subr.bf16.mxu0 %v3126
      %3421 = vmatpush1.bf16.msra.mxu0 %v3125
      %3422 = vmatprep.subr.bf16.mxu0 %v3134
      %3423 = vmatpush1.bf16.msra.mxu0 %v3133
      %3424 = vmatprep.mubr.bf16.mxu0 %v2494
      %3425 = vmatmul.mubr.bf16.gmra.mrb[0].mxu0 %v2493
      %v3426 = vpop.f32.mrb[0].mxu0
      %v3427 = vadd.f32 0.0, %v3426
      %v3428 = vpop.f32.mrb[0].mxu0
      %v3429 = vadd.f32 0.0, %v3428
      %v3430 = vpop.f32.mrb[0].mxu0
      %v3431 = vadd.f32 0.0, %v3430
      %v3432 = vpop.f32.mrb[0].mxu0
      %v3433 = vadd.f32 0.0, %v3432
      %3434 = vdwg.mxu0
      %3435 = vrot.lane.b32.xlu0 %v3298, 33
      %v3436 = vpop.permute.xlu0 %3435
      %3437 = vrot.lane.b32.xlu0 %v3302, 33
      %v3438 = vpop.permute.xlu0 %3437
      %3439 = vrot.lane.b32.xlu0 %v3300, 33
      %v3440 = vpop.permute.xlu0 %3439
      %3441 = vrot.lane.b32.xlu0 %v3304, 33
      %v3442 = vpop.permute.xlu0 %3441
      %3443 = vrot.lane.b32.xlu0 %v3341, 33
      %v3444 = vpop.permute.xlu0 %3443
      %3445 = vrot.lane.b32.xlu0 %v3345, 33
      %v3446 = vpop.permute.xlu0 %3445
      %3447 = vrot.lane.b32.xlu0 %v3343, 33
      %v3448 = vpop.permute.xlu0 %3447
      %3449 = vrot.lane.b32.xlu0 %v3347, 33
      %v3450 = vpop.permute.xlu0 %3449
      %3451 = vrot.lane.b32.xlu0 %v3384, 33
      %v3452 = vpop.permute.xlu0 %3451
      %3453 = vrot.lane.b32.xlu0 %v3388, 33
      %v3454 = vpop.permute.xlu0 %3453
      %3455 = vrot.lane.b32.xlu0 %v3386, 33
      %v3456 = vpop.permute.xlu0 %3455
      %3457 = vrot.lane.b32.xlu0 %v3390, 33
      %v3458 = vpop.permute.xlu0 %3457
      %3459 = vrot.lane.b32.xlu0 %v3427, 33
      %v3460 = vpop.permute.xlu0 %3459
      %3461 = vrot.lane.b32.xlu0 %v3431, 33
      %v3462 = vpop.permute.xlu0 %3461
      %3463 = vrot.lane.b32.xlu0 %v3429, 33
      %v3464 = vpop.permute.xlu0 %3463
      %3465 = vrot.lane.b32.xlu0 %v3433, 33
      %v3466 = vpop.permute.xlu0 %3465
      %vm3467 = vcmp.lt.s32.totalorder %v865, 33
      %v3468 = vsel %vm3467, %v3460, %v3464
      %v3469 = vsel %vm3467, %v3462, %v3466
      %v3470 = vsel %vm3467, %v3456, %v3460
      %v3471 = vsel %vm3467, %v3458, %v3462
      %v3472 = vsel %vm3467, %v3452, %v3456
      %v3473 = vsel %vm3467, %v3454, %v3458
      %v3474 = vsel %vm3467, %v3448, %v3452
      %v3475 = vsel %vm3467, %v3450, %v3454
      %v3476 = vsel %vm3467, %v3444, %v3448
      %v3477 = vsel %vm3467, %v3446, %v3450
      %v3478 = vsel %vm3467, %v3440, %v3444
      %v3479 = vsel %vm3467, %v3442, %v3446
      %v3480 = vsel %vm3467, %v3436, %v3440
      %v3481 = vsel %vm3467, %v3438, %v3442
      %v3482 = vsel %vm3467, %v3464, %v3436
      %v3483 = vsel %vm3467, %v3466, %v3438
      %v3484 = vsel %vm2461, 1, 0
      %v3485 = vsel %vm2462, 1, 0
      %v3486 = vsel %vm2463, 1, 0
      %v3487 = vsel %vm2464, 1, 0
      %v3488 = vsel %vm2465, 1, 0
      %v3489 = vsel %vm2466, 1, 0
      %v3490 = vsel %vm2467, 1, 0
      %v3491 = vsel %vm2468, 1, 0
      %vm3492 = vcmp.eq.s32.totalorder %v3484, 1
      %vm3493 = vcmp.eq.s32.totalorder %v3485, 1
      %vm3494 = vcmp.eq.s32.totalorder %v3486, 1
      %vm3495 = vcmp.eq.s32.totalorder %v3487, 1
      %vm3496 = vcmp.eq.s32.totalorder %v3488, 1
      %vm3497 = vcmp.eq.s32.totalorder %v3489, 1
      %vm3498 = vcmp.eq.s32.totalorder %v3490, 1
      %vm3499 = vcmp.eq.s32.totalorder %v3491, 1
      %v3500 = vsel %vm3492, %v3482, 0.0
      %v3501 = vsel %vm3493, %v3480, 0.0
      %v3502 = vsel %vm3494, %v3478, 0.0
      %v3503 = vsel %vm3495, %v3476, 0.0
      %v3504 = vsel %vm3496, %v3474, 0.0
      %v3505 = vsel %vm3497, %v3472, 0.0
      %v3506 = vsel %vm3498, %v3470, 0.0
      %v3507 = vsel %vm3499, %v3468, 0.0
      %v3508 = vsel %vm3492, %v3483, 0.0
      %v3509 = vsel %vm3493, %v3481, 0.0
      %v3510 = vsel %vm3494, %v3479, 0.0
      %v3511 = vsel %vm3495, %v3477, 0.0
      %v3512 = vsel %vm3496, %v3475, 0.0
      %v3513 = vsel %vm3497, %v3473, 0.0
      %v3514 = vsel %vm3498, %v3471, 0.0
      %v3515 = vsel %vm3499, %v3469, 0.0
      %3516 = vrot.lane.b32.xlu0 %v3298, 32
      %v3517 = vpop.permute.xlu0 %3516
      %3518 = vrot.lane.b32.xlu0 %v3302, 32
      %v3519 = vpop.permute.xlu0 %3518
      %3520 = vrot.lane.b32.xlu0 %v3300, 32
      %v3521 = vpop.permute.xlu0 %3520
      %3522 = vrot.lane.b32.xlu0 %v3304, 32
      %v3523 = vpop.permute.xlu0 %3522
      %3524 = vrot.lane.b32.xlu0 %v3341, 32
      %v3525 = vpop.permute.xlu0 %3524
      %3526 = vrot.lane.b32.xlu0 %v3345, 32
      %v3527 = vpop.permute.xlu0 %3526
      %3528 = vrot.lane.b32.xlu0 %v3343, 32
      %v3529 = vpop.permute.xlu0 %3528
      %3530 = vrot.lane.b32.xlu0 %v3347, 32
      %v3531 = vpop.permute.xlu0 %3530
      %3532 = vrot.lane.b32.xlu0 %v3384, 32
      %v3533 = vpop.permute.xlu0 %3532
      %3534 = vrot.lane.b32.xlu0 %v3388, 32
      %v3535 = vpop.permute.xlu0 %3534
      %3536 = vrot.lane.b32.xlu0 %v3386, 32
      %v3537 = vpop.permute.xlu0 %3536
      %3538 = vrot.lane.b32.xlu0 %v3390, 32
      %v3539 = vpop.permute.xlu0 %3538
      %3540 = vrot.lane.b32.xlu0 %v3427, 32
      %v3541 = vpop.permute.xlu0 %3540
      %3542 = vrot.lane.b32.xlu0 %v3431, 32
      %v3543 = vpop.permute.xlu0 %3542
      %3544 = vrot.lane.b32.xlu0 %v3429, 32
      %v3545 = vpop.permute.xlu0 %3544
      %3546 = vrot.lane.b32.xlu0 %v3433, 32
      %v3547 = vpop.permute.xlu0 %3546
      %vm3548 = vcmp.lt.s32.totalorder %v865, 32
      %v3549 = vsel %vm3548, %v3541, %v3545
      %v3550 = vsel %vm3548, %v3543, %v3547
      %v3551 = vsel %vm3548, %v3537, %v3541
      %v3552 = vsel %vm3548, %v3539, %v3543
      %v3553 = vsel %vm3548, %v3533, %v3537
      %v3554 = vsel %vm3548, %v3535, %v3539
      %v3555 = vsel %vm3548, %v3529, %v3533
      %v3556 = vsel %vm3548, %v3531, %v3535
      %v3557 = vsel %vm3548, %v3525, %v3529
      %v3558 = vsel %vm3548, %v3527, %v3531
      %v3559 = vsel %vm3548, %v3521, %v3525
      %v3560 = vsel %vm3548, %v3523, %v3527
      %v3561 = vsel %vm3548, %v3517, %v3521
      %v3562 = vsel %vm3548, %v3519, %v3523
      %v3563 = vsel %vm3548, %v3545, %v3517
      %v3564 = vsel %vm3548, %v3547, %v3519
      %v3565 = vsel %vm2429, 1, 0
      %v3566 = vsel %vm2430, 1, 0
      %v3567 = vsel %vm2431, 1, 0
      %v3568 = vsel %vm2432, 1, 0
      %v3569 = vsel %vm2433, 1, 0
      %v3570 = vsel %vm2434, 1, 0
      %v3571 = vsel %vm2435, 1, 0
      %v3572 = vsel %vm2436, 1, 0
      %vm3573 = vcmp.eq.s32.totalorder %v3565, 1
      %vm3574 = vcmp.eq.s32.totalorder %v3566, 1
      %vm3575 = vcmp.eq.s32.totalorder %v3567, 1
      %vm3576 = vcmp.eq.s32.totalorder %v3568, 1
      %vm3577 = vcmp.eq.s32.totalorder %v3569, 1
      %vm3578 = vcmp.eq.s32.totalorder %v3570, 1
      %vm3579 = vcmp.eq.s32.totalorder %v3571, 1
      %vm3580 = vcmp.eq.s32.totalorder %v3572, 1
      %v3581 = vsel %vm3573, %v3563, 0.0
      %v3582 = vsel %vm3574, %v3561, 0.0
      %v3583 = vsel %vm3575, %v3559, 0.0
      %v3584 = vsel %vm3576, %v3557, 0.0
      %v3585 = vsel %vm3577, %v3555, 0.0
      %v3586 = vsel %vm3578, %v3553, 0.0
      %v3587 = vsel %vm3579, %v3551, 0.0
      %v3588 = vsel %vm3580, %v3549, 0.0
      %v3589 = vsel %vm3573, %v3564, 0.0
      %v3590 = vsel %vm3574, %v3562, 0.0
      %v3591 = vsel %vm3575, %v3560, 0.0
      %v3592 = vsel %vm3576, %v3558, 0.0
      %v3593 = vsel %vm3577, %v3556, 0.0
      %v3594 = vsel %vm3578, %v3554, 0.0
      %v3595 = vsel %vm3579, %v3552, 0.0
      %v3596 = vsel %vm3580, %v3550, 0.0
      %3597 = vrot.lane.b32.xlu0 %v3298, 31
      %v3598 = vpop.permute.xlu0 %3597
      %3599 = vrot.lane.b32.xlu0 %v3302, 31
      %v3600 = vpop.permute.xlu0 %3599
      %3601 = vrot.lane.b32.xlu0 %v3300, 31
      %v3602 = vpop.permute.xlu0 %3601
      %3603 = vrot.lane.b32.xlu0 %v3304, 31
      %v3604 = vpop.permute.xlu0 %3603
      %3605 = vrot.lane.b32.xlu0 %v3341, 31
      %v3606 = vpop.permute.xlu0 %3605
      %3607 = vrot.lane.b32.xlu0 %v3345, 31
      %v3608 = vpop.permute.xlu0 %3607
      %3609 = vrot.lane.b32.xlu0 %v3343, 31
      %v3610 = vpop.permute.xlu0 %3609
      %3611 = vrot.lane.b32.xlu0 %v3347, 31
      %v3612 = vpop.permute.xlu0 %3611
      %3613 = vrot.lane.b32.xlu0 %v3384, 31
      %v3614 = vpop.permute.xlu0 %3613
      %3615 = vrot.lane.b32.xlu0 %v3388, 31
      %v3616 = vpop.permute.xlu0 %3615
      %3617 = vrot.lane.b32.xlu0 %v3386, 31
      %v3618 = vpop.permute.xlu0 %3617
      %3619 = vrot.lane.b32.xlu0 %v3390, 31
      %v3620 = vpop.permute.xlu0 %3619
      %3621 = vrot.lane.b32.xlu0 %v3427, 31
      %v3622 = vpop.permute.xlu0 %3621
      %3623 = vrot.lane.b32.xlu0 %v3431, 31
      %v3624 = vpop.permute.xlu0 %3623
      %3625 = vrot.lane.b32.xlu0 %v3429, 31
      %v3626 = vpop.permute.xlu0 %3625
      %3627 = vrot.lane.b32.xlu0 %v3433, 31
      %v3628 = vpop.permute.xlu0 %3627
      %vm3629 = vcmp.lt.s32.totalorder %v865, 31
      %v3630 = vsel %vm3629, %v3622, %v3626
      %v3631 = vsel %vm3629, %v3624, %v3628
      %v3632 = vsel %vm3629, %v3618, %v3622
      %v3633 = vsel %vm3629, %v3620, %v3624
      %v3634 = vsel %vm3629, %v3614, %v3618
      %v3635 = vsel %vm3629, %v3616, %v3620
      %v3636 = vsel %vm3629, %v3610, %v3614
      %v3637 = vsel %vm3629, %v3612, %v3616
      %v3638 = vsel %vm3629, %v3606, %v3610
      %v3639 = vsel %vm3629, %v3608, %v3612
      %v3640 = vsel %vm3629, %v3602, %v3606
      %v3641 = vsel %vm3629, %v3604, %v3608
      %v3642 = vsel %vm3629, %v3598, %v3602
      %v3643 = vsel %vm3629, %v3600, %v3604
      %v3644 = vsel %vm3629, %v3626, %v3598
      %v3645 = vsel %vm3629, %v3628, %v3600
      %v3646 = vsel %vm2469, 1, 0
      %v3647 = vsel %vm2470, 1, 0
      %v3648 = vsel %vm2471, 1, 0
      %v3649 = vsel %vm2472, 1, 0
      %v3650 = vsel %vm2473, 1, 0
      %v3651 = vsel %vm2474, 1, 0
      %v3652 = vsel %vm2475, 1, 0
      %v3653 = vsel %vm2476, 1, 0
      %vm3654 = vcmp.eq.s32.totalorder %v3646, 1
      %vm3655 = vcmp.eq.s32.totalorder %v3647, 1
      %vm3656 = vcmp.eq.s32.totalorder %v3648, 1
      %vm3657 = vcmp.eq.s32.totalorder %v3649, 1
      %vm3658 = vcmp.eq.s32.totalorder %v3650, 1
      %vm3659 = vcmp.eq.s32.totalorder %v3651, 1
      %vm3660 = vcmp.eq.s32.totalorder %v3652, 1
      %vm3661 = vcmp.eq.s32.totalorder %v3653, 1
      %v3662 = vsel %vm3654, %v3644, 0.0
      %v3663 = vsel %vm3655, %v3642, 0.0
      %v3664 = vsel %vm3656, %v3640, 0.0
      %v3665 = vsel %vm3657, %v3638, 0.0
      %v3666 = vsel %vm3658, %v3636, 0.0
      %v3667 = vsel %vm3659, %v3634, 0.0
      %v3668 = vsel %vm3660, %v3632, 0.0
      %v3669 = vsel %vm3661, %v3630, 0.0
      %v3670 = vsel %vm3654, %v3645, 0.0
      %v3671 = vsel %vm3655, %v3643, 0.0
      %v3672 = vsel %vm3656, %v3641, 0.0
      %v3673 = vsel %vm3657, %v3639, 0.0
      %v3674 = vsel %vm3658, %v3637, 0.0
      %v3675 = vsel %vm3659, %v3635, 0.0
      %v3676 = vsel %vm3660, %v3633, 0.0
      %v3677 = vsel %vm3661, %v3631, 0.0
      %3678 = vrot.lane.b32.xlu0 %v3298, 1
      %v3679 = vpop.permute.xlu0 %3678
      %3680 = vrot.lane.b32.xlu0 %v3302, 1
      %v3681 = vpop.permute.xlu0 %3680
      %3682 = vrot.lane.b32.xlu0 %v3300, 1
      %v3683 = vpop.permute.xlu0 %3682
      %3684 = vrot.lane.b32.xlu0 %v3304, 1
      %v3685 = vpop.permute.xlu0 %3684
      %3686 = vrot.lane.b32.xlu0 %v3341, 1
      %v3687 = vpop.permute.xlu0 %3686
      %3688 = vrot.lane.b32.xlu0 %v3345, 1
      %v3689 = vpop.permute.xlu0 %3688
      %3690 = vrot.lane.b32.xlu0 %v3343, 1
      %v3691 = vpop.permute.xlu0 %3690
      %3692 = vrot.lane.b32.xlu0 %v3347, 1
      %v3693 = vpop.permute.xlu0 %3692
      %3694 = vrot.lane.b32.xlu0 %v3384, 1
      %v3695 = vpop.permute.xlu0 %3694
      %3696 = vrot.lane.b32.xlu0 %v3388, 1
      %v3697 = vpop.permute.xlu0 %3696
      %3698 = vrot.lane.b32.xlu0 %v3386, 1
      %v3699 = vpop.permute.xlu0 %3698
      %3700 = vrot.lane.b32.xlu0 %v3390, 1
      %v3701 = vpop.permute.xlu0 %3700
      %3702 = vrot.lane.b32.xlu0 %v3427, 1
      %v3703 = vpop.permute.xlu0 %3702
      %3704 = vrot.lane.b32.xlu0 %v3431, 1
      %v3705 = vpop.permute.xlu0 %3704
      %3706 = vrot.lane.b32.xlu0 %v3429, 1
      %v3707 = vpop.permute.xlu0 %3706
      %3708 = vrot.lane.b32.xlu0 %v3433, 1
      %v3709 = vpop.permute.xlu0 %3708
      %v3710 = vsel %vm1122, %v3703, %v3707
      %v3711 = vsel %vm1122, %v3705, %v3709
      %v3712 = vsel %vm1122, %v3699, %v3703
      %v3713 = vsel %vm1122, %v3701, %v3705
      %v3714 = vsel %vm1122, %v3695, %v3699
      %v3715 = vsel %vm1122, %v3697, %v3701
      %v3716 = vsel %vm1122, %v3691, %v3695
      %v3717 = vsel %vm1122, %v3693, %v3697
      %v3718 = vsel %vm1122, %v3687, %v3691
      %v3719 = vsel %vm1122, %v3689, %v3693
      %v3720 = vsel %vm1122, %v3683, %v3687
      %v3721 = vsel %vm1122, %v3685, %v3689
      %v3722 = vsel %vm1122, %v3679, %v3683
      %v3723 = vsel %vm1122, %v3681, %v3685
      %v3724 = vsel %vm1122, %v3707, %v3679
      %v3725 = vsel %vm1122, %v3709, %v3681
      %v3726 = vsel %vm2445, 1, 0
      %v3727 = vsel %vm2446, 1, 0
      %v3728 = vsel %vm2447, 1, 0
      %v3729 = vsel %vm2448, 1, 0
      %v3730 = vsel %vm2449, 1, 0
      %v3731 = vsel %vm2450, 1, 0
      %v3732 = vsel %vm2451, 1, 0
      %v3733 = vsel %vm2452, 1, 0
      %vm3734 = vcmp.eq.s32.totalorder %v3726, 1
      %vm3735 = vcmp.eq.s32.totalorder %v3727, 1
      %vm3736 = vcmp.eq.s32.totalorder %v3728, 1
      %vm3737 = vcmp.eq.s32.totalorder %v3729, 1
      %vm3738 = vcmp.eq.s32.totalorder %v3730, 1
      %vm3739 = vcmp.eq.s32.totalorder %v3731, 1
      %vm3740 = vcmp.eq.s32.totalorder %v3732, 1
      %vm3741 = vcmp.eq.s32.totalorder %v3733, 1
      %v3742 = vsel %vm3734, %v3724, 0.0
      %v3743 = vsel %vm3735, %v3722, 0.0
      %v3744 = vsel %vm3736, %v3720, 0.0
      %v3745 = vsel %vm3737, %v3718, 0.0
      %v3746 = vsel %vm3738, %v3716, 0.0
      %v3747 = vsel %vm3739, %v3714, 0.0
      %v3748 = vsel %vm3740, %v3712, 0.0
      %v3749 = vsel %vm3741, %v3710, 0.0
      %v3750 = vsel %vm3734, %v3725, 0.0
      %v3751 = vsel %vm3735, %v3723, 0.0
      %v3752 = vsel %vm3736, %v3721, 0.0
      %v3753 = vsel %vm3737, %v3719, 0.0
      %v3754 = vsel %vm3738, %v3717, 0.0
      %v3755 = vsel %vm3739, %v3715, 0.0
      %v3756 = vsel %vm3740, %v3713, 0.0
      %v3757 = vsel %vm3741, %v3711, 0.0
      %3758 = vrot.lane.b32.xlu0 %v3298, 127
      %v3759 = vpop.permute.xlu0 %3758
      %3760 = vrot.lane.b32.xlu0 %v3302, 127
      %v3761 = vpop.permute.xlu0 %3760
      %3762 = vrot.lane.b32.xlu0 %v3300, 127
      %v3763 = vpop.permute.xlu0 %3762
      %3764 = vrot.lane.b32.xlu0 %v3304, 127
      %v3765 = vpop.permute.xlu0 %3764
      %3766 = vrot.lane.b32.xlu0 %v3341, 127
      %v3767 = vpop.permute.xlu0 %3766
      %3768 = vrot.lane.b32.xlu0 %v3345, 127
      %v3769 = vpop.permute.xlu0 %3768
      %3770 = vrot.lane.b32.xlu0 %v3343, 127
      %v3771 = vpop.permute.xlu0 %3770
      %3772 = vrot.lane.b32.xlu0 %v3347, 127
      %v3773 = vpop.permute.xlu0 %3772
      %3774 = vrot.lane.b32.xlu0 %v3384, 127
      %v3775 = vpop.permute.xlu0 %3774
      %3776 = vrot.lane.b32.xlu0 %v3388, 127
      %v3777 = vpop.permute.xlu0 %3776
      %3778 = vrot.lane.b32.xlu0 %v3386, 127
      %v3779 = vpop.permute.xlu0 %3778
      %3780 = vrot.lane.b32.xlu0 %v3390, 127
      %v3781 = vpop.permute.xlu0 %3780
      %3782 = vrot.lane.b32.xlu0 %v3427, 127
      %v3783 = vpop.permute.xlu0 %3782
      %3784 = vrot.lane.b32.xlu0 %v3431, 127
      %v3785 = vpop.permute.xlu0 %3784
      %3786 = vrot.lane.b32.xlu0 %v3429, 127
      %v3787 = vpop.permute.xlu0 %3786
      %3788 = vrot.lane.b32.xlu0 %v3433, 127
      %v3789 = vpop.permute.xlu0 %3788
      %v3790 = vsel %vm1159, %v3783, %v3787
      %v3791 = vsel %vm1159, %v3785, %v3789
      %v3792 = vsel %vm1159, %v3779, %v3783
      %v3793 = vsel %vm1159, %v3781, %v3785
      %v3794 = vsel %vm1159, %v3775, %v3779
      %v3795 = vsel %vm1159, %v3777, %v3781
      %v3796 = vsel %vm1159, %v3771, %v3775
      %v3797 = vsel %vm1159, %v3773, %v3777
      %v3798 = vsel %vm1159, %v3767, %v3771
      %v3799 = vsel %vm1159, %v3769, %v3773
      %v3800 = vsel %vm1159, %v3763, %v3767
      %v3801 = vsel %vm1159, %v3765, %v3769
      %v3802 = vsel %vm1159, %v3759, %v3763
      %v3803 = vsel %vm1159, %v3761, %v3765
      %v3804 = vsel %vm1159, %v3787, %v3759
      %v3805 = vsel %vm1159, %v3789, %v3761
      %v3806 = vsel %vm2453, 1, 0
      %v3807 = vsel %vm2454, 1, 0
      %v3808 = vsel %vm2455, 1, 0
      %v3809 = vsel %vm2456, 1, 0
      %v3810 = vsel %vm2457, 1, 0
      %v3811 = vsel %vm2458, 1, 0
      %v3812 = vsel %vm2459, 1, 0
      %v3813 = vsel %vm2460, 1, 0
      %vm3814 = vcmp.eq.s32.totalorder %v3806, 1
      %vm3815 = vcmp.eq.s32.totalorder %v3807, 1
      %vm3816 = vcmp.eq.s32.totalorder %v3808, 1
      %vm3817 = vcmp.eq.s32.totalorder %v3809, 1
      %vm3818 = vcmp.eq.s32.totalorder %v3810, 1
      %vm3819 = vcmp.eq.s32.totalorder %v3811, 1
      %vm3820 = vcmp.eq.s32.totalorder %v3812, 1
      %vm3821 = vcmp.eq.s32.totalorder %v3813, 1
      %v3822 = vsel %vm3814, %v3802, 0.0
      %v3823 = vsel %vm3815, %v3800, 0.0
      %v3824 = vsel %vm3816, %v3798, 0.0
      %v3825 = vsel %vm3817, %v3796, 0.0
      %v3826 = vsel %vm3818, %v3794, 0.0
      %v3827 = vsel %vm3819, %v3792, 0.0
      %v3828 = vsel %vm3820, %v3790, 0.0
      %v3829 = vsel %vm3821, %v3804, 0.0
      %v3830 = vsel %vm3814, %v3803, 0.0
      %v3831 = vsel %vm3815, %v3801, 0.0
      %v3832 = vsel %vm3816, %v3799, 0.0
      %v3833 = vsel %vm3817, %v3797, 0.0
      %v3834 = vsel %vm3818, %v3795, 0.0
      %v3835 = vsel %vm3819, %v3793, 0.0
      %v3836 = vsel %vm3820, %v3791, 0.0
      %v3837 = vsel %vm3821, %v3805, 0.0
      %3838 = vrot.lane.b32.xlu0 %v3298, 97
      %v3839 = vpop.permute.xlu0 %3838
      %3840 = vrot.lane.b32.xlu0 %v3302, 97
      %v3841 = vpop.permute.xlu0 %3840
      %3842 = vrot.lane.b32.xlu0 %v3300, 97
      %v3843 = vpop.permute.xlu0 %3842
      %3844 = vrot.lane.b32.xlu0 %v3304, 97
      %v3845 = vpop.permute.xlu0 %3844
      %3846 = vrot.lane.b32.xlu0 %v3341, 97
      %v3847 = vpop.permute.xlu0 %3846
      %3848 = vrot.lane.b32.xlu0 %v3345, 97
      %v3849 = vpop.permute.xlu0 %3848
      %3850 = vrot.lane.b32.xlu0 %v3343, 97
      %v3851 = vpop.permute.xlu0 %3850
      %3852 = vrot.lane.b32.xlu0 %v3347, 97
      %v3853 = vpop.permute.xlu0 %3852
      %3854 = vrot.lane.b32.xlu0 %v3384, 97
      %v3855 = vpop.permute.xlu0 %3854
      %3856 = vrot.lane.b32.xlu0 %v3388, 97
      %v3857 = vpop.permute.xlu0 %3856
      %3858 = vrot.lane.b32.xlu0 %v3386, 97
      %v3859 = vpop.permute.xlu0 %3858
      %3860 = vrot.lane.b32.xlu0 %v3390, 97
      %v3861 = vpop.permute.xlu0 %3860
      %3862 = vrot.lane.b32.xlu0 %v3427, 97
      %v3863 = vpop.permute.xlu0 %3862
      %3864 = vrot.lane.b32.xlu0 %v3431, 97
      %v3865 = vpop.permute.xlu0 %3864
      %3866 = vrot.lane.b32.xlu0 %v3429, 97
      %v3867 = vpop.permute.xlu0 %3866
      %3868 = vrot.lane.b32.xlu0 %v3433, 97
      %v3869 = vpop.permute.xlu0 %3868
      %vm3870 = vcmp.lt.s32.totalorder %v865, 97
      %v3871 = vsel %vm3870, %v3863, %v3867
      %v3872 = vsel %vm3870, %v3865, %v3869
      %v3873 = vsel %vm3870, %v3859, %v3863
      %v3874 = vsel %vm3870, %v3861, %v3865
      %v3875 = vsel %vm3870, %v3855, %v3859
      %v3876 = vsel %vm3870, %v3857, %v3861
      %v3877 = vsel %vm3870, %v3851, %v3855
      %v3878 = vsel %vm3870, %v3853, %v3857
      %v3879 = vsel %vm3870, %v3847, %v3851
      %v3880 = vsel %vm3870, %v3849, %v3853
      %v3881 = vsel %vm3870, %v3843, %v3847
      %v3882 = vsel %vm3870, %v3845, %v3849
      %v3883 = vsel %vm3870, %v3839, %v3843
      %v3884 = vsel %vm3870, %v3841, %v3845
      %v3885 = vsel %vm3870, %v3867, %v3839
      %v3886 = vsel %vm3870, %v3869, %v3841
      %v3887 = vsel %vm2477, 1, 0
      %v3888 = vsel %vm2478, 1, 0
      %v3889 = vsel %vm2479, 1, 0
      %v3890 = vsel %vm2480, 1, 0
      %v3891 = vsel %vm2481, 1, 0
      %v3892 = vsel %vm2482, 1, 0
      %v3893 = vsel %vm2483, 1, 0
      %v3894 = vsel %vm2484, 1, 0
      %vm3895 = vcmp.eq.s32.totalorder %v3887, 1
      %vm3896 = vcmp.eq.s32.totalorder %v3888, 1
      %vm3897 = vcmp.eq.s32.totalorder %v3889, 1
      %vm3898 = vcmp.eq.s32.totalorder %v3890, 1
      %vm3899 = vcmp.eq.s32.totalorder %v3891, 1
      %vm3900 = vcmp.eq.s32.totalorder %v3892, 1
      %vm3901 = vcmp.eq.s32.totalorder %v3893, 1
      %vm3902 = vcmp.eq.s32.totalorder %v3894, 1
      %v3903 = vsel %vm3895, %v3883, 0.0
      %v3904 = vsel %vm3896, %v3881, 0.0
      %v3905 = vsel %vm3897, %v3879, 0.0
      %v3906 = vsel %vm3898, %v3877, 0.0
      %v3907 = vsel %vm3899, %v3875, 0.0
      %v3908 = vsel %vm3900, %v3873, 0.0
      %v3909 = vsel %vm3901, %v3871, 0.0
      %v3910 = vsel %vm3902, %v3885, 0.0
      %v3911 = vsel %vm3895, %v3884, 0.0
      %v3912 = vsel %vm3896, %v3882, 0.0
      %v3913 = vsel %vm3897, %v3880, 0.0
      %v3914 = vsel %vm3898, %v3878, 0.0
      %v3915 = vsel %vm3899, %v3876, 0.0
      %v3916 = vsel %vm3900, %v3874, 0.0
      %v3917 = vsel %vm3901, %v3872, 0.0
      %v3918 = vsel %vm3902, %v3886, 0.0
      %3919 = vrot.lane.b32.xlu0 %v3298, 96
      %v3920 = vpop.permute.xlu0 %3919
      %3921 = vrot.lane.b32.xlu0 %v3302, 96
      %v3922 = vpop.permute.xlu0 %3921
      %3923 = vrot.lane.b32.xlu0 %v3300, 96
      %v3924 = vpop.permute.xlu0 %3923
      %3925 = vrot.lane.b32.xlu0 %v3304, 96
      %v3926 = vpop.permute.xlu0 %3925
      %3927 = vrot.lane.b32.xlu0 %v3341, 96
      %v3928 = vpop.permute.xlu0 %3927
      %3929 = vrot.lane.b32.xlu0 %v3345, 96
      %v3930 = vpop.permute.xlu0 %3929
      %3931 = vrot.lane.b32.xlu0 %v3343, 96
      %v3932 = vpop.permute.xlu0 %3931
      %3933 = vrot.lane.b32.xlu0 %v3347, 96
      %v3934 = vpop.permute.xlu0 %3933
      %3935 = vrot.lane.b32.xlu0 %v3384, 96
      %v3936 = vpop.permute.xlu0 %3935
      %3937 = vrot.lane.b32.xlu0 %v3388, 96
      %v3938 = vpop.permute.xlu0 %3937
      %3939 = vrot.lane.b32.xlu0 %v3386, 96
      %v3940 = vpop.permute.xlu0 %3939
      %3941 = vrot.lane.b32.xlu0 %v3390, 96
      %v3942 = vpop.permute.xlu0 %3941
      %3943 = vrot.lane.b32.xlu0 %v3427, 96
      %v3944 = vpop.permute.xlu0 %3943
      %3945 = vrot.lane.b32.xlu0 %v3431, 96
      %v3946 = vpop.permute.xlu0 %3945
      %3947 = vrot.lane.b32.xlu0 %v3429, 96
      %v3948 = vpop.permute.xlu0 %3947
      %3949 = vrot.lane.b32.xlu0 %v3433, 96
      %v3950 = vpop.permute.xlu0 %3949
      %vm3951 = vcmp.lt.s32.totalorder %v865, 96
      %v3952 = vsel %vm3951, %v3944, %v3948
      %v3953 = vsel %vm3951, %v3946, %v3950
      %v3954 = vsel %vm3951, %v3940, %v3944
      %v3955 = vsel %vm3951, %v3942, %v3946
      %v3956 = vsel %vm3951, %v3936, %v3940
      %v3957 = vsel %vm3951, %v3938, %v3942
      %v3958 = vsel %vm3951, %v3932, %v3936
      %v3959 = vsel %vm3951, %v3934, %v3938
      %v3960 = vsel %vm3951, %v3928, %v3932
      %v3961 = vsel %vm3951, %v3930, %v3934
      %v3962 = vsel %vm3951, %v3924, %v3928
      %v3963 = vsel %vm3951, %v3926, %v3930
      %v3964 = vsel %vm3951, %v3920, %v3924
      %v3965 = vsel %vm3951, %v3922, %v3926
      %v3966 = vsel %vm3951, %v3948, %v3920
      %v3967 = vsel %vm3951, %v3950, %v3922
      %v3968 = vsel %vm2437, 1, 0
      %v3969 = vsel %vm2438, 1, 0
      %v3970 = vsel %vm2439, 1, 0
      %v3971 = vsel %vm2440, 1, 0
      %v3972 = vsel %vm2441, 1, 0
      %v3973 = vsel %vm2442, 1, 0
      %v3974 = vsel %vm2443, 1, 0
      %v3975 = vsel %vm2444, 1, 0
      %vm3976 = vcmp.eq.s32.totalorder %v3968, 1
      %vm3977 = vcmp.eq.s32.totalorder %v3969, 1
      %vm3978 = vcmp.eq.s32.totalorder %v3970, 1
      %vm3979 = vcmp.eq.s32.totalorder %v3971, 1
      %vm3980 = vcmp.eq.s32.totalorder %v3972, 1
      %vm3981 = vcmp.eq.s32.totalorder %v3973, 1
      %vm3982 = vcmp.eq.s32.totalorder %v3974, 1
      %vm3983 = vcmp.eq.s32.totalorder %v3975, 1
      %v3984 = vsel %vm3976, %v3964, 0.0
      %v3985 = vsel %vm3977, %v3962, 0.0
      %v3986 = vsel %vm3978, %v3960, 0.0
      %v3987 = vsel %vm3979, %v3958, 0.0
      %v3988 = vsel %vm3980, %v3956, 0.0
      %v3989 = vsel %vm3981, %v3954, 0.0
      %v3990 = vsel %vm3982, %v3952, 0.0
      %v3991 = vsel %vm3983, %v3966, 0.0
      %v3992 = vsel %vm3976, %v3965, 0.0
      %v3993 = vsel %vm3977, %v3963, 0.0
      %v3994 = vsel %vm3978, %v3961, 0.0
      %v3995 = vsel %vm3979, %v3959, 0.0
      %v3996 = vsel %vm3980, %v3957, 0.0
      %v3997 = vsel %vm3981, %v3955, 0.0
      %v3998 = vsel %vm3982, %v3953, 0.0
      %v3999 = vsel %vm3983, %v3967, 0.0
      %4000 = vrot.lane.b32.xlu0 %v3298, 95
      %v4001 = vpop.permute.xlu0 %4000
      %4002 = vrot.lane.b32.xlu0 %v3302, 95
      %v4003 = vpop.permute.xlu0 %4002
      %4004 = vrot.lane.b32.xlu0 %v3300, 95
      %v4005 = vpop.permute.xlu0 %4004
      %4006 = vrot.lane.b32.xlu0 %v3304, 95
      %v4007 = vpop.permute.xlu0 %4006
      %4008 = vrot.lane.b32.xlu0 %v3341, 95
      %v4009 = vpop.permute.xlu0 %4008
      %4010 = vrot.lane.b32.xlu0 %v3345, 95
      %v4011 = vpop.permute.xlu0 %4010
      %4012 = vrot.lane.b32.xlu0 %v3343, 95
      %v4013 = vpop.permute.xlu0 %4012
      %4014 = vrot.lane.b32.xlu0 %v3347, 95
      %v4015 = vpop.permute.xlu0 %4014
      %4016 = vrot.lane.b32.xlu0 %v3384, 95
      %v4017 = vpop.permute.xlu0 %4016
      %4018 = vrot.lane.b32.xlu0 %v3388, 95
      %v4019 = vpop.permute.xlu0 %4018
      %4020 = vrot.lane.b32.xlu0 %v3386, 95
      %v4021 = vpop.permute.xlu0 %4020
      %4022 = vrot.lane.b32.xlu0 %v3390, 95
      %v4023 = vpop.permute.xlu0 %4022
      %4024 = vrot.lane.b32.xlu0 %v3427, 95
      %v4025 = vpop.permute.xlu0 %4024
      %4026 = vrot.lane.b32.xlu0 %v3431, 95
      %v4027 = vpop.permute.xlu0 %4026
      %4028 = vrot.lane.b32.xlu0 %v3429, 95
      %v4029 = vpop.permute.xlu0 %4028
      %4030 = vrot.lane.b32.xlu0 %v3433, 95
      %v4031 = vpop.permute.xlu0 %4030
      %vm4032 = vcmp.lt.s32.totalorder %v865, 95
      %v4033 = vsel %vm4032, %v4025, %v4029
      %v4034 = vsel %vm4032, %v4027, %v4031
      %v4035 = vsel %vm4032, %v4021, %v4025
      %v4036 = vsel %vm4032, %v4023, %v4027
      %v4037 = vsel %vm4032, %v4017, %v4021
      %v4038 = vsel %vm4032, %v4019, %v4023
      %v4039 = vsel %vm4032, %v4013, %v4017
      %v4040 = vsel %vm4032, %v4015, %v4019
      %v4041 = vsel %vm4032, %v4009, %v4013
      %v4042 = vsel %vm4032, %v4011, %v4015
      %v4043 = vsel %vm4032, %v4005, %v4009
      %v4044 = vsel %vm4032, %v4007, %v4011
      %v4045 = vsel %vm4032, %v4001, %v4005
      %v4046 = vsel %vm4032, %v4003, %v4007
      %v4047 = vsel %vm4032, %v4029, %v4001
      %v4048 = vsel %vm4032, %v4031, %v4003
      %v4049 = vsel %vm2485, 1, 0
      %v4050 = vsel %vm2486, 1, 0
      %v4051 = vsel %vm2487, 1, 0
      %v4052 = vsel %vm2488, 1, 0
      %v4053 = vsel %vm2489, 1, 0
      %v4054 = vsel %vm2490, 1, 0
      %v4055 = vsel %vm2491, 1, 0
      %v4056 = vsel %vm2492, 1, 0
      %vm4057 = vcmp.eq.s32.totalorder %v4049, 1
      %vm4058 = vcmp.eq.s32.totalorder %v4050, 1
      %vm4059 = vcmp.eq.s32.totalorder %v4051, 1
      %vm4060 = vcmp.eq.s32.totalorder %v4052, 1
      %vm4061 = vcmp.eq.s32.totalorder %v4053, 1
      %vm4062 = vcmp.eq.s32.totalorder %v4054, 1
      %vm4063 = vcmp.eq.s32.totalorder %v4055, 1
      %vm4064 = vcmp.eq.s32.totalorder %v4056, 1
      %v4065 = vsel %vm4057, %v4045, 0.0
      %v4066 = vsel %vm4058, %v4043, 0.0
      %v4067 = vsel %vm4059, %v4041, 0.0
      %v4068 = vsel %vm4060, %v4039, 0.0
      %v4069 = vsel %vm4061, %v4037, 0.0
      %v4070 = vsel %vm4062, %v4035, 0.0
      %v4071 = vsel %vm4063, %v4033, 0.0
      %v4072 = vsel %vm4064, %v4047, 0.0
      %v4073 = vsel %vm4057, %v4046, 0.0
      %v4074 = vsel %vm4058, %v4044, 0.0
      %v4075 = vsel %vm4059, %v4042, 0.0
      %v4076 = vsel %vm4060, %v4040, 0.0
      %v4077 = vsel %vm4061, %v4038, 0.0
      %v4078 = vsel %vm4062, %v4036, 0.0
      %v4079 = vsel %vm4063, %v4034, 0.0
      %v4080 = vsel %vm4064, %v4048, 0.0
      %v4081 = vpack.c.bf16 %v3508, %v3500
      %v4082 = vpack.c.bf16 %v3509, %v3501
      %v4083 = vpack.c.bf16 %v3510, %v3502
      %v4084 = vpack.c.bf16 %v3511, %v3503
      %v4085 = vpack.c.bf16 %v3512, %v3504
      %v4086 = vpack.c.bf16 %v3513, %v3505
      %v4087 = vpack.c.bf16 %v3514, %v3506
      %v4088 = vpack.c.bf16 %v3515, %v3507
      %v4089 = vpack.c.bf16 %v3589, %v3581
      %v4090 = vpack.c.bf16 %v3590, %v3582
      %v4091 = vpack.c.bf16 %v3591, %v3583
      %v4092 = vpack.c.bf16 %v3592, %v3584
      %v4093 = vpack.c.bf16 %v3593, %v3585
      %v4094 = vpack.c.bf16 %v3594, %v3586
      %v4095 = vpack.c.bf16 %v3595, %v3587
      %v4096 = vpack.c.bf16 %v3596, %v3588
      %v4097 = vpack.c.bf16 %v3670, %v3662
      %v4098 = vpack.c.bf16 %v3671, %v3663
      %v4099 = vpack.c.bf16 %v3672, %v3664
      %v4100 = vpack.c.bf16 %v3673, %v3665
      %v4101 = vpack.c.bf16 %v3674, %v3666
      %v4102 = vpack.c.bf16 %v3675, %v3667
      %v4103 = vpack.c.bf16 %v3676, %v3668
      %v4104 = vpack.c.bf16 %v3677, %v3669
      %v4105 = vpack.c.bf16 %v3750, %v3742
      %v4106 = vpack.c.bf16 %v3751, %v3743
      %v4107 = vpack.c.bf16 %v3752, %v3744
      %v4108 = vpack.c.bf16 %v3753, %v3745
      %v4109 = vpack.c.bf16 %v3754, %v3746
      %v4110 = vpack.c.bf16 %v3755, %v3747
      %v4111 = vpack.c.bf16 %v3756, %v3748
      %v4112 = vpack.c.bf16 %v3757, %v3749
      %v4113 = vpack.c.bf16 %v3302, %v3298
      %v4114 = vpack.c.bf16 %v3304, %v3300
      %v4115 = vpack.c.bf16 %v3345, %v3341
      %v4116 = vpack.c.bf16 %v3347, %v3343
      %v4117 = vpack.c.bf16 %v3388, %v3384
      %v4118 = vpack.c.bf16 %v3390, %v3386
      %v4119 = vpack.c.bf16 %v3431, %v3427
      %v4120 = vpack.c.bf16 %v3433, %v3429
      %v4121 = vpack.c.bf16 %v3830, %v3822
      %v4122 = vpack.c.bf16 %v3831, %v3823
      %v4123 = vpack.c.bf16 %v3832, %v3824
      %v4124 = vpack.c.bf16 %v3833, %v3825
      %v4125 = vpack.c.bf16 %v3834, %v3826
      %v4126 = vpack.c.bf16 %v3835, %v3827
      %v4127 = vpack.c.bf16 %v3836, %v3828
      %v4128 = vpack.c.bf16 %v3837, %v3829
      %v4129 = vpack.c.bf16 %v3911, %v3903
      %v4130 = vpack.c.bf16 %v3912, %v3904
      %v4131 = vpack.c.bf16 %v3913, %v3905
      %v4132 = vpack.c.bf16 %v3914, %v3906
      %v4133 = vpack.c.bf16 %v3915, %v3907
      %v4134 = vpack.c.bf16 %v3916, %v3908
      %v4135 = vpack.c.bf16 %v3917, %v3909
      %v4136 = vpack.c.bf16 %v3918, %v3910
      %v4137 = vpack.c.bf16 %v3992, %v3984
      %v4138 = vpack.c.bf16 %v3993, %v3985
      %v4139 = vpack.c.bf16 %v3994, %v3986
      %v4140 = vpack.c.bf16 %v3995, %v3987
      %v4141 = vpack.c.bf16 %v3996, %v3988
      %v4142 = vpack.c.bf16 %v3997, %v3989
      %v4143 = vpack.c.bf16 %v3998, %v3990
      %v4144 = vpack.c.bf16 %v3999, %v3991
      %v4145 = vpack.c.bf16 %v4073, %v4065
      %v4146 = vpack.c.bf16 %v4074, %v4066
      %v4147 = vpack.c.bf16 %v4075, %v4067
      %v4148 = vpack.c.bf16 %v4076, %v4068
      %v4149 = vpack.c.bf16 %v4077, %v4069
      %v4150 = vpack.c.bf16 %v4078, %v4070
      %v4151 = vpack.c.bf16 %v4079, %v4071
      %v4152 = vpack.c.bf16 %v4080, %v4072
      %v4153 = vld [vmem:[%s15] sm:$0xff]
      %v4154 = vld [vmem:[%s16] sm:$0xff]
      %4156 = vset.pattern.permute.xlu0 0
      %4157 = vperm.xlu0 %4156, %v4154
      %v4158 = vpop.permute.xlu0 %4157
      %v4161 = vunpack.c.l.b16 %v4153
      %v4162 = vunpack.c.h.b16 %v4153
      %v4163 = vpack.c.b16 %v4161, %v4161
      %v4164 = vpack.c.b16 %v4162, %v4162
      %v4167 = vsel %vm1901, %v4164, 0
      %4169 = vmatprep.subr.bf16.mxu0 %v4082
      %4170 = vmatpush1.bf16.msra.mxu0 %v4081
      %4171 = vmatprep.subr.bf16.mxu0 %v4090
      %4172 = vmatpush1.bf16.msra.mxu0 %v4089
      %4173 = vmatprep.subr.bf16.mxu0 %v4098
      %4174 = vmatpush1.bf16.msra.mxu0 %v4097
      %4175 = vmatprep.subr.bf16.mxu0 %v4106
      %4176 = vmatpush1.bf16.msra.mxu0 %v4105
      %4177 = vmatprep.subr.bf16.mxu0 %v4114
      %4178 = vmatpush1.bf16.msra.mxu0 %v4113
      %4179 = vmatprep.subr.bf16.mxu0 %v4122
      %4180 = vmatpush1.bf16.msra.mxu0 %v4121
      %4181 = vmatprep.subr.bf16.mxu0 %v4130
      %4182 = vmatpush1.bf16.msra.mxu0 %v4129
      %4183 = vmatprep.subr.bf16.mxu0 %v4138
      %4184 = vmatpush1.bf16.msra.mxu0 %v4137
      %4185 = vmatprep.subr.bf16.mxu0 %v4146
      %4186 = vmatpush1.bf16.msra.mxu0 %v4145
      %4187 = vmatprep.subr.bf16.mxu0 0
      %4188 = vmatpush1.bf16.msra.mxu0 0
      %4189 = vmatprep.subr.bf16.mxu0 0
      %4190 = vmatpush1.bf16.msra.mxu0 0
      %4191 = vmatprep.subr.bf16.mxu0 0
      %4192 = vmatpush1.bf16.msra.mxu0 0
      %4193 = vmatprep.subr.bf16.mxu0 0
      %4194 = vmatpush1.bf16.msra.mxu0 0
      %4195 = vmatprep.subr.bf16.mxu0 0
      %4196 = vmatpush1.bf16.msra.mxu0 0
      %4197 = vmatprep.subr.bf16.mxu0 0
      %4198 = vmatpush1.bf16.msra.mxu0 0
      %4199 = vmatprep.subr.bf16.mxu0 0
      %4200 = vmatpush1.bf16.msra.mxu0 0
      %4201 = vmatprep.mubr.bf16.mxu0 %v4167
      %4202 = vmatmul.mubr.bf16.gmra.mrb[0].mxu0 %v4163
      %v4203 = vpop.f32.mrb[0].mxu0
      %v4204 = vadd.f32 %v4158, %v4203
      %v4205 = vpop.f32.mrb[0].mxu0
      %v4206 = vadd.f32 %v4158, %v4205
      %v4207 = vpop.f32.mrb[0].mxu0
      %v4208 = vpop.f32.mrb[0].mxu0
      %4209 = vdwg.mxu0
      %4210 = vmatprep.subr.bf16.mxu0 %v4084
      %4211 = vmatpush1.bf16.msra.mxu0 %v4083
      %4212 = vmatprep.subr.bf16.mxu0 %v4092
      %4213 = vmatpush1.bf16.msra.mxu0 %v4091
      %4214 = vmatprep.subr.bf16.mxu0 %v4100
      %4215 = vmatpush1.bf16.msra.mxu0 %v4099
      %4216 = vmatprep.subr.bf16.mxu0 %v4108
      %4217 = vmatpush1.bf16.msra.mxu0 %v4107
      %4218 = vmatprep.subr.bf16.mxu0 %v4116
      %4219 = vmatpush1.bf16.msra.mxu0 %v4115
      %4220 = vmatprep.subr.bf16.mxu0 %v4124
      %4221 = vmatpush1.bf16.msra.mxu0 %v4123
      %4222 = vmatprep.subr.bf16.mxu0 %v4132
      %4223 = vmatpush1.bf16.msra.mxu0 %v4131
      %4224 = vmatprep.subr.bf16.mxu0 %v4140
      %4225 = vmatpush1.bf16.msra.mxu0 %v4139
      %4226 = vmatprep.subr.bf16.mxu0 %v4148
      %4227 = vmatpush1.bf16.msra.mxu0 %v4147
      %4228 = vmatprep.subr.bf16.mxu0 0
      %4229 = vmatpush1.bf16.msra.mxu0 0
      %4230 = vmatprep.subr.bf16.mxu0 0
      %4231 = vmatpush1.bf16.msra.mxu0 0
      %4232 = vmatprep.subr.bf16.mxu0 0
      %4233 = vmatpush1.bf16.msra.mxu0 0
      %4234 = vmatprep.subr.bf16.mxu0 0
      %4235 = vmatpush1.bf16.msra.mxu0 0
      %4236 = vmatprep.subr.bf16.mxu0 0
      %4237 = vmatpush1.bf16.msra.mxu0 0
      %4238 = vmatprep.subr.bf16.mxu0 0
      %4239 = vmatpush1.bf16.msra.mxu0 0
      %4240 = vmatprep.subr.bf16.mxu0 0
      %4241 = vmatpush1.bf16.msra.mxu0 0
      %4242 = vmatprep.mubr.bf16.mxu0 %v4167
      %4243 = vmatmul.mubr.bf16.gmra.mrb[0].mxu0 %v4163
      %v4244 = vpop.f32.mrb[0].mxu0
      %v4245 = vadd.f32 %v4158, %v4244
      %v4246 = vpop.f32.mrb[0].mxu0
      %v4247 = vadd.f32 %v4158, %v4246
      %v4248 = vpop.f32.mrb[0].mxu0
      %v4249 = vpop.f32.mrb[0].mxu0
      %4250 = vdwg.mxu0
      %4251 = vmatprep.subr.bf16.mxu0 %v4086
      %4252 = vmatpush1.bf16.msra.mxu0 %v4085
      %4253 = vmatprep.subr.bf16.mxu0 %v4094
      %4254 = vmatpush1.bf16.msra.mxu0 %v4093
      %4255 = vmatprep.subr.bf16.mxu0 %v4102
      %4256 = vmatpush1.bf16.msra.mxu0 %v4101
      %4257 = vmatprep.subr.bf16.mxu0 %v4110
      %4258 = vmatpush1.bf16.msra.mxu0 %v4109
      %4259 = vmatprep.subr.bf16.mxu0 %v4118
      %4260 = vmatpush1.bf16.msra.mxu0 %v4117
      %4261 = vmatprep.subr.bf16.mxu0 %v4126
      %4262 = vmatpush1.bf16.msra.mxu0 %v4125
      %4263 = vmatprep.subr.bf16.mxu0 %v4134
      %4264 = vmatpush1.bf16.msra.mxu0 %v4133
      %4265 = vmatprep.subr.bf16.mxu0 %v4142
      %4266 = vmatpush1.bf16.msra.mxu0 %v4141
      %4267 = vmatprep.subr.bf16.mxu0 %v4150
      %4268 = vmatpush1.bf16.msra.mxu0 %v4149
      %4269 = vmatprep.subr.bf16.mxu0 0
      %4270 = vmatpush1.bf16.msra.mxu0 0
      %4271 = vmatprep.subr.bf16.mxu0 0
      %4272 = vmatpush1.bf16.msra.mxu0 0
      %4273 = vmatprep.subr.bf16.mxu0 0
      %4274 = vmatpush1.bf16.msra.mxu0 0
      %4275 = vmatprep.subr.bf16.mxu0 0
      %4276 = vmatpush1.bf16.msra.mxu0 0
      %4277 = vmatprep.subr.bf16.mxu0 0
      %4278 = vmatpush1.bf16.msra.mxu0 0
      %4279 = vmatprep.subr.bf16.mxu0 0
      %4280 = vmatpush1.bf16.msra.mxu0 0
      %4281 = vmatprep.subr.bf16.mxu0 0
      %4282 = vmatpush1.bf16.msra.mxu0 0
      %4283 = vmatprep.mubr.bf16.mxu0 %v4167
      %4284 = vmatmul.mubr.bf16.gmra.mrb[0].mxu0 %v4163
      %v4285 = vpop.f32.mrb[0].mxu0
      %v4286 = vadd.f32 %v4158, %v4285
      %v4287 = vpop.f32.mrb[0].mxu0
      %v4288 = vadd.f32 %v4158, %v4287
      %v4289 = vpop.f32.mrb[0].mxu0
      %v4290 = vpop.f32.mrb[0].mxu0
      %4291 = vdwg.mxu0
      %4292 = vmatprep.subr.bf16.mxu0 %v4088
      %4293 = vmatpush1.bf16.msra.mxu0 %v4087
      %4294 = vmatprep.subr.bf16.mxu0 %v4096
      %4295 = vmatpush1.bf16.msra.mxu0 %v4095
      %4296 = vmatprep.subr.bf16.mxu0 %v4104
      %4297 = vmatpush1.bf16.msra.mxu0 %v4103
      %4298 = vmatprep.subr.bf16.mxu0 %v4112
      %4299 = vmatpush1.bf16.msra.mxu0 %v4111
      %4300 = vmatprep.subr.bf16.mxu0 %v4120
      %4301 = vmatpush1.bf16.msra.mxu0 %v4119
      %4302 = vmatprep.subr.bf16.mxu0 %v4128
      %4303 = vmatpush1.bf16.msra.mxu0 %v4127
      %4304 = vmatprep.subr.bf16.mxu0 %v4136
      %4305 = vmatpush1.bf16.msra.mxu0 %v4135
      %4306 = vmatprep.subr.bf16.mxu0 %v4144
      %4307 = vmatpush1.bf16.msra.mxu0 %v4143
      %4308 = vmatprep.subr.bf16.mxu0 %v4152
      %4309 = vmatpush1.bf16.msra.mxu0 %v4151
      %4310 = vmatprep.subr.bf16.mxu0 0
      %4311 = vmatpush1.bf16.msra.mxu0 0
      %4312 = vmatprep.subr.bf16.mxu0 0
      %4313 = vmatpush1.bf16.msra.mxu0 0
      %4314 = vmatprep.subr.bf16.mxu0 0
      %4315 = vmatpush1.bf16.msra.mxu0 0
      %4316 = vmatprep.subr.bf16.mxu0 0
      %4317 = vmatpush1.bf16.msra.mxu0 0
      %4318 = vmatprep.subr.bf16.mxu0 0
      %4319 = vmatpush1.bf16.msra.mxu0 0
      %4320 = vmatprep.subr.bf16.mxu0 0
      %4321 = vmatpush1.bf16.msra.mxu0 0
      %4322 = vmatprep.subr.bf16.mxu0 0
      %4323 = vmatpush1.bf16.msra.mxu0 0
      %4324 = vmatprep.mubr.bf16.mxu0 %v4167
      %4325 = vmatmul.mubr.bf16.gmra.mrb[0].mxu0 %v4163
      %v4326 = vpop.f32.mrb[0].mxu0
      %v4327 = vadd.f32 %v4158, %v4326
      %v4328 = vpop.f32.mrb[0].mxu0
      %v4329 = vadd.f32 %v4158, %v4328
      %v4330 = vpop.f32.mrb[0].mxu0
      %v4331 = vpop.f32.mrb[0].mxu0
      %4332 = vdwg.mxu0
      %v4333 = vld [vmem:[%s854] sm:$0xff]
      %v4334 = vld [vmem:[%s854 + $0x8] sm:$0xff]
      %v4335 = vld [vmem:[%s854 + $0x10] sm:$0xff]
      %v4336 = vld [vmem:[%s854 + $0x18] sm:$0xff]
      %v4337 = vld [vmem:[%s854 + $0x20] sm:$0xff]
      %v4338 = vld [vmem:[%s854 + $0x28] sm:$0xff]
      %v4339 = vld [vmem:[%s854 + $0x30] sm:$0xff]
      %v4340 = vld [vmem:[%s854 + $0x38] sm:$0xff]
      %v4341 = vadd.f32 %v4204, %v4333
      %v4342 = vadd.f32 %v4206, %v4334
      %v4343 = vadd.f32 %v4245, %v4335
      %v4344 = vadd.f32 %v4247, %v4336
      %v4345 = vadd.f32 %v4286, %v4337
      %v4346 = vadd.f32 %v4288, %v4338
      %v4347 = vadd.f32 %v4327, %v4339
      %v4348 = vadd.f32 %v4329, %v4340
      %vm4349 = vcmp.lt.s32.totalorder %v1457, 2
      %vm4350 = vmand %vm1459, %vm4349
      %vm4351 = vcmp.ge.s32.totalorder %v1457, 2
      %vm4352 = vmand %vm4351, %vm1461
      %vm4353 = vcmp.lt.s32.totalorder %v1457, 6
      %vm4354 = vmand %vm1465, %vm4353
      %vm4355 = vcmp.ge.s32.totalorder %v1457, 6
      %vm4356 = vmand %vm4355, %vm1467
      %v4357 = vadd.f32 %v4341, %v4342
      %v4358 = vadd.f32 %v4357, %v4343
      %v4359 = vadd.f32 %v4358, %v4344
      %v4360 = vadd.f32 %v4359, %v4345
      %v4361 = vadd.f32 %v4360, %v4346
      %v4362 = vadd.f32 %v4361, %v4347
      %v4363 = vadd.f32 %v4362, %v4348
      %4364 = vadd.xlane.f32.xlu0 %v4363
      %v4365 = vpop.xlane.xlu0 %4364
      %v4366 = vsel %vm4350, %v4365, 0.0
      %v4367 = vsel %vm1491, %v4366, 0.0
      %4368 = vadd.xlane.f32.xlu0 %v4367
      %v4369 = vpop.xlane.xlu0 %4368
      %v4370 = vrot.slane %v4369, 4
      %v4371 = vadd.f32 %v4369, %v4370
      %v4372 = vrot.slane %v4371, 2
      %v4373 = vadd.f32 %v4371, %v4372
      %v4374 = vrot.slane %v4373, 1
      %v4375 = vadd.f32 %v4373, %v4374
      %s4376 = vtos %v4375
      %s4377 = smul.f32 %s4376, 0.00048828125
      %v4378 = vstv %s4377
      %v4379 = vsel %vm4350, %v4378, 0.0
      %v4380 = vadd.f32 %v4379, 0.0
      %v4381 = vsel %vm4352, %v4365, 0.0
      %v4382 = vsel %vm1491, %v4381, 0.0
      %4383 = vadd.xlane.f32.xlu0 %v4382
      %v4384 = vpop.xlane.xlu0 %4383
      %v4385 = vrot.slane %v4384, 4
      %v4386 = vadd.f32 %v4384, %v4385
      %v4387 = vrot.slane %v4386, 2
      %v4388 = vadd.f32 %v4386, %v4387
      %v4389 = vrot.slane %v4388, 1
      %v4390 = vadd.f32 %v4388, %v4389
      %s4391 = vtos %v4390
      %s4392 = smul.f32 %s4391, 0.00048828125
      %v4393 = vstv %s4392
      %v4394 = vsel %vm4352, %v4393, 0.0
      %v4395 = vadd.f32 %v4380, %v4394
      %v4396 = vsel %vm4354, %v4365, 0.0
      %v4397 = vsel %vm1491, %v4396, 0.0
      %4398 = vadd.xlane.f32.xlu0 %v4397
      %v4399 = vpop.xlane.xlu0 %4398
      %v4400 = vrot.slane %v4399, 4
      %v4401 = vadd.f32 %v4399, %v4400
      %v4402 = vrot.slane %v4401, 2
      %v4403 = vadd.f32 %v4401, %v4402
      %v4404 = vrot.slane %v4403, 1
      %v4405 = vadd.f32 %v4403, %v4404
      %s4406 = vtos %v4405
      %s4407 = smul.f32 %s4406, 0.00048828125
      %v4408 = vstv %s4407
      %v4409 = vsel %vm4354, %v4408, 0.0
      %v4410 = vadd.f32 %v4395, %v4409
      %v4411 = vsel %vm4356, %v4365, 0.0
      %v4412 = vsel %vm1491, %v4411, 0.0
      %4413 = vadd.xlane.f32.xlu0 %v4412
      %v4414 = vpop.xlane.xlu0 %4413
      %v4415 = vrot.slane %v4414, 4
      %v4416 = vadd.f32 %v4414, %v4415
      %v4417 = vrot.slane %v4416, 2
      %v4418 = vadd.f32 %v4416, %v4417
      %v4419 = vrot.slane %v4418, 1
      %v4420 = vadd.f32 %v4418, %v4419
      %s4421 = vtos %v4420
      %s4422 = smul.f32 %s4421, 0.00048828125
      %v4423 = vstv %s4422
      %v4424 = vsel %vm4356, %v4423, 0.0
      %v4425 = vadd.f32 %v4410, %v4424
      %v4426 = vsub.f32 %v4341, %v4425
      %v4427 = vsub.f32 %v4342, %v4425
      %v4428 = vsub.f32 %v4343, %v4425
      %v4429 = vsub.f32 %v4344, %v4425
      %v4430 = vsub.f32 %v4345, %v4425
      %v4431 = vsub.f32 %v4346, %v4425
      %v4432 = vsub.f32 %v4347, %v4425
      %v4433 = vsub.f32 %v4348, %v4425
      %v4434 = vmul.f32 %v4426, %v4426
      %v4435 = vmul.f32 %v4427, %v4427
      %v4436 = vmul.f32 %v4428, %v4428
      %v4437 = vmul.f32 %v4429, %v4429
      %v4438 = vmul.f32 %v4430, %v4430
      %v4439 = vmul.f32 %v4431, %v4431
      %v4440 = vmul.f32 %v4432, %v4432
      %v4441 = vmul.f32 %v4433, %v4433
      %v4442 = vadd.f32 %v4434, %v4435
      %v4443 = vadd.f32 %v4442, %v4436
      %v4444 = vadd.f32 %v4443, %v4437
      %v4445 = vadd.f32 %v4444, %v4438
      %v4446 = vadd.f32 %v4445, %v4439
      %v4447 = vadd.f32 %v4446, %v4440
      %v4448 = vadd.f32 %v4447, %v4441
      %4449 = vadd.xlane.f32.xlu0 %v4448
      %v4450 = vpop.xlane.xlu0 %4449
      %v4451 = vsel %vm4350, %v4450, 0.0
      %v4452 = vsel %vm1491, %v4451, 0.0
      %4453 = vadd.xlane.f32.xlu0 %v4452
      %v4454 = vpop.xlane.xlu0 %4453
      %v4455 = vrot.slane %v4454, 4
      %v4456 = vadd.f32 %v4454, %v4455
      %v4457 = vrot.slane %v4456, 2
      %v4458 = vadd.f32 %v4456, %v4457
      %v4459 = vrot.slane %v4458, 1
      %v4460 = vadd.f32 %v4458, %v4459
      %s4461 = vtos %v4460
      %s4462 = smul.f32 %s4461, 0.00048828125
      %v4463 = vstv %s4462
      %v4464 = vsel %vm4350, %v4463, 0.0
      %v4465 = vadd.f32 %v4464, 0.0
      %v4466 = vsel %vm4352, %v4450, 0.0
      %v4467 = vsel %vm1491, %v4466, 0.0
      %4468 = vadd.xlane.f32.xlu0 %v4467
      %v4469 = vpop.xlane.xlu0 %4468
      %v4470 = vrot.slane %v4469, 4
      %v4471 = vadd.f32 %v4469, %v4470
      %v4472 = vrot.slane %v4471, 2
      %v4473 = vadd.f32 %v4471, %v4472
      %v4474 = vrot.slane %v4473, 1
      %v4475 = vadd.f32 %v4473, %v4474
      %s4476 = vtos %v4475
      %s4477 = smul.f32 %s4476, 0.00048828125
      %v4478 = vstv %s4477
      %v4479 = vsel %vm4352, %v4478, 0.0
      %v4480 = vadd.f32 %v4465, %v4479
      %v4481 = vsel %vm4354, %v4450, 0.0
      %v4482 = vsel %vm1491, %v4481, 0.0
      %4483 = vadd.xlane.f32.xlu0 %v4482
      %v4484 = vpop.xlane.xlu0 %4483
      %v4485 = vrot.slane %v4484, 4
      %v4486 = vadd.f32 %v4484, %v4485
      %v4487 = vrot.slane %v4486, 2
      %v4488 = vadd.f32 %v4486, %v4487
      %v4489 = vrot.slane %v4488, 1
      %v4490 = vadd.f32 %v4488, %v4489
      %s4491 = vtos %v4490
      %s4492 = smul.f32 %s4491, 0.00048828125
      %v4493 = vstv %s4492
      %v4494 = vsel %vm4354, %v4493, 0.0
      %v4495 = vadd.f32 %v4480, %v4494
      %v4496 = vsel %vm4356, %v4450, 0.0
      %v4497 = vsel %vm1491, %v4496, 0.0
      %4498 = vadd.xlane.f32.xlu0 %v4497
      %v4499 = vpop.xlane.xlu0 %4498
      %v4500 = vrot.slane %v4499, 4
      %v4501 = vadd.f32 %v4499, %v4500
      %v4502 = vrot.slane %v4501, 2
      %v4503 = vadd.f32 %v4501, %v4502
      %v4504 = vrot.slane %v4503, 1
      %v4505 = vadd.f32 %v4503, %v4504
      %s4506 = vtos %v4505
      %s4507 = smul.f32 %s4506, 0.00048828125
      %v4508 = vstv %s4507
      %v4509 = vsel %vm4356, %v4508, 0.0
      %v4510 = vadd.f32 %v4495, %v4509
      %v4511 = vadd.f32 %v4510, 1e-05
      %v4512 = vrsqrt.pop %v4511
      %v4513 = vmul.f32 %v4426, %v4512
      %v4514 = vmul.f32 %v4427, %v4512
      %v4515 = vmul.f32 %v4428, %v4512
      %v4516 = vmul.f32 %v4429, %v4512
      %v4517 = vmul.f32 %v4430, %v4512
      %v4518 = vmul.f32 %v4431, %v4512
      %v4519 = vmul.f32 %v4432, %v4512
      %v4520 = vmul.f32 %v4433, %v4512
      %v4521 = vld [vmem:[%s17] sm:$0xff]
      %4523 = vset.pattern.permute.xlu0 0
      %4524 = vperm.xlu0 %4523, %v4521
      %v4525 = vpop.permute.xlu0 %4524
      %v4527 = vmul.f32 %v4513, %v4525
      %v4528 = vmul.f32 %v4514, %v4525
      %v4529 = vmul.f32 %v4515, %v4525
      %v4530 = vmul.f32 %v4516, %v4525
      %v4531 = vmul.f32 %v4517, %v4525
      %v4532 = vmul.f32 %v4518, %v4525
      %v4533 = vmul.f32 %v4519, %v4525
      %v4534 = vmul.f32 %v4520, %v4525
      %v4535 = vld [vmem:[%s18] sm:$0xff]
      %4537 = vset.pattern.permute.xlu0 0
      %4538 = vperm.xlu0 %4537, %v4535
      %v4539 = vpop.permute.xlu0 %4538
      %v4541 = vadd.f32 %v4527, %v4539
      %v4542 = vadd.f32 %v4528, %v4539
      %v4543 = vadd.f32 %v4529, %v4539
      %v4544 = vadd.f32 %v4530, %v4539
      %v4545 = vadd.f32 %v4531, %v4539
      %v4546 = vadd.f32 %v4532, %v4539
      %v4547 = vadd.f32 %v4533, %v4539
      %v4548 = vadd.f32 %v4534, %v4539
      %v4549 = vxor.u32 %v4541, 2147483648
      %v4550 = vxor.u32 %v4542, 2147483648
      %v4551 = vxor.u32 %v4543, 2147483648
      %v4552 = vxor.u32 %v4544, 2147483648
      %v4553 = vxor.u32 %v4545, 2147483648
      %v4554 = vxor.u32 %v4546, 2147483648
      %v4555 = vxor.u32 %v4547, 2147483648
      %v4556 = vxor.u32 %v4548, 2147483648
      %v4557 = vmul.f32 %v4549, 1.442695
      %v4558 = vpow.pop %v4557
      %v4559 = vmul.f32 %v4550, 1.442695
      %v4560 = vpow.pop %v4559
      %v4561 = vmul.f32 %v4551, 1.442695
      %v4562 = vpow.pop %v4561
      %v4563 = vmul.f32 %v4552, 1.442695
      %v4564 = vpow.pop %v4563
      %v4565 = vmul.f32 %v4553, 1.442695
      %v4566 = vpow.pop %v4565
      %v4567 = vmul.f32 %v4554, 1.442695
      %v4568 = vpow.pop %v4567
      %v4569 = vmul.f32 %v4555, 1.442695
      %v4570 = vpow.pop %v4569
      %v4571 = vmul.f32 %v4556, 1.442695
      %v4572 = vpow.pop %v4571
      %v4573 = vadd.f32 %v4558, 1.0
      %v4574 = vadd.f32 %v4560, 1.0
      %v4575 = vadd.f32 %v4562, 1.0
      %v4576 = vadd.f32 %v4564, 1.0
      %v4577 = vadd.f32 %v4566, 1.0
      %v4578 = vadd.f32 %v4568, 1.0
      %v4579 = vadd.f32 %v4570, 1.0
      %v4580 = vadd.f32 %v4572, 1.0
      %v4581 = vrcp.pop %v4573
      %v4582 = vmul.f32 1.0, %v4581
      %v4583 = vrcp.pop %v4574
      %v4584 = vmul.f32 1.0, %v4583
      %v4585 = vrcp.pop %v4575
      %v4586 = vmul.f32 1.0, %v4585
      %v4587 = vrcp.pop %v4576
      %v4588 = vmul.f32 1.0, %v4587
      %v4589 = vrcp.pop %v4577
      %v4590 = vmul.f32 1.0, %v4589
      %v4591 = vrcp.pop %v4578
      %v4592 = vmul.f32 1.0, %v4591
      %v4593 = vrcp.pop %v4579
      %v4594 = vmul.f32 1.0, %v4593
      %v4595 = vrcp.pop %v4580
      %v4596 = vmul.f32 1.0, %v4595
      %v4597 = vmul.f32 %v4541, %v4582
      %v4598 = vmul.f32 %v4542, %v4584
      %v4599 = vmul.f32 %v4543, %v4586
      %v4600 = vmul.f32 %v4544, %v4588
      %v4601 = vmul.f32 %v4545, %v4590
      %v4602 = vmul.f32 %v4546, %v4592
      %v4603 = vmul.f32 %v4547, %v4594
      %v4604 = vmul.f32 %v4548, %v4596
      %4605 = vrot.lane.b32.xlu0 %v4597, 33
      %v4606 = vpop.permute.xlu0 %4605
      %4607 = vrot.lane.b32.xlu0 %v4598, 33
      %v4608 = vpop.permute.xlu0 %4607
      %4609 = vrot.lane.b32.xlu0 %v4599, 33
      %v4610 = vpop.permute.xlu0 %4609
      %4611 = vrot.lane.b32.xlu0 %v4600, 33
      %v4612 = vpop.permute.xlu0 %4611
      %4613 = vrot.lane.b32.xlu0 %v4601, 33
      %v4614 = vpop.permute.xlu0 %4613
      %4615 = vrot.lane.b32.xlu0 %v4602, 33
      %v4616 = vpop.permute.xlu0 %4615
      %4617 = vrot.lane.b32.xlu0 %v4603, 33
      %v4618 = vpop.permute.xlu0 %4617
      %4619 = vrot.lane.b32.xlu0 %v4604, 33
      %v4620 = vpop.permute.xlu0 %4619
      %v4621 = vsel %vm3467, %v4618, %v4620
      %v4622 = vsel %vm3467, %v4616, %v4618
      %v4623 = vsel %vm3467, %v4614, %v4616
      %v4624 = vsel %vm3467, %v4612, %v4614
      %v4625 = vsel %vm3467, %v4610, %v4612
      %v4626 = vsel %vm3467, %v4608, %v4610
      %v4627 = vsel %vm3467, %v4606, %v4608
      %v4628 = vsel %vm3467, %v4620, %v4606
      %v4629 = vsel %vm3492, %v4628, 0.0
      %v4630 = vsel %vm3493, %v4627, 0.0
      %v4631 = vsel %vm3494, %v4626, 0.0
      %v4632 = vsel %vm3495, %v4625, 0.0
      %v4633 = vsel %vm3496, %v4624, 0.0
      %v4634 = vsel %vm3497, %v4623, 0.0
      %v4635 = vsel %vm3498, %v4622, 0.0
      %v4636 = vsel %vm3499, %v4621, 0.0
      %4637 = vrot.lane.b32.xlu0 %v4597, 32
      %v4638 = vpop.permute.xlu0 %4637
      %4639 = vrot.lane.b32.xlu0 %v4598, 32
      %v4640 = vpop.permute.xlu0 %4639
      %4641 = vrot.lane.b32.xlu0 %v4599, 32
      %v4642 = vpop.permute.xlu0 %4641
      %4643 = vrot.lane.b32.xlu0 %v4600, 32
      %v4644 = vpop.permute.xlu0 %4643
      %4645 = vrot.lane.b32.xlu0 %v4601, 32
      %v4646 = vpop.permute.xlu0 %4645
      %4647 = vrot.lane.b32.xlu0 %v4602, 32
      %v4648 = vpop.permute.xlu0 %4647
      %4649 = vrot.lane.b32.xlu0 %v4603, 32
      %v4650 = vpop.permute.xlu0 %4649
      %4651 = vrot.lane.b32.xlu0 %v4604, 32
      %v4652 = vpop.permute.xlu0 %4651
      %v4653 = vsel %vm3548, %v4650, %v4652
      %v4654 = vsel %vm3548, %v4648, %v4650
      %v4655 = vsel %vm3548, %v4646, %v4648
      %v4656 = vsel %vm3548, %v4644, %v4646
      %v4657 = vsel %vm3548, %v4642, %v4644
      %v4658 = vsel %vm3548, %v4640, %v4642
      %v4659 = vsel %vm3548, %v4638, %v4640
      %v4660 = vsel %vm3548, %v4652, %v4638
      %v4661 = vsel %vm3573, %v4660, 0.0
      %v4662 = vsel %vm3574, %v4659, 0.0
      %v4663 = vsel %vm3575, %v4658, 0.0
      %v4664 = vsel %vm3576, %v4657, 0.0
      %v4665 = vsel %vm3577, %v4656, 0.0
      %v4666 = vsel %vm3578, %v4655, 0.0
      %v4667 = vsel %vm3579, %v4654, 0.0
      %v4668 = vsel %vm3580, %v4653, 0.0
      %4669 = vrot.lane.b32.xlu0 %v4597, 31
      %v4670 = vpop.permute.xlu0 %4669
      %4671 = vrot.lane.b32.xlu0 %v4598, 31
      %v4672 = vpop.permute.xlu0 %4671
      %4673 = vrot.lane.b32.xlu0 %v4599, 31
      %v4674 = vpop.permute.xlu0 %4673
      %4675 = vrot.lane.b32.xlu0 %v4600, 31
      %v4676 = vpop.permute.xlu0 %4675
      %4677 = vrot.lane.b32.xlu0 %v4601, 31
      %v4678 = vpop.permute.xlu0 %4677
      %4679 = vrot.lane.b32.xlu0 %v4602, 31
      %v4680 = vpop.permute.xlu0 %4679
      %4681 = vrot.lane.b32.xlu0 %v4603, 31
      %v4682 = vpop.permute.xlu0 %4681
      %4683 = vrot.lane.b32.xlu0 %v4604, 31
      %v4684 = vpop.permute.xlu0 %4683
      %v4685 = vsel %vm3629, %v4682, %v4684
      %v4686 = vsel %vm3629, %v4680, %v4682
      %v4687 = vsel %vm3629, %v4678, %v4680
      %v4688 = vsel %vm3629, %v4676, %v4678
      %v4689 = vsel %vm3629, %v4674, %v4676
      %v4690 = vsel %vm3629, %v4672, %v4674
      %v4691 = vsel %vm3629, %v4670, %v4672
      %v4692 = vsel %vm3629, %v4684, %v4670
      %v4693 = vsel %vm3654, %v4692, 0.0
      %v4694 = vsel %vm3655, %v4691, 0.0
      %v4695 = vsel %vm3656, %v4690, 0.0
      %v4696 = vsel %vm3657, %v4689, 0.0
      %v4697 = vsel %vm3658, %v4688, 0.0
      %v4698 = vsel %vm3659, %v4687, 0.0
      %v4699 = vsel %vm3660, %v4686, 0.0
      %v4700 = vsel %vm3661, %v4685, 0.0
      %4701 = vrot.lane.b32.xlu0 %v4597, 1
      %v4702 = vpop.permute.xlu0 %4701
      %4703 = vrot.lane.b32.xlu0 %v4598, 1
      %v4704 = vpop.permute.xlu0 %4703
      %4705 = vrot.lane.b32.xlu0 %v4599, 1
      %v4706 = vpop.permute.xlu0 %4705
      %4707 = vrot.lane.b32.xlu0 %v4600, 1
      %v4708 = vpop.permute.xlu0 %4707
      %4709 = vrot.lane.b32.xlu0 %v4601, 1
      %v4710 = vpop.permute.xlu0 %4709
      %4711 = vrot.lane.b32.xlu0 %v4602, 1
      %v4712 = vpop.permute.xlu0 %4711
      %4713 = vrot.lane.b32.xlu0 %v4603, 1
      %v4714 = vpop.permute.xlu0 %4713
      %4715 = vrot.lane.b32.xlu0 %v4604, 1
      %v4716 = vpop.permute.xlu0 %4715
      %v4717 = vsel %vm1122, %v4714, %v4716
      %v4718 = vsel %vm1122, %v4712, %v4714
      %v4719 = vsel %vm1122, %v4710, %v4712
      %v4720 = vsel %vm1122, %v4708, %v4710
      %v4721 = vsel %vm1122, %v4706, %v4708
      %v4722 = vsel %vm1122, %v4704, %v4706
      %v4723 = vsel %vm1122, %v4702, %v4704
      %v4724 = vsel %vm1122, %v4716, %v4702
      %v4725 = vsel %vm3734, %v4724, 0.0
      %v4726 = vsel %vm3735, %v4723, 0.0
      %v4727 = vsel %vm3736, %v4722, 0.0
      %v4728 = vsel %vm3737, %v4721, 0.0
      %v4729 = vsel %vm3738, %v4720, 0.0
      %v4730 = vsel %vm3739, %v4719, 0.0
      %v4731 = vsel %vm3740, %v4718, 0.0
      %v4732 = vsel %vm3741, %v4717, 0.0
      %4733 = vrot.lane.b32.xlu0 %v4597, 127
      %v4734 = vpop.permute.xlu0 %4733
      %4735 = vrot.lane.b32.xlu0 %v4598, 127
      %v4736 = vpop.permute.xlu0 %4735
      %4737 = vrot.lane.b32.xlu0 %v4599, 127
      %v4738 = vpop.permute.xlu0 %4737
      %4739 = vrot.lane.b32.xlu0 %v4600, 127
      %v4740 = vpop.permute.xlu0 %4739
      %4741 = vrot.lane.b32.xlu0 %v4601, 127
      %v4742 = vpop.permute.xlu0 %4741
      %4743 = vrot.lane.b32.xlu0 %v4602, 127
      %v4744 = vpop.permute.xlu0 %4743
      %4745 = vrot.lane.b32.xlu0 %v4603, 127
      %v4746 = vpop.permute.xlu0 %4745
      %4747 = vrot.lane.b32.xlu0 %v4604, 127
      %v4748 = vpop.permute.xlu0 %4747
      %v4749 = vsel %vm1159, %v4746, %v4748
      %v4750 = vsel %vm1159, %v4744, %v4746
      %v4751 = vsel %vm1159, %v4742, %v4744
      %v4752 = vsel %vm1159, %v4740, %v4742
      %v4753 = vsel %vm1159, %v4738, %v4740
      %v4754 = vsel %vm1159, %v4736, %v4738
      %v4755 = vsel %vm1159, %v4734, %v4736
      %v4756 = vsel %vm1159, %v4748, %v4734
      %v4757 = vsel %vm3814, %v4755, 0.0
      %v4758 = vsel %vm3815, %v4754, 0.0
      %v4759 = vsel %vm3816, %v4753, 0.0
      %v4760 = vsel %vm3817, %v4752, 0.0
      %v4761 = vsel %vm3818, %v4751, 0.0
      %v4762 = vsel %vm3819, %v4750, 0.0
      %v4763 = vsel %vm3820, %v4749, 0.0
      %v4764 = vsel %vm3821, %v4756, 0.0
      %4765 = vrot.lane.b32.xlu0 %v4597, 97
      %v4766 = vpop.permute.xlu0 %4765
      %4767 = vrot.lane.b32.xlu0 %v4598, 97
      %v4768 = vpop.permute.xlu0 %4767
      %4769 = vrot.lane.b32.xlu0 %v4599, 97
      %v4770 = vpop.permute.xlu0 %4769
      %4771 = vrot.lane.b32.xlu0 %v4600, 97
      %v4772 = vpop.permute.xlu0 %4771
      %4773 = vrot.lane.b32.xlu0 %v4601, 97
      %v4774 = vpop.permute.xlu0 %4773
      %4775 = vrot.lane.b32.xlu0 %v4602, 97
      %v4776 = vpop.permute.xlu0 %4775
      %4777 = vrot.lane.b32.xlu0 %v4603, 97
      %v4778 = vpop.permute.xlu0 %4777
      %4779 = vrot.lane.b32.xlu0 %v4604, 97
      %v4780 = vpop.permute.xlu0 %4779
      %v4781 = vsel %vm3870, %v4778, %v4780
      %v4782 = vsel %vm3870, %v4776, %v4778
      %v4783 = vsel %vm3870, %v4774, %v4776
      %v4784 = vsel %vm3870, %v4772, %v4774
      %v4785 = vsel %vm3870, %v4770, %v4772
      %v4786 = vsel %vm3870, %v4768, %v4770
      %v4787 = vsel %vm3870, %v4766, %v4768
      %v4788 = vsel %vm3870, %v4780, %v4766
      %v4789 = vsel %vm3895, %v4787, 0.0
      %v4790 = vsel %vm3896, %v4786, 0.0
      %v4791 = vsel %vm3897, %v4785, 0.0
      %v4792 = vsel %vm3898, %v4784, 0.0
      %v4793 = vsel %vm3899, %v4783, 0.0
      %v4794 = vsel %vm3900, %v4782, 0.0
      %v4795 = vsel %vm3901, %v4781, 0.0
      %v4796 = vsel %vm3902, %v4788, 0.0
      %4797 = vrot.lane.b32.xlu0 %v4597, 96
      %v4798 = vpop.permute.xlu0 %4797
      %4799 = vrot.lane.b32.xlu0 %v4598, 96
      %v4800 = vpop.permute.xlu0 %4799
      %4801 = vrot.lane.b32.xlu0 %v4599, 96
      %v4802 = vpop.permute.xlu0 %4801
      %4803 = vrot.lane.b32.xlu0 %v4600, 96
      %v4804 = vpop.permute.xlu0 %4803
      %4805 = vrot.lane.b32.xlu0 %v4601, 96
      %v4806 = vpop.permute.xlu0 %4805
      %4807 = vrot.lane.b32.xlu0 %v4602, 96
      %v4808 = vpop.permute.xlu0 %4807
      %4809 = vrot.lane.b32.xlu0 %v4603, 96
      %v4810 = vpop.permute.xlu0 %4809
      %4811 = vrot.lane.b32.xlu0 %v4604, 96
      %v4812 = vpop.permute.xlu0 %4811
      %v4813 = vsel %vm3951, %v4810, %v4812
      %v4814 = vsel %vm3951, %v4808, %v4810
      %v4815 = vsel %vm3951, %v4806, %v4808
      %v4816 = vsel %vm3951, %v4804, %v4806
      %v4817 = vsel %vm3951, %v4802, %v4804
      %v4818 = vsel %vm3951, %v4800, %v4802
      %v4819 = vsel %vm3951, %v4798, %v4800
      %v4820 = vsel %vm3951, %v4812, %v4798
      %v4821 = vsel %vm3976, %v4819, 0.0
      %v4822 = vsel %vm3977, %v4818, 0.0
      %v4823 = vsel %vm3978, %v4817, 0.0
      %v4824 = vsel %vm3979, %v4816, 0.0
      %v4825 = vsel %vm3980, %v4815, 0.0
      %v4826 = vsel %vm3981, %v4814, 0.0
      %v4827 = vsel %vm3982, %v4813, 0.0
      %v4828 = vsel %vm3983, %v4820, 0.0
      %4829 = vrot.lane.b32.xlu0 %v4597, 95
      %v4830 = vpop.permute.xlu0 %4829
      %4831 = vrot.lane.b32.xlu0 %v4598, 95
      %v4832 = vpop.permute.xlu0 %4831
      %4833 = vrot.lane.b32.xlu0 %v4599, 95
      %v4834 = vpop.permute.xlu0 %4833
      %4835 = vrot.lane.b32.xlu0 %v4600, 95
      %v4836 = vpop.permute.xlu0 %4835
      %4837 = vrot.lane.b32.xlu0 %v4601, 95
      %v4838 = vpop.permute.xlu0 %4837
      %4839 = vrot.lane.b32.xlu0 %v4602, 95
      %v4840 = vpop.permute.xlu0 %4839
      %4841 = vrot.lane.b32.xlu0 %v4603, 95
      %v4842 = vpop.permute.xlu0 %4841
      %4843 = vrot.lane.b32.xlu0 %v4604, 95
      %v4844 = vpop.permute.xlu0 %4843
      %v4845 = vsel %vm4032, %v4842, %v4844
      %v4846 = vsel %vm4032, %v4840, %v4842
      %v4847 = vsel %vm4032, %v4838, %v4840
      %v4848 = vsel %vm4032, %v4836, %v4838
      %v4849 = vsel %vm4032, %v4834, %v4836
      %v4850 = vsel %vm4032, %v4832, %v4834
      %v4851 = vsel %vm4032, %v4830, %v4832
      %v4852 = vsel %vm4032, %v4844, %v4830
      %v4853 = vsel %vm4057, %v4851, 0.0
      %v4854 = vsel %vm4058, %v4850, 0.0
      %v4855 = vsel %vm4059, %v4849, 0.0
      %v4856 = vsel %vm4060, %v4848, 0.0
      %v4857 = vsel %vm4061, %v4847, 0.0
      %v4858 = vsel %vm4062, %v4846, 0.0
      %v4859 = vsel %vm4063, %v4845, 0.0
      %v4860 = vsel %vm4064, %v4852, 0.0
      %v4861 = vpack.c.bf16 %v4661, %v4629
      %v4862 = vpack.c.bf16 %v4662, %v4630
      %v4863 = vpack.c.bf16 %v4663, %v4631
      %v4864 = vpack.c.bf16 %v4664, %v4632
      %v4865 = vpack.c.bf16 %v4665, %v4633
      %v4866 = vpack.c.bf16 %v4666, %v4634
      %v4867 = vpack.c.bf16 %v4667, %v4635
      %v4868 = vpack.c.bf16 %v4668, %v4636
      %v4869 = vpack.c.bf16 %v4725, %v4693
      %v4870 = vpack.c.bf16 %v4726, %v4694
      %v4871 = vpack.c.bf16 %v4727, %v4695
      %v4872 = vpack.c.bf16 %v4728, %v4696
      %v4873 = vpack.c.bf16 %v4729, %v4697
      %v4874 = vpack.c.bf16 %v4730, %v4698
      %v4875 = vpack.c.bf16 %v4731, %v4699
      %v4876 = vpack.c.bf16 %v4732, %v4700
      %v4877 = vpack.c.bf16 %v4757, %v4597
      %v4878 = vpack.c.bf16 %v4758, %v4598
      %v4879 = vpack.c.bf16 %v4759, %v4599
      %v4880 = vpack.c.bf16 %v4760, %v4600
      %v4881 = vpack.c.bf16 %v4761, %v4601
      %v4882 = vpack.c.bf16 %v4762, %v4602
      %v4883 = vpack.c.bf16 %v4763, %v4603
      %v4884 = vpack.c.bf16 %v4764, %v4604
      %v4885 = vpack.c.bf16 %v4821, %v4789
      %v4886 = vpack.c.bf16 %v4822, %v4790
      %v4887 = vpack.c.bf16 %v4823, %v4791
      %v4888 = vpack.c.bf16 %v4824, %v4792
      %v4889 = vpack.c.bf16 %v4825, %v4793
      %v4890 = vpack.c.bf16 %v4826, %v4794
      %v4891 = vpack.c.bf16 %v4827, %v4795
      %v4892 = vpack.c.bf16 %v4828, %v4796
      %v4893 = vpack.c.bf16 %v4853, %v4853
      %v4894 = vpack.c.bf16 %v4854, %v4854
      %v4895 = vpack.c.bf16 %v4855, %v4855
      %v4896 = vpack.c.bf16 %v4856, %v4856
      %v4897 = vpack.c.bf16 %v4857, %v4857
      %v4898 = vpack.c.bf16 %v4858, %v4858
      %v4899 = vpack.c.bf16 %v4859, %v4859
      %v4900 = vpack.c.bf16 %v4860, %v4860
      %v4901 = vld [vmem:[%s19] sm:$0xf]
      %v4902 = vld [vmem:[%s20] sm:$0xff]
      %4904 = vset.pattern.permute.xlu0 0
      %4905 = vperm.xlu0 %4904, %v4902
      %v4906 = vpop.permute.xlu0 %4905
      %vm4908 = vcmask 588800
      %v4910 = vsel %vm4908, %v4901, 0
      %vm4912 = vcmask 1043456
      %v4914 = vsel %vm4912, %v4893, 0
      %v4917 = vsel %vm4912, %v4894, 0
      %v4920 = vsel %vm4912, %v4895, 0
      %v4923 = vsel %vm4912, %v4896, 0
      %v4926 = vsel %vm4912, %v4897, 0
      %v4929 = vsel %vm4912, %v4898, 0
      %v4932 = vsel %vm4912, %v4899, 0
      %v4935 = vsel %vm4912, %v4900, 0
      %4937 = vmatprep.subr.bf16.mxu0 %v4862
      %4938 = vmatpush1.bf16.msra.mxu0 %v4861
      %4939 = vmatprep.subr.bf16.mxu0 %v4870
      %4940 = vmatpush1.bf16.msra.mxu0 %v4869
      %4941 = vmatprep.subr.bf16.mxu0 %v4878
      %4942 = vmatpush1.bf16.msra.mxu0 %v4877
      %4943 = vmatprep.subr.bf16.mxu0 %v4886
      %4944 = vmatpush1.bf16.msra.mxu0 %v4885
      %4945 = vmatprep.subr.bf16.mxu0 %v4917
      %4946 = vmatpush1.bf16.msra.mxu0 %v4914
      %4947 = vmatprep.subr.bf16.mxu0 0
      %4948 = vmatpush1.bf16.msra.mxu0 0
      %4949 = vmatprep.subr.bf16.mxu0 0
      %4950 = vmatpush1.bf16.msra.mxu0 0
      %4951 = vmatprep.subr.bf16.mxu0 0
      %4952 = vmatpush1.bf16.msra.mxu0 0
      %4953 = vmatprep.subr.bf16.mxu0 0
      %4954 = vmatpush1.bf16.msra.mxu0 0
      %4955 = vmatprep.subr.bf16.mxu0 0
      %4956 = vmatpush1.bf16.msra.mxu0 0
      %4957 = vmatprep.subr.bf16.mxu0 0
      %4958 = vmatpush1.bf16.msra.mxu0 0
      %4959 = vmatprep.subr.bf16.mxu0 0
      %4960 = vmatpush1.bf16.msra.mxu0 0
      %4961 = vmatprep.subr.bf16.mxu0 0
      %4962 = vmatpush1.bf16.msra.mxu0 0
      %4963 = vmatprep.subr.bf16.mxu0 0
      %4964 = vmatpush1.bf16.msra.mxu0 0
      %4965 = vmatprep.subr.bf16.mxu0 0
      %4966 = vmatpush1.bf16.msra.mxu0 0
      %4967 = vmatprep.subr.bf16.mxu0 0
      %4968 = vmatpush1.bf16.msra.mxu0 0
      %4969 = vmatprep.mubr.bf16.mxu0 0
      %4970 = vmatmul.mubr.bf16.gmra.mrb[0].mxu0 %v4910
      %v4971 = vpop.f32.mrb[0].mxu0
      %v4972 = vadd.f32 %v4906, %v4971
      %v4973 = vpop.f32.mrb[0].mxu0
      %v4974 = vadd.f32 %v4906, %v4973
      %v4975 = vpop.f32.mrb[0].mxu0
      %v4976 = vpop.f32.mrb[0].mxu0
      %4977 = vdwg.mxu0
      %4978 = vmatprep.subr.bf16.mxu0 %v4864
      %4979 = vmatpush1.bf16.msra.mxu0 %v4863
      %4980 = vmatprep.subr.bf16.mxu0 %v4872
      %4981 = vmatpush1.bf16.msra.mxu0 %v4871
      %4982 = vmatprep.subr.bf16.mxu0 %v4880
      %4983 = vmatpush1.bf16.msra.mxu0 %v4879
      %4984 = vmatprep.subr.bf16.mxu0 %v4888
      %4985 = vmatpush1.bf16.msra.mxu0 %v4887
      %4986 = vmatprep.subr.bf16.mxu0 %v4923
      %4987 = vmatpush1.bf16.msra.mxu0 %v4920
      %4988 = vmatprep.subr.bf16.mxu0 0
      %4989 = vmatpush1.bf16.msra.mxu0 0
      %4990 = vmatprep.subr.bf16.mxu0 0
      %4991 = vmatpush1.bf16.msra.mxu0 0
      %4992 = vmatprep.subr.bf16.mxu0 0
      %4993 = vmatpush1.bf16.msra.mxu0 0
      %4994 = vmatprep.subr.bf16.mxu0 0
      %4995 = vmatpush1.bf16.msra.mxu0 0
      %4996 = vmatprep.subr.bf16.mxu0 0
      %4997 = vmatpush1.bf16.msra.mxu0 0
      %4998 = vmatprep.subr.bf16.mxu0 0
      %4999 = vmatpush1.bf16.msra.mxu0 0
      %5000 = vmatprep.subr.bf16.mxu0 0
      %5001 = vmatpush1.bf16.msra.mxu0 0
      %5002 = vmatprep.subr.bf16.mxu0 0
      %5003 = vmatpush1.bf16.msra.mxu0 0
      %5004 = vmatprep.subr.bf16.mxu0 0
      %5005 = vmatpush1.bf16.msra.mxu0 0
      %5006 = vmatprep.subr.bf16.mxu0 0
      %5007 = vmatpush1.bf16.msra.mxu0 0
      %5008 = vmatprep.subr.bf16.mxu0 0
      %5009 = vmatpush1.bf16.msra.mxu0 0
      %5010 = vmatprep.mubr.bf16.mxu0 0
      %5011 = vmatmul.mubr.bf16.gmra.mrb[0].mxu0 %v4910
      %v5012 = vpop.f32.mrb[0].mxu0
      %v5013 = vadd.f32 %v4906, %v5012
      %v5014 = vpop.f32.mrb[0].mxu0
      %v5015 = vadd.f32 %v4906, %v5014
      %v5016 = vpop.f32.mrb[0].mxu0
      %v5017 = vpop.f32.mrb[0].mxu0
      %5018 = vdwg.mxu0
      %5019 = vmatprep.subr.bf16.mxu0 %v4866
      %5020 = vmatpush1.bf16.msra.mxu0 %v4865
      %5021 = vmatprep.subr.bf16.mxu0 %v4874
      %5022 = vmatpush1.bf16.msra.mxu0 %v4873
      %5023 = vmatprep.subr.bf16.mxu0 %v4882
      %5024 = vmatpush1.bf16.msra.mxu0 %v4881
      %5025 = vmatprep.subr.bf16.mxu0 %v4890
      %5026 = vmatpush1.bf16.msra.mxu0 %v4889
      %5027 = vmatprep.subr.bf16.mxu0 %v4929
      %5028 = vmatpush1.bf16.msra.mxu0 %v4926
      %5029 = vmatprep.subr.bf16.mxu0 0
      %5030 = vmatpush1.bf16.msra.mxu0 0
      %5031 = vmatprep.subr.bf16.mxu0 0
      %5032 = vmatpush1.bf16.msra.mxu0 0
      %5033 = vmatprep.subr.bf16.mxu0 0
      %5034 = vmatpush1.bf16.msra.mxu0 0
      %5035 = vmatprep.subr.bf16.mxu0 0
      %5036 = vmatpush1.bf16.msra.mxu0 0
      %5037 = vmatprep.subr.bf16.mxu0 0
      %5038 = vmatpush1.bf16.msra.mxu0 0
      %5039 = vmatprep.subr.bf16.mxu0 0
      %5040 = vmatpush1.bf16.msra.mxu0 0
      %5041 = vmatprep.subr.bf16.mxu0 0
      %5042 = vmatpush1.bf16.msra.mxu0 0
      %5043 = vmatprep.subr.bf16.mxu0 0
      %5044 = vmatpush1.bf16.msra.mxu0 0
      %5045 = vmatprep.subr.bf16.mxu0 0
      %5046 = vmatpush1.bf16.msra.mxu0 0
      %5047 = vmatprep.subr.bf16.mxu0 0
      %5048 = vmatpush1.bf16.msra.mxu0 0
      %5049 = vmatprep.subr.bf16.mxu0 0
      %5050 = vmatpush1.bf16.msra.mxu0 0
      %5051 = vmatprep.mubr.bf16.mxu0 0
      %5052 = vmatmul.mubr.bf16.gmra.mrb[0].mxu0 %v4910
      %v5053 = vpop.f32.mrb[0].mxu0
      %v5054 = vadd.f32 %v4906, %v5053
      %v5055 = vpop.f32.mrb[0].mxu0
      %v5056 = vadd.f32 %v4906, %v5055
      %v5057 = vpop.f32.mrb[0].mxu0
      %v5058 = vpop.f32.mrb[0].mxu0
      %5059 = vdwg.mxu0
      %5060 = vmatprep.subr.bf16.mxu0 %v4868
      %5061 = vmatpush1.bf16.msra.mxu0 %v4867
      %5062 = vmatprep.subr.bf16.mxu0 %v4876
      %5063 = vmatpush1.bf16.msra.mxu0 %v4875
      %5064 = vmatprep.subr.bf16.mxu0 %v4884
      %5065 = vmatpush1.bf16.msra.mxu0 %v4883
      %5066 = vmatprep.subr.bf16.mxu0 %v4892
      %5067 = vmatpush1.bf16.msra.mxu0 %v4891
      %5068 = vmatprep.subr.bf16.mxu0 %v4935
      %5069 = vmatpush1.bf16.msra.mxu0 %v4932
      %5070 = vmatprep.subr.bf16.mxu0 0
      %5071 = vmatpush1.bf16.msra.mxu0 0
      %5072 = vmatprep.subr.bf16.mxu0 0
      %5073 = vmatpush1.bf16.msra.mxu0 0
      %5074 = vmatprep.subr.bf16.mxu0 0
      %5075 = vmatpush1.bf16.msra.mxu0 0
      %5076 = vmatprep.subr.bf16.mxu0 0
      %5077 = vmatpush1.bf16.msra.mxu0 0
      %5078 = vmatprep.subr.bf16.mxu0 0
      %5079 = vmatpush1.bf16.msra.mxu0 0
      %5080 = vmatprep.subr.bf16.mxu0 0
      %5081 = vmatpush1.bf16.msra.mxu0 0
      %5082 = vmatprep.subr.bf16.mxu0 0
      %5083 = vmatpush1.bf16.msra.mxu0 0
      %5084 = vmatprep.subr.bf16.mxu0 0
      %5085 = vmatpush1.bf16.msra.mxu0 0
      %5086 = vmatprep.subr.bf16.mxu0 0
      %5087 = vmatpush1.bf16.msra.mxu0 0
      %5088 = vmatprep.subr.bf16.mxu0 0
      %5089 = vmatpush1.bf16.msra.mxu0 0
      %5090 = vmatprep.subr.bf16.mxu0 0
      %5091 = vmatpush1.bf16.msra.mxu0 0
      %5092 = vmatprep.mubr.bf16.mxu0 0
      %5093 = vmatmul.mubr.bf16.gmra.mrb[0].mxu0 %v4910
      %v5094 = vpop.f32.mrb[0].mxu0
      %v5095 = vadd.f32 %v4906, %v5094
      %v5096 = vpop.f32.mrb[0].mxu0
      %v5097 = vadd.f32 %v4906, %v5096
      %v5098 = vpop.f32.mrb[0].mxu0
      %v5099 = vpop.f32.mrb[0].mxu0
      %5100 = vdwg.mxu0
      %v5101 = vadd.f32 %v4972, %v4974
      %v5102 = vadd.f32 %v5101, %v5013
      %v5103 = vadd.f32 %v5102, %v5015
      %v5104 = vadd.f32 %v5103, %v5054
      %v5105 = vadd.f32 %v5104, %v5056
      %v5106 = vadd.f32 %v5105, %v5095
      %v5107 = vadd.f32 %v5106, %v5097
      %5108 = vadd.xlane.f32.xlu0 %v5107
      %v5109 = vpop.xlane.xlu0 %5108
      %v5110 = vsel %vm4350, %v5109, 0.0
      %v5111 = vsel %vm1491, %v5110, 0.0
      %5112 = vadd.xlane.f32.xlu0 %v5111
      %v5113 = vpop.xlane.xlu0 %5112
      %v5114 = vrot.slane %v5113, 4
      %v5115 = vadd.f32 %v5113, %v5114
      %v5116 = vrot.slane %v5115, 2
      %v5117 = vadd.f32 %v5115, %v5116
      %v5118 = vrot.slane %v5117, 1
      %v5119 = vadd.f32 %v5117, %v5118
      %s5120 = vtos %v5119
      %s5121 = smul.f32 %s5120, 0.00048828125
      %v5122 = vstv %s5121
      %v5123 = vsel %vm4350, %v5122, 0.0
      %v5124 = vadd.f32 %v5123, 0.0
      %v5125 = vsel %vm4352, %v5109, 0.0
      %v5126 = vsel %vm1491, %v5125, 0.0
      %5127 = vadd.xlane.f32.xlu0 %v5126
      %v5128 = vpop.xlane.xlu0 %5127
      %v5129 = vrot.slane %v5128, 4
      %v5130 = vadd.f32 %v5128, %v5129
      %v5131 = vrot.slane %v5130, 2
      %v5132 = vadd.f32 %v5130, %v5131
      %v5133 = vrot.slane %v5132, 1
      %v5134 = vadd.f32 %v5132, %v5133
      %s5135 = vtos %v5134
      %s5136 = smul.f32 %s5135, 0.00048828125
      %v5137 = vstv %s5136
      %v5138 = vsel %vm4352, %v5137, 0.0
      %v5139 = vadd.f32 %v5124, %v5138
      %v5140 = vsel %vm4354, %v5109, 0.0
      %v5141 = vsel %vm1491, %v5140, 0.0
      %5142 = vadd.xlane.f32.xlu0 %v5141
      %v5143 = vpop.xlane.xlu0 %5142
      %v5144 = vrot.slane %v5143, 4
      %v5145 = vadd.f32 %v5143, %v5144
      %v5146 = vrot.slane %v5145, 2
      %v5147 = vadd.f32 %v5145, %v5146
      %v5148 = vrot.slane %v5147, 1
      %v5149 = vadd.f32 %v5147, %v5148
      %s5150 = vtos %v5149
      %s5151 = smul.f32 %s5150, 0.00048828125
      %v5152 = vstv %s5151
      %v5153 = vsel %vm4354, %v5152, 0.0
      %v5154 = vadd.f32 %v5139, %v5153
      %v5155 = vsel %vm4356, %v5109, 0.0
      %v5156 = vsel %vm1491, %v5155, 0.0
      %5157 = vadd.xlane.f32.xlu0 %v5156
      %v5158 = vpop.xlane.xlu0 %5157
      %v5159 = vrot.slane %v5158, 4
      %v5160 = vadd.f32 %v5158, %v5159
      %v5161 = vrot.slane %v5160, 2
      %v5162 = vadd.f32 %v5160, %v5161
      %v5163 = vrot.slane %v5162, 1
      %v5164 = vadd.f32 %v5162, %v5163
      %s5165 = vtos %v5164
      %s5166 = smul.f32 %s5165, 0.00048828125
      %v5167 = vstv %s5166
      %v5168 = vsel %vm4356, %v5167, 0.0
      %v5169 = vadd.f32 %v5154, %v5168
      %v5170 = vsub.f32 %v4972, %v5169
      %v5171 = vsub.f32 %v4974, %v5169
      %v5172 = vsub.f32 %v5013, %v5169
      %v5173 = vsub.f32 %v5015, %v5169
      %v5174 = vsub.f32 %v5054, %v5169
      %v5175 = vsub.f32 %v5056, %v5169
      %v5176 = vsub.f32 %v5095, %v5169
      %v5177 = vsub.f32 %v5097, %v5169
      %v5178 = vmul.f32 %v5170, %v5170
      %v5179 = vmul.f32 %v5171, %v5171
      %v5180 = vmul.f32 %v5172, %v5172
      %v5181 = vmul.f32 %v5173, %v5173
      %v5182 = vmul.f32 %v5174, %v5174
      %v5183 = vmul.f32 %v5175, %v5175
      %v5184 = vmul.f32 %v5176, %v5176
      %v5185 = vmul.f32 %v5177, %v5177
      %v5186 = vadd.f32 %v5178, %v5179
      %v5187 = vadd.f32 %v5186, %v5180
      %v5188 = vadd.f32 %v5187, %v5181
      %v5189 = vadd.f32 %v5188, %v5182
      %v5190 = vadd.f32 %v5189, %v5183
      %v5191 = vadd.f32 %v5190, %v5184
      %v5192 = vadd.f32 %v5191, %v5185
      %5193 = vadd.xlane.f32.xlu0 %v5192
      %v5194 = vpop.xlane.xlu0 %5193
      %v5195 = vsel %vm4350, %v5194, 0.0
      %v5196 = vsel %vm1491, %v5195, 0.0
      %5197 = vadd.xlane.f32.xlu0 %v5196
      %v5198 = vpop.xlane.xlu0 %5197
      %v5199 = vrot.slane %v5198, 4
      %v5200 = vadd.f32 %v5198, %v5199
      %v5201 = vrot.slane %v5200, 2
      %v5202 = vadd.f32 %v5200, %v5201
      %v5203 = vrot.slane %v5202, 1
      %v5204 = vadd.f32 %v5202, %v5203
      %s5205 = vtos %v5204
      %s5206 = smul.f32 %s5205, 0.00048828125
      %v5207 = vstv %s5206
      %v5208 = vsel %vm4350, %v5207, 0.0
      %v5209 = vadd.f32 %v5208, 0.0
      %v5210 = vsel %vm4352, %v5194, 0.0
      %v5211 = vsel %vm1491, %v5210, 0.0
      %5212 = vadd.xlane.f32.xlu0 %v5211
      %v5213 = vpop.xlane.xlu0 %5212
      %v5214 = vrot.slane %v5213, 4
      %v5215 = vadd.f32 %v5213, %v5214
      %v5216 = vrot.slane %v5215, 2
      %v5217 = vadd.f32 %v5215, %v5216
      %v5218 = vrot.slane %v5217, 1
      %v5219 = vadd.f32 %v5217, %v5218
      %s5220 = vtos %v5219
      %s5221 = smul.f32 %s5220, 0.00048828125
      %v5222 = vstv %s5221
      %v5223 = vsel %vm4352, %v5222, 0.0
      %v5224 = vadd.f32 %v5209, %v5223
      %v5225 = vsel %vm4354, %v5194, 0.0
      %v5226 = vsel %vm1491, %v5225, 0.0
      %5227 = vadd.xlane.f32.xlu0 %v5226
      %v5228 = vpop.xlane.xlu0 %5227
      %v5229 = vrot.slane %v5228, 4
      %v5230 = vadd.f32 %v5228, %v5229
      %v5231 = vrot.slane %v5230, 2
      %v5232 = vadd.f32 %v5230, %v5231
      %v5233 = vrot.slane %v5232, 1
      %v5234 = vadd.f32 %v5232, %v5233
      %s5235 = vtos %v5234
      %s5236 = smul.f32 %s5235, 0.00048828125
      %v5237 = vstv %s5236
      %v5238 = vsel %vm4354, %v5237, 0.0
      %v5239 = vadd.f32 %v5224, %v5238
      %v5240 = vsel %vm4356, %v5194, 0.0
      %v5241 = vsel %vm1491, %v5240, 0.0
      %5242 = vadd.xlane.f32.xlu0 %v5241
      %v5243 = vpop.xlane.xlu0 %5242
      %v5244 = vrot.slane %v5243, 4
      %v5245 = vadd.f32 %v5243, %v5244
      %v5246 = vrot.slane %v5245, 2
      %v5247 = vadd.f32 %v5245, %v5246
      %v5248 = vrot.slane %v5247, 1
      %v5249 = vadd.f32 %v5247, %v5248
      %s5250 = vtos %v5249
      %s5251 = smul.f32 %s5250, 0.00048828125
      %v5252 = vstv %s5251
      %v5253 = vsel %vm4356, %v5252, 0.0
      %v5254 = vadd.f32 %v5239, %v5253
      %v5255 = vadd.f32 %v5254, 1e-05
      %v5256 = vrsqrt.pop %v5255
      %v5257 = vmul.f32 %v5170, %v5256
      %v5258 = vmul.f32 %v5171, %v5256
      %v5259 = vmul.f32 %v5172, %v5256
      %v5260 = vmul.f32 %v5173, %v5256
      %v5261 = vmul.f32 %v5174, %v5256
      %v5262 = vmul.f32 %v5175, %v5256
      %v5263 = vmul.f32 %v5176, %v5256
      %v5264 = vmul.f32 %v5177, %v5256
      %v5265 = vld [vmem:[%s21] sm:$0xff]
      %5267 = vset.pattern.permute.xlu0 0
      %5268 = vperm.xlu0 %5267, %v5265
      %v5269 = vpop.permute.xlu0 %5268
      %v5271 = vmul.f32 %v5257, %v5269
      %v5272 = vmul.f32 %v5258, %v5269
      %v5273 = vmul.f32 %v5259, %v5269
      %v5274 = vmul.f32 %v5260, %v5269
      %v5275 = vmul.f32 %v5261, %v5269
      %v5276 = vmul.f32 %v5262, %v5269
      %v5277 = vmul.f32 %v5263, %v5269
      %v5278 = vmul.f32 %v5264, %v5269
      %v5279 = vld [vmem:[%s22] sm:$0xff]
      %5281 = vset.pattern.permute.xlu0 0
      %5282 = vperm.xlu0 %5281, %v5279
      %v5283 = vpop.permute.xlu0 %5282
      %v5285 = vadd.f32 %v5271, %v5283
      %v5286 = vadd.f32 %v5272, %v5283
      %v5287 = vadd.f32 %v5273, %v5283
      %v5288 = vadd.f32 %v5274, %v5283
      %v5289 = vadd.f32 %v5275, %v5283
      %v5290 = vadd.f32 %v5276, %v5283
      %v5291 = vadd.f32 %v5277, %v5283
      %v5292 = vadd.f32 %v5278, %v5283
      %v5293 = vxor.u32 %v5285, 2147483648
      %v5294 = vxor.u32 %v5286, 2147483648
      %v5295 = vxor.u32 %v5287, 2147483648
      %v5296 = vxor.u32 %v5288, 2147483648
      %v5297 = vxor.u32 %v5289, 2147483648
      %v5298 = vxor.u32 %v5290, 2147483648
      %v5299 = vxor.u32 %v5291, 2147483648
      %v5300 = vxor.u32 %v5292, 2147483648
      %v5301 = vmul.f32 %v5293, 1.442695
      %v5302 = vpow.pop %v5301
      %v5303 = vmul.f32 %v5294, 1.442695
      %v5304 = vpow.pop %v5303
      %v5305 = vmul.f32 %v5295, 1.442695
      %v5306 = vpow.pop %v5305
      %v5307 = vmul.f32 %v5296, 1.442695
      %v5308 = vpow.pop %v5307
      %v5309 = vmul.f32 %v5297, 1.442695
      %v5310 = vpow.pop %v5309
      %v5311 = vmul.f32 %v5298, 1.442695
      %v5312 = vpow.pop %v5311
      %v5313 = vmul.f32 %v5299, 1.442695
      %v5314 = vpow.pop %v5313
      %v5315 = vmul.f32 %v5300, 1.442695
      %v5316 = vpow.pop %v5315
      %v5317 = vadd.f32 %v5302, 1.0
      %v5318 = vadd.f32 %v5304, 1.0
      %v5319 = vadd.f32 %v5306, 1.0
      %v5320 = vadd.f32 %v5308, 1.0
      %v5321 = vadd.f32 %v5310, 1.0
      %v5322 = vadd.f32 %v5312, 1.0
      %v5323 = vadd.f32 %v5314, 1.0
      %v5324 = vadd.f32 %v5316, 1.0
      %v5325 = vrcp.pop %v5317
      %v5326 = vmul.f32 1.0, %v5325
      %v5327 = vrcp.pop %v5318
      %v5328 = vmul.f32 1.0, %v5327
      %v5329 = vrcp.pop %v5319
      %v5330 = vmul.f32 1.0, %v5329
      %v5331 = vrcp.pop %v5320
      %v5332 = vmul.f32 1.0, %v5331
      %v5333 = vrcp.pop %v5321
      %v5334 = vmul.f32 1.0, %v5333
      %v5335 = vrcp.pop %v5322
      %v5336 = vmul.f32 1.0, %v5335
      %v5337 = vrcp.pop %v5323
      %v5338 = vmul.f32 1.0, %v5337
      %v5339 = vrcp.pop %v5324
      %v5340 = vmul.f32 1.0, %v5339
      %v5341 = vmul.f32 %v5285, %v5326
      %v5342 = vmul.f32 %v5286, %v5328
      %v5343 = vmul.f32 %v5287, %v5330
      %v5344 = vmul.f32 %v5288, %v5332
      %v5345 = vmul.f32 %v5289, %v5334
      %v5346 = vmul.f32 %v5290, %v5336
      %v5347 = vmul.f32 %v5291, %v5338
      %v5348 = vmul.f32 %v5292, %v5340
      %5349 = vrot.lane.b32.xlu0 %v5341, 33
      %v5350 = vpop.permute.xlu0 %5349
      %5351 = vrot.lane.b32.xlu0 %v5342, 33
      %v5352 = vpop.permute.xlu0 %5351
      %5353 = vrot.lane.b32.xlu0 %v5343, 33
      %v5354 = vpop.permute.xlu0 %5353
      %5355 = vrot.lane.b32.xlu0 %v5344, 33
      %v5356 = vpop.permute.xlu0 %5355
      %5357 = vrot.lane.b32.xlu0 %v5345, 33
      %v5358 = vpop.permute.xlu0 %5357
      %5359 = vrot.lane.b32.xlu0 %v5346, 33
      %v5360 = vpop.permute.xlu0 %5359
      %5361 = vrot.lane.b32.xlu0 %v5347, 33
      %v5362 = vpop.permute.xlu0 %5361
      %5363 = vrot.lane.b32.xlu0 %v5348, 33
      %v5364 = vpop.permute.xlu0 %5363
      %v5365 = vsel %vm3467, %v5362, %v5364
      %v5366 = vsel %vm3467, %v5360, %v5362
      %v5367 = vsel %vm3467, %v5358, %v5360
      %v5368 = vsel %vm3467, %v5356, %v5358
      %v5369 = vsel %vm3467, %v5354, %v5356
      %v5370 = vsel %vm3467, %v5352, %v5354
      %v5371 = vsel %vm3467, %v5350, %v5352
      %v5372 = vsel %vm3467, %v5364, %v5350
      %v5373 = vsel %vm3492, %v5372, 0.0
      %v5374 = vsel %vm3493, %v5371, 0.0
      %v5375 = vsel %vm3494, %v5370, 0.0
      %v5376 = vsel %vm3495, %v5369, 0.0
      %v5377 = vsel %vm3496, %v5368, 0.0
      %v5378 = vsel %vm3497, %v5367, 0.0
      %v5379 = vsel %vm3498, %v5366, 0.0
      %v5380 = vsel %vm3499, %v5365, 0.0
      %5381 = vrot.lane.b32.xlu0 %v5341, 32
      %v5382 = vpop.permute.xlu0 %5381
      %5383 = vrot.lane.b32.xlu0 %v5342, 32
      %v5384 = vpop.permute.xlu0 %5383
      %5385 = vrot.lane.b32.xlu0 %v5343, 32
      %v5386 = vpop.permute.xlu0 %5385
      %5387 = vrot.lane.b32.xlu0 %v5344, 32
      %v5388 = vpop.permute.xlu0 %5387
      %5389 = vrot.lane.b32.xlu0 %v5345, 32
      %v5390 = vpop.permute.xlu0 %5389
      %5391 = vrot.lane.b32.xlu0 %v5346, 32
      %v5392 = vpop.permute.xlu0 %5391
      %5393 = vrot.lane.b32.xlu0 %v5347, 32
      %v5394 = vpop.permute.xlu0 %5393
      %5395 = vrot.lane.b32.xlu0 %v5348, 32
      %v5396 = vpop.permute.xlu0 %5395
      %v5397 = vsel %vm3548, %v5394, %v5396
      %v5398 = vsel %vm3548, %v5392, %v5394
      %v5399 = vsel %vm3548, %v5390, %v5392
      %v5400 = vsel %vm3548, %v5388, %v5390
      %v5401 = vsel %vm3548, %v5386, %v5388
      %v5402 = vsel %vm3548, %v5384, %v5386
      %v5403 = vsel %vm3548, %v5382, %v5384
      %v5404 = vsel %vm3548, %v5396, %v5382
      %v5405 = vsel %vm3573, %v5404, 0.0
      %v5406 = vsel %vm3574, %v5403, 0.0
      %v5407 = vsel %vm3575, %v5402, 0.0
      %v5408 = vsel %vm3576, %v5401, 0.0
      %v5409 = vsel %vm3577, %v5400, 0.0
      %v5410 = vsel %vm3578, %v5399, 0.0
      %v5411 = vsel %vm3579, %v5398, 0.0
      %v5412 = vsel %vm3580, %v5397, 0.0
      %5413 = vrot.lane.b32.xlu0 %v5341, 31
      %v5414 = vpop.permute.xlu0 %5413
      %5415 = vrot.lane.b32.xlu0 %v5342, 31
      %v5416 = vpop.permute.xlu0 %5415
      %5417 = vrot.lane.b32.xlu0 %v5343, 31
      %v5418 = vpop.permute.xlu0 %5417
      %5419 = vrot.lane.b32.xlu0 %v5344, 31
      %v5420 = vpop.permute.xlu0 %5419
      %5421 = vrot.lane.b32.xlu0 %v5345, 31
      %v5422 = vpop.permute.xlu0 %5421
      %5423 = vrot.lane.b32.xlu0 %v5346, 31
      %v5424 = vpop.permute.xlu0 %5423
      %5425 = vrot.lane.b32.xlu0 %v5347, 31
      %v5426 = vpop.permute.xlu0 %5425
      %5427 = vrot.lane.b32.xlu0 %v5348, 31
      %v5428 = vpop.permute.xlu0 %5427
      %v5429 = vsel %vm3629, %v5426, %v5428
      %v5430 = vsel %vm3629, %v5424, %v5426
      %v5431 = vsel %vm3629, %v5422, %v5424
      %v5432 = vsel %vm3629, %v5420, %v5422
      %v5433 = vsel %vm3629, %v5418, %v5420
      %v5434 = vsel %vm3629, %v5416, %v5418
      %v5435 = vsel %vm3629, %v5414, %v5416
      %v5436 = vsel %vm3629, %v5428, %v5414
      %v5437 = vsel %vm3654, %v5436, 0.0
      %v5438 = vsel %vm3655, %v5435, 0.0
      %v5439 = vsel %vm3656, %v5434, 0.0
      %v5440 = vsel %vm3657, %v5433, 0.0
      %v5441 = vsel %vm3658, %v5432, 0.0
      %v5442 = vsel %vm3659, %v5431, 0.0
      %v5443 = vsel %vm3660, %v5430, 0.0
      %v5444 = vsel %vm3661, %v5429, 0.0
      %5445 = vrot.lane.b32.xlu0 %v5341, 1
      %v5446 = vpop.permute.xlu0 %5445
      %5447 = vrot.lane.b32.xlu0 %v5342, 1
      %v5448 = vpop.permute.xlu0 %5447
      %5449 = vrot.lane.b32.xlu0 %v5343, 1
      %v5450 = vpop.permute.xlu0 %5449
      %5451 = vrot.lane.b32.xlu0 %v5344, 1
      %v5452 = vpop.permute.xlu0 %5451
      %5453 = vrot.lane.b32.xlu0 %v5345, 1
      %v5454 = vpop.permute.xlu0 %5453
      %5455 = vrot.lane.b32.xlu0 %v5346, 1
      %v5456 = vpop.permute.xlu0 %5455
      %5457 = vrot.lane.b32.xlu0 %v5347, 1
      %v5458 = vpop.permute.xlu0 %5457
      %5459 = vrot.lane.b32.xlu0 %v5348, 1
      %v5460 = vpop.permute.xlu0 %5459
      %v5461 = vsel %vm1122, %v5458, %v5460
      %v5462 = vsel %vm1122, %v5456, %v5458
      %v5463 = vsel %vm1122, %v5454, %v5456
      %v5464 = vsel %vm1122, %v5452, %v5454
      %v5465 = vsel %vm1122, %v5450, %v5452
      %v5466 = vsel %vm1122, %v5448, %v5450
      %v5467 = vsel %vm1122, %v5446, %v5448
      %v5468 = vsel %vm1122, %v5460, %v5446
      %v5469 = vsel %vm3734, %v5468, 0.0
      %v5470 = vsel %vm3735, %v5467, 0.0
      %v5471 = vsel %vm3736, %v5466, 0.0
      %v5472 = vsel %vm3737, %v5465, 0.0
      %v5473 = vsel %vm3738, %v5464, 0.0
      %v5474 = vsel %vm3739, %v5463, 0.0
      %v5475 = vsel %vm3740, %v5462, 0.0
      %v5476 = vsel %vm3741, %v5461, 0.0
      %5477 = vrot.lane.b32.xlu0 %v5341, 127
      %v5478 = vpop.permute.xlu0 %5477
      %5479 = vrot.lane.b32.xlu0 %v5342, 127
      %v5480 = vpop.permute.xlu0 %5479
      %5481 = vrot.lane.b32.xlu0 %v5343, 127
      %v5482 = vpop.permute.xlu0 %5481
      %5483 = vrot.lane.b32.xlu0 %v5344, 127
      %v5484 = vpop.permute.xlu0 %5483
      %5485 = vrot.lane.b32.xlu0 %v5345, 127
      %v5486 = vpop.permute.xlu0 %5485
      %5487 = vrot.lane.b32.xlu0 %v5346, 127
      %v5488 = vpop.permute.xlu0 %5487
      %5489 = vrot.lane.b32.xlu0 %v5347, 127
      %v5490 = vpop.permute.xlu0 %5489
      %5491 = vrot.lane.b32.xlu0 %v5348, 127
      %v5492 = vpop.permute.xlu0 %5491
      %v5493 = vsel %vm1159, %v5490, %v5492
      %v5494 = vsel %vm1159, %v5488, %v5490
      %v5495 = vsel %vm1159, %v5486, %v5488
      %v5496 = vsel %vm1159, %v5484, %v5486
      %v5497 = vsel %vm1159, %v5482, %v5484
      %v5498 = vsel %vm1159, %v5480, %v5482
      %v5499 = vsel %vm1159, %v5478, %v5480
      %v5500 = vsel %vm1159, %v5492, %v5478
      %v5501 = vsel %vm3814, %v5499, 0.0
      %v5502 = vsel %vm3815, %v5498, 0.0
      %v5503 = vsel %vm3816, %v5497, 0.0
      %v5504 = vsel %vm3817, %v5496, 0.0
      %v5505 = vsel %vm3818, %v5495, 0.0
      %v5506 = vsel %vm3819, %v5494, 0.0
      %v5507 = vsel %vm3820, %v5493, 0.0
      %v5508 = vsel %vm3821, %v5500, 0.0
      %5509 = vrot.lane.b32.xlu0 %v5341, 97
      %v5510 = vpop.permute.xlu0 %5509
      %5511 = vrot.lane.b32.xlu0 %v5342, 97
      %v5512 = vpop.permute.xlu0 %5511
      %5513 = vrot.lane.b32.xlu0 %v5343, 97
      %v5514 = vpop.permute.xlu0 %5513
      %5515 = vrot.lane.b32.xlu0 %v5344, 97
      %v5516 = vpop.permute.xlu0 %5515
      %5517 = vrot.lane.b32.xlu0 %v5345, 97
      %v5518 = vpop.permute.xlu0 %5517
      %5519 = vrot.lane.b32.xlu0 %v5346, 97
      %v5520 = vpop.permute.xlu0 %5519
      %5521 = vrot.lane.b32.xlu0 %v5347, 97
      %v5522 = vpop.permute.xlu0 %5521
      %5523 = vrot.lane.b32.xlu0 %v5348, 97
      %v5524 = vpop.permute.xlu0 %5523
      %v5525 = vsel %vm3870, %v5522, %v5524
      %v5526 = vsel %vm3870, %v5520, %v5522
      %v5527 = vsel %vm3870, %v5518, %v5520
      %v5528 = vsel %vm3870, %v5516, %v5518
      %v5529 = vsel %vm3870, %v5514, %v5516
      %v5530 = vsel %vm3870, %v5512, %v5514
      %v5531 = vsel %vm3870, %v5510, %v5512
      %v5532 = vsel %vm3870, %v5524, %v5510
      %v5533 = vsel %vm3895, %v5531, 0.0
      %v5534 = vsel %vm3896, %v5530, 0.0
      %v5535 = vsel %vm3897, %v5529, 0.0
      %v5536 = vsel %vm3898, %v5528, 0.0
      %v5537 = vsel %vm3899, %v5527, 0.0
      %v5538 = vsel %vm3900, %v5526, 0.0
      %v5539 = vsel %vm3901, %v5525, 0.0
      %v5540 = vsel %vm3902, %v5532, 0.0
      %5541 = vrot.lane.b32.xlu0 %v5341, 96
      %v5542 = vpop.permute.xlu0 %5541
      %5543 = vrot.lane.b32.xlu0 %v5342, 96
      %v5544 = vpop.permute.xlu0 %5543
      %5545 = vrot.lane.b32.xlu0 %v5343, 96
      %v5546 = vpop.permute.xlu0 %5545
      %5547 = vrot.lane.b32.xlu0 %v5344, 96
      %v5548 = vpop.permute.xlu0 %5547
      %5549 = vrot.lane.b32.xlu0 %v5345, 96
      %v5550 = vpop.permute.xlu0 %5549
      %5551 = vrot.lane.b32.xlu0 %v5346, 96
      %v5552 = vpop.permute.xlu0 %5551
      %5553 = vrot.lane.b32.xlu0 %v5347, 96
      %v5554 = vpop.permute.xlu0 %5553
      %5555 = vrot.lane.b32.xlu0 %v5348, 96
      %v5556 = vpop.permute.xlu0 %5555
      %v5557 = vsel %vm3951, %v5554, %v5556
      %v5558 = vsel %vm3951, %v5552, %v5554
      %v5559 = vsel %vm3951, %v5550, %v5552
      %v5560 = vsel %vm3951, %v5548, %v5550
      %v5561 = vsel %vm3951, %v5546, %v5548
      %v5562 = vsel %vm3951, %v5544, %v5546
      %v5563 = vsel %vm3951, %v5542, %v5544
      %v5564 = vsel %vm3951, %v5556, %v5542
      %v5565 = vsel %vm3976, %v5563, 0.0
      %v5566 = vsel %vm3977, %v5562, 0.0
      %v5567 = vsel %vm3978, %v5561, 0.0
      %v5568 = vsel %vm3979, %v5560, 0.0
      %v5569 = vsel %vm3980, %v5559, 0.0
      %v5570 = vsel %vm3981, %v5558, 0.0
      %v5571 = vsel %vm3982, %v5557, 0.0
      %v5572 = vsel %vm3983, %v5564, 0.0
      %5573 = vrot.lane.b32.xlu0 %v5341, 95
      %v5574 = vpop.permute.xlu0 %5573
      %5575 = vrot.lane.b32.xlu0 %v5342, 95
      %v5576 = vpop.permute.xlu0 %5575
      %5577 = vrot.lane.b32.xlu0 %v5343, 95
      %v5578 = vpop.permute.xlu0 %5577
      %5579 = vrot.lane.b32.xlu0 %v5344, 95
      %v5580 = vpop.permute.xlu0 %5579
      %5581 = vrot.lane.b32.xlu0 %v5345, 95
      %v5582 = vpop.permute.xlu0 %5581
      %5583 = vrot.lane.b32.xlu0 %v5346, 95
      %v5584 = vpop.permute.xlu0 %5583
      %5585 = vrot.lane.b32.xlu0 %v5347, 95
      %v5586 = vpop.permute.xlu0 %5585
      %5587 = vrot.lane.b32.xlu0 %v5348, 95
      %v5588 = vpop.permute.xlu0 %5587
      %v5589 = vsel %vm4032, %v5586, %v5588
      %v5590 = vsel %vm4032, %v5584, %v5586
      %v5591 = vsel %vm4032, %v5582, %v5584
      %v5592 = vsel %vm4032, %v5580, %v5582
      %v5593 = vsel %vm4032, %v5578, %v5580
      %v5594 = vsel %vm4032, %v5576, %v5578
      %v5595 = vsel %vm4032, %v5574, %v5576
      %v5596 = vsel %vm4032, %v5588, %v5574
      %v5597 = vsel %vm4057, %v5595, 0.0
      %v5598 = vsel %vm4058, %v5594, 0.0
      %v5599 = vsel %vm4059, %v5593, 0.0
      %v5600 = vsel %vm4060, %v5592, 0.0
      %v5601 = vsel %vm4061, %v5591, 0.0
      %v5602 = vsel %vm4062, %v5590, 0.0
      %v5603 = vsel %vm4063, %v5589, 0.0
      %v5604 = vsel %vm4064, %v5596, 0.0
      %v5605 = vpack.c.bf16 %v5405, %v5373
      %v5606 = vpack.c.bf16 %v5406, %v5374
      %v5607 = vpack.c.bf16 %v5407, %v5375
      %v5608 = vpack.c.bf16 %v5408, %v5376
      %v5609 = vpack.c.bf16 %v5409, %v5377
      %v5610 = vpack.c.bf16 %v5410, %v5378
      %v5611 = vpack.c.bf16 %v5411, %v5379
      %v5612 = vpack.c.bf16 %v5412, %v5380
      %v5613 = vpack.c.bf16 %v5469, %v5437
      %v5614 = vpack.c.bf16 %v5470, %v5438
      %v5615 = vpack.c.bf16 %v5471, %v5439
      %v5616 = vpack.c.bf16 %v5472, %v5440
      %v5617 = vpack.c.bf16 %v5473, %v5441
      %v5618 = vpack.c.bf16 %v5474, %v5442
      %v5619 = vpack.c.bf16 %v5475, %v5443
      %v5620 = vpack.c.bf16 %v5476, %v5444
      %v5621 = vpack.c.bf16 %v5501, %v5341
      %v5622 = vpack.c.bf16 %v5502, %v5342
      %v5623 = vpack.c.bf16 %v5503, %v5343
      %v5624 = vpack.c.bf16 %v5504, %v5344
      %v5625 = vpack.c.bf16 %v5505, %v5345
      %v5626 = vpack.c.bf16 %v5506, %v5346
      %v5627 = vpack.c.bf16 %v5507, %v5347
      %v5628 = vpack.c.bf16 %v5508, %v5348
      %v5629 = vpack.c.bf16 %v5565, %v5533
      %v5630 = vpack.c.bf16 %v5566, %v5534
      %v5631 = vpack.c.bf16 %v5567, %v5535
      %v5632 = vpack.c.bf16 %v5568, %v5536
      %v5633 = vpack.c.bf16 %v5569, %v5537
      %v5634 = vpack.c.bf16 %v5570, %v5538
      %v5635 = vpack.c.bf16 %v5571, %v5539
      %v5636 = vpack.c.bf16 %v5572, %v5540
      %v5637 = vpack.c.bf16 %v5597, %v5597
      %v5638 = vpack.c.bf16 %v5598, %v5598
      %v5639 = vpack.c.bf16 %v5599, %v5599
      %v5640 = vpack.c.bf16 %v5600, %v5600
      %v5641 = vpack.c.bf16 %v5601, %v5601
      %v5642 = vpack.c.bf16 %v5602, %v5602
      %v5643 = vpack.c.bf16 %v5603, %v5603
      %v5644 = vpack.c.bf16 %v5604, %v5604
      %v5645 = vld [vmem:[%s23] sm:$0xf]
      %v5646 = vld [vmem:[%s24] sm:$0xff]
      %5648 = vset.pattern.permute.xlu0 0
      %5649 = vperm.xlu0 %5648, %v5646
      %v5650 = vpop.permute.xlu0 %5649
      %v5653 = vsel %vm4908, %v5645, 0
      %v5656 = vsel %vm4912, %v5637, 0
      %v5659 = vsel %vm4912, %v5638, 0
      %v5662 = vsel %vm4912, %v5639, 0
      %v5665 = vsel %vm4912, %v5640, 0
      %v5668 = vsel %vm4912, %v5641, 0
      %v5671 = vsel %vm4912, %v5642, 0
      %v5674 = vsel %vm4912, %v5643, 0
      %v5677 = vsel %vm4912, %v5644, 0
      %5679 = vmatprep.subr.bf16.mxu0 %v5606
      %5680 = vmatpush1.bf16.msra.mxu0 %v5605
      %5681 = vmatprep.subr.bf16.mxu0 %v5614
      %5682 = vmatpush1.bf16.msra.mxu0 %v5613
      %5683 = vmatprep.subr.bf16.mxu0 %v5622
      %5684 = vmatpush1.bf16.msra.mxu0 %v5621
      %5685 = vmatprep.subr.bf16.mxu0 %v5630
      %5686 = vmatpush1.bf16.msra.mxu0 %v5629
      %5687 = vmatprep.subr.bf16.mxu0 %v5659
      %5688 = vmatpush1.bf16.msra.mxu0 %v5656
      %5689 = vmatprep.subr.bf16.mxu0 0
      %5690 = vmatpush1.bf16.msra.mxu0 0
      %5691 = vmatprep.subr.bf16.mxu0 0
      %5692 = vmatpush1.bf16.msra.mxu0 0
      %5693 = vmatprep.subr.bf16.mxu0 0
      %5694 = vmatpush1.bf16.msra.mxu0 0
      %5695 = vmatprep.subr.bf16.mxu0 0
      %5696 = vmatpush1.bf16.msra.mxu0 0
      %5697 = vmatprep.subr.bf16.mxu0 0
      %5698 = vmatpush1.bf16.msra.mxu0 0
      %5699 = vmatprep.subr.bf16.mxu0 0
      %5700 = vmatpush1.bf16.msra.mxu0 0
      %5701 = vmatprep.subr.bf16.mxu0 0
      %5702 = vmatpush1.bf16.msra.mxu0 0
      %5703 = vmatprep.subr.bf16.mxu0 0
      %5704 = vmatpush1.bf16.msra.mxu0 0
      %5705 = vmatprep.subr.bf16.mxu0 0
      %5706 = vmatpush1.bf16.msra.mxu0 0
      %5707 = vmatprep.subr.bf16.mxu0 0
      %5708 = vmatpush1.bf16.msra.mxu0 0
      %5709 = vmatprep.subr.bf16.mxu0 0
      %5710 = vmatpush1.bf16.msra.mxu0 0
      %5711 = vmatprep.mubr.bf16.mxu0 0
      %5712 = vmatmul.mubr.bf16.gmra.mrb[0].mxu0 %v5653
      %v5713 = vpop.f32.mrb[0].mxu0
      %v5714 = vadd.f32 %v5650, %v5713
      %v5715 = vpop.f32.mrb[0].mxu0
      %v5716 = vadd.f32 %v5650, %v5715
      %v5717 = vpop.f32.mrb[0].mxu0
      %v5718 = vpop.f32.mrb[0].mxu0
      %5719 = vdwg.mxu0
      %5720 = vmatprep.subr.bf16.mxu0 %v5608
      %5721 = vmatpush1.bf16.msra.mxu0 %v5607
      %5722 = vmatprep.subr.bf16.mxu0 %v5616
      %5723 = vmatpush1.bf16.msra.mxu0 %v5615
      %5724 = vmatprep.subr.bf16.mxu0 %v5624
      %5725 = vmatpush1.bf16.msra.mxu0 %v5623
      %5726 = vmatprep.subr.bf16.mxu0 %v5632
      %5727 = vmatpush1.bf16.msra.mxu0 %v5631
      %5728 = vmatprep.subr.bf16.mxu0 %v5665
      %5729 = vmatpush1.bf16.msra.mxu0 %v5662
      %5730 = vmatprep.subr.bf16.mxu0 0
      %5731 = vmatpush1.bf16.msra.mxu0 0
      %5732 = vmatprep.subr.bf16.mxu0 0
      %5733 = vmatpush1.bf16.msra.mxu0 0
      %5734 = vmatprep.subr.bf16.mxu0 0
      %5735 = vmatpush1.bf16.msra.mxu0 0
      %5736 = vmatprep.subr.bf16.mxu0 0
      %5737 = vmatpush1.bf16.msra.mxu0 0
      %5738 = vmatprep.subr.bf16.mxu0 0
      %5739 = vmatpush1.bf16.msra.mxu0 0
      %5740 = vmatprep.subr.bf16.mxu0 0
      %5741 = vmatpush1.bf16.msra.mxu0 0
      %5742 = vmatprep.subr.bf16.mxu0 0
      %5743 = vmatpush1.bf16.msra.mxu0 0
      %5744 = vmatprep.subr.bf16.mxu0 0
      %5745 = vmatpush1.bf16.msra.mxu0 0
      %5746 = vmatprep.subr.bf16.mxu0 0
      %5747 = vmatpush1.bf16.msra.mxu0 0
      %5748 = vmatprep.subr.bf16.mxu0 0
      %5749 = vmatpush1.bf16.msra.mxu0 0
      %5750 = vmatprep.subr.bf16.mxu0 0
      %5751 = vmatpush1.bf16.msra.mxu0 0
      %5752 = vmatprep.mubr.bf16.mxu0 0
      %5753 = vmatmul.mubr.bf16.gmra.mrb[0].mxu0 %v5653
      %v5754 = vpop.f32.mrb[0].mxu0
      %v5755 = vadd.f32 %v5650, %v5754
      %v5756 = vpop.f32.mrb[0].mxu0
      %v5757 = vadd.f32 %v5650, %v5756
      %v5758 = vpop.f32.mrb[0].mxu0
      %v5759 = vpop.f32.mrb[0].mxu0
      %5760 = vdwg.mxu0
      %5761 = vmatprep.subr.bf16.mxu0 %v5610
      %5762 = vmatpush1.bf16.msra.mxu0 %v5609
      %5763 = vmatprep.subr.bf16.mxu0 %v5618
      %5764 = vmatpush1.bf16.msra.mxu0 %v5617
      %5765 = vmatprep.subr.bf16.mxu0 %v5626
      %5766 = vmatpush1.bf16.msra.mxu0 %v5625
      %5767 = vmatprep.subr.bf16.mxu0 %v5634
      %5768 = vmatpush1.bf16.msra.mxu0 %v5633
      %5769 = vmatprep.subr.bf16.mxu0 %v5671
      %5770 = vmatpush1.bf16.msra.mxu0 %v5668
      %5771 = vmatprep.subr.bf16.mxu0 0
      %5772 = vmatpush1.bf16.msra.mxu0 0
      %5773 = vmatprep.subr.bf16.mxu0 0
      %5774 = vmatpush1.bf16.msra.mxu0 0
      %5775 = vmatprep.subr.bf16.mxu0 0
      %5776 = vmatpush1.bf16.msra.mxu0 0
      %5777 = vmatprep.subr.bf16.mxu0 0
      %5778 = vmatpush1.bf16.msra.mxu0 0
      %5779 = vmatprep.subr.bf16.mxu0 0
      %5780 = vmatpush1.bf16.msra.mxu0 0
      %5781 = vmatprep.subr.bf16.mxu0 0
      %5782 = vmatpush1.bf16.msra.mxu0 0
      %5783 = vmatprep.subr.bf16.mxu0 0
      %5784 = vmatpush1.bf16.msra.mxu0 0
      %5785 = vmatprep.subr.bf16.mxu0 0
      %5786 = vmatpush1.bf16.msra.mxu0 0
      %5787 = vmatprep.subr.bf16.mxu0 0
      %5788 = vmatpush1.bf16.msra.mxu0 0
      %5789 = vmatprep.subr.bf16.mxu0 0
      %5790 = vmatpush1.bf16.msra.mxu0 0
      %5791 = vmatprep.subr.bf16.mxu0 0
      %5792 = vmatpush1.bf16.msra.mxu0 0
      %5793 = vmatprep.mubr.bf16.mxu0 0
      %5794 = vmatmul.mubr.bf16.gmra.mrb[0].mxu0 %v5653
      %v5795 = vpop.f32.mrb[0].mxu0
      %v5796 = vadd.f32 %v5650, %v5795
      %v5797 = vpop.f32.mrb[0].mxu0
      %v5798 = vadd.f32 %v5650, %v5797
      %v5799 = vpop.f32.mrb[0].mxu0
      %v5800 = vpop.f32.mrb[0].mxu0
      %5801 = vdwg.mxu0
      %5802 = vmatprep.subr.bf16.mxu0 %v5612
      %5803 = vmatpush1.bf16.msra.mxu0 %v5611
      %5804 = vmatprep.subr.bf16.mxu0 %v5620
      %5805 = vmatpush1.bf16.msra.mxu0 %v5619
      %5806 = vmatprep.subr.bf16.mxu0 %v5628
      %5807 = vmatpush1.bf16.msra.mxu0 %v5627
      %5808 = vmatprep.subr.bf16.mxu0 %v5636
      %5809 = vmatpush1.bf16.msra.mxu0 %v5635
      %5810 = vmatprep.subr.bf16.mxu0 %v5677
      %5811 = vmatpush1.bf16.msra.mxu0 %v5674
      %5812 = vmatprep.subr.bf16.mxu0 0
      %5813 = vmatpush1.bf16.msra.mxu0 0
      %5814 = vmatprep.subr.bf16.mxu0 0
      %5815 = vmatpush1.bf16.msra.mxu0 0
      %5816 = vmatprep.subr.bf16.mxu0 0
      %5817 = vmatpush1.bf16.msra.mxu0 0
      %5818 = vmatprep.subr.bf16.mxu0 0
      %5819 = vmatpush1.bf16.msra.mxu0 0
      %5820 = vmatprep.subr.bf16.mxu0 0
      %5821 = vmatpush1.bf16.msra.mxu0 0
      %5822 = vmatprep.subr.bf16.mxu0 0
      %5823 = vmatpush1.bf16.msra.mxu0 0
      %5824 = vmatprep.subr.bf16.mxu0 0
      %5825 = vmatpush1.bf16.msra.mxu0 0
      %5826 = vmatprep.subr.bf16.mxu0 0
      %5827 = vmatpush1.bf16.msra.mxu0 0
      %5828 = vmatprep.subr.bf16.mxu0 0
      %5829 = vmatpush1.bf16.msra.mxu0 0
      %5830 = vmatprep.subr.bf16.mxu0 0
      %5831 = vmatpush1.bf16.msra.mxu0 0
      %5832 = vmatprep.subr.bf16.mxu0 0
      %5833 = vmatpush1.bf16.msra.mxu0 0
      %5834 = vmatprep.mubr.bf16.mxu0 0
      %5835 = vmatmul.mubr.bf16.gmra.mrb[0].mxu0 %v5653
      %v5836 = vpop.f32.mrb[0].mxu0
      %v5837 = vadd.f32 %v5650, %v5836
      %v5838 = vpop.f32.mrb[0].mxu0
      %v5839 = vadd.f32 %v5650, %v5838
      %v5840 = vpop.f32.mrb[0].mxu0
      %v5841 = vpop.f32.mrb[0].mxu0
      %5842 = vdwg.mxu0
      %v5843 = vadd.f32 %v4341, %v5714
      %v5844 = vadd.f32 %v4342, %v5716
      %v5845 = vadd.f32 %v4343, %v5755
      %v5846 = vadd.f32 %v4344, %v5757
      %v5847 = vadd.f32 %v4345, %v5796
      %v5848 = vadd.f32 %v4346, %v5798
      %v5849 = vadd.f32 %v4347, %v5837
      %v5850 = vadd.f32 %v4348, %v5839
      %5851 = vrot.lane.b32.xlu0 %v5843, 33
      %v5852 = vpop.permute.xlu0 %5851
      %5853 = vrot.lane.b32.xlu0 %v5844, 33
      %v5854 = vpop.permute.xlu0 %5853
      %5855 = vrot.lane.b32.xlu0 %v5845, 33
      %v5856 = vpop.permute.xlu0 %5855
      %5857 = vrot.lane.b32.xlu0 %v5846, 33
      %v5858 = vpop.permute.xlu0 %5857
      %5859 = vrot.lane.b32.xlu0 %v5847, 33
      %v5860 = vpop.permute.xlu0 %5859
      %5861 = vrot.lane.b32.xlu0 %v5848, 33
      %v5862 = vpop.permute.xlu0 %5861
      %5863 = vrot.lane.b32.xlu0 %v5849, 33
      %v5864 = vpop.permute.xlu0 %5863
      %5865 = vrot.lane.b32.xlu0 %v5850, 33
      %v5866 = vpop.permute.xlu0 %5865
      %v5867 = vsel %vm3467, %v5864, %v5866
      %v5868 = vsel %vm3467, %v5862, %v5864
      %v5869 = vsel %vm3467, %v5860, %v5862
      %v5870 = vsel %vm3467, %v5858, %v5860
      %v5871 = vsel %vm3467, %v5856, %v5858
      %v5872 = vsel %vm3467, %v5854, %v5856
      %v5873 = vsel %vm3467, %v5852, %v5854
      %v5874 = vsel %vm3467, %v5866, %v5852
      %v5875 = vsel %vm3492, %v5874, 0.0
      %v5876 = vsel %vm3493, %v5873, 0.0
      %v5877 = vsel %vm3494, %v5872, 0.0
      %v5878 = vsel %vm3495, %v5871, 0.0
      %v5879 = vsel %vm3496, %v5870, 0.0
      %v5880 = vsel %vm3497, %v5869, 0.0
      %v5881 = vsel %vm3498, %v5868, 0.0
      %v5882 = vsel %vm3499, %v5867, 0.0
      %5883 = vrot.lane.b32.xlu0 %v5843, 32
      %v5884 = vpop.permute.xlu0 %5883
      %5885 = vrot.lane.b32.xlu0 %v5844, 32
      %v5886 = vpop.permute.xlu0 %5885
      %5887 = vrot.lane.b32.xlu0 %v5845, 32
      %v5888 = vpop.permute.xlu0 %5887
      %5889 = vrot.lane.b32.xlu0 %v5846, 32
      %v5890 = vpop.permute.xlu0 %5889
      %5891 = vrot.lane.b32.xlu0 %v5847, 32
      %v5892 = vpop.permute.xlu0 %5891
      %5893 = vrot.lane.b32.xlu0 %v5848, 32
      %v5894 = vpop.permute.xlu0 %5893
      %5895 = vrot.lane.b32.xlu0 %v5849, 32
      %v5896 = vpop.permute.xlu0 %5895
      %5897 = vrot.lane.b32.xlu0 %v5850, 32
      %v5898 = vpop.permute.xlu0 %5897
      %v5899 = vsel %vm3548, %v5896, %v5898
      %v5900 = vsel %vm3548, %v5894, %v5896
      %v5901 = vsel %vm3548, %v5892, %v5894
      %v5902 = vsel %vm3548, %v5890, %v5892
      %v5903 = vsel %vm3548, %v5888, %v5890
      %v5904 = vsel %vm3548, %v5886, %v5888
      %v5905 = vsel %vm3548, %v5884, %v5886
      %v5906 = vsel %vm3548, %v5898, %v5884
      %v5907 = vsel %vm3573, %v5906, 0.0
      %v5908 = vsel %vm3574, %v5905, 0.0
      %v5909 = vsel %vm3575, %v5904, 0.0
      %v5910 = vsel %vm3576, %v5903, 0.0
      %v5911 = vsel %vm3577, %v5902, 0.0
      %v5912 = vsel %vm3578, %v5901, 0.0
      %v5913 = vsel %vm3579, %v5900, 0.0
      %v5914 = vsel %vm3580, %v5899, 0.0
      %5915 = vrot.lane.b32.xlu0 %v5843, 31
      %v5916 = vpop.permute.xlu0 %5915
      %5917 = vrot.lane.b32.xlu0 %v5844, 31
      %v5918 = vpop.permute.xlu0 %5917
      %5919 = vrot.lane.b32.xlu0 %v5845, 31
      %v5920 = vpop.permute.xlu0 %5919
      %5921 = vrot.lane.b32.xlu0 %v5846, 31
      %v5922 = vpop.permute.xlu0 %5921
      %5923 = vrot.lane.b32.xlu0 %v5847, 31
      %v5924 = vpop.permute.xlu0 %5923
      %5925 = vrot.lane.b32.xlu0 %v5848, 31
      %v5926 = vpop.permute.xlu0 %5925
      %5927 = vrot.lane.b32.xlu0 %v5849, 31
      %v5928 = vpop.permute.xlu0 %5927
      %5929 = vrot.lane.b32.xlu0 %v5850, 31
      %v5930 = vpop.permute.xlu0 %5929
      %v5931 = vsel %vm3629, %v5928, %v5930
      %v5932 = vsel %vm3629, %v5926, %v5928
      %v5933 = vsel %vm3629, %v5924, %v5926
      %v5934 = vsel %vm3629, %v5922, %v5924
      %v5935 = vsel %vm3629, %v5920, %v5922
      %v5936 = vsel %vm3629, %v5918, %v5920
      %v5937 = vsel %vm3629, %v5916, %v5918
      %v5938 = vsel %vm3629, %v5930, %v5916
      %v5939 = vsel %vm3654, %v5938, 0.0
      %v5940 = vsel %vm3655, %v5937, 0.0
      %v5941 = vsel %vm3656, %v5936, 0.0
      %v5942 = vsel %vm3657, %v5935, 0.0
      %v5943 = vsel %vm3658, %v5934, 0.0
      %v5944 = vsel %vm3659, %v5933, 0.0
      %v5945 = vsel %vm3660, %v5932, 0.0
      %v5946 = vsel %vm3661, %v5931, 0.0
      %5947 = vrot.lane.b32.xlu0 %v5843, 1
      %v5948 = vpop.permute.xlu0 %5947
      %5949 = vrot.lane.b32.xlu0 %v5844, 1
      %v5950 = vpop.permute.xlu0 %5949
      %5951 = vrot.lane.b32.xlu0 %v5845, 1
      %v5952 = vpop.permute.xlu0 %5951
      %5953 = vrot.lane.b32.xlu0 %v5846, 1
      %v5954 = vpop.permute.xlu0 %5953
      %5955 = vrot.lane.b32.xlu0 %v5847, 1
      %v5956 = vpop.permute.xlu0 %5955
      %5957 = vrot.lane.b32.xlu0 %v5848, 1
      %v5958 = vpop.permute.xlu0 %5957
      %5959 = vrot.lane.b32.xlu0 %v5849, 1
      %v5960 = vpop.permute.xlu0 %5959
      %5961 = vrot.lane.b32.xlu0 %v5850, 1
      %v5962 = vpop.permute.xlu0 %5961
      %v5963 = vsel %vm1122, %v5960, %v5962
      %v5964 = vsel %vm1122, %v5958, %v5960
      %v5965 = vsel %vm1122, %v5956, %v5958
      %v5966 = vsel %vm1122, %v5954, %v5956
      %v5967 = vsel %vm1122, %v5952, %v5954
      %v5968 = vsel %vm1122, %v5950, %v5952
      %v5969 = vsel %vm1122, %v5948, %v5950
      %v5970 = vsel %vm1122, %v5962, %v5948
      %v5971 = vsel %vm3734, %v5970, 0.0
      %v5972 = vsel %vm3735, %v5969, 0.0
      %v5973 = vsel %vm3736, %v5968, 0.0
      %v5974 = vsel %vm3737, %v5967, 0.0
      %v5975 = vsel %vm3738, %v5966, 0.0
      %v5976 = vsel %vm3739, %v5965, 0.0
      %v5977 = vsel %vm3740, %v5964, 0.0
      %v5978 = vsel %vm3741, %v5963, 0.0
      %5979 = vrot.lane.b32.xlu0 %v5843, 127
      %v5980 = vpop.permute.xlu0 %5979
      %5981 = vrot.lane.b32.xlu0 %v5844, 127
      %v5982 = vpop.permute.xlu0 %5981
      %5983 = vrot.lane.b32.xlu0 %v5845, 127
      %v5984 = vpop.permute.xlu0 %5983
      %5985 = vrot.lane.b32.xlu0 %v5846, 127
      %v5986 = vpop.permute.xlu0 %5985
      %5987 = vrot.lane.b32.xlu0 %v5847, 127
      %v5988 = vpop.permute.xlu0 %5987
      %5989 = vrot.lane.b32.xlu0 %v5848, 127
      %v5990 = vpop.permute.xlu0 %5989
      %5991 = vrot.lane.b32.xlu0 %v5849, 127
      %v5992 = vpop.permute.xlu0 %5991
      %5993 = vrot.lane.b32.xlu0 %v5850, 127
      %v5994 = vpop.permute.xlu0 %5993
      %v5995 = vsel %vm1159, %v5992, %v5994
      %v5996 = vsel %vm1159, %v5990, %v5992
      %v5997 = vsel %vm1159, %v5988, %v5990
      %v5998 = vsel %vm1159, %v5986, %v5988
      %v5999 = vsel %vm1159, %v5984, %v5986
      %v6000 = vsel %vm1159, %v5982, %v5984
      %v6001 = vsel %vm1159, %v5980, %v5982
      %v6002 = vsel %vm1159, %v5994, %v5980
      %v6003 = vsel %vm3814, %v6001, 0.0
      %v6004 = vsel %vm3815, %v6000, 0.0
      %v6005 = vsel %vm3816, %v5999, 0.0
      %v6006 = vsel %vm3817, %v5998, 0.0
      %v6007 = vsel %vm3818, %v5997, 0.0
      %v6008 = vsel %vm3819, %v5996, 0.0
      %v6009 = vsel %vm3820, %v5995, 0.0
      %v6010 = vsel %vm3821, %v6002, 0.0
      %6011 = vrot.lane.b32.xlu0 %v5843, 97
      %v6012 = vpop.permute.xlu0 %6011
      %6013 = vrot.lane.b32.xlu0 %v5844, 97
      %v6014 = vpop.permute.xlu0 %6013
      %6015 = vrot.lane.b32.xlu0 %v5845, 97
      %v6016 = vpop.permute.xlu0 %6015
      %6017 = vrot.lane.b32.xlu0 %v5846, 97
      %v6018 = vpop.permute.xlu0 %6017
      %6019 = vrot.lane.b32.xlu0 %v5847, 97
      %v6020 = vpop.permute.xlu0 %6019
      %6021 = vrot.lane.b32.xlu0 %v5848, 97
      %v6022 = vpop.permute.xlu0 %6021
      %6023 = vrot.lane.b32.xlu0 %v5849, 97
      %v6024 = vpop.permute.xlu0 %6023
      %6025 = vrot.lane.b32.xlu0 %v5850, 97
      %v6026 = vpop.permute.xlu0 %6025
      %v6027 = vsel %vm3870, %v6024, %v6026
      %v6028 = vsel %vm3870, %v6022, %v6024
      %v6029 = vsel %vm3870, %v6020, %v6022
      %v6030 = vsel %vm3870, %v6018, %v6020
      %v6031 = vsel %vm3870, %v6016, %v6018
      %v6032 = vsel %vm3870, %v6014, %v6016
      %v6033 = vsel %vm3870, %v6012, %v6014
      %v6034 = vsel %vm3870, %v6026, %v6012
      %v6035 = vsel %vm3895, %v6033, 0.0
      %v6036 = vsel %vm3896, %v6032, 0.0
      %v6037 = vsel %vm3897, %v6031, 0.0
      %v6038 = vsel %vm3898, %v6030, 0.0
      %v6039 = vsel %vm3899, %v6029, 0.0
      %v6040 = vsel %vm3900, %v6028, 0.0
      %v6041 = vsel %vm3901, %v6027, 0.0
      %v6042 = vsel %vm3902, %v6034, 0.0
      %6043 = vrot.lane.b32.xlu0 %v5843, 96
      %v6044 = vpop.permute.xlu0 %6043
      %6045 = vrot.lane.b32.xlu0 %v5844, 96
      %v6046 = vpop.permute.xlu0 %6045
      %6047 = vrot.lane.b32.xlu0 %v5845, 96
      %v6048 = vpop.permute.xlu0 %6047
      %6049 = vrot.lane.b32.xlu0 %v5846, 96
      %v6050 = vpop.permute.xlu0 %6049
      %6051 = vrot.lane.b32.xlu0 %v5847, 96
      %v6052 = vpop.permute.xlu0 %6051
      %6053 = vrot.lane.b32.xlu0 %v5848, 96
      %v6054 = vpop.permute.xlu0 %6053
      %6055 = vrot.lane.b32.xlu0 %v5849, 96
      %v6056 = vpop.permute.xlu0 %6055
      %6057 = vrot.lane.b32.xlu0 %v5850, 96
      %v6058 = vpop.permute.xlu0 %6057
      %v6059 = vsel %vm3951, %v6056, %v6058
      %v6060 = vsel %vm3951, %v6054, %v6056
      %v6061 = vsel %vm3951, %v6052, %v6054
      %v6062 = vsel %vm3951, %v6050, %v6052
      %v6063 = vsel %vm3951, %v6048, %v6050
      %v6064 = vsel %vm3951, %v6046, %v6048
      %v6065 = vsel %vm3951, %v6044, %v6046
      %v6066 = vsel %vm3951, %v6058, %v6044
      %v6067 = vsel %vm3976, %v6065, 0.0
      %v6068 = vsel %vm3977, %v6064, 0.0
      %v6069 = vsel %vm3978, %v6063, 0.0
      %v6070 = vsel %vm3979, %v6062, 0.0
      %v6071 = vsel %vm3980, %v6061, 0.0
      %v6072 = vsel %vm3981, %v6060, 0.0
      %v6073 = vsel %vm3982, %v6059, 0.0
      %v6074 = vsel %vm3983, %v6066, 0.0
      %6075 = vrot.lane.b32.xlu0 %v5843, 95
      %v6076 = vpop.permute.xlu0 %6075
      %6077 = vrot.lane.b32.xlu0 %v5844, 95
      %v6078 = vpop.permute.xlu0 %6077
      %6079 = vrot.lane.b32.xlu0 %v5845, 95
      %v6080 = vpop.permute.xlu0 %6079
      %6081 = vrot.lane.b32.xlu0 %v5846, 95
      %v6082 = vpop.permute.xlu0 %6081
      %6083 = vrot.lane.b32.xlu0 %v5847, 95
      %v6084 = vpop.permute.xlu0 %6083
      %6085 = vrot.lane.b32.xlu0 %v5848, 95
      %v6086 = vpop.permute.xlu0 %6085
      %6087 = vrot.lane.b32.xlu0 %v5849, 95
      %v6088 = vpop.permute.xlu0 %6087
      %6089 = vrot.lane.b32.xlu0 %v5850, 95
      %v6090 = vpop.permute.xlu0 %6089
      %v6091 = vsel %vm4032, %v6088, %v6090
      %v6092 = vsel %vm4032, %v6086, %v6088
      %v6093 = vsel %vm4032, %v6084, %v6086
      %v6094 = vsel %vm4032, %v6082, %v6084
      %v6095 = vsel %vm4032, %v6080, %v6082
      %v6096 = vsel %vm4032, %v6078, %v6080
      %v6097 = vsel %vm4032, %v6076, %v6078
      %v6098 = vsel %vm4032, %v6090, %v6076
      %v6099 = vsel %vm4057, %v6097, 0.0
      %v6100 = vsel %vm4058, %v6096, 0.0
      %v6101 = vsel %vm4059, %v6095, 0.0
      %v6102 = vsel %vm4060, %v6094, 0.0
      %v6103 = vsel %vm4061, %v6093, 0.0
      %v6104 = vsel %vm4062, %v6092, 0.0
      %v6105 = vsel %vm4063, %v6091, 0.0
      %v6106 = vsel %vm4064, %v6098, 0.0
      %v6107 = vpack.c.bf16 %v5907, %v5875
      %v6108 = vpack.c.bf16 %v5908, %v5876
      %v6109 = vpack.c.bf16 %v5909, %v5877
      %v6110 = vpack.c.bf16 %v5910, %v5878
      %v6111 = vpack.c.bf16 %v5911, %v5879
      %v6112 = vpack.c.bf16 %v5912, %v5880
      %v6113 = vpack.c.bf16 %v5913, %v5881
      %v6114 = vpack.c.bf16 %v5914, %v5882
      %v6115 = vpack.c.bf16 %v5971, %v5939
      %v6116 = vpack.c.bf16 %v5972, %v5940
      %v6117 = vpack.c.bf16 %v5973, %v5941
      %v6118 = vpack.c.bf16 %v5974, %v5942
      %v6119 = vpack.c.bf16 %v5975, %v5943
      %v6120 = vpack.c.bf16 %v5976, %v5944
      %v6121 = vpack.c.bf16 %v5977, %v5945
      %v6122 = vpack.c.bf16 %v5978, %v5946
      %v6123 = vpack.c.bf16 %v6003, %v5843
      %v6124 = vpack.c.bf16 %v6004, %v5844
      %v6125 = vpack.c.bf16 %v6005, %v5845
      %v6126 = vpack.c.bf16 %v6006, %v5846
      %v6127 = vpack.c.bf16 %v6007, %v5847
      %v6128 = vpack.c.bf16 %v6008, %v5848
      %v6129 = vpack.c.bf16 %v6009, %v5849
      %v6130 = vpack.c.bf16 %v6010, %v5850
      %v6131 = vpack.c.bf16 %v6067, %v6035
      %v6132 = vpack.c.bf16 %v6068, %v6036
      %v6133 = vpack.c.bf16 %v6069, %v6037
      %v6134 = vpack.c.bf16 %v6070, %v6038
      %v6135 = vpack.c.bf16 %v6071, %v6039
      %v6136 = vpack.c.bf16 %v6072, %v6040
      %v6137 = vpack.c.bf16 %v6073, %v6041
      %v6138 = vpack.c.bf16 %v6074, %v6042
      %v6139 = vpack.c.bf16 %v6099, %v6099
      %v6140 = vpack.c.bf16 %v6100, %v6100
      %v6141 = vpack.c.bf16 %v6101, %v6101
      %v6142 = vpack.c.bf16 %v6102, %v6102
      %v6143 = vpack.c.bf16 %v6103, %v6103
      %v6144 = vpack.c.bf16 %v6104, %v6104
      %v6145 = vpack.c.bf16 %v6105, %v6105
      %v6146 = vpack.c.bf16 %v6106, %v6106
      %v6147 = vld [vmem:[%s25] sm:$0x1]
      %v6148 = vld [vmem:[#allocation2] sm:$0x1]
      %6150 = vset.pattern.permute.xlu0 0
      %6151 = vperm.xlu0 %6150, %v6148
      %v6152 = vpop.permute.xlu0 %6151
      %v6154 = vlaneseq
      %v6155 = vshrl.u32 %v6154, 7
      %v6156 = vsub.s32 0, %v6155
      %v6157 = vrot.slane %v6152, %v6156
      %v6159 = vsel %vm4908, %v6147, 0
      %v6162 = vsel %vm4912, %v6139, 0
      %v6165 = vsel %vm4912, %v6140, 0
      %v6168 = vsel %vm4912, %v6141, 0
      %v6171 = vsel %vm4912, %v6142, 0
      %v6174 = vsel %vm4912, %v6143, 0
      %v6177 = vsel %vm4912, %v6144, 0
      %v6180 = vsel %vm4912, %v6145, 0
      %v6183 = vsel %vm4912, %v6146, 0
      %6185 = vmatprep.subr.bf16.mxu0 %v6108
      %6186 = vmatpush1.bf16.msra.mxu0 %v6107
      %6187 = vmatprep.subr.bf16.mxu0 %v6116
      %6188 = vmatpush1.bf16.msra.mxu0 %v6115
      %6189 = vmatprep.subr.bf16.mxu0 %v6124
      %6190 = vmatpush1.bf16.msra.mxu0 %v6123
      %6191 = vmatprep.subr.bf16.mxu0 %v6132
      %6192 = vmatpush1.bf16.msra.mxu0 %v6131
      %6193 = vmatprep.subr.bf16.mxu0 %v6165
      %6194 = vmatpush1.bf16.msra.mxu0 %v6162
      %6195 = vmatprep.subr.bf16.mxu0 0
      %6196 = vmatpush1.bf16.msra.mxu0 0
      %6197 = vmatprep.subr.bf16.mxu0 0
      %6198 = vmatpush1.bf16.msra.mxu0 0
      %6199 = vmatprep.subr.bf16.mxu0 0
      %6200 = vmatpush1.bf16.msra.mxu0 0
      %6201 = vmatprep.subr.bf16.mxu0 0
      %6202 = vmatpush1.bf16.msra.mxu0 0
      %6203 = vmatprep.subr.bf16.mxu0 0
      %6204 = vmatpush1.bf16.msra.mxu0 0
      %6205 = vmatprep.subr.bf16.mxu0 0
      %6206 = vmatpush1.bf16.msra.mxu0 0
      %6207 = vmatprep.subr.bf16.mxu0 0
      %6208 = vmatpush1.bf16.msra.mxu0 0
      %6209 = vmatprep.subr.bf16.mxu0 0
      %6210 = vmatpush1.bf16.msra.mxu0 0
      %6211 = vmatprep.subr.bf16.mxu0 0
      %6212 = vmatpush1.bf16.msra.mxu0 0
      %6213 = vmatprep.subr.bf16.mxu0 0
      %6214 = vmatpush1.bf16.msra.mxu0 0
      %6215 = vmatprep.subr.bf16.mxu0 0
      %6216 = vmatpush1.bf16.msra.mxu0 0
      %6217 = vmatprep.mubr.bf16.mxu0 0
      %6218 = vmatmul.mubr.bf16.gmra.mrb[0].mxu0 %v6159
      %v6219 = vpop.f32.mrb[0].mxu0
      %v6220 = vadd.f32 %v6157, %v6219
      %v6221 = vpop.f32.mrb[0].mxu0
      %v6222 = vadd.f32 %v6157, %v6221
      %v6223 = vpop.f32.mrb[0].mxu0
      %v6224 = vpop.f32.mrb[0].mxu0
      %6225 = vdwg.mxu0
      %6226 = vmatprep.subr.bf16.mxu0 %v6110
      %6227 = vmatpush1.bf16.msra.mxu0 %v6109
      %6228 = vmatprep.subr.bf16.mxu0 %v6118
      %6229 = vmatpush1.bf16.msra.mxu0 %v6117
      %6230 = vmatprep.subr.bf16.mxu0 %v6126
      %6231 = vmatpush1.bf16.msra.mxu0 %v6125
      %6232 = vmatprep.subr.bf16.mxu0 %v6134
      %6233 = vmatpush1.bf16.msra.mxu0 %v6133
      %6234 = vmatprep.subr.bf16.mxu0 %v6171
      %6235 = vmatpush1.bf16.msra.mxu0 %v6168
      %6236 = vmatprep.subr.bf16.mxu0 0
      %6237 = vmatpush1.bf16.msra.mxu0 0
      %6238 = vmatprep.subr.bf16.mxu0 0
      %6239 = vmatpush1.bf16.msra.mxu0 0
      %6240 = vmatprep.subr.bf16.mxu0 0
      %6241 = vmatpush1.bf16.msra.mxu0 0
      %6242 = vmatprep.subr.bf16.mxu0 0
      %6243 = vmatpush1.bf16.msra.mxu0 0
      %6244 = vmatprep.subr.bf16.mxu0 0
      %6245 = vmatpush1.bf16.msra.mxu0 0
      %6246 = vmatprep.subr.bf16.mxu0 0
      %6247 = vmatpush1.bf16.msra.mxu0 0
      %6248 = vmatprep.subr.bf16.mxu0 0
      %6249 = vmatpush1.bf16.msra.mxu0 0
      %6250 = vmatprep.subr.bf16.mxu0 0
      %6251 = vmatpush1.bf16.msra.mxu0 0
      %6252 = vmatprep.subr.bf16.mxu0 0
      %6253 = vmatpush1.bf16.msra.mxu0 0
      %6254 = vmatprep.subr.bf16.mxu0 0
      %6255 = vmatpush1.bf16.msra.mxu0 0
      %6256 = vmatprep.subr.bf16.mxu0 0
      %6257 = vmatpush1.bf16.msra.mxu0 0
      %6258 = vmatprep.mubr.bf16.mxu0 0
      %6259 = vmatmul.mubr.bf16.gmra.mrb[0].mxu0 %v6159
      %v6260 = vpop.f32.mrb[0].mxu0
      %v6261 = vadd.f32 %v6157, %v6260
      %v6262 = vpop.f32.mrb[0].mxu0
      %v6263 = vadd.f32 %v6157, %v6262
      %v6264 = vpop.f32.mrb[0].mxu0
      %v6265 = vpop.f32.mrb[0].mxu0
      %6266 = vdwg.mxu0
      %6267 = vmatprep.subr.bf16.mxu0 %v6112
      %6268 = vmatpush1.bf16.msra.mxu0 %v6111
      %6269 = vmatprep.subr.bf16.mxu0 %v6120
      %6270 = vmatpush1.bf16.msra.mxu0 %v6119
      %6271 = vmatprep.subr.bf16.mxu0 %v6128
      %6272 = vmatpush1.bf16.msra.mxu0 %v6127
      %6273 = vmatprep.subr.bf16.mxu0 %v6136
      %6274 = vmatpush1.bf16.msra.mxu0 %v6135
      %6275 = vmatprep.subr.bf16.mxu0 %v6177
      %6276 = vmatpush1.bf16.msra.mxu0 %v6174
      %6277 = vmatprep.subr.bf16.mxu0 0
      %6278 = vmatpush1.bf16.msra.mxu0 0
      %6279 = vmatprep.subr.bf16.mxu0 0
      %6280 = vmatpush1.bf16.msra.mxu0 0
      %6281 = vmatprep.subr.bf16.mxu0 0
      %6282 = vmatpush1.bf16.msra.mxu0 0
      %6283 = vmatprep.subr.bf16.mxu0 0
      %6284 = vmatpush1.bf16.msra.mxu0 0
      %6285 = vmatprep.subr.bf16.mxu0 0
      %6286 = vmatpush1.bf16.msra.mxu0 0
      %6287 = vmatprep.subr.bf16.mxu0 0
      %6288 = vmatpush1.bf16.msra.mxu0 0
      %6289 = vmatprep.subr.bf16.mxu0 0
      %6290 = vmatpush1.bf16.msra.mxu0 0
      %6291 = vmatprep.subr.bf16.mxu0 0
      %6292 = vmatpush1.bf16.msra.mxu0 0
      %6293 = vmatprep.subr.bf16.mxu0 0
      %6294 = vmatpush1.bf16.msra.mxu0 0
      %6295 = vmatprep.subr.bf16.mxu0 0
      %6296 = vmatpush1.bf16.msra.mxu0 0
      %6297 = vmatprep.subr.bf16.mxu0 0
      %6298 = vmatpush1.bf16.msra.mxu0 0
      %6299 = vmatprep.mubr.bf16.mxu0 0
      %6300 = vmatmul.mubr.bf16.gmra.mrb[0].mxu0 %v6159
      %v6301 = vpop.f32.mrb[0].mxu0
      %v6302 = vadd.f32 %v6157, %v6301
      %v6303 = vpop.f32.mrb[0].mxu0
      %v6304 = vadd.f32 %v6157, %v6303
      %v6305 = vpop.f32.mrb[0].mxu0
      %v6306 = vpop.f32.mrb[0].mxu0
      %6307 = vdwg.mxu0
      %6308 = vmatprep.subr.bf16.mxu0 %v6114
      %6309 = vmatpush1.bf16.msra.mxu0 %v6113
      %6310 = vmatprep.subr.bf16.mxu0 %v6122
      %6311 = vmatpush1.bf16.msra.mxu0 %v6121
      %6312 = vmatprep.subr.bf16.mxu0 %v6130
      %6313 = vmatpush1.bf16.msra.mxu0 %v6129
      %6314 = vmatprep.subr.bf16.mxu0 %v6138
      %6315 = vmatpush1.bf16.msra.mxu0 %v6137
      %6316 = vmatprep.subr.bf16.mxu0 %v6183
      %6317 = vmatpush1.bf16.msra.mxu0 %v6180
      %6318 = vmatprep.subr.bf16.mxu0 0
      %6319 = vmatpush1.bf16.msra.mxu0 0
      %6320 = vmatprep.subr.bf16.mxu0 0
      %6321 = vmatpush1.bf16.msra.mxu0 0
      %6322 = vmatprep.subr.bf16.mxu0 0
      %6323 = vmatpush1.bf16.msra.mxu0 0
      %6324 = vmatprep.subr.bf16.mxu0 0
      %6325 = vmatpush1.bf16.msra.mxu0 0
      %6326 = vmatprep.subr.bf16.mxu0 0
      %6327 = vmatpush1.bf16.msra.mxu0 0
      %6328 = vmatprep.subr.bf16.mxu0 0
      %6329 = vmatpush1.bf16.msra.mxu0 0
      %6330 = vmatprep.subr.bf16.mxu0 0
      %6331 = vmatpush1.bf16.msra.mxu0 0
      %6332 = vmatprep.subr.bf16.mxu0 0
      %6333 = vmatpush1.bf16.msra.mxu0 0
      %6334 = vmatprep.subr.bf16.mxu0 0
      %6335 = vmatpush1.bf16.msra.mxu0 0
      %6336 = vmatprep.subr.bf16.mxu0 0
      %6337 = vmatpush1.bf16.msra.mxu0 0
      %6338 = vmatprep.subr.bf16.mxu0 0
      %6339 = vmatpush1.bf16.msra.mxu0 0
      %6340 = vmatprep.mubr.bf16.mxu0 0
      %6341 = vmatmul.mubr.bf16.gmra.mrb[0].mxu0 %v6159
      %v6342 = vpop.f32.mrb[0].mxu0
      %v6343 = vadd.f32 %v6157, %v6342
      %v6344 = vpop.f32.mrb[0].mxu0
      %v6345 = vadd.f32 %v6157, %v6344
      %v6346 = vpop.f32.mrb[0].mxu0
      %v6347 = vpop.f32.mrb[0].mxu0
      %6348 = vdwg.mxu0
      %v6357 = vcombine.low %v6220, %v6222
      %v6358 = vcombine.low %v6261, %v6263
      %v6359 = vcombine.low %v6302, %v6304
      %v6360 = vcombine.low %v6343, %v6345
      %v6362 = vunpack.c.l.s4 1966171168
      %v6363 = vunpack.c.0.s8 %v6362
      %v6364 = vlaneseq
      %v6365 = vshrl.u32 %v6364, 7
      %v6366 = vsub.s32 %v6363, %v6365
      %v6367 = vrot.slane %v6357, %v6366
      %v6369 = vunpack.c.l.s4 1966171168
      %v6370 = vunpack.c.0.s8 %v6369
      %v6371 = vlaneseq
      %v6372 = vshrl.u32 %v6371, 7
      %v6373 = vsub.s32 %v6370, %v6372
      %v6374 = vrot.slane %v6358, %v6373
      %v6376 = vunpack.c.l.s4 1966171168
      %v6377 = vunpack.c.0.s8 %v6376
      %v6378 = vlaneseq
      %v6379 = vshrl.u32 %v6378, 7
      %v6380 = vsub.s32 %v6377, %v6379
      %v6381 = vrot.slane %v6359, %v6380
      %v6383 = vunpack.c.l.s4 1966171168
      %v6384 = vunpack.c.0.s8 %v6383
      %v6385 = vlaneseq
      %v6386 = vshrl.u32 %v6385, 7
      %v6387 = vsub.s32 %v6384, %v6386
      %v6388 = vrot.slane %v6360, %v6387
      %v6389 = vcombine.low %v6367, %v6374
      %v6390 = vcombine.low %v6381, %v6388
      %v6392 = vunpack.c.l.s4 1966171168
      %v6393 = vunpack.c.0.s8 %v6392
      %v6394 = vlaneseq
      %v6395 = vshrl.u32 %v6394, 7
      %v6396 = vsub.s32 %v6393, %v6395
      %v6397 = vrot.slane %v6389, %v6396
      %v6399 = vunpack.c.l.s4 1966171168
      %v6400 = vunpack.c.0.s8 %v6399
      %v6401 = vlaneseq
      %v6402 = vshrl.u32 %v6401, 7
      %v6403 = vsub.s32 %v6400, %v6402
      %v6404 = vrot.slane %v6390, %v6403
      %v6405 = vcombine.low %v6397, %v6404
      %6407 = vst [vmem:[%s858] sm:$0xff] %v6405
      %p6408 = scmp.lt.s32.totalorder %s40, 1
      %s6409 = scalar_select %p6408, %s40, 1
      %s6410 = smul.addr %s6409, 8
      %s6411 = scalar_lea.vmem %s27, %s6410
      // Predicated region
      $region129: #{punetg_decoder_forward.1} parent=127 // pred_check
        %p6412 = pneg %p640
      $region130: #{punetg_decoder_forward.1} parent=127 // pred_check_branch
        %6414 = sbr.rel (%p6412) target = $region132
      $region131: #{punetg_decoder_forward.1} parent=127 // pred_region
        _
      $region132: #{punetg_decoder_forward.1} parent=127 // pred_fallthru
        _
    $region128: #{punetg_decoder_forward.1} parent=5 // pred_fallthru
      _
    %p6415 = scmp.le.s32.totalorder 2, %s35
    // Predicated region
    $region133: #{punetg_decoder_forward.1} parent=5 // pred_check
      %p6416 = pneg %p6415
    $region134: #{punetg_decoder_forward.1} parent=5 // pred_check_branch
      %6418 = sbr.rel (%p6416) target = $region136
    $region135: #{punetg_decoder_forward.1} parent=5 // pred_region
      %s6419 = ssub.s32 %s35, 2
      // Predicated region
      $region137: #{punetg_decoder_forward.1} parent=135 // pred_check
        %p6420 = pneg %p646
      $region138: #{punetg_decoder_forward.1} parent=135 // pred_check_branch
        %6422 = sbr.rel (%p6420) target = $region140
      $region139: #{punetg_decoder_forward.1} parent=135 // pred_region
        %p6423 = scmp.lt.s32.totalorder %s41, 1
        %s6424 = scalar_select %p6423, %s41, 1
        %s6425 = smul.addr %s6424, 8
        %s6426 = scalar_lea.vmem %s27, %s6425
      $region140: #{punetg_decoder_forward.1} parent=135 // pred_fallthru
        _
    $region136: #{punetg_decoder_forward.1} parent=5 // pred_fallthru
      _
  $region6: #{punetg_decoder_forward.1} parent=0 // loop_footer
    %s39 = sadd.s32 1, %s35
  $region7: #{punetg_decoder_forward.1} parent=0 // loop_footer_branch
    %34 = sbr.rel target = $region3
  $region8: #{punetg_decoder_forward.1} parent=0 // loop_exit
    _

</llo_original>
